<compile_context>
chip_gen: v5e
topology: v5e:2x2
jax: 0.10.0
libtpu: 0.0.40
codegen_flags: <defaults>
</compile_context>

<pallas_src>
import functools

import jax
import jax.numpy as jnp
from jax.experimental import pallas as pl
from jax.experimental.pallas import tpu as pltpu

_H = 512      # LSTM hidden size / head width
_FEAT = 182   # real features per row
_NA = 11      # number of actions (mask width)

_WEIGHT_KEYS = ("w1", "b1", "wa1", "ba1", "wb1", "bb1", "wa2", "ba2", "wb2", "bb2",
                "wl", "bl", "wg", "bg", "wh1", "bh1", "ws2", "bs2", "wa2h", "ba2h",
                "wq", "bq")


# ----------------------------------------------------------------------------- helpers
def _mxu(a, w):
    """MXU matmul: bf16 operands, f32 accumulation."""
    return jnp.dot(a.astype(jnp.bfloat16), w, preferred_element_type=jnp.float32)


# ----------------------------------------------------------------------------- kernel
def lstm_qnet_kernel(x_ref, mask_ref, h0_ref, c0_ref,
                     w1, b1, wa1, ba1, wb1, bb1, wa2, ba2, wb2, bb2, wl, bl,
                     wg, bg, wh1, bh1, ws2, bs2, wa2h, ba2h, wq, bq,
                     q_ref, hn_ref, cn_ref, *, seq_len, hist, block_b):
    rows = seq_len * block_b              # LSTM / head rows, ordered (timestep, batch)

    # ---- StateEncoder over all hist*rows rows of this batch block (M filled) ------
    # fc_1's weight is zero-padded over the trailing 11 mask lanes, so the full
    # 193-lane slab (already bf16) goes straight to the MXU.
    xe = x_ref[...]                                                  # (hist*rows, 193) bf16
    h = jnp.maximum(jnp.dot(xe, w1[...], preferred_element_type=jnp.float32)
                    + b1[...], 0.0)                                  # (hist*rows, 128) f32
    for wa, ba, wb, bb in ((wa1, ba1, wb1, bb1), (wa2, ba2, wb2, bb2)):
        r = jnp.maximum(_mxu(h, wa[...]) + ba[...], 0.0)             # Linear + ReLU
        r = _mxu(r, wb[...]) + bb[...]                               # (Dropout = id) + Linear
        h = jnp.maximum(r + h, 0.0)                                  # residual + ReLU
    enc = jnp.maximum(_mxu(h, wl[...]) + bl[...], 0.0)               # (hist*rows, 64) f32

    # ---- LSTMCell: every step uses its own provided (h, c), so all steps run in
    # parallel as rows.  Hist-major layout -> gates are a sum of partial matmuls
    # over static sublane-aligned slices (no gather matmuls, no lane concat).
    gates = _mxu(h0_ref[...], wg[hist * 64:, :]) + bg[...]           # h_prev @ W_hh + b
    for hi in range(hist):
        gates += _mxu(enc[hi * rows:(hi + 1) * rows, :],
                      wg[hi * 64:(hi + 1) * 64, :])                  # x_hist_hi @ W_ih_hi
    i_g = jax.nn.sigmoid(gates[:, 0 * _H:1 * _H])
    f_g = jax.nn.sigmoid(gates[:, 1 * _H:2 * _H])
    g_g = jnp.tanh(gates[:, 2 * _H:3 * _H])
    o_g = jax.nn.sigmoid(gates[:, 3 * _H:4 * _H])
    c_new = f_g * c0_ref[...] + i_g * g_g                            # f32 elementwise
    h_new = o_g * jnp.tanh(c_new)                                    # (rows, 512) f32

    # ---- Dueling heads: layer-1 branches fused into one (512, 1024) matmul; the
    # epilogue sv + (av - mean(av)) is folded into one pre-centred (1024, 128)
    # weight -> lane-dense q slab, no XLU mean, no sub-128-lane slices.
    h1 = jnp.maximum(_mxu(h_new, wh1[...]) + bh1[...], 0.0)          # (rows, 1024)
    sv2 = jnp.maximum(_mxu(h1[:, :_H], ws2[...]) + bs2[...], 0.0)    # state branch
    av2 = jnp.maximum(_mxu(h1[:, _H:], wa2h[...]) + ba2h[...], 0.0)  # action branch
    q = _mxu(sv2, wq[:_H, :]) + _mxu(av2, wq[_H:, :]) + bq[...]      # (rows, 128)
    q_ref[...] = q + (1.0 - mask_ref[...]) * (-1e33)                 # mask penalty in f32

    # Last timestep's (h, c): with (timestep, batch)-ordered rows this is simply
    # the last block_b rows — one static contiguous slice.
    hn_ref[...] = h_new[(seq_len - 1) * block_b:, :]
    cn_ref[...] = c_new[(seq_len - 1) * block_b:, :]


# ----------------------------------------------------------------------------- wrapper
def _pick_block_b(b, l):
    """Rows per grid step: fill the MXU M (~256 rows) with sublane-aligned blocks."""
    target = max(1, 256 // max(l, 1))
    if b <= target:
        return b                           # whole batch in one grid step
    return max(8, (target // 8) * 8)       # keep tiled blocks multiples of 8


def lstm_qnet_forward(packed, x, hidden_states_tuple, *, block_b=None):
    """x: (B, L, HIST, 193) f32.  hns/cns: (L, 1, B, 512) f32."""
    b, l, hist, feat = x.shape
    hns, cns = hidden_states_tuple

    if block_b is None:
        block_b = _pick_block_b(b, l)
    nb = -(-b // block_b)                  # number of batch blocks (grid steps)
    bp = nb * block_b
    if bp != b:                            # zero-pad the batch: every block full-size
        x = jnp.concatenate([x, jnp.zeros((bp - b,) + x.shape[1:], x.dtype)], axis=0)
        hns = jnp.concatenate([hns, jnp.zeros((l, 1, bp - b, _H), hns.dtype)], axis=2)
        cns = jnp.concatenate([cns, jnp.zeros((l, 1, bp - b, _H), cns.dtype)], axis=2)

    rows = l * block_b                     # LSTM / head rows per block
    rows_e = hist * rows                   # encoder rows per block

    # Encoder input: hist-major rows per block, cast to bf16 (feeds the MXU only).
    x_enc = jnp.transpose(x.reshape(nb, block_b, l, hist, feat),
                          (0, 3, 2, 1, 4)).reshape(nb * rows_e, feat).astype(jnp.bfloat16)
    # Action mask: (timestep, batch)-ordered rows, ones-padded to 128 lanes.
    mask = jnp.transpose(x[:, :, 0, feat - _NA:], (1, 0, 2)).astype(jnp.float32)
    mask = jnp.pad(mask, ((0, 0), (0, 0), (0, 128 - _NA)), constant_values=1.0)
    mask = jnp.transpose(mask.reshape(l, nb, block_b, 128),
                         (1, 0, 2, 3)).reshape(nb * rows, 128)
    # Provided per-step (h, c), (timestep, batch)-ordered.  h0 only feeds the MXU -> bf16.
    h0 = jnp.transpose(hns.reshape(l, nb, block_b, _H),
                       (1, 0, 2, 3)).reshape(nb * rows, _H).astype(jnp.bfloat16)
    c0 = jnp.transpose(cns.reshape(l, nb, block_b, _H),
                       (1, 0, 2, 3)).reshape(nb * rows, _H)          # stays f32

    weights = [packed[k] for k in _WEIGHT_KEYS]

    def block_spec(shape2d):               # per-batch-block rows
        return pl.BlockSpec(shape2d, lambda i: (i, 0))

    def full_spec(w):                      # weights: whole array, resident across steps
        return pl.BlockSpec(tuple(w.shape), lambda i: (0, 0))

    kernel = functools.partial(lstm_qnet_kernel, seq_len=l, hist=hist, block_b=block_b)

    q_pad, hn_all, cn_all = pl.pallas_call(
        kernel,
        grid=(nb,),
        in_specs=[block_spec((rows_e, feat)), block_spec((rows, 128)),
                  block_spec((rows, _H)), block_spec((rows, _H))]
                 + [full_spec(w) for w in weights],
        out_specs=(block_spec((rows, 128)),
                   block_spec((block_b, _H)),
                   block_spec((block_b, _H))),
        out_shape=(jax.ShapeDtypeStruct((nb * rows, 128), jnp.float32),
                   jax.ShapeDtypeStruct((bp, _H), jnp.float32),
                   jax.ShapeDtypeStruct((bp, _H), jnp.float32)),
        compiler_params=pltpu.CompilerParams(
            dimension_semantics=("parallel",),       # batch blocks split across TCs (v7x)
            vmem_limit_bytes=32 * 1024 * 1024),
    )(x_enc, mask, h0, c0, *weights)

    q = jnp.transpose(q_pad.reshape(nb, l, block_b, 128),
                      (0, 2, 1, 3)).reshape(bp, l, 128)[:b, :, :_NA]
    return q, (hn_all[:b][None, :, :], cn_all[:b][None, :, :])


# ----------------------------------------------------------------------------- params
def init_params(key, hist_length):
    """PyTorch-equivalent params, stored transposed as (in, out)."""
    def linear(k, fan_in, fan_out):
        kw, kb = jax.random.split(k)
        s = 1.0 / jnp.sqrt(jnp.float32(fan_in))
        w = jax.random.uniform(kw, (fan_in, fan_out), jnp.float32, -s, s)
        b = jax.random.uniform(kb, (1, fan_out), jnp.float32, -s, s)
        return w, b

    ks = list(jax.random.split(key, 16))

    enc = {}
    enc["w1"], enc["b1"] = linear(ks[0], _FEAT, 128)
    enc["wa1"], enc["ba1"] = linear(ks[1], 128, 128)
    enc["wb1"], enc["bb1"] = linear(ks[2], 128, 128)
    enc["wa2"], enc["ba2"] = linear(ks[3], 128, 128)
    enc["wb2"], enc["bb2"] = linear(ks[4], 128, 128)
    enc["wl"], enc["bl"] = linear(ks[5], 128, 64)

    d_in = 64 * hist_length
    s = 1.0 / jnp.sqrt(jnp.float32(_H))
    k6a, k6b, k6c, k6d = jax.random.split(ks[6], 4)
    lstm = {
        "wih": jax.random.uniform(k6a, (d_in, 4 * _H), jnp.float32, -s, s),
        "whh": jax.random.uniform(k6b, (_H, 4 * _H), jnp.float32, -s, s),
        # bias_ih + bias_hh folded into one (1, 2048) vector
        "b": (jax.random.uniform(k6c, (1, 4 * _H), jnp.float32, -s, s)
              + jax.random.uniform(k6d, (1, 4 * _H), jnp.float32, -s, s)),
    }

    head = {}
    head["ws1"], head["bs1"] = linear(ks[7], _H, _H)
    head["ws2"], head["bs2"] = linear(ks[8], _H, _H)
    head["ws3"], head["bs3"] = linear(ks[9], _H, 1)
    head["wa1"], head["ba1"] = linear(ks[10], _H, _H)
    head["wa2"], head["ba2"] = linear(ks[11], _H, _H)
    head["wa3"], head["ba3"] = linear(ks[12], _H, _NA)

    return {"enc": enc, "lstm": lstm, "head": head}


def pack_params(params):
    """Fuse / pad / cast the PyTorch-layout params into the kernel's layout."""
    f32, bf16 = jnp.float32, jnp.bfloat16
    enc, lstm, head = params["enc"], params["lstm"], params["head"]

    # fc_1 weight zero-padded over the 11 mask lanes -> feed the full 193-lane slab.
    w1p = jnp.zeros((_FEAT + _NA, 128), f32).at[:_FEAT, :].set(enc["w1"])

    # Dueling epilogue folded into one pre-centred, lane-dense (1024, 128) weight:
    #   q = sv + (av - mean(av)) = [sv2|av2] @ [[ws3 * 1_11]; [wa3 @ C]] + (bs3*1_11 + ba3 @ C)
    # with C = I_11 - (1/11) * ones(11, 11); padded with zeros to 128 lanes.
    center = jnp.eye(_NA, dtype=f32) - jnp.full((_NA, _NA), 1.0 / _NA, f32)
    wq = jnp.zeros((2 * _H, 128), f32)
    wq = wq.at[:_H, :_NA].set(jnp.broadcast_to(head["ws3"], (_H, _NA)))
    wq = wq.at[_H:, :_NA].set(head["wa3"] @ center)
    bq = jnp.zeros((1, 128), f32).at[:, :_NA].set(head["bs3"] + head["ba3"] @ center)

    return {
        "w1": w1p.astype(bf16), "b1": enc["b1"],
        "wa1": enc["wa1"].astype(bf16), "ba1": enc["ba1"],
        "wb1": enc["wb1"].astype(bf16), "bb1": enc["bb1"],
        "wa2": enc["wa2"].astype(bf16), "ba2": enc["ba2"],
        "wb2": enc["wb2"].astype(bf16), "bb2": enc["bb2"],
        "wl": enc["wl"].astype(bf16), "bl": enc["bl"],
        # LSTM: one fused (hist*64 + 512, 2048) gate weight; bias_ih + bias_hh folded.
        "wg": jnp.concatenate([lstm["wih"], lstm["whh"]], axis=0).astype(bf16),
        "bg": lstm["b"],
        # Dueling heads: layer-1 branches fused side-by-side.
        "wh1": jnp.concatenate([head["ws1"], head["wa1"]], axis=1).astype(bf16),
        "bh1": jnp.concatenate([head["bs1"], head["ba1"]], axis=1),
        "ws2": head["ws2"].astype(bf16), "bs2": head["bs2"],
        "wa2h": head["wa2"].astype(bf16), "ba2h": head["ba2"],
        "wq": wq.astype(bf16), "bq": bq,
    }


# ----------------------------------------------------------------------------- reference
def lstm_qnet_reference(params, x, hidden_states_tuple, hist_length):
    """Pure-JAX float32 reference matching the PyTorch forward."""
    enc, lstm, head = params["enc"], params["lstm"], params["head"]
    b, l = x.shape[0], x.shape[1]
    xf = x[:, :, :, :-_NA].reshape(-1, _FEAT)
    mask = x[:, :, 0, -_NA:]

    h = jnp.maximum(xf @ enc["w1"] + enc["b1"], 0.0)
    for wa, ba, wb, bb in (("wa1", "ba1", "wb1", "bb1"), ("wa2", "ba2", "wb2", "bb2")):
        r = jnp.maximum(h @ enc[wa] + enc[ba], 0.0)
        r = r @ enc[wb] + enc[bb]
        h = jnp.maximum(r + h, 0.0)
    e = jnp.maximum(h @ enc["wl"] + enc["bl"], 0.0)
    encoded = e.reshape(b, l, hist_length * 64)

    hns, cns = hidden_states_tuple
    outs, hn, cn = [], None, None
    for it in range(l):
        g = encoded[:, it, :] @ lstm["wih"] + hns[it, 0] @ lstm["whh"] + lstm["b"]
        i_g = jax.nn.sigmoid(g[:, 0 * _H:1 * _H])
        f_g = jax.nn.sigmoid(g[:, 1 * _H:2 * _H])
        g_g = jnp.tanh(g[:, 2 * _H:3 * _H])
        o_g = jax.nn.sigmoid(g[:, 3 * _H:4 * _H])
        cn = f_g * cns[it, 0] + i_g * g_g
        hn = o_g * jnp.tanh(cn)
        outs.append(hn)
    temporal = jnp.stack(outs, axis=1).reshape(b * l, _H)

    sv = jnp.maximum(temporal @ head["ws1"] + head["bs1"], 0.0)
    sv = jnp.maximum(sv @ head["ws2"] + head["bs2"], 0.0)
    sv = sv @ head["ws3"] + head["bs3"]
    av = jnp.maximum(temporal @ head["wa1"] + head["ba1"], 0.0)
    av = jnp.maximum(av @ head["wa2"] + head["ba2"], 0.0)
    av = av @ head["wa3"] + head["ba3"]
    q = sv + (av - av.mean(axis=1, keepdims=True))
    q = q.reshape(b, l, _NA) + (1.0 - mask) * (-1e33)
    return q, (hn[None], cn[None])


# ----------------------------------------------------------------------------- main
if __name__ == "__main__":
    B, L, HIST = 2, 8, 2                        # x is (B, L, HIST, 193)

    key = jax.random.PRNGKey(0)
    kp, kx, kh, kc, km = jax.random.split(key, 5)

    params = init_params(kp, HIST)
    packed = pack_params(params)

    feats = jax.random.normal(kx, (B, L, HIST, _FEAT), jnp.float32)
    mask_bits = jax.random.bernoulli(km, 0.7, (B, L, 1, _NA)).astype(jnp.float32)
    mask_region = jnp.broadcast_to(mask_bits, (B, L, HIST, _NA))
    x = jnp.concatenate([feats, mask_region], axis=-1)          # (B, L, HIST, 193)

    hns = jax.random.normal(kh, (L, 1, B, _H), jnp.float32)
    cns = jax.random.normal(kc, (L, 1, B, _H), jnp.float32)

    fwd = jax.jit(lstm_qnet_forward)
    q_value, (hn, cn) = fwd(packed, x, (hns, cns))
    jax.block_until_ready((q_value, hn, cn))

    assert q_value.shape == (B, L, _NA)
    assert hn.shape == (1, B, _H) and cn.shape == (1, B, _H)
    assert bool(jnp.all(jnp.isfinite(hn))) and bool(jnp.all(jnp.isfinite(cn)))

    # Validation vs. a pure-JAX f32 reference.  The kernel uses bf16 MXU operands
    # with f32 accumulation; compare q only on UNMASKED actions (masked entries are
    # ~ -1e33 and would pass any tolerance trivially).
    q_ref, (hn_ref, cn_ref) = lstm_qnet_reference(params, x, (hns, cns), HIST)
    assert bool(jnp.allclose(hn, hn_ref, rtol=5e-2, atol=5e-2))
    assert bool(jnp.allclose(cn, cn_ref, rtol=5e-2, atol=5e-2))
    sel = mask_bits[:, :, 0, :] > 0.5
    assert bool(jnp.allclose(jnp.where(sel, q_value, 0.0),
                             jnp.where(sel, q_ref, 0.0), rtol=5e-2, atol=5e-2))

    print("KERNEL_OK")
</pallas_src>

<mosaic_0001>
module attributes {stable_mosaic.version = 11 : i64} {
  func.func @lstm_qnet_kernel(%arg0: i32, %arg1: memref<32x193xbf16, #tpu.memory_space<vmem>>, %arg2: memref<16x128xf32, #tpu.memory_space<vmem>>, %arg3: memref<16x512xbf16, #tpu.memory_space<vmem>>, %arg4: memref<16x512xf32, #tpu.memory_space<vmem>>, %arg5: memref<193x128xbf16, #tpu.memory_space<vmem>>, %arg6: memref<1x128xf32, #tpu.memory_space<vmem>>, %arg7: memref<128x128xbf16, #tpu.memory_space<vmem>>, %arg8: memref<1x128xf32, #tpu.memory_space<vmem>>, %arg9: memref<128x128xbf16, #tpu.memory_space<vmem>>, %arg10: memref<1x128xf32, #tpu.memory_space<vmem>>, %arg11: memref<128x128xbf16, #tpu.memory_space<vmem>>, %arg12: memref<1x128xf32, #tpu.memory_space<vmem>>, %arg13: memref<128x128xbf16, #tpu.memory_space<vmem>>, %arg14: memref<1x128xf32, #tpu.memory_space<vmem>>, %arg15: memref<128x64xbf16, #tpu.memory_space<vmem>>, %arg16: memref<1x64xf32, #tpu.memory_space<vmem>>, %arg17: memref<640x2048xbf16, #tpu.memory_space<vmem>>, %arg18: memref<1x2048xf32, #tpu.memory_space<vmem>>, %arg19: memref<512x1024xbf16, #tpu.memory_space<vmem>>, %arg20: memref<1x1024xf32, #tpu.memory_space<vmem>>, %arg21: memref<512x512xbf16, #tpu.memory_space<vmem>>, %arg22: memref<1x512xf32, #tpu.memory_space<vmem>>, %arg23: memref<512x512xbf16, #tpu.memory_space<vmem>>, %arg24: memref<1x512xf32, #tpu.memory_space<vmem>>, %arg25: memref<1024x128xbf16, #tpu.memory_space<vmem>>, %arg26: memref<1x128xf32, #tpu.memory_space<vmem>>, %arg27: memref<16x128xf32, #tpu.memory_space<vmem>>, %arg28: memref<2x512xf32, #tpu.memory_space<vmem>>, %arg29: memref<2x512xf32, #tpu.memory_space<vmem>>) attributes {dimension_semantics = [#tpu.dimension_semantics<parallel>], iteration_bounds = array<i64: 1>, scalar_prefetch = 0 : i64, scratch_operands = 0 : i64, tpu.core_type = #tpu.core_type<tc>, window_params = [{transform_indices = @transform_0, window_bounds = array<i64: 32, 193>}, {transform_indices = @transform_1, window_bounds = array<i64: 16, 128>}, {transform_indices = @transform_2, window_bounds = array<i64: 16, 512>}, {transform_indices = @transform_3, window_bounds = array<i64: 16, 512>}, {pipeline_mode = #tpu.pipeline_mode<synchronous>, transform_indices = @transform_4, window_bounds = array<i64: 193, 128>}, {pipeline_mode = #tpu.pipeline_mode<synchronous>, transform_indices = @transform_5, window_bounds = array<i64: 1, 128>}, {pipeline_mode = #tpu.pipeline_mode<synchronous>, transform_indices = @transform_6, window_bounds = array<i64: 128, 128>}, {pipeline_mode = #tpu.pipeline_mode<synchronous>, transform_indices = @transform_7, window_bounds = array<i64: 1, 128>}, {pipeline_mode = #tpu.pipeline_mode<synchronous>, transform_indices = @transform_8, window_bounds = array<i64: 128, 128>}, {pipeline_mode = #tpu.pipeline_mode<synchronous>, transform_indices = @transform_9, window_bounds = array<i64: 1, 128>}, {pipeline_mode = #tpu.pipeline_mode<synchronous>, transform_indices = @transform_10, window_bounds = array<i64: 128, 128>}, {pipeline_mode = #tpu.pipeline_mode<synchronous>, transform_indices = @transform_11, window_bounds = array<i64: 1, 128>}, {pipeline_mode = #tpu.pipeline_mode<synchronous>, transform_indices = @transform_12, window_bounds = array<i64: 128, 128>}, {pipeline_mode = #tpu.pipeline_mode<synchronous>, transform_indices = @transform_13, window_bounds = array<i64: 1, 128>}, {pipeline_mode = #tpu.pipeline_mode<synchronous>, transform_indices = @transform_14, window_bounds = array<i64: 128, 64>}, {pipeline_mode = #tpu.pipeline_mode<synchronous>, transform_indices = @transform_15, window_bounds = array<i64: 1, 64>}, {pipeline_mode = #tpu.pipeline_mode<synchronous>, transform_indices = @transform_16, window_bounds = array<i64: 640, 2048>}, {pipeline_mode = #tpu.pipeline_mode<synchronous>, transform_indices = @transform_17, window_bounds = array<i64: 1, 2048>}, {pipeline_mode = #tpu.pipeline_mode<synchronous>, transform_indices = @transform_18, window_bounds = array<i64: 512, 1024>}, {pipeline_mode = #tpu.pipeline_mode<synchronous>, transform_indices = @transform_19, window_bounds = array<i64: 1, 1024>}, {pipeline_mode = #tpu.pipeline_mode<synchronous>, transform_indices = @transform_20, window_bounds = array<i64: 512, 512>}, {pipeline_mode = #tpu.pipeline_mode<synchronous>, transform_indices = @transform_21, window_bounds = array<i64: 1, 512>}, {pipeline_mode = #tpu.pipeline_mode<synchronous>, transform_indices = @transform_22, window_bounds = array<i64: 512, 512>}, {pipeline_mode = #tpu.pipeline_mode<synchronous>, transform_indices = @transform_23, window_bounds = array<i64: 1, 512>}, {pipeline_mode = #tpu.pipeline_mode<synchronous>, transform_indices = @transform_24, window_bounds = array<i64: 1024, 128>}, {pipeline_mode = #tpu.pipeline_mode<synchronous>, transform_indices = @transform_25, window_bounds = array<i64: 1, 128>}, {transform_indices = @transform_26, window_bounds = array<i64: 16, 128>}, {transform_indices = @transform_27, window_bounds = array<i64: 2, 512>}, {transform_indices = @transform_28, window_bounds = array<i64: 2, 512>}]} {
    %c0 = arith.constant 0 : index
    %c0_0 = arith.constant 0 : index
    %0 = vector.load %arg1[%c0, %c0_0] : memref<32x193xbf16, #tpu.memory_space<vmem>>, vector<32x193xbf16>
    %c0_1 = arith.constant 0 : index
    %c0_2 = arith.constant 0 : index
    %1 = vector.load %arg5[%c0_1, %c0_2] : memref<193x128xbf16, #tpu.memory_space<vmem>>, vector<193x128xbf16>
    %cst = arith.constant dense<0.000000e+00> : vector<32x128xf32>
    %2 = tpu.matmul %0, %1, %cst {dimension_numbers = #tpu.dot_dimension_numbers<[1], [0], [0], [1], [0, 0, 1, 1], [], []>} : vector<32x193xbf16>, vector<193x128xbf16>, vector<32x128xf32> -> vector<32x128xf32>
    %c0_3 = arith.constant 0 : index
    %c0_4 = arith.constant 0 : index
    %3 = vector.load %arg6[%c0_3, %c0_4] : memref<1x128xf32, #tpu.memory_space<vmem>>, vector<1x128xf32>
    %4 = vector.broadcast %3 : vector<1x128xf32> to vector<32x128xf32>
    %5 = arith.addf %2, %4 : vector<32x128xf32>
    %cst_5 = arith.constant 0.000000e+00 : f32
    %6 = vector.broadcast %cst_5 : f32 to vector<32x128xf32>
    %7 = arith.maximumf %5, %6 : vector<32x128xf32>
    %c0_6 = arith.constant 0 : index
    %c0_7 = arith.constant 0 : index
    %8 = vector.load %arg7[%c0_6, %c0_7] : memref<128x128xbf16, #tpu.memory_space<vmem>>, vector<128x128xbf16>
    %9 = arith.truncf %7 : vector<32x128xf32> to vector<32x128xbf16>
    %cst_8 = arith.constant dense<0.000000e+00> : vector<32x128xf32>
    %10 = tpu.matmul %9, %8, %cst_8 {dimension_numbers = #tpu.dot_dimension_numbers<[1], [0], [0], [1], [0, 0, 1, 1], [], []>} : vector<32x128xbf16>, vector<128x128xbf16>, vector<32x128xf32> -> vector<32x128xf32>
    %c0_9 = arith.constant 0 : index
    %c0_10 = arith.constant 0 : index
    %11 = vector.load %arg8[%c0_9, %c0_10] : memref<1x128xf32, #tpu.memory_space<vmem>>, vector<1x128xf32>
    %12 = vector.broadcast %11 : vector<1x128xf32> to vector<32x128xf32>
    %13 = arith.addf %10, %12 : vector<32x128xf32>
    %cst_11 = arith.constant 0.000000e+00 : f32
    %14 = vector.broadcast %cst_11 : f32 to vector<32x128xf32>
    %15 = arith.maximumf %13, %14 : vector<32x128xf32>
    %c0_12 = arith.constant 0 : index
    %c0_13 = arith.constant 0 : index
    %16 = vector.load %arg9[%c0_12, %c0_13] : memref<128x128xbf16, #tpu.memory_space<vmem>>, vector<128x128xbf16>
    %17 = arith.truncf %15 : vector<32x128xf32> to vector<32x128xbf16>
    %cst_14 = arith.constant dense<0.000000e+00> : vector<32x128xf32>
    %18 = tpu.matmul %17, %16, %cst_14 {dimension_numbers = #tpu.dot_dimension_numbers<[1], [0], [0], [1], [0, 0, 1, 1], [], []>} : vector<32x128xbf16>, vector<128x128xbf16>, vector<32x128xf32> -> vector<32x128xf32>
    %c0_15 = arith.constant 0 : index
    %c0_16 = arith.constant 0 : index
    %19 = vector.load %arg10[%c0_15, %c0_16] : memref<1x128xf32, #tpu.memory_space<vmem>>, vector<1x128xf32>
    %20 = vector.broadcast %19 : vector<1x128xf32> to vector<32x128xf32>
    %21 = arith.addf %18, %20 : vector<32x128xf32>
    %22 = arith.addf %21, %7 : vector<32x128xf32>
    %cst_17 = arith.constant 0.000000e+00 : f32
    %23 = vector.broadcast %cst_17 : f32 to vector<32x128xf32>
    %24 = arith.maximumf %22, %23 : vector<32x128xf32>
    %c0_18 = arith.constant 0 : index
    %c0_19 = arith.constant 0 : index
    %25 = vector.load %arg11[%c0_18, %c0_19] : memref<128x128xbf16, #tpu.memory_space<vmem>>, vector<128x128xbf16>
    %26 = arith.truncf %24 : vector<32x128xf32> to vector<32x128xbf16>
    %cst_20 = arith.constant dense<0.000000e+00> : vector<32x128xf32>
    %27 = tpu.matmul %26, %25, %cst_20 {dimension_numbers = #tpu.dot_dimension_numbers<[1], [0], [0], [1], [0, 0, 1, 1], [], []>} : vector<32x128xbf16>, vector<128x128xbf16>, vector<32x128xf32> -> vector<32x128xf32>
    %c0_21 = arith.constant 0 : index
    %c0_22 = arith.constant 0 : index
    %28 = vector.load %arg12[%c0_21, %c0_22] : memref<1x128xf32, #tpu.memory_space<vmem>>, vector<1x128xf32>
    %29 = vector.broadcast %28 : vector<1x128xf32> to vector<32x128xf32>
    %30 = arith.addf %27, %29 : vector<32x128xf32>
    %cst_23 = arith.constant 0.000000e+00 : f32
    %31 = vector.broadcast %cst_23 : f32 to vector<32x128xf32>
    %32 = arith.maximumf %30, %31 : vector<32x128xf32>
    %c0_24 = arith.constant 0 : index
    %c0_25 = arith.constant 0 : index
    %33 = vector.load %arg13[%c0_24, %c0_25] : memref<128x128xbf16, #tpu.memory_space<vmem>>, vector<128x128xbf16>
    %34 = arith.truncf %32 : vector<32x128xf32> to vector<32x128xbf16>
    %cst_26 = arith.constant dense<0.000000e+00> : vector<32x128xf32>
    %35 = tpu.matmul %34, %33, %cst_26 {dimension_numbers = #tpu.dot_dimension_numbers<[1], [0], [0], [1], [0, 0, 1, 1], [], []>} : vector<32x128xbf16>, vector<128x128xbf16>, vector<32x128xf32> -> vector<32x128xf32>
    %c0_27 = arith.constant 0 : index
    %c0_28 = arith.constant 0 : index
    %36 = vector.load %arg14[%c0_27, %c0_28] : memref<1x128xf32, #tpu.memory_space<vmem>>, vector<1x128xf32>
    %37 = vector.broadcast %36 : vector<1x128xf32> to vector<32x128xf32>
    %38 = arith.addf %35, %37 : vector<32x128xf32>
    %39 = arith.addf %38, %24 : vector<32x128xf32>
    %cst_29 = arith.constant 0.000000e+00 : f32
    %40 = vector.broadcast %cst_29 : f32 to vector<32x128xf32>
    %41 = arith.maximumf %39, %40 : vector<32x128xf32>
    %c0_30 = arith.constant 0 : index
    %c0_31 = arith.constant 0 : index
    %42 = vector.load %arg15[%c0_30, %c0_31] : memref<128x64xbf16, #tpu.memory_space<vmem>>, vector<128x64xbf16>
    %43 = arith.truncf %41 : vector<32x128xf32> to vector<32x128xbf16>
    %cst_32 = arith.constant dense<0.000000e+00> : vector<32x64xf32>
    %44 = tpu.matmul %43, %42, %cst_32 {dimension_numbers = #tpu.dot_dimension_numbers<[1], [0], [0], [1], [0, 0, 1, 1], [], []>} : vector<32x128xbf16>, vector<128x64xbf16>, vector<32x64xf32> -> vector<32x64xf32>
    %c0_33 = arith.constant 0 : index
    %c0_34 = arith.constant 0 : index
    %45 = vector.load %arg16[%c0_33, %c0_34] : memref<1x64xf32, #tpu.memory_space<vmem>>, vector<1x64xf32>
    %46 = vector.broadcast %45 : vector<1x64xf32> to vector<32x64xf32>
    %47 = arith.addf %44, %46 : vector<32x64xf32>
    %cst_35 = arith.constant 0.000000e+00 : f32
    %48 = vector.broadcast %cst_35 : f32 to vector<32x64xf32>
    %49 = arith.maximumf %47, %48 : vector<32x64xf32>
    %c0_36 = arith.constant 0 : index
    %c0_37 = arith.constant 0 : index
    %50 = vector.load %arg3[%c0_36, %c0_37] : memref<16x512xbf16, #tpu.memory_space<vmem>>, vector<16x512xbf16>
    %c128 = arith.constant 128 : index
    %c0_38 = arith.constant 0 : index
    %51 = vector.load %arg17[%c128, %c0_38] : memref<640x2048xbf16, #tpu.memory_space<vmem>>, vector<512x2048xbf16>
    %cst_39 = arith.constant dense<0.000000e+00> : vector<16x2048xf32>
    %52 = tpu.matmul %50, %51, %cst_39 {dimension_numbers = #tpu.dot_dimension_numbers<[1], [0], [0], [1], [0, 0, 1, 1], [], []>} : vector<16x512xbf16>, vector<512x2048xbf16>, vector<16x2048xf32> -> vector<16x2048xf32>
    %c0_40 = arith.constant 0 : index
    %c0_41 = arith.constant 0 : index
    %53 = vector.load %arg18[%c0_40, %c0_41] : memref<1x2048xf32, #tpu.memory_space<vmem>>, vector<1x2048xf32>
    %54 = vector.broadcast %53 : vector<1x2048xf32> to vector<16x2048xf32>
    %55 = arith.addf %52, %54 : vector<16x2048xf32>
    %56 = vector.extract_strided_slice %49 {offsets = [0, 0], sizes = [16, 64], strides = [1, 1]} : vector<32x64xf32> to vector<16x64xf32>
    %c0_42 = arith.constant 0 : index
    %c0_43 = arith.constant 0 : index
    %57 = vector.load %arg17[%c0_42, %c0_43] : memref<640x2048xbf16, #tpu.memory_space<vmem>>, vector<64x2048xbf16>
    %58 = arith.truncf %56 : vector<16x64xf32> to vector<16x64xbf16>
    %cst_44 = arith.constant dense<0.000000e+00> : vector<16x2048xf32>
    %59 = tpu.matmul %58, %57, %cst_44 {dimension_numbers = #tpu.dot_dimension_numbers<[1], [0], [0], [1], [0, 0, 1, 1], [], []>} : vector<16x64xbf16>, vector<64x2048xbf16>, vector<16x2048xf32> -> vector<16x2048xf32>
    %60 = arith.addf %55, %59 : vector<16x2048xf32>
    %61 = vector.extract_strided_slice %49 {offsets = [16, 0], sizes = [16, 64], strides = [1, 1]} : vector<32x64xf32> to vector<16x64xf32>
    %c64 = arith.constant 64 : index
    %c0_45 = arith.constant 0 : index
    %62 = vector.load %arg17[%c64, %c0_45] : memref<640x2048xbf16, #tpu.memory_space<vmem>>, vector<64x2048xbf16>
    %63 = arith.truncf %61 : vector<16x64xf32> to vector<16x64xbf16>
    %cst_46 = arith.constant dense<0.000000e+00> : vector<16x2048xf32>
    %64 = tpu.matmul %63, %62, %cst_46 {dimension_numbers = #tpu.dot_dimension_numbers<[1], [0], [0], [1], [0, 0, 1, 1], [], []>} : vector<16x64xbf16>, vector<64x2048xbf16>, vector<16x2048xf32> -> vector<16x2048xf32>
    %65 = arith.addf %60, %64 : vector<16x2048xf32>
    %66 = vector.extract_strided_slice %65 {offsets = [0, 0], sizes = [16, 512], strides = [1, 1]} : vector<16x2048xf32> to vector<16x512xf32>
    %67 = arith.negf %66 : vector<16x512xf32>
    %68 = math.exp %67 : vector<16x512xf32>
    %cst_47 = arith.constant 1.000000e+00 : f32
    %69 = vector.broadcast %cst_47 : f32 to vector<16x512xf32>
    %70 = arith.addf %69, %68 : vector<16x512xf32>
    %71 = arith.divf %69, %70 : vector<16x512xf32>
    %72 = vector.extract_strided_slice %65 {offsets = [0, 512], sizes = [16, 512], strides = [1, 1]} : vector<16x2048xf32> to vector<16x512xf32>
    %73 = arith.negf %72 : vector<16x512xf32>
    %74 = math.exp %73 : vector<16x512xf32>
    %cst_48 = arith.constant 1.000000e+00 : f32
    %75 = vector.broadcast %cst_48 : f32 to vector<16x512xf32>
    %76 = arith.addf %75, %74 : vector<16x512xf32>
    %77 = arith.divf %75, %76 : vector<16x512xf32>
    %78 = vector.extract_strided_slice %65 {offsets = [0, 1024], sizes = [16, 512], strides = [1, 1]} : vector<16x2048xf32> to vector<16x512xf32>
    %79 = math.tanh %78 : vector<16x512xf32>
    %80 = vector.extract_strided_slice %65 {offsets = [0, 1536], sizes = [16, 512], strides = [1, 1]} : vector<16x2048xf32> to vector<16x512xf32>
    %81 = arith.negf %80 : vector<16x512xf32>
    %82 = math.exp %81 : vector<16x512xf32>
    %cst_49 = arith.constant 1.000000e+00 : f32
    %83 = vector.broadcast %cst_49 : f32 to vector<16x512xf32>
    %84 = arith.addf %83, %82 : vector<16x512xf32>
    %85 = arith.divf %83, %84 : vector<16x512xf32>
    %c0_50 = arith.constant 0 : index
    %c0_51 = arith.constant 0 : index
    %86 = vector.load %arg4[%c0_50, %c0_51] : memref<16x512xf32, #tpu.memory_space<vmem>>, vector<16x512xf32>
    %87 = arith.mulf %77, %86 : vector<16x512xf32>
    %88 = arith.mulf %71, %79 : vector<16x512xf32>
    %89 = arith.addf %87, %88 : vector<16x512xf32>
    %90 = math.tanh %89 : vector<16x512xf32>
    %91 = arith.mulf %85, %90 : vector<16x512xf32>
    %c0_52 = arith.constant 0 : index
    %c0_53 = arith.constant 0 : index
    %92 = vector.load %arg19[%c0_52, %c0_53] : memref<512x1024xbf16, #tpu.memory_space<vmem>>, vector<512x1024xbf16>
    %93 = arith.truncf %91 : vector<16x512xf32> to vector<16x512xbf16>
    %cst_54 = arith.constant dense<0.000000e+00> : vector<16x1024xf32>
    %94 = tpu.matmul %93, %92, %cst_54 {dimension_numbers = #tpu.dot_dimension_numbers<[1], [0], [0], [1], [0, 0, 1, 1], [], []>} : vector<16x512xbf16>, vector<512x1024xbf16>, vector<16x1024xf32> -> vector<16x1024xf32>
    %c0_55 = arith.constant 0 : index
    %c0_56 = arith.constant 0 : index
    %95 = vector.load %arg20[%c0_55, %c0_56] : memref<1x1024xf32, #tpu.memory_space<vmem>>, vector<1x1024xf32>
    %96 = vector.broadcast %95 : vector<1x1024xf32> to vector<16x1024xf32>
    %97 = arith.addf %94, %96 : vector<16x1024xf32>
    %cst_57 = arith.constant 0.000000e+00 : f32
    %98 = vector.broadcast %cst_57 : f32 to vector<16x1024xf32>
    %99 = arith.maximumf %97, %98 : vector<16x1024xf32>
    %100 = vector.extract_strided_slice %99 {offsets = [0, 0], sizes = [16, 512], strides = [1, 1]} : vector<16x1024xf32> to vector<16x512xf32>
    %c0_58 = arith.constant 0 : index
    %c0_59 = arith.constant 0 : index
    %101 = vector.load %arg21[%c0_58, %c0_59] : memref<512x512xbf16, #tpu.memory_space<vmem>>, vector<512x512xbf16>
    %102 = arith.truncf %100 : vector<16x512xf32> to vector<16x512xbf16>
    %cst_60 = arith.constant dense<0.000000e+00> : vector<16x512xf32>
    %103 = tpu.matmul %102, %101, %cst_60 {dimension_numbers = #tpu.dot_dimension_numbers<[1], [0], [0], [1], [0, 0, 1, 1], [], []>} : vector<16x512xbf16>, vector<512x512xbf16>, vector<16x512xf32> -> vector<16x512xf32>
    %c0_61 = arith.constant 0 : index
    %c0_62 = arith.constant 0 : index
    %104 = vector.load %arg22[%c0_61, %c0_62] : memref<1x512xf32, #tpu.memory_space<vmem>>, vector<1x512xf32>
    %105 = vector.broadcast %104 : vector<1x512xf32> to vector<16x512xf32>
    %106 = arith.addf %103, %105 : vector<16x512xf32>
    %cst_63 = arith.constant 0.000000e+00 : f32
    %107 = vector.broadcast %cst_63 : f32 to vector<16x512xf32>
    %108 = arith.maximumf %106, %107 : vector<16x512xf32>
    %109 = vector.extract_strided_slice %99 {offsets = [0, 512], sizes = [16, 512], strides = [1, 1]} : vector<16x1024xf32> to vector<16x512xf32>
    %c0_64 = arith.constant 0 : index
    %c0_65 = arith.constant 0 : index
    %110 = vector.load %arg23[%c0_64, %c0_65] : memref<512x512xbf16, #tpu.memory_space<vmem>>, vector<512x512xbf16>
    %111 = arith.truncf %109 : vector<16x512xf32> to vector<16x512xbf16>
    %cst_66 = arith.constant dense<0.000000e+00> : vector<16x512xf32>
    %112 = tpu.matmul %111, %110, %cst_66 {dimension_numbers = #tpu.dot_dimension_numbers<[1], [0], [0], [1], [0, 0, 1, 1], [], []>} : vector<16x512xbf16>, vector<512x512xbf16>, vector<16x512xf32> -> vector<16x512xf32>
    %c0_67 = arith.constant 0 : index
    %c0_68 = arith.constant 0 : index
    %113 = vector.load %arg24[%c0_67, %c0_68] : memref<1x512xf32, #tpu.memory_space<vmem>>, vector<1x512xf32>
    %114 = vector.broadcast %113 : vector<1x512xf32> to vector<16x512xf32>
    %115 = arith.addf %112, %114 : vector<16x512xf32>
    %cst_69 = arith.constant 0.000000e+00 : f32
    %116 = vector.broadcast %cst_69 : f32 to vector<16x512xf32>
    %117 = arith.maximumf %115, %116 : vector<16x512xf32>
    %c0_70 = arith.constant 0 : index
    %c0_71 = arith.constant 0 : index
    %118 = vector.load %arg25[%c0_70, %c0_71] : memref<1024x128xbf16, #tpu.memory_space<vmem>>, vector<512x128xbf16>
    %119 = arith.truncf %108 : vector<16x512xf32> to vector<16x512xbf16>
    %cst_72 = arith.constant dense<0.000000e+00> : vector<16x128xf32>
    %120 = tpu.matmul %119, %118, %cst_72 {dimension_numbers = #tpu.dot_dimension_numbers<[1], [0], [0], [1], [0, 0, 1, 1], [], []>} : vector<16x512xbf16>, vector<512x128xbf16>, vector<16x128xf32> -> vector<16x128xf32>
    %c512 = arith.constant 512 : index
    %c0_73 = arith.constant 0 : index
    %121 = vector.load %arg25[%c512, %c0_73] : memref<1024x128xbf16, #tpu.memory_space<vmem>>, vector<512x128xbf16>
    %122 = arith.truncf %117 : vector<16x512xf32> to vector<16x512xbf16>
    %cst_74 = arith.constant dense<0.000000e+00> : vector<16x128xf32>
    %123 = tpu.matmul %122, %121, %cst_74 {dimension_numbers = #tpu.dot_dimension_numbers<[1], [0], [0], [1], [0, 0, 1, 1], [], []>} : vector<16x512xbf16>, vector<512x128xbf16>, vector<16x128xf32> -> vector<16x128xf32>
    %124 = arith.addf %120, %123 : vector<16x128xf32>
    %c0_75 = arith.constant 0 : index
    %c0_76 = arith.constant 0 : index
    %125 = vector.load %arg26[%c0_75, %c0_76] : memref<1x128xf32, #tpu.memory_space<vmem>>, vector<1x128xf32>
    %126 = vector.broadcast %125 : vector<1x128xf32> to vector<16x128xf32>
    %127 = arith.addf %124, %126 : vector<16x128xf32>
    %c0_77 = arith.constant 0 : index
    %c0_78 = arith.constant 0 : index
    %128 = vector.load %arg2[%c0_77, %c0_78] : memref<16x128xf32, #tpu.memory_space<vmem>>, vector<16x128xf32>
    %cst_79 = arith.constant 1.000000e+00 : f32
    %129 = vector.broadcast %cst_79 : f32 to vector<16x128xf32>
    %130 = arith.subf %129, %128 : vector<16x128xf32>
    %cst_80 = arith.constant -9.99999994E+32 : f32
    %131 = vector.broadcast %cst_80 : f32 to vector<16x128xf32>
    %132 = arith.mulf %130, %131 : vector<16x128xf32>
    %133 = arith.addf %127, %132 : vector<16x128xf32>
    %c0_81 = arith.constant 0 : index
    %c0_82 = arith.constant 0 : index
    %134 = vector.load %arg27[%c0_81, %c0_82] : memref<16x128xf32, #tpu.memory_space<vmem>>, vector<16x128xf32>
    tpu.vector_store %arg27[%c0_81, %c0_82], %133 {strides = array<i32>} : memref<16x128xf32, #tpu.memory_space<vmem>>, vector<16x128xf32>,
    %135 = vector.extract_strided_slice %91 {offsets = [14, 0], sizes = [2, 512], strides = [1, 1]} : vector<16x512xf32> to vector<2x512xf32>
    %c0_83 = arith.constant 0 : index
    %c0_84 = arith.constant 0 : index
    %136 = vector.load %arg28[%c0_83, %c0_84] : memref<2x512xf32, #tpu.memory_space<vmem>>, vector<2x512xf32>
    tpu.vector_store %arg28[%c0_83, %c0_84], %135 {strides = array<i32>} : memref<2x512xf32, #tpu.memory_space<vmem>>, vector<2x512xf32>,
    %137 = vector.extract_strided_slice %89 {offsets = [14, 0], sizes = [2, 512], strides = [1, 1]} : vector<16x512xf32> to vector<2x512xf32>
    %c0_85 = arith.constant 0 : index
    %c0_86 = arith.constant 0 : index
    %138 = vector.load %arg29[%c0_85, %c0_86] : memref<2x512xf32, #tpu.memory_space<vmem>>, vector<2x512xf32>
    tpu.vector_store %arg29[%c0_85, %c0_86], %137 {strides = array<i32>} : memref<2x512xf32, #tpu.memory_space<vmem>>, vector<2x512xf32>,
    return
  }
  func.func @transform_0(%arg0: i32) -> (i32, i32) {
    %c0_i32 = arith.constant 0 : i32
    %c0_i32_0 = arith.constant 0 : i32
    return %arg0, %c0_i32 : i32, i32
  }
  func.func @transform_1(%arg0: i32) -> (i32, i32) {
    %c0_i32 = arith.constant 0 : i32
    %c0_i32_0 = arith.constant 0 : i32
    return %arg0, %c0_i32 : i32, i32
  }
  func.func @transform_2(%arg0: i32) -> (i32, i32) {
    %c0_i32 = arith.constant 0 : i32
    %c0_i32_0 = arith.constant 0 : i32
    return %arg0, %c0_i32 : i32, i32
  }
  func.func @transform_3(%arg0: i32) -> (i32, i32) {
    %c0_i32 = arith.constant 0 : i32
    %c0_i32_0 = arith.constant 0 : i32
    return %arg0, %c0_i32 : i32, i32
  }
  func.func @transform_4(%arg0: i32) -> (i32, i32) {
    %c0_i32 = arith.constant 0 : i32
    %c0_i32_0 = arith.constant 0 : i32
    %c0_i32_1 = arith.constant 0 : i32
    return %c0_i32, %c0_i32_0 : i32, i32
  }
  func.func @transform_5(%arg0: i32) -> (i32, i32) {
    %c0_i32 = arith.constant 0 : i32
    %c0_i32_0 = arith.constant 0 : i32
    %c0_i32_1 = arith.constant 0 : i32
    return %c0_i32, %c0_i32_0 : i32, i32
  }
  func.func @transform_6(%arg0: i32) -> (i32, i32) {
    %c0_i32 = arith.constant 0 : i32
    %c0_i32_0 = arith.constant 0 : i32
    %c0_i32_1 = arith.constant 0 : i32
    return %c0_i32, %c0_i32_0 : i32, i32
  }
  func.func @transform_7(%arg0: i32) -> (i32, i32) {
    %c0_i32 = arith.constant 0 : i32
    %c0_i32_0 = arith.constant 0 : i32
    %c0_i32_1 = arith.constant 0 : i32
    return %c0_i32, %c0_i32_0 : i32, i32
  }
  func.func @transform_8(%arg0: i32) -> (i32, i32) {
    %c0_i32 = arith.constant 0 : i32
    %c0_i32_0 = arith.constant 0 : i32
    %c0_i32_1 = arith.constant 0 : i32
    return %c0_i32, %c0_i32_0 : i32, i32
  }
  func.func @transform_9(%arg0: i32) -> (i32, i32) {
    %c0_i32 = arith.constant 0 : i32
    %c0_i32_0 = arith.constant 0 : i32
    %c0_i32_1 = arith.constant 0 : i32
    return %c0_i32, %c0_i32_0 : i32, i32
  }
  func.func @transform_10(%arg0: i32) -> (i32, i32) {
    %c0_i32 = arith.constant 0 : i32
    %c0_i32_0 = arith.constant 0 : i32
    %c0_i32_1 = arith.constant 0 : i32
    return %c0_i32, %c0_i32_0 : i32, i32
  }
  func.func @transform_11(%arg0: i32) -> (i32, i32) {
    %c0_i32 = arith.constant 0 : i32
    %c0_i32_0 = arith.constant 0 : i32
    %c0_i32_1 = arith.constant 0 : i32
    return %c0_i32, %c0_i32_0 : i32, i32
  }
  func.func @transform_12(%arg0: i32) -> (i32, i32) {
    %c0_i32 = arith.constant 0 : i32
    %c0_i32_0 = arith.constant 0 : i32
    %c0_i32_1 = arith.constant 0 : i32
    return %c0_i32, %c0_i32_0 : i32, i32
  }
  func.func @transform_13(%arg0: i32) -> (i32, i32) {
    %c0_i32 = arith.constant 0 : i32
    %c0_i32_0 = arith.constant 0 : i32
    %c0_i32_1 = arith.constant 0 : i32
    return %c0_i32, %c0_i32_0 : i32, i32
  }
  func.func @transform_14(%arg0: i32) -> (i32, i32) {
    %c0_i32 = arith.constant 0 : i32
    %c0_i32_0 = arith.constant 0 : i32
    %c0_i32_1 = arith.constant 0 : i32
    return %c0_i32, %c0_i32_0 : i32, i32
  }
  func.func @transform_15(%arg0: i32) -> (i32, i32) {
    %c0_i32 = arith.constant 0 : i32
    %c0_i32_0 = arith.constant 0 : i32
    %c0_i32_1 = arith.constant 0 : i32
    return %c0_i32, %c0_i32_0 : i32, i32
  }
  func.func @transform_16(%arg0: i32) -> (i32, i32) {
    %c0_i32 = arith.constant 0 : i32
    %c0_i32_0 = arith.constant 0 : i32
    %c0_i32_1 = arith.constant 0 : i32
    return %c0_i32, %c0_i32_0 : i32, i32
  }
  func.func @transform_17(%arg0: i32) -> (i32, i32) {
    %c0_i32 = arith.constant 0 : i32
    %c0_i32_0 = arith.constant 0 : i32
    %c0_i32_1 = arith.constant 0 : i32
    return %c0_i32, %c0_i32_0 : i32, i32
  }
  func.func @transform_18(%arg0: i32) -> (i32, i32) {
    %c0_i32 = arith.constant 0 : i32
    %c0_i32_0 = arith.constant 0 : i32
    %c0_i32_1 = arith.constant 0 : i32
    return %c0_i32, %c0_i32_0 : i32, i32
  }
  func.func @transform_19(%arg0: i32) -> (i32, i32) {
    %c0_i32 = arith.constant 0 : i32
    %c0_i32_0 = arith.constant 0 : i32
    %c0_i32_1 = arith.constant 0 : i32
    return %c0_i32, %c0_i32_0 : i32, i32
  }
  func.func @transform_20(%arg0: i32) -> (i32, i32) {
    %c0_i32 = arith.constant 0 : i32
    %c0_i32_0 = arith.constant 0 : i32
    %c0_i32_1 = arith.constant 0 : i32
    return %c0_i32, %c0_i32_0 : i32, i32
  }
  func.func @transform_21(%arg0: i32) -> (i32, i32) {
    %c0_i32 = arith.constant 0 : i32
    %c0_i32_0 = arith.constant 0 : i32
    %c0_i32_1 = arith.constant 0 : i32
    return %c0_i32, %c0_i32_0 : i32, i32
  }
  func.func @transform_22(%arg0: i32) -> (i32, i32) {
    %c0_i32 = arith.constant 0 : i32
    %c0_i32_0 = arith.constant 0 : i32
    %c0_i32_1 = arith.constant 0 : i32
    return %c0_i32, %c0_i32_0 : i32, i32
  }
  func.func @transform_23(%arg0: i32) -> (i32, i32) {
    %c0_i32 = arith.constant 0 : i32
    %c0_i32_0 = arith.constant 0 : i32
    %c0_i32_1 = arith.constant 0 : i32
    return %c0_i32, %c0_i32_0 : i32, i32
  }
  func.func @transform_24(%arg0: i32) -> (i32, i32) {
    %c0_i32 = arith.constant 0 : i32
    %c0_i32_0 = arith.constant 0 : i32
    %c0_i32_1 = arith.constant 0 : i32
    return %c0_i32, %c0_i32_0 : i32, i32
  }
  func.func @transform_25(%arg0: i32) -> (i32, i32) {
    %c0_i32 = arith.constant 0 : i32
    %c0_i32_0 = arith.constant 0 : i32
    %c0_i32_1 = arith.constant 0 : i32
    return %c0_i32, %c0_i32_0 : i32, i32
  }
  func.func @transform_26(%arg0: i32) -> (i32, i32) {
    %c0_i32 = arith.constant 0 : i32
    %c0_i32_0 = arith.constant 0 : i32
    return %arg0, %c0_i32 : i32, i32
  }
  func.func @transform_27(%arg0: i32) -> (i32, i32) {
    %c0_i32 = arith.constant 0 : i32
    %c0_i32_0 = arith.constant 0 : i32
    return %arg0, %c0_i32 : i32, i32
  }
  func.func @transform_28(%arg0: i32) -> (i32, i32) {
    %c0_i32 = arith.constant 0 : i32
    %c0_i32_0 = arith.constant 0 : i32
    return %arg0, %c0_i32 : i32, i32
  }
}

</mosaic_0001>

<llo_original>
// kernel: lstm_qnet_forward.1
$region0: #{lstm_qnet_forward.1}
  #allocation0 [shape = 'u32[]', space=smem, size = 0x4, offset = 0x4, fixed_abs, tag = 'smem constant byte address 0x4 - core index']
  #allocation1 [shape = 'u32[72,128]{1,0:T(1,128)}', space=vmem, size = 0x9000, scoped, tag = 'internal scratch']
  %s0 = inlined_call_operand.vmem [shape: bf16[32,193], index: 0, kind: input, shape index: {}]
  %s1 = inlined_call_operand.vmem [shape: f32[16,128], index: 1, kind: input, shape index: {}]
  %s2 = inlined_call_operand.vmem [shape: bf16[16,512], index: 2, kind: input, shape index: {}]
  %s3 = inlined_call_operand.vmem [shape: f32[16,512], index: 3, kind: input, shape index: {}]
  %s4 = inlined_call_operand.hbm [shape: bf16[193,128], index: 4, kind: input, shape index: {}]
  %s5 = inlined_call_operand.hbm [shape: f32[1,128], index: 5, kind: input, shape index: {}]
  %s6 = inlined_call_operand.hbm [shape: bf16[128,128], index: 6, kind: input, shape index: {}]
  %s7 = inlined_call_operand.hbm [shape: f32[1,128], index: 7, kind: input, shape index: {}]
  %s8 = inlined_call_operand.hbm [shape: bf16[128,128], index: 8, kind: input, shape index: {}]
  %s9 = inlined_call_operand.hbm [shape: f32[1,128], index: 9, kind: input, shape index: {}]
  %s10 = inlined_call_operand.hbm [shape: bf16[128,128], index: 10, kind: input, shape index: {}]
  %s11 = inlined_call_operand.hbm [shape: f32[1,128], index: 11, kind: input, shape index: {}]
  %s12 = inlined_call_operand.hbm [shape: bf16[128,128], index: 12, kind: input, shape index: {}]
  %s13 = inlined_call_operand.hbm [shape: f32[1,128], index: 13, kind: input, shape index: {}]
  %s14 = inlined_call_operand.vmem [shape: bf16[128,64], index: 14, kind: input, shape index: {}]
  %s15 = inlined_call_operand.hbm [shape: f32[1,64], index: 15, kind: input, shape index: {}]
  %s16 = inlined_call_operand.hbm [shape: bf16[640,2048], index: 16, kind: input, shape index: {}]
  %s17 = inlined_call_operand.hbm [shape: f32[1,2048], index: 17, kind: input, shape index: {}]
  %s18 = inlined_call_operand.hbm [shape: bf16[512,1024], index: 18, kind: input, shape index: {}]
  %s19 = inlined_call_operand.hbm [shape: f32[1,1024], index: 19, kind: input, shape index: {}]
  %s20 = inlined_call_operand.hbm [shape: bf16[512,512], index: 20, kind: input, shape index: {}]
  %s21 = inlined_call_operand.hbm [shape: f32[1,512], index: 21, kind: input, shape index: {}]
  %s22 = inlined_call_operand.hbm [shape: bf16[512,512], index: 22, kind: input, shape index: {}]
  %s23 = inlined_call_operand.hbm [shape: f32[1,512], index: 23, kind: input, shape index: {}]
  %s24 = inlined_call_operand.hbm [shape: bf16[1024,128], index: 24, kind: input, shape index: {}]
  %s25 = inlined_call_operand.hbm [shape: f32[1,128], index: 25, kind: input, shape index: {}]
  %s26 = inlined_call_operand.vmem [shape: f32[16,128], index: 26, kind: output, shape index: {0}]
  %s27 = inlined_call_operand.hbm [shape: f32[2,512], index: 27, kind: output, shape index: {1}]
  %s28 = inlined_call_operand.hbm [shape: f32[2,512], index: 28, kind: output, shape index: {2}]
  %29 = xla_tuple %s26, %s27, %s28
  %s30 = sld [smem:[#allocation0]]
  $region214: #{lstm_qnet_forward.1} parent=0
    _
  %s32 = ssub.s32 1, %s30
  %s33 = scalar_select 0, %s32, %s30
  $region1: #{lstm_qnet_forward.1} parent=0
    #allocation2 [shape = 'u8[51200]{0}', space=vmem, size = 0xc800, scoped, tag = 'input window, operand 4, single buffered']
    #allocation3 [shape = 's32[1]{0}', space=sflag, size = 0x4, scoped, tag = 'scoped memory for lstm_qnet_forward.1']
    #allocation4 [shape = 's32[1]{0}', space=sflag, size = 0x4, scoped, tag = 'scoped memory for lstm_qnet_forward.1']
    #allocation5 [shape = 'u8[512]{0}', space=vmem, size = 0x400, scoped, tag = 'input window, operand 5, single buffered']
    #allocation6 [shape = 's32[1]{0}', space=sflag, size = 0x4, scoped, tag = 'scoped memory for lstm_qnet_forward.1']
    #allocation7 [shape = 'u8[32768]{0}', space=vmem, size = 0x8000, scoped, tag = 'input window, operand 6, single buffered']
    #allocation8 [shape = 'u8[512]{0}', space=vmem, size = 0x400, scoped, tag = 'input window, operand 7, single buffered']
    #allocation9 [shape = 's32[1]{0}', space=sflag, size = 0x4, scoped, tag = 'scoped memory for lstm_qnet_forward.1']
    #allocation10 [shape = 'u8[32768]{0}', space=vmem, size = 0x8000, scoped, tag = 'input window, operand 8, single buffered']
    #allocation11 [shape = 'u8[512]{0}', space=vmem, size = 0x400, scoped, tag = 'input window, operand 9, single buffered']
    #allocation12 [shape = 's32[1]{0}', space=sflag, size = 0x4, scoped, tag = 'scoped memory for lstm_qnet_forward.1']
    #allocation13 [shape = 'u8[32768]{0}', space=vmem, size = 0x8000, scoped, tag = 'input window, operand 10, single buffered']
    #allocation14 [shape = 'u8[512]{0}', space=vmem, size = 0x400, scoped, tag = 'input window, operand 11, single buffered']
    #allocation15 [shape = 's32[1]{0}', space=sflag, size = 0x4, scoped, tag = 'scoped memory for lstm_qnet_forward.1']
    #allocation16 [shape = 'u8[32768]{0}', space=vmem, size = 0x8000, scoped, tag = 'input window, operand 12, single buffered']
    #allocation17 [shape = 'u8[512]{0}', space=vmem, size = 0x400, scoped, tag = 'input window, operand 13, single buffered']
    #allocation18 [shape = 's32[1]{0}', space=sflag, size = 0x4, scoped, tag = 'scoped memory for lstm_qnet_forward.1']
    #allocation19 [shape = 'u8[512]{0}', space=vmem, size = 0x400, scoped, tag = 'input window, operand 15, single buffered']
    #allocation20 [shape = 'u8[2621440]{0}', space=vmem, size = 0x280000, scoped, tag = 'input window, operand 16, single buffered']
    #allocation21 [shape = 's32[1]{0}', space=sflag, size = 0x4, scoped, tag = 'scoped memory for lstm_qnet_forward.1']
    #allocation22 [shape = 'u8[8192]{0}', space=vmem, size = 0x2000, scoped, tag = 'input window, operand 17, single buffered']
    #allocation23 [shape = 'u8[1048576]{0}', space=vmem, size = 0x100000, scoped, tag = 'input window, operand 18, single buffered']
    #allocation24 [shape = 's32[1]{0}', space=sflag, size = 0x4, scoped, tag = 'scoped memory for lstm_qnet_forward.1']
    #allocation25 [shape = 'u8[4096]{0}', space=vmem, size = 0x1000, scoped, tag = 'input window, operand 19, single buffered']
    #allocation26 [shape = 'u8[524288]{0}', space=vmem, size = 0x80000, scoped, tag = 'input window, operand 20, single buffered']
    #allocation27 [shape = 's32[1]{0}', space=sflag, size = 0x4, scoped, tag = 'scoped memory for lstm_qnet_forward.1']
    #allocation28 [shape = 'u8[2048]{0}', space=vmem, size = 0x800, scoped, tag = 'input window, operand 21, single buffered']
    #allocation29 [shape = 'u8[524288]{0}', space=vmem, size = 0x80000, scoped, tag = 'input window, operand 22, single buffered']
    #allocation30 [shape = 's32[1]{0}', space=sflag, size = 0x4, scoped, tag = 'scoped memory for lstm_qnet_forward.1']
    #allocation31 [shape = 'u8[2048]{0}', space=vmem, size = 0x800, scoped, tag = 'input window, operand 23, single buffered']
    #allocation32 [shape = 'u8[262144]{0}', space=vmem, size = 0x40000, scoped, tag = 'input window, operand 24, single buffered']
    #allocation33 [shape = 's32[1]{0}', space=sflag, size = 0x4, scoped, tag = 'scoped memory for lstm_qnet_forward.1']
    #allocation34 [shape = 'u8[512]{0}', space=vmem, size = 0x400, scoped, tag = 'input window, operand 25, single buffered']
    #allocation35 [shape = 'u8[4096]{0}', space=vmem, size = 0x1000, scoped, tag = 'output window, operand 1, single buffered']
    #allocation36 [shape = 'u8[4096]{0}', space=vmem, size = 0x1000, scoped, tag = 'output window, operand 2, single buffered']
    #allocation37 [shape = 's32[1]{0}', space=sflag, size = 0x4, scoped, tag = 'scoped memory for lstm_qnet_forward.1']
    %34 = vsyncpa [#allocation3], 0
    %35 = vsyncpa [#allocation6], 0
    %36 = vsyncpa [#allocation9], 0
    %37 = vsyncpa [#allocation12], 0
    %38 = vsyncpa [#allocation15], 0
    %39 = vsyncpa [#allocation18], 0
    %40 = vsyncpa [#allocation21], 0
    %41 = vsyncpa [#allocation24], 0
    %42 = vsyncpa [#allocation27], 0
    %43 = vsyncpa [#allocation30], 0
    %44 = vsyncpa [#allocation33], 0
    %45 = vsyncpa [#allocation4], 0
    %46 = vsyncpa [#allocation37], 0
    // Predicated region
    $region2: #{lstm_qnet_forward.1} parent=1 // pred_check
      _
    $region3: #{lstm_qnet_forward.1} parent=1 // pred_check_branch
      %48 = sbr.rel (0) target = $region5
    $region4: #{lstm_qnet_forward.1} parent=1 // pred_region
      _
    $region5: #{lstm_qnet_forward.1} parent=1 // pred_fallthru
      _
    // Predicated region
    $region6: #{lstm_qnet_forward.1} parent=1 // pred_check
      _
    $region7: #{lstm_qnet_forward.1} parent=1 // pred_check_branch
      %50 = sbr.rel (0) target = $region9
    $region8: #{lstm_qnet_forward.1} parent=1 // pred_region
      _
    $region9: #{lstm_qnet_forward.1} parent=1 // pred_fallthru
      _
    // Predicated region
    $region10: #{lstm_qnet_forward.1} parent=1 // pred_check
      _
    $region11: #{lstm_qnet_forward.1} parent=1 // pred_check_branch
      %52 = sbr.rel (0) target = $region13
    $region12: #{lstm_qnet_forward.1} parent=1 // pred_region
      _
    $region13: #{lstm_qnet_forward.1} parent=1 // pred_fallthru
      _
    // Predicated region
    $region14: #{lstm_qnet_forward.1} parent=1 // pred_check
      _
    $region15: #{lstm_qnet_forward.1} parent=1 // pred_check_branch
      %54 = sbr.rel (0) target = $region17
    $region16: #{lstm_qnet_forward.1} parent=1 // pred_region
      _
    $region17: #{lstm_qnet_forward.1} parent=1 // pred_fallthru
      _
    // Predicated region
    $region18: #{lstm_qnet_forward.1} parent=1 // pred_check
      _
    $region19: #{lstm_qnet_forward.1} parent=1 // pred_check_branch
      %56 = sbr.rel (0) target = $region21
    $region20: #{lstm_qnet_forward.1} parent=1 // pred_region
      %58 = vsyncadd [#allocation3], 0
      %s59 = sshll.u32 %s4, 4
      %s60 = int_to_ptr.hbm [resolvable:$true] %s59
      %s61 = sshll.u32 [#allocation2], 4
      %s62 = int_to_ptr.vmem [resolvable:$true] %s61
      %67 = dma.hbm_to_vmem [thread:$0]  %s60, 1600, %s62, [#allocation3], 64, 64, 4
    $region21: #{lstm_qnet_forward.1} parent=1 // pred_fallthru
      _
    // Predicated region
    $region22: #{lstm_qnet_forward.1} parent=1 // pred_check
      _
    $region23: #{lstm_qnet_forward.1} parent=1 // pred_check_branch
      %69 = sbr.rel (0) target = $region25
    $region24: #{lstm_qnet_forward.1} parent=1 // pred_region
      %71 = vsyncadd [#allocation6], 0
      %s73 = sshll.u32 %s5, 4
      %s74 = int_to_ptr.hbm [resolvable:$true] %s73
      %s75 = sshll.u32 [#allocation5], 4
      %s76 = int_to_ptr.vmem [resolvable:$true] %s75
      %78 = dma.hbm_to_vmem [thread:$0]  %s74, 16, %s76, [#allocation6]
    $region25: #{lstm_qnet_forward.1} parent=1 // pred_fallthru
      _
    // Predicated region
    $region26: #{lstm_qnet_forward.1} parent=1 // pred_check
      _
    $region27: #{lstm_qnet_forward.1} parent=1 // pred_check_branch
      %80 = sbr.rel (0) target = $region29
    $region28: #{lstm_qnet_forward.1} parent=1 // pred_region
      %82 = vsyncadd [#allocation6], 0
      %s83 = sshll.u32 %s6, 4
      %s84 = int_to_ptr.hbm [resolvable:$true] %s83
      %s85 = sshll.u32 [#allocation7], 4
      %s86 = int_to_ptr.vmem [resolvable:$true] %s85
      %91 = dma.hbm_to_vmem [thread:$0]  %s84, 1024, %s86, [#allocation6], 64, 64, 4
    $region29: #{lstm_qnet_forward.1} parent=1 // pred_fallthru
      _
    // Predicated region
    $region30: #{lstm_qnet_forward.1} parent=1 // pred_check
      _
    $region31: #{lstm_qnet_forward.1} parent=1 // pred_check_branch
      %93 = sbr.rel (0) target = $region33
    $region32: #{lstm_qnet_forward.1} parent=1 // pred_region
      %95 = vsyncadd [#allocation9], 0
      %s97 = sshll.u32 %s7, 4
      %s98 = int_to_ptr.hbm [resolvable:$true] %s97
      %s99 = sshll.u32 [#allocation8], 4
      %s100 = int_to_ptr.vmem [resolvable:$true] %s99
      %102 = dma.hbm_to_vmem [thread:$0]  %s98, 16, %s100, [#allocation9]
    $region33: #{lstm_qnet_forward.1} parent=1 // pred_fallthru
      _
    // Predicated region
    $region34: #{lstm_qnet_forward.1} parent=1 // pred_check
      _
    $region35: #{lstm_qnet_forward.1} parent=1 // pred_check_branch
      %104 = sbr.rel (0) target = $region37
    $region36: #{lstm_qnet_forward.1} parent=1 // pred_region
      %106 = vsyncadd [#allocation9], 0
      %s107 = sshll.u32 %s8, 4
      %s108 = int_to_ptr.hbm [resolvable:$true] %s107
      %s109 = sshll.u32 [#allocation10], 4
      %s110 = int_to_ptr.vmem [resolvable:$true] %s109
      %115 = dma.hbm_to_vmem [thread:$0]  %s108, 1024, %s110, [#allocation9], 64, 64, 4
    $region37: #{lstm_qnet_forward.1} parent=1 // pred_fallthru
      _
    // Predicated region
    $region38: #{lstm_qnet_forward.1} parent=1 // pred_check
      _
    $region39: #{lstm_qnet_forward.1} parent=1 // pred_check_branch
      %117 = sbr.rel (0) target = $region41
    $region40: #{lstm_qnet_forward.1} parent=1 // pred_region
      %119 = vsyncadd [#allocation12], 0
      %s121 = sshll.u32 %s9, 4
      %s122 = int_to_ptr.hbm [resolvable:$true] %s121
      %s123 = sshll.u32 [#allocation11], 4
      %s124 = int_to_ptr.vmem [resolvable:$true] %s123
      %126 = dma.hbm_to_vmem [thread:$0]  %s122, 16, %s124, [#allocation12]
    $region41: #{lstm_qnet_forward.1} parent=1 // pred_fallthru
      _
    // Predicated region
    $region42: #{lstm_qnet_forward.1} parent=1 // pred_check
      _
    $region43: #{lstm_qnet_forward.1} parent=1 // pred_check_branch
      %128 = sbr.rel (0) target = $region45
    $region44: #{lstm_qnet_forward.1} parent=1 // pred_region
      %130 = vsyncadd [#allocation12], 0
      %s131 = sshll.u32 %s10, 4
      %s132 = int_to_ptr.hbm [resolvable:$true] %s131
      %s133 = sshll.u32 [#allocation13], 4
      %s134 = int_to_ptr.vmem [resolvable:$true] %s133
      %139 = dma.hbm_to_vmem [thread:$0]  %s132, 1024, %s134, [#allocation12], 64, 64, 4
    $region45: #{lstm_qnet_forward.1} parent=1 // pred_fallthru
      _
    // Predicated region
    $region46: #{lstm_qnet_forward.1} parent=1 // pred_check
      _
    $region47: #{lstm_qnet_forward.1} parent=1 // pred_check_branch
      %141 = sbr.rel (0) target = $region49
    $region48: #{lstm_qnet_forward.1} parent=1 // pred_region
      %143 = vsyncadd [#allocation15], 0
      %s145 = sshll.u32 %s11, 4
      %s146 = int_to_ptr.hbm [resolvable:$true] %s145
      %s147 = sshll.u32 [#allocation14], 4
      %s148 = int_to_ptr.vmem [resolvable:$true] %s147
      %150 = dma.hbm_to_vmem [thread:$0]  %s146, 16, %s148, [#allocation15]
    $region49: #{lstm_qnet_forward.1} parent=1 // pred_fallthru
      _
    // Predicated region
    $region50: #{lstm_qnet_forward.1} parent=1 // pred_check
      _
    $region51: #{lstm_qnet_forward.1} parent=1 // pred_check_branch
      %152 = sbr.rel (0) target = $region53
    $region52: #{lstm_qnet_forward.1} parent=1 // pred_region
      %154 = vsyncadd [#allocation15], 0
      %s155 = sshll.u32 %s12, 4
      %s156 = int_to_ptr.hbm [resolvable:$true] %s155
      %s157 = sshll.u32 [#allocation16], 4
      %s158 = int_to_ptr.vmem [resolvable:$true] %s157
      %163 = dma.hbm_to_vmem [thread:$0]  %s156, 1024, %s158, [#allocation15], 64, 64, 4
    $region53: #{lstm_qnet_forward.1} parent=1 // pred_fallthru
      _
    // Predicated region
    $region54: #{lstm_qnet_forward.1} parent=1 // pred_check
      _
    $region55: #{lstm_qnet_forward.1} parent=1 // pred_check_branch
      %165 = sbr.rel (0) target = $region57
    $region56: #{lstm_qnet_forward.1} parent=1 // pred_region
      %167 = vsyncadd [#allocation18], 0
      %s169 = sshll.u32 %s13, 4
      %s170 = int_to_ptr.hbm [resolvable:$true] %s169
      %s171 = sshll.u32 [#allocation17], 4
      %s172 = int_to_ptr.vmem [resolvable:$true] %s171
      %174 = dma.hbm_to_vmem [thread:$0]  %s170, 16, %s172, [#allocation18]
    $region57: #{lstm_qnet_forward.1} parent=1 // pred_fallthru
      _
    // Predicated region
    $region58: #{lstm_qnet_forward.1} parent=1 // pred_check
      _
    $region59: #{lstm_qnet_forward.1} parent=1 // pred_check_branch
      %176 = sbr.rel (0) target = $region61
    $region60: #{lstm_qnet_forward.1} parent=1 // pred_region
      _
    $region61: #{lstm_qnet_forward.1} parent=1 // pred_fallthru
      _
    // Predicated region
    $region62: #{lstm_qnet_forward.1} parent=1 // pred_check
      _
    $region63: #{lstm_qnet_forward.1} parent=1 // pred_check_branch
      %178 = sbr.rel (0) target = $region65
    $region64: #{lstm_qnet_forward.1} parent=1 // pred_region
      %180 = vsyncadd [#allocation18], 0
      %s182 = sshll.u32 %s15, 4
      %s183 = int_to_ptr.hbm [resolvable:$true] %s182
      %s184 = sshll.u32 [#allocation19], 4
      %s185 = int_to_ptr.vmem [resolvable:$true] %s184
      %187 = dma.hbm_to_vmem [thread:$0]  %s183, 16, %s185, [#allocation18]
    $region65: #{lstm_qnet_forward.1} parent=1 // pred_fallthru
      _
    // Predicated region
    $region66: #{lstm_qnet_forward.1} parent=1 // pred_check
      _
    $region67: #{lstm_qnet_forward.1} parent=1 // pred_check_branch
      %189 = sbr.rel (0) target = $region69
    $region68: #{lstm_qnet_forward.1} parent=1 // pred_region
      %191 = vsyncadd [#allocation21], 0
      %s192 = sshll.u32 %s16, 4
      %s193 = int_to_ptr.hbm [resolvable:$true] %s192
      %s194 = sshll.u32 [#allocation20], 4
      %s195 = int_to_ptr.vmem [resolvable:$true] %s194
      %200 = dma.hbm_to_vmem [thread:$0]  %s193, 81920, %s195, [#allocation21], 1024, 1024, 64
    $region69: #{lstm_qnet_forward.1} parent=1 // pred_fallthru
      _
    // Predicated region
    $region70: #{lstm_qnet_forward.1} parent=1 // pred_check
      _
    $region71: #{lstm_qnet_forward.1} parent=1 // pred_check_branch
      %202 = sbr.rel (0) target = $region73
    $region72: #{lstm_qnet_forward.1} parent=1 // pred_region
      %204 = vsyncadd [#allocation21], 0
      %s206 = sshll.u32 %s17, 4
      %s207 = int_to_ptr.hbm [resolvable:$true] %s206
      %s208 = sshll.u32 [#allocation22], 4
      %s209 = int_to_ptr.vmem [resolvable:$true] %s208
      %211 = dma.hbm_to_vmem [thread:$0]  %s207, 256, %s209, [#allocation21]
    $region73: #{lstm_qnet_forward.1} parent=1 // pred_fallthru
      _
    // Predicated region
    $region74: #{lstm_qnet_forward.1} parent=1 // pred_check
      _
    $region75: #{lstm_qnet_forward.1} parent=1 // pred_check_branch
      %213 = sbr.rel (0) target = $region77
    $region76: #{lstm_qnet_forward.1} parent=1 // pred_region
      %215 = vsyncadd [#allocation24], 0
      %s216 = sshll.u32 %s18, 4
      %s217 = int_to_ptr.hbm [resolvable:$true] %s216
      %s218 = sshll.u32 [#allocation23], 4
      %s219 = int_to_ptr.vmem [resolvable:$true] %s218
      %224 = dma.hbm_to_vmem [thread:$0]  %s217, 32768, %s219, [#allocation24], 512, 512, 32
    $region77: #{lstm_qnet_forward.1} parent=1 // pred_fallthru
      _
    // Predicated region
    $region78: #{lstm_qnet_forward.1} parent=1 // pred_check
      _
    $region79: #{lstm_qnet_forward.1} parent=1 // pred_check_branch
      %226 = sbr.rel (0) target = $region81
    $region80: #{lstm_qnet_forward.1} parent=1 // pred_region
      %228 = vsyncadd [#allocation24], 0
      %s230 = sshll.u32 %s19, 4
      %s231 = int_to_ptr.hbm [resolvable:$true] %s230
      %s232 = sshll.u32 [#allocation25], 4
      %s233 = int_to_ptr.vmem [resolvable:$true] %s232
      %235 = dma.hbm_to_vmem [thread:$0]  %s231, 128, %s233, [#allocation24]
    $region81: #{lstm_qnet_forward.1} parent=1 // pred_fallthru
      _
    // Predicated region
    $region82: #{lstm_qnet_forward.1} parent=1 // pred_check
      _
    $region83: #{lstm_qnet_forward.1} parent=1 // pred_check_branch
      %237 = sbr.rel (0) target = $region85
    $region84: #{lstm_qnet_forward.1} parent=1 // pred_region
      %239 = vsyncadd [#allocation27], 0
      %s240 = sshll.u32 %s20, 4
      %s241 = int_to_ptr.hbm [resolvable:$true] %s240
      %s242 = sshll.u32 [#allocation26], 4
      %s243 = int_to_ptr.vmem [resolvable:$true] %s242
      %248 = dma.hbm_to_vmem [thread:$0]  %s241, 16384, %s243, [#allocation27], 256, 256, 16
    $region85: #{lstm_qnet_forward.1} parent=1 // pred_fallthru
      _
    // Predicated region
    $region86: #{lstm_qnet_forward.1} parent=1 // pred_check
      _
    $region87: #{lstm_qnet_forward.1} parent=1 // pred_check_branch
      %250 = sbr.rel (0) target = $region89
    $region88: #{lstm_qnet_forward.1} parent=1 // pred_region
      %252 = vsyncadd [#allocation27], 0
      %s254 = sshll.u32 %s21, 4
      %s255 = int_to_ptr.hbm [resolvable:$true] %s254
      %s256 = sshll.u32 [#allocation28], 4
      %s257 = int_to_ptr.vmem [resolvable:$true] %s256
      %259 = dma.hbm_to_vmem [thread:$0]  %s255, 64, %s257, [#allocation27]
    $region89: #{lstm_qnet_forward.1} parent=1 // pred_fallthru
      _
    // Predicated region
    $region90: #{lstm_qnet_forward.1} parent=1 // pred_check
      _
    $region91: #{lstm_qnet_forward.1} parent=1 // pred_check_branch
      %261 = sbr.rel (0) target = $region93
    $region92: #{lstm_qnet_forward.1} parent=1 // pred_region
      %263 = vsyncadd [#allocation30], 0
      %s264 = sshll.u32 %s22, 4
      %s265 = int_to_ptr.hbm [resolvable:$true] %s264
      %s266 = sshll.u32 [#allocation29], 4
      %s267 = int_to_ptr.vmem [resolvable:$true] %s266
      %272 = dma.hbm_to_vmem [thread:$0]  %s265, 16384, %s267, [#allocation30], 256, 256, 16
    $region93: #{lstm_qnet_forward.1} parent=1 // pred_fallthru
      _
    // Predicated region
    $region94: #{lstm_qnet_forward.1} parent=1 // pred_check
      _
    $region95: #{lstm_qnet_forward.1} parent=1 // pred_check_branch
      %274 = sbr.rel (0) target = $region97
    $region96: #{lstm_qnet_forward.1} parent=1 // pred_region
      %276 = vsyncadd [#allocation30], 0
      %s278 = sshll.u32 %s23, 4
      %s279 = int_to_ptr.hbm [resolvable:$true] %s278
      %s280 = sshll.u32 [#allocation31], 4
      %s281 = int_to_ptr.vmem [resolvable:$true] %s280
      %283 = dma.hbm_to_vmem [thread:$0]  %s279, 64, %s281, [#allocation30]
    $region97: #{lstm_qnet_forward.1} parent=1 // pred_fallthru
      _
    // Predicated region
    $region98: #{lstm_qnet_forward.1} parent=1 // pred_check
      _
    $region99: #{lstm_qnet_forward.1} parent=1 // pred_check_branch
      %285 = sbr.rel (0) target = $region101
    $region100: #{lstm_qnet_forward.1} parent=1 // pred_region
      %287 = vsyncadd [#allocation33], 0
      %s288 = sshll.u32 %s24, 4
      %s289 = int_to_ptr.hbm [resolvable:$true] %s288
      %s290 = sshll.u32 [#allocation32], 4
      %s291 = int_to_ptr.vmem [resolvable:$true] %s290
      %296 = dma.hbm_to_vmem [thread:$0]  %s289, 8192, %s291, [#allocation33], 64, 64, 4
    $region101: #{lstm_qnet_forward.1} parent=1 // pred_fallthru
      _
    // Predicated region
    $region102: #{lstm_qnet_forward.1} parent=1 // pred_check
      _
    $region103: #{lstm_qnet_forward.1} parent=1 // pred_check_branch
      %298 = sbr.rel (0) target = $region105
    $region104: #{lstm_qnet_forward.1} parent=1 // pred_region
      %300 = vsyncadd [#allocation33], 0
      %s302 = sshll.u32 %s25, 4
      %s303 = int_to_ptr.hbm [resolvable:$true] %s302
      %s304 = sshll.u32 [#allocation34], 4
      %s305 = int_to_ptr.vmem [resolvable:$true] %s304
      %307 = dma.hbm_to_vmem [thread:$0]  %s303, 16, %s305, [#allocation33]
    $region105: #{lstm_qnet_forward.1} parent=1 // pred_fallthru
      _
    // Predicated region
    $region106: #{lstm_qnet_forward.1} parent=1 // pred_check
      _
    $region107: #{lstm_qnet_forward.1} parent=1 // pred_check_branch
      %309 = sbr.rel (0) target = $region109
    $region108: #{lstm_qnet_forward.1} parent=1 // pred_region
      %311 = dma.done [#allocation3], 1600
    $region109: #{lstm_qnet_forward.1} parent=1 // pred_fallthru
      _
    // Predicated region
    $region110: #{lstm_qnet_forward.1} parent=1 // pred_check
      _
    $region111: #{lstm_qnet_forward.1} parent=1 // pred_check_branch
      %313 = sbr.rel (0) target = $region113
    $region112: #{lstm_qnet_forward.1} parent=1 // pred_region
      %315 = dma.done [#allocation6], 16
    $region113: #{lstm_qnet_forward.1} parent=1 // pred_fallthru
      _
    // Predicated region
    $region114: #{lstm_qnet_forward.1} parent=1 // pred_check
      _
    $region115: #{lstm_qnet_forward.1} parent=1 // pred_check_branch
      %317 = sbr.rel (0) target = $region117
    $region116: #{lstm_qnet_forward.1} parent=1 // pred_region
      %319 = dma.done [#allocation6], 1024
    $region117: #{lstm_qnet_forward.1} parent=1 // pred_fallthru
      _
    // Predicated region
    $region118: #{lstm_qnet_forward.1} parent=1 // pred_check
      _
    $region119: #{lstm_qnet_forward.1} parent=1 // pred_check_branch
      %321 = sbr.rel (0) target = $region121
    $region120: #{lstm_qnet_forward.1} parent=1 // pred_region
      %323 = dma.done [#allocation9], 16
    $region121: #{lstm_qnet_forward.1} parent=1 // pred_fallthru
      _
    // Predicated region
    $region122: #{lstm_qnet_forward.1} parent=1 // pred_check
      _
    $region123: #{lstm_qnet_forward.1} parent=1 // pred_check_branch
      %325 = sbr.rel (0) target = $region125
    $region124: #{lstm_qnet_forward.1} parent=1 // pred_region
      %327 = dma.done [#allocation9], 1024
    $region125: #{lstm_qnet_forward.1} parent=1 // pred_fallthru
      _
    // Predicated region
    $region126: #{lstm_qnet_forward.1} parent=1 // pred_check
      _
    $region127: #{lstm_qnet_forward.1} parent=1 // pred_check_branch
      %329 = sbr.rel (0) target = $region129
    $region128: #{lstm_qnet_forward.1} parent=1 // pred_region
      %331 = dma.done [#allocation12], 16
    $region129: #{lstm_qnet_forward.1} parent=1 // pred_fallthru
      _
    // Predicated region
    $region130: #{lstm_qnet_forward.1} parent=1 // pred_check
      _
    $region131: #{lstm_qnet_forward.1} parent=1 // pred_check_branch
      %333 = sbr.rel (0) target = $region133
    $region132: #{lstm_qnet_forward.1} parent=1 // pred_region
      %335 = dma.done [#allocation12], 1024
    $region133: #{lstm_qnet_forward.1} parent=1 // pred_fallthru
      _
    // Predicated region
    $region134: #{lstm_qnet_forward.1} parent=1 // pred_check
      _
    $region135: #{lstm_qnet_forward.1} parent=1 // pred_check_branch
      %337 = sbr.rel (0) target = $region137
    $region136: #{lstm_qnet_forward.1} parent=1 // pred_region
      %339 = dma.done [#allocation15], 16
    $region137: #{lstm_qnet_forward.1} parent=1 // pred_fallthru
      _
    // Predicated region
    $region138: #{lstm_qnet_forward.1} parent=1 // pred_check
      _
    $region139: #{lstm_qnet_forward.1} parent=1 // pred_check_branch
      %341 = sbr.rel (0) target = $region141
    $region140: #{lstm_qnet_forward.1} parent=1 // pred_region
      %343 = dma.done [#allocation15], 1024
    $region141: #{lstm_qnet_forward.1} parent=1 // pred_fallthru
      _
    // Predicated region
    $region142: #{lstm_qnet_forward.1} parent=1 // pred_check
      _
    $region143: #{lstm_qnet_forward.1} parent=1 // pred_check_branch
      %345 = sbr.rel (0) target = $region145
    $region144: #{lstm_qnet_forward.1} parent=1 // pred_region
      %347 = dma.done [#allocation18], 16
    $region145: #{lstm_qnet_forward.1} parent=1 // pred_fallthru
      _
    // Predicated region
    $region146: #{lstm_qnet_forward.1} parent=1 // pred_check
      _
    $region147: #{lstm_qnet_forward.1} parent=1 // pred_check_branch
      %349 = sbr.rel (0) target = $region149
    $region148: #{lstm_qnet_forward.1} parent=1 // pred_region
      %351 = dma.done [#allocation18], 16
    $region149: #{lstm_qnet_forward.1} parent=1 // pred_fallthru
      _
    // Predicated region
    $region150: #{lstm_qnet_forward.1} parent=1 // pred_check
      _
    $region151: #{lstm_qnet_forward.1} parent=1 // pred_check_branch
      %353 = sbr.rel (0) target = $region153
    $region152: #{lstm_qnet_forward.1} parent=1 // pred_region
      %355 = dma.done [#allocation21], 81920
    $region153: #{lstm_qnet_forward.1} parent=1 // pred_fallthru
      _
    // Predicated region
    $region154: #{lstm_qnet_forward.1} parent=1 // pred_check
      _
    $region155: #{lstm_qnet_forward.1} parent=1 // pred_check_branch
      %357 = sbr.rel (0) target = $region157
    $region156: #{lstm_qnet_forward.1} parent=1 // pred_region
      %359 = dma.done [#allocation21], 256
    $region157: #{lstm_qnet_forward.1} parent=1 // pred_fallthru
      _
    // Predicated region
    $region158: #{lstm_qnet_forward.1} parent=1 // pred_check
      _
    $region159: #{lstm_qnet_forward.1} parent=1 // pred_check_branch
      %361 = sbr.rel (0) target = $region161
    $region160: #{lstm_qnet_forward.1} parent=1 // pred_region
      %363 = dma.done [#allocation24], 32768
    $region161: #{lstm_qnet_forward.1} parent=1 // pred_fallthru
      _
    // Predicated region
    $region162: #{lstm_qnet_forward.1} parent=1 // pred_check
      _
    $region163: #{lstm_qnet_forward.1} parent=1 // pred_check_branch
      %365 = sbr.rel (0) target = $region165
    $region164: #{lstm_qnet_forward.1} parent=1 // pred_region
      %367 = dma.done [#allocation24], 128
    $region165: #{lstm_qnet_forward.1} parent=1 // pred_fallthru
      _
    // Predicated region
    $region166: #{lstm_qnet_forward.1} parent=1 // pred_check
      _
    $region167: #{lstm_qnet_forward.1} parent=1 // pred_check_branch
      %369 = sbr.rel (0) target = $region169
    $region168: #{lstm_qnet_forward.1} parent=1 // pred_region
      %371 = dma.done [#allocation27], 16384
    $region169: #{lstm_qnet_forward.1} parent=1 // pred_fallthru
      _
    // Predicated region
    $region170: #{lstm_qnet_forward.1} parent=1 // pred_check
      _
    $region171: #{lstm_qnet_forward.1} parent=1 // pred_check_branch
      %373 = sbr.rel (0) target = $region173
    $region172: #{lstm_qnet_forward.1} parent=1 // pred_region
      %375 = dma.done [#allocation27], 64
    $region173: #{lstm_qnet_forward.1} parent=1 // pred_fallthru
      _
    // Predicated region
    $region174: #{lstm_qnet_forward.1} parent=1 // pred_check
      _
    $region175: #{lstm_qnet_forward.1} parent=1 // pred_check_branch
      %377 = sbr.rel (0) target = $region177
    $region176: #{lstm_qnet_forward.1} parent=1 // pred_region
      %379 = dma.done [#allocation30], 16384
    $region177: #{lstm_qnet_forward.1} parent=1 // pred_fallthru
      _
    // Predicated region
    $region178: #{lstm_qnet_forward.1} parent=1 // pred_check
      _
    $region179: #{lstm_qnet_forward.1} parent=1 // pred_check_branch
      %381 = sbr.rel (0) target = $region181
    $region180: #{lstm_qnet_forward.1} parent=1 // pred_region
      %383 = dma.done [#allocation30], 64
    $region181: #{lstm_qnet_forward.1} parent=1 // pred_fallthru
      _
    // Predicated region
    $region182: #{lstm_qnet_forward.1} parent=1 // pred_check
      _
    $region183: #{lstm_qnet_forward.1} parent=1 // pred_check_branch
      %385 = sbr.rel (0) target = $region185
    $region184: #{lstm_qnet_forward.1} parent=1 // pred_region
      %387 = dma.done [#allocation33], 8192
    $region185: #{lstm_qnet_forward.1} parent=1 // pred_fallthru
      _
    // Predicated region
    $region186: #{lstm_qnet_forward.1} parent=1 // pred_check
      _
    $region187: #{lstm_qnet_forward.1} parent=1 // pred_check_branch
      %389 = sbr.rel (0) target = $region189
    $region188: #{lstm_qnet_forward.1} parent=1 // pred_region
      %391 = dma.done [#allocation33], 16
    $region189: #{lstm_qnet_forward.1} parent=1 // pred_fallthru
      _
    %v393 = vld [vmem:[%s0] sm:$0xff]
    %v394 = vld [vmem:[%s0 + $0x8] sm:$0xff]
    %v395 = vld [vmem:[%s0 + $0x10] sm:$0xff]
    %v396 = vld [vmem:[%s0 + $0x18] sm:$0xff]
    %v397 = vld [vmem:[#allocation2] sm:$0xf]
    %v398 = vld [vmem:[#allocation2 + $0x4] sm:$0xf]
    %v399 = vld [vmem:[#allocation2 + $0x8] sm:$0xf]
    %v400 = vld [vmem:[#allocation2 + $0xc] sm:$0xf]
    %v401 = vld [vmem:[#allocation2 + $0x10] sm:$0xf]
    %v402 = vld [vmem:[#allocation2 + $0x14] sm:$0xf]
    %v403 = vld [vmem:[#allocation2 + $0x18] sm:$0xf]
    %v404 = vld [vmem:[#allocation2 + $0x1c] sm:$0xf]
    %v405 = vld [vmem:[#allocation2 + $0x20] sm:$0xf]
    %v406 = vld [vmem:[#allocation2 + $0x24] sm:$0xf]
    %v407 = vld [vmem:[#allocation2 + $0x28] sm:$0xf]
    %v408 = vld [vmem:[#allocation2 + $0x2c] sm:$0xf]
    %v409 = vld [vmem:[#allocation2 + $0x30] sm:$0xf]
    %v410 = vld [vmem:[#allocation2 + $0x34] sm:$0xf]
    %v411 = vld [vmem:[#allocation2 + $0x38] sm:$0xf]
    %v412 = vld [vmem:[#allocation2 + $0x3c] sm:$0xf]
    %v413 = vld [vmem:[#allocation2 + $0x40] sm:$0xf]
    %v414 = vld [vmem:[#allocation2 + $0x44] sm:$0xf]
    %v415 = vld [vmem:[#allocation2 + $0x48] sm:$0xf]
    %v416 = vld [vmem:[#allocation2 + $0x4c] sm:$0xf]
    %v417 = vld [vmem:[#allocation2 + $0x50] sm:$0xf]
    %v418 = vld [vmem:[#allocation2 + $0x54] sm:$0xf]
    %v419 = vld [vmem:[#allocation2 + $0x58] sm:$0xf]
    %v420 = vld [vmem:[#allocation2 + $0x5c] sm:$0xf]
    %v421 = vld [vmem:[#allocation2 + $0x60] sm:$0x1]
    %v422 = vld [vmem:[#allocation5] sm:$0x1]
    %v424 = vperm.slane %v422, 0
    %v430 = vunpack.c.l.b16 %v393
    %v431 = vunpack.c.h.b16 %v393
    %v432 = vunpack.c.l.b16 %v394
    %v433 = vunpack.c.h.b16 %v394
    %v434 = vunpack.c.l.b16 %v395
    %v435 = vunpack.c.h.b16 %v395
    %v436 = vunpack.c.l.b16 %v396
    %v437 = vunpack.c.h.b16 %v396
    %v438 = vpack.c.b16 %v432, %v430
    %v439 = vpack.c.b16 %v433, %v431
    %v440 = vpack.c.b16 %v436, %v434
    %v441 = vpack.c.b16 %v437, %v435
    %v469 = vunpack.c.l.b16 %v397
    %v470 = vunpack.c.l.b16 %v398
    %v471 = vunpack.c.l.b16 %v399
    %v472 = vunpack.c.l.b16 %v400
    %v473 = vunpack.c.l.b16 %v401
    %v474 = vunpack.c.l.b16 %v402
    %v475 = vunpack.c.l.b16 %v403
    %v476 = vunpack.c.l.b16 %v404
    %v477 = vunpack.c.l.b16 %v405
    %v478 = vunpack.c.l.b16 %v406
    %v479 = vunpack.c.l.b16 %v407
    %v480 = vunpack.c.l.b16 %v408
    %v481 = vunpack.c.l.b16 %v409
    %v482 = vunpack.c.l.b16 %v410
    %v483 = vunpack.c.l.b16 %v411
    %v484 = vunpack.c.l.b16 %v412
    %v485 = vunpack.c.l.b16 %v413
    %v486 = vunpack.c.l.b16 %v414
    %v487 = vunpack.c.l.b16 %v415
    %v488 = vunpack.c.l.b16 %v416
    %v489 = vunpack.c.l.b16 %v417
    %v490 = vunpack.c.l.b16 %v418
    %v491 = vunpack.c.l.b16 %v419
    %v492 = vunpack.c.l.b16 %v420
    %v493 = vunpack.c.l.b16 %v421
    %v494 = vpack.c.b16 %v470, %v469
    %v495 = vpack.c.b16 %v472, %v471
    %v496 = vpack.c.b16 %v474, %v473
    %v497 = vpack.c.b16 %v476, %v475
    %v498 = vpack.c.b16 %v478, %v477
    %v499 = vpack.c.b16 %v480, %v479
    %v500 = vpack.c.b16 %v482, %v481
    %v501 = vpack.c.b16 %v484, %v483
    %v502 = vpack.c.b16 %v486, %v485
    %v503 = vpack.c.b16 %v488, %v487
    %v504 = vpack.c.b16 %v490, %v489
    %v505 = vpack.c.b16 %v492, %v491
    %v506 = vpack.c.b16 %v493, %v493
    %vm519 = vcmask 531456
    %v521 = vsel %vm519, %v439, 0
    %v524 = vsel %vm519, %v441, 0
    %vm526 = vcmask 1040384
    %v527 = vsel 0, 4294967295, 65535
    %v528 = vsel %vm526, %v527, 0
    %v530 = vand.u32 %v506, %v528
    %532 = vmatpush.bf16.msra.mxu0 %v501
    %533 = vmatpush.bf16.msra.mxu0 %v500
    %534 = vmatpush.bf16.msra.mxu0 %v499
    %535 = vmatpush.bf16.msra.mxu0 %v498
    %536 = vmatpush.bf16.msra.mxu0 %v497
    %537 = vmatpush.bf16.msra.mxu0 %v496
    %538 = vmatpush.bf16.msra.mxu0 %v495
    %539 = vmatpush.bf16.msra.mxu0 %v494
    %540 = vmatmul.bf16.gmra.mxu0 %v438
    %v541 = vpop.f32.mrf.mxu0
    %v542 = vadd.f32 %v424, %v541
    %v543 = vpop.f32.mrf.mxu0
    %v544 = vadd.f32 %v424, %v543
    %545 = vmatmul.bf16.gmra.mxu0 %v440
    %v546 = vpop.f32.mrf.mxu0
    %v547 = vadd.f32 %v424, %v546
    %v548 = vpop.f32.mrf.mxu0
    %v549 = vadd.f32 %v424, %v548
    %550 = vdwg.mxu0
    %551 = vmatpush.bf16.msra.mxu0 0
    %552 = vmatpush.bf16.msra.mxu0 0
    %553 = vmatpush.bf16.msra.mxu0 0
    %554 = vmatpush.bf16.msra.mxu0 %v530
    %555 = vmatpush.bf16.msra.mxu0 %v505
    %556 = vmatpush.bf16.msra.mxu0 %v504
    %557 = vmatpush.bf16.msra.mxu0 %v503
    %558 = vmatpush.bf16.msra.mxu0 %v502
    %559 = vmatmul.bf16.gmra.mxu0 %v521
    %v560 = vpop.f32.mrf.mxu0
    %v561 = vadd.f32 %v542, %v560
    %v562 = vpop.f32.mrf.mxu0
    %v563 = vadd.f32 %v544, %v562
    %564 = vmatmul.bf16.gmra.mxu0 %v524
    %v565 = vpop.f32.mrf.mxu0
    %v566 = vadd.f32 %v547, %v565
    %v567 = vpop.f32.mrf.mxu0
    %v568 = vadd.f32 %v549, %v567
    %569 = vdwg.mxu0
    %v570 = vmax.f32 %v561, 0.0
    %v571 = vmax.f32 %v563, 0.0
    %v572 = vmax.f32 %v566, 0.0
    %v573 = vmax.f32 %v568, 0.0
    %v574 = vld [vmem:[#allocation7] sm:$0xf]
    %v575 = vld [vmem:[#allocation7 + $0x4] sm:$0xf]
    %v576 = vld [vmem:[#allocation7 + $0x8] sm:$0xf]
    %v577 = vld [vmem:[#allocation7 + $0xc] sm:$0xf]
    %v578 = vld [vmem:[#allocation7 + $0x10] sm:$0xf]
    %v579 = vld [vmem:[#allocation7 + $0x14] sm:$0xf]
    %v580 = vld [vmem:[#allocation7 + $0x18] sm:$0xf]
    %v581 = vld [vmem:[#allocation7 + $0x1c] sm:$0xf]
    %v582 = vld [vmem:[#allocation7 + $0x20] sm:$0xf]
    %v583 = vld [vmem:[#allocation7 + $0x24] sm:$0xf]
    %v584 = vld [vmem:[#allocation7 + $0x28] sm:$0xf]
    %v585 = vld [vmem:[#allocation7 + $0x2c] sm:$0xf]
    %v586 = vld [vmem:[#allocation7 + $0x30] sm:$0xf]
    %v587 = vld [vmem:[#allocation7 + $0x34] sm:$0xf]
    %v588 = vld [vmem:[#allocation7 + $0x38] sm:$0xf]
    %v589 = vld [vmem:[#allocation7 + $0x3c] sm:$0xf]
    %v590 = vpack.c.bf16 %v571, %v570
    %v591 = vpack.c.bf16 %v573, %v572
    %v592 = vld [vmem:[#allocation8] sm:$0x1]
    %v594 = vperm.slane %v592, 0
    %v612 = vunpack.c.l.b16 %v574
    %v613 = vunpack.c.l.b16 %v575
    %v614 = vunpack.c.l.b16 %v576
    %v615 = vunpack.c.l.b16 %v577
    %v616 = vunpack.c.l.b16 %v578
    %v617 = vunpack.c.l.b16 %v579
    %v618 = vunpack.c.l.b16 %v580
    %v619 = vunpack.c.l.b16 %v581
    %v620 = vunpack.c.l.b16 %v582
    %v621 = vunpack.c.l.b16 %v583
    %v622 = vunpack.c.l.b16 %v584
    %v623 = vunpack.c.l.b16 %v585
    %v624 = vunpack.c.l.b16 %v586
    %v625 = vunpack.c.l.b16 %v587
    %v626 = vunpack.c.l.b16 %v588
    %v627 = vunpack.c.l.b16 %v589
    %v628 = vpack.c.b16 %v613, %v612
    %v629 = vpack.c.b16 %v615, %v614
    %v630 = vpack.c.b16 %v617, %v616
    %v631 = vpack.c.b16 %v619, %v618
    %v632 = vpack.c.b16 %v621, %v620
    %v633 = vpack.c.b16 %v623, %v622
    %v634 = vpack.c.b16 %v625, %v624
    %v635 = vpack.c.b16 %v627, %v626
    %644 = vmatpush.bf16.msra.mxu0 %v635
    %645 = vmatpush.bf16.msra.mxu0 %v634
    %646 = vmatpush.bf16.msra.mxu0 %v633
    %647 = vmatpush.bf16.msra.mxu0 %v632
    %648 = vmatpush.bf16.msra.mxu0 %v631
    %649 = vmatpush.bf16.msra.mxu0 %v630
    %650 = vmatpush.bf16.msra.mxu0 %v629
    %651 = vmatpush.bf16.msra.mxu0 %v628
    %652 = vmatmul.bf16.gmra.mxu0 %v590
    %v653 = vpop.f32.mrf.mxu0
    %v654 = vadd.f32 %v594, %v653
    %v655 = vpop.f32.mrf.mxu0
    %v656 = vadd.f32 %v594, %v655
    %657 = vmatmul.bf16.gmra.mxu0 %v591
    %v658 = vpop.f32.mrf.mxu0
    %v659 = vadd.f32 %v594, %v658
    %v660 = vpop.f32.mrf.mxu0
    %v661 = vadd.f32 %v594, %v660
    %662 = vdwg.mxu0
    %v663 = vmax.f32 %v654, 0.0
    %v664 = vmax.f32 %v656, 0.0
    %v665 = vmax.f32 %v659, 0.0
    %v666 = vmax.f32 %v661, 0.0
    %v667 = vld [vmem:[#allocation10] sm:$0xf]
    %v668 = vld [vmem:[#allocation10 + $0x4] sm:$0xf]
    %v669 = vld [vmem:[#allocation10 + $0x8] sm:$0xf]
    %v670 = vld [vmem:[#allocation10 + $0xc] sm:$0xf]
    %v671 = vld [vmem:[#allocation10 + $0x10] sm:$0xf]
    %v672 = vld [vmem:[#allocation10 + $0x14] sm:$0xf]
    %v673 = vld [vmem:[#allocation10 + $0x18] sm:$0xf]
    %v674 = vld [vmem:[#allocation10 + $0x1c] sm:$0xf]
    %v675 = vld [vmem:[#allocation10 + $0x20] sm:$0xf]
    %v676 = vld [vmem:[#allocation10 + $0x24] sm:$0xf]
    %v677 = vld [vmem:[#allocation10 + $0x28] sm:$0xf]
    %v678 = vld [vmem:[#allocation10 + $0x2c] sm:$0xf]
    %v679 = vld [vmem:[#allocation10 + $0x30] sm:$0xf]
    %v680 = vld [vmem:[#allocation10 + $0x34] sm:$0xf]
    %v681 = vld [vmem:[#allocation10 + $0x38] sm:$0xf]
    %v682 = vld [vmem:[#allocation10 + $0x3c] sm:$0xf]
    %v683 = vpack.c.bf16 %v664, %v663
    %v684 = vpack.c.bf16 %v666, %v665
    %v685 = vld [vmem:[#allocation11] sm:$0x1]
    %v687 = vperm.slane %v685, 0
    %v705 = vunpack.c.l.b16 %v667
    %v706 = vunpack.c.l.b16 %v668
    %v707 = vunpack.c.l.b16 %v669
    %v708 = vunpack.c.l.b16 %v670
    %v709 = vunpack.c.l.b16 %v671
    %v710 = vunpack.c.l.b16 %v672
    %v711 = vunpack.c.l.b16 %v673
    %v712 = vunpack.c.l.b16 %v674
    %v713 = vunpack.c.l.b16 %v675
    %v714 = vunpack.c.l.b16 %v676
    %v715 = vunpack.c.l.b16 %v677
    %v716 = vunpack.c.l.b16 %v678
    %v717 = vunpack.c.l.b16 %v679
    %v718 = vunpack.c.l.b16 %v680
    %v719 = vunpack.c.l.b16 %v681
    %v720 = vunpack.c.l.b16 %v682
    %v721 = vpack.c.b16 %v706, %v705
    %v722 = vpack.c.b16 %v708, %v707
    %v723 = vpack.c.b16 %v710, %v709
    %v724 = vpack.c.b16 %v712, %v711
    %v725 = vpack.c.b16 %v714, %v713
    %v726 = vpack.c.b16 %v716, %v715
    %v727 = vpack.c.b16 %v718, %v717
    %v728 = vpack.c.b16 %v720, %v719
    %737 = vmatpush.bf16.msra.mxu0 %v728
    %738 = vmatpush.bf16.msra.mxu0 %v727
    %739 = vmatpush.bf16.msra.mxu0 %v726
    %740 = vmatpush.bf16.msra.mxu0 %v725
    %741 = vmatpush.bf16.msra.mxu0 %v724
    %742 = vmatpush.bf16.msra.mxu0 %v723
    %743 = vmatpush.bf16.msra.mxu0 %v722
    %744 = vmatpush.bf16.msra.mxu0 %v721
    %745 = vmatmul.bf16.gmra.mxu0 %v683
    %v746 = vpop.f32.mrf.mxu0
    %v747 = vadd.f32 %v687, %v746
    %v748 = vpop.f32.mrf.mxu0
    %v749 = vadd.f32 %v687, %v748
    %750 = vmatmul.bf16.gmra.mxu0 %v684
    %v751 = vpop.f32.mrf.mxu0
    %v752 = vadd.f32 %v687, %v751
    %v753 = vpop.f32.mrf.mxu0
    %v754 = vadd.f32 %v687, %v753
    %755 = vdwg.mxu0
    %v756 = vadd.f32 %v747, %v570
    %v757 = vadd.f32 %v749, %v571
    %v758 = vadd.f32 %v752, %v572
    %v759 = vadd.f32 %v754, %v573
    %v760 = vmax.f32 %v756, 0.0
    %v761 = vmax.f32 %v757, 0.0
    %v762 = vmax.f32 %v758, 0.0
    %v763 = vmax.f32 %v759, 0.0
    %v764 = vld [vmem:[#allocation13] sm:$0xf]
    %v765 = vld [vmem:[#allocation13 + $0x4] sm:$0xf]
    %v766 = vld [vmem:[#allocation13 + $0x8] sm:$0xf]
    %v767 = vld [vmem:[#allocation13 + $0xc] sm:$0xf]
    %v768 = vld [vmem:[#allocation13 + $0x10] sm:$0xf]
    %v769 = vld [vmem:[#allocation13 + $0x14] sm:$0xf]
    %v770 = vld [vmem:[#allocation13 + $0x18] sm:$0xf]
    %v771 = vld [vmem:[#allocation13 + $0x1c] sm:$0xf]
    %v772 = vld [vmem:[#allocation13 + $0x20] sm:$0xf]
    %v773 = vld [vmem:[#allocation13 + $0x24] sm:$0xf]
    %v774 = vld [vmem:[#allocation13 + $0x28] sm:$0xf]
    %v775 = vld [vmem:[#allocation13 + $0x2c] sm:$0xf]
    %v776 = vld [vmem:[#allocation13 + $0x30] sm:$0xf]
    %v777 = vld [vmem:[#allocation13 + $0x34] sm:$0xf]
    %v778 = vld [vmem:[#allocation13 + $0x38] sm:$0xf]
    %v779 = vld [vmem:[#allocation13 + $0x3c] sm:$0xf]
    %v780 = vpack.c.bf16 %v761, %v760
    %v781 = vpack.c.bf16 %v763, %v762
    %v782 = vld [vmem:[#allocation14] sm:$0x1]
    %v784 = vperm.slane %v782, 0
    %v802 = vunpack.c.l.b16 %v764
    %v803 = vunpack.c.l.b16 %v765
    %v804 = vunpack.c.l.b16 %v766
    %v805 = vunpack.c.l.b16 %v767
    %v806 = vunpack.c.l.b16 %v768
    %v807 = vunpack.c.l.b16 %v769
    %v808 = vunpack.c.l.b16 %v770
    %v809 = vunpack.c.l.b16 %v771
    %v810 = vunpack.c.l.b16 %v772
    %v811 = vunpack.c.l.b16 %v773
    %v812 = vunpack.c.l.b16 %v774
    %v813 = vunpack.c.l.b16 %v775
    %v814 = vunpack.c.l.b16 %v776
    %v815 = vunpack.c.l.b16 %v777
    %v816 = vunpack.c.l.b16 %v778
    %v817 = vunpack.c.l.b16 %v779
    %v818 = vpack.c.b16 %v803, %v802
    %v819 = vpack.c.b16 %v805, %v804
    %v820 = vpack.c.b16 %v807, %v806
    %v821 = vpack.c.b16 %v809, %v808
    %v822 = vpack.c.b16 %v811, %v810
    %v823 = vpack.c.b16 %v813, %v812
    %v824 = vpack.c.b16 %v815, %v814
    %v825 = vpack.c.b16 %v817, %v816
    %834 = vmatpush.bf16.msra.mxu0 %v825
    %835 = vmatpush.bf16.msra.mxu0 %v824
    %836 = vmatpush.bf16.msra.mxu0 %v823
    %837 = vmatpush.bf16.msra.mxu0 %v822
    %838 = vmatpush.bf16.msra.mxu0 %v821
    %839 = vmatpush.bf16.msra.mxu0 %v820
    %840 = vmatpush.bf16.msra.mxu0 %v819
    %841 = vmatpush.bf16.msra.mxu0 %v818
    %842 = vmatmul.bf16.gmra.mxu0 %v780
    %v843 = vpop.f32.mrf.mxu0
    %v844 = vadd.f32 %v784, %v843
    %v845 = vpop.f32.mrf.mxu0
    %v846 = vadd.f32 %v784, %v845
    %847 = vmatmul.bf16.gmra.mxu0 %v781
    %v848 = vpop.f32.mrf.mxu0
    %v849 = vadd.f32 %v784, %v848
    %v850 = vpop.f32.mrf.mxu0
    %v851 = vadd.f32 %v784, %v850
    %852 = vdwg.mxu0
    %v853 = vmax.f32 %v844, 0.0
    %v854 = vmax.f32 %v846, 0.0
    %v855 = vmax.f32 %v849, 0.0
    %v856 = vmax.f32 %v851, 0.0
    %v857 = vld [vmem:[#allocation16] sm:$0xf]
    %v858 = vld [vmem:[#allocation16 + $0x4] sm:$0xf]
    %v859 = vld [vmem:[#allocation16 + $0x8] sm:$0xf]
    %v860 = vld [vmem:[#allocation16 + $0xc] sm:$0xf]
    %v861 = vld [vmem:[#allocation16 + $0x10] sm:$0xf]
    %v862 = vld [vmem:[#allocation16 + $0x14] sm:$0xf]
    %v863 = vld [vmem:[#allocation16 + $0x18] sm:$0xf]
    %v864 = vld [vmem:[#allocation16 + $0x1c] sm:$0xf]
    %v865 = vld [vmem:[#allocation16 + $0x20] sm:$0xf]
    %v866 = vld [vmem:[#allocation16 + $0x24] sm:$0xf]
    %v867 = vld [vmem:[#allocation16 + $0x28] sm:$0xf]
    %v868 = vld [vmem:[#allocation16 + $0x2c] sm:$0xf]
    %v869 = vld [vmem:[#allocation16 + $0x30] sm:$0xf]
    %v870 = vld [vmem:[#allocation16 + $0x34] sm:$0xf]
    %v871 = vld [vmem:[#allocation16 + $0x38] sm:$0xf]
    %v872 = vld [vmem:[#allocation16 + $0x3c] sm:$0xf]
    %v873 = vpack.c.bf16 %v854, %v853
    %v874 = vpack.c.bf16 %v856, %v855
    %v875 = vld [vmem:[#allocation17] sm:$0x1]
    %v877 = vperm.slane %v875, 0
    %v895 = vunpack.c.l.b16 %v857
    %v896 = vunpack.c.l.b16 %v858
    %v897 = vunpack.c.l.b16 %v859
    %v898 = vunpack.c.l.b16 %v860
    %v899 = vunpack.c.l.b16 %v861
    %v900 = vunpack.c.l.b16 %v862
    %v901 = vunpack.c.l.b16 %v863
    %v902 = vunpack.c.l.b16 %v864
    %v903 = vunpack.c.l.b16 %v865
    %v904 = vunpack.c.l.b16 %v866
    %v905 = vunpack.c.l.b16 %v867
    %v906 = vunpack.c.l.b16 %v868
    %v907 = vunpack.c.l.b16 %v869
    %v908 = vunpack.c.l.b16 %v870
    %v909 = vunpack.c.l.b16 %v871
    %v910 = vunpack.c.l.b16 %v872
    %v911 = vpack.c.b16 %v896, %v895
    %v912 = vpack.c.b16 %v898, %v897
    %v913 = vpack.c.b16 %v900, %v899
    %v914 = vpack.c.b16 %v902, %v901
    %v915 = vpack.c.b16 %v904, %v903
    %v916 = vpack.c.b16 %v906, %v905
    %v917 = vpack.c.b16 %v908, %v907
    %v918 = vpack.c.b16 %v910, %v909
    %927 = vmatpush.bf16.msra.mxu0 %v918
    %928 = vmatpush.bf16.msra.mxu0 %v917
    %929 = vmatpush.bf16.msra.mxu0 %v916
    %930 = vmatpush.bf16.msra.mxu0 %v915
    %931 = vmatpush.bf16.msra.mxu0 %v914
    %932 = vmatpush.bf16.msra.mxu0 %v913
    %933 = vmatpush.bf16.msra.mxu0 %v912
    %934 = vmatpush.bf16.msra.mxu0 %v911
    %935 = vmatmul.bf16.gmra.mxu0 %v873
    %v936 = vpop.f32.mrf.mxu0
    %v937 = vadd.f32 %v877, %v936
    %v938 = vpop.f32.mrf.mxu0
    %v939 = vadd.f32 %v877, %v938
    %940 = vmatmul.bf16.gmra.mxu0 %v874
    %v941 = vpop.f32.mrf.mxu0
    %v942 = vadd.f32 %v877, %v941
    %v943 = vpop.f32.mrf.mxu0
    %v944 = vadd.f32 %v877, %v943
    %945 = vdwg.mxu0
    %v946 = vadd.f32 %v937, %v760
    %v947 = vadd.f32 %v939, %v761
    %v948 = vadd.f32 %v942, %v762
    %v949 = vadd.f32 %v944, %v763
    %v950 = vmax.f32 %v946, 0.0
    %v951 = vmax.f32 %v947, 0.0
    %v952 = vmax.f32 %v948, 0.0
    %v953 = vmax.f32 %v949, 0.0
    %v954 = vld [vmem:[%s14] sm:$0xf]
    %v955 = vld [vmem:[%s14 + $0x4] sm:$0xf]
    %v956 = vld [vmem:[%s14 + $0x8] sm:$0xf]
    %v957 = vld [vmem:[%s14 + $0xc] sm:$0xf]
    %v958 = vld [vmem:[%s14 + $0x10] sm:$0xf]
    %v959 = vld [vmem:[%s14 + $0x14] sm:$0xf]
    %v960 = vld [vmem:[%s14 + $0x18] sm:$0xf]
    %v961 = vld [vmem:[%s14 + $0x1c] sm:$0xf]
    %v962 = vld [vmem:[%s14 + $0x20] sm:$0xf]
    %v963 = vld [vmem:[%s14 + $0x24] sm:$0xf]
    %v964 = vld [vmem:[%s14 + $0x28] sm:$0xf]
    %v965 = vld [vmem:[%s14 + $0x2c] sm:$0xf]
    %v966 = vld [vmem:[%s14 + $0x30] sm:$0xf]
    %v967 = vld [vmem:[%s14 + $0x34] sm:$0xf]
    %v968 = vld [vmem:[%s14 + $0x38] sm:$0xf]
    %v969 = vld [vmem:[%s14 + $0x3c] sm:$0xf]
    %v970 = vpack.c.bf16 %v951, %v950
    %v971 = vpack.c.bf16 %v953, %v952
    %v972 = vld [vmem:[#allocation19] sm:$0x1]
    %v974 = vperm.slane %v972, 0
    %v992 = vunpack.c.l.b16 %v954
    %v993 = vunpack.c.l.b16 %v955
    %v994 = vunpack.c.l.b16 %v956
    %v995 = vunpack.c.l.b16 %v957
    %v996 = vunpack.c.l.b16 %v958
    %v997 = vunpack.c.l.b16 %v959
    %v998 = vunpack.c.l.b16 %v960
    %v999 = vunpack.c.l.b16 %v961
    %v1000 = vunpack.c.l.b16 %v962
    %v1001 = vunpack.c.l.b16 %v963
    %v1002 = vunpack.c.l.b16 %v964
    %v1003 = vunpack.c.l.b16 %v965
    %v1004 = vunpack.c.l.b16 %v966
    %v1005 = vunpack.c.l.b16 %v967
    %v1006 = vunpack.c.l.b16 %v968
    %v1007 = vunpack.c.l.b16 %v969
    %v1008 = vpack.c.b16 %v993, %v992
    %v1009 = vpack.c.b16 %v995, %v994
    %v1010 = vpack.c.b16 %v997, %v996
    %v1011 = vpack.c.b16 %v999, %v998
    %v1012 = vpack.c.b16 %v1001, %v1000
    %v1013 = vpack.c.b16 %v1003, %v1002
    %v1014 = vpack.c.b16 %v1005, %v1004
    %v1015 = vpack.c.b16 %v1007, %v1006
    %1024 = vmatpush.bf16.msra.mxu0 %v1015
    %1025 = vmatpush.bf16.msra.mxu0 %v1014
    %1026 = vmatpush.bf16.msra.mxu0 %v1013
    %1027 = vmatpush.bf16.msra.mxu0 %v1012
    %1028 = vmatpush.bf16.msra.mxu0 %v1011
    %1029 = vmatpush.bf16.msra.mxu0 %v1010
    %1030 = vmatpush.bf16.msra.mxu0 %v1009
    %1031 = vmatpush.bf16.msra.mxu0 %v1008
    %1032 = vmatmul.bf16.gmra.mxu0 %v970
    %v1033 = vpop.f32.mrf.mxu0
    %v1034 = vadd.f32 %v974, %v1033
    %v1035 = vpop.f32.mrf.mxu0
    %v1036 = vadd.f32 %v974, %v1035
    %1037 = vmatmul.bf16.gmra.mxu0 %v971
    %v1038 = vpop.f32.mrf.mxu0
    %v1039 = vadd.f32 %v974, %v1038
    %v1040 = vpop.f32.mrf.mxu0
    %v1041 = vadd.f32 %v974, %v1040
    %1042 = vdwg.mxu0
    %v1043 = vmax.f32 %v1034, 0.0
    %v1044 = vmax.f32 %v1036, 0.0
    %v1045 = vmax.f32 %v1039, 0.0
    %v1046 = vmax.f32 %v1041, 0.0
    %v1047 = vld [vmem:[%s2] sm:$0xff]
    %v1048 = vld [vmem:[%s2 + $0x8] sm:$0xff]
    %v1049 = vld [vmem:[%s2 + $0x10] sm:$0xff]
    %v1050 = vld [vmem:[%s2 + $0x18] sm:$0xff]
    %v1051 = vld [vmem:[#allocation20 + $0x400] sm:$0xff]
    %v1052 = vld [vmem:[#allocation20 + $0x408] sm:$0xff]
    %v1053 = vld [vmem:[#allocation20 + $0x410] sm:$0xff]
    %v1054 = vld [vmem:[#allocation20 + $0x418] sm:$0xff]
    %v1055 = vld [vmem:[#allocation20 + $0x420] sm:$0xff]
    %v1056 = vld [vmem:[#allocation20 + $0x428] sm:$0xff]
    %v1057 = vld [vmem:[#allocation20 + $0x430] sm:$0xff]
    %v1058 = vld [vmem:[#allocation20 + $0x438] sm:$0xff]
    %v1059 = vld [vmem:[#allocation20 + $0x440] sm:$0xff]
    %v1060 = vld [vmem:[#allocation20 + $0x448] sm:$0xff]
    %v1061 = vld [vmem:[#allocation20 + $0x450] sm:$0xff]
    %v1062 = vld [vmem:[#allocation20 + $0x458] sm:$0xff]
    %v1063 = vld [vmem:[#allocation20 + $0x460] sm:$0xff]
    %v1064 = vld [vmem:[#allocation20 + $0x468] sm:$0xff]
    %v1065 = vld [vmem:[#allocation20 + $0x470] sm:$0xff]
    %v1066 = vld [vmem:[#allocation20 + $0x478] sm:$0xff]
    %v1067 = vld [vmem:[#allocation20 + $0x480] sm:$0xff]
    %v1068 = vld [vmem:[#allocation20 + $0x488] sm:$0xff]
    %v1069 = vld [vmem:[#allocation20 + $0x490] sm:$0xff]
    %v1070 = vld [vmem:[#allocation20 + $0x498] sm:$0xff]
    %v1071 = vld [vmem:[#allocation20 + $0x4a0] sm:$0xff]
    %v1072 = vld [vmem:[#allocation20 + $0x4a8] sm:$0xff]
    %v1073 = vld [vmem:[#allocation20 + $0x4b0] sm:$0xff]
    %v1074 = vld [vmem:[#allocation20 + $0x4b8] sm:$0xff]
    %v1075 = vld [vmem:[#allocation20 + $0x4c0] sm:$0xff]
    %v1076 = vld [vmem:[#allocation20 + $0x4c8] sm:$0xff]
    %v1077 = vld [vmem:[#allocation20 + $0x4d0] sm:$0xff]
    %v1078 = vld [vmem:[#allocation20 + $0x4d8] sm:$0xff]
    %v1079 = vld [vmem:[#allocation20 + $0x4e0] sm:$0xff]
    %v1080 = vld [vmem:[#allocation20 + $0x4e8] sm:$0xff]
    %v1081 = vld [vmem:[#allocation20 + $0x4f0] sm:$0xff]
    %v1082 = vld [vmem:[#allocation20 + $0x4f8] sm:$0xff]
    %v1083 = vld [vmem:[#allocation20 + $0x500] sm:$0xff]
    %v1084 = vld [vmem:[#allocation20 + $0x508] sm:$0xff]
    %v1085 = vld [vmem:[#allocation20 + $0x510] sm:$0xff]
    %v1086 = vld [vmem:[#allocation20 + $0x518] sm:$0xff]
    %v1087 = vld [vmem:[#allocation20 + $0x520] sm:$0xff]
    %v1088 = vld [vmem:[#allocation20 + $0x528] sm:$0xff]
    %v1089 = vld [vmem:[#allocation20 + $0x530] sm:$0xff]
    %v1090 = vld [vmem:[#allocation20 + $0x538] sm:$0xff]
    %v1091 = vld [vmem:[#allocation20 + $0x540] sm:$0xff]
    %v1092 = vld [vmem:[#allocation20 + $0x548] sm:$0xff]
    %v1093 = vld [vmem:[#allocation20 + $0x550] sm:$0xff]
    %v1094 = vld [vmem:[#allocation20 + $0x558] sm:$0xff]
    %v1095 = vld [vmem:[#allocation20 + $0x560] sm:$0xff]
    %v1096 = vld [vmem:[#allocation20 + $0x568] sm:$0xff]
    %v1097 = vld [vmem:[#allocation20 + $0x570] sm:$0xff]
    %v1098 = vld [vmem:[#allocation20 + $0x578] sm:$0xff]
    %v1099 = vld [vmem:[#allocation20 + $0x580] sm:$0xff]
    %v1100 = vld [vmem:[#allocation20 + $0x588] sm:$0xff]
    %v1101 = vld [vmem:[#allocation20 + $0x590] sm:$0xff]
    %v1102 = vld [vmem:[#allocation20 + $0x598] sm:$0xff]
    %v1103 = vld [vmem:[#allocation20 + $0x5a0] sm:$0xff]
    %v1104 = vld [vmem:[#allocation20 + $0x5a8] sm:$0xff]
    %v1105 = vld [vmem:[#allocation20 + $0x5b0] sm:$0xff]
    %v1106 = vld [vmem:[#allocation20 + $0x5b8] sm:$0xff]
    %v1107 = vld [vmem:[#allocation20 + $0x5c0] sm:$0xff]
    %v1108 = vld [vmem:[#allocation20 + $0x5c8] sm:$0xff]
    %v1109 = vld [vmem:[#allocation20 + $0x5d0] sm:$0xff]
    %v1110 = vld [vmem:[#allocation20 + $0x5d8] sm:$0xff]
    %v1111 = vld [vmem:[#allocation20 + $0x5e0] sm:$0xff]
    %v1112 = vld [vmem:[#allocation20 + $0x5e8] sm:$0xff]
    %v1113 = vld [vmem:[#allocation20 + $0x5f0] sm:$0xff]
    %v1114 = vld [vmem:[#allocation20 + $0x5f8] sm:$0xff]
    %v1115 = vld [vmem:[#allocation20 + $0x600] sm:$0xff]
    %v1116 = vld [vmem:[#allocation20 + $0x608] sm:$0xff]
    %v1117 = vld [vmem:[#allocation20 + $0x610] sm:$0xff]
    %v1118 = vld [vmem:[#allocation20 + $0x618] sm:$0xff]
    %v1119 = vld [vmem:[#allocation20 + $0x620] sm:$0xff]
    %v1120 = vld [vmem:[#allocation20 + $0x628] sm:$0xff]
    %v1121 = vld [vmem:[#allocation20 + $0x630] sm:$0xff]
    %v1122 = vld [vmem:[#allocation20 + $0x638] sm:$0xff]
    %v1123 = vld [vmem:[#allocation20 + $0x640] sm:$0xff]
    %v1124 = vld [vmem:[#allocation20 + $0x648] sm:$0xff]
    %v1125 = vld [vmem:[#allocation20 + $0x650] sm:$0xff]
    %v1126 = vld [vmem:[#allocation20 + $0x658] sm:$0xff]
    %v1127 = vld [vmem:[#allocation20 + $0x660] sm:$0xff]
    %v1128 = vld [vmem:[#allocation20 + $0x668] sm:$0xff]
    %v1129 = vld [vmem:[#allocation20 + $0x670] sm:$0xff]
    %v1130 = vld [vmem:[#allocation20 + $0x678] sm:$0xff]
    %v1131 = vld [vmem:[#allocation20 + $0x680] sm:$0xff]
    %v1132 = vld [vmem:[#allocation20 + $0x688] sm:$0xff]
    %v1133 = vld [vmem:[#allocation20 + $0x690] sm:$0xff]
    %v1134 = vld [vmem:[#allocation20 + $0x698] sm:$0xff]
    %v1135 = vld [vmem:[#allocation20 + $0x6a0] sm:$0xff]
    %v1136 = vld [vmem:[#allocation20 + $0x6a8] sm:$0xff]
    %v1137 = vld [vmem:[#allocation20 + $0x6b0] sm:$0xff]
    %v1138 = vld [vmem:[#allocation20 + $0x6b8] sm:$0xff]
    %v1139 = vld [vmem:[#allocation20 + $0x6c0] sm:$0xff]
    %v1140 = vld [vmem:[#allocation20 + $0x6c8] sm:$0xff]
    %v1141 = vld [vmem:[#allocation20 + $0x6d0] sm:$0xff]
    %v1142 = vld [vmem:[#allocation20 + $0x6d8] sm:$0xff]
    %v1143 = vld [vmem:[#allocation20 + $0x6e0] sm:$0xff]
    %v1144 = vld [vmem:[#allocation20 + $0x6e8] sm:$0xff]
    %v1145 = vld [vmem:[#allocation20 + $0x6f0] sm:$0xff]
    %v1146 = vld [vmem:[#allocation20 + $0x6f8] sm:$0xff]
    %v1147 = vld [vmem:[#allocation20 + $0x700] sm:$0xff]
    %v1148 = vld [vmem:[#allocation20 + $0x708] sm:$0xff]
    %v1149 = vld [vmem:[#allocation20 + $0x710] sm:$0xff]
    %v1150 = vld [vmem:[#allocation20 + $0x718] sm:$0xff]
    %v1151 = vld [vmem:[#allocation20 + $0x720] sm:$0xff]
    %v1152 = vld [vmem:[#allocation20 + $0x728] sm:$0xff]
    %v1153 = vld [vmem:[#allocation20 + $0x730] sm:$0xff]
    %v1154 = vld [vmem:[#allocation20 + $0x738] sm:$0xff]
    %v1155 = vld [vmem:[#allocation20 + $0x740] sm:$0xff]
    %v1156 = vld [vmem:[#allocation20 + $0x748] sm:$0xff]
    %v1157 = vld [vmem:[#allocation20 + $0x750] sm:$0xff]
    %v1158 = vld [vmem:[#allocation20 + $0x758] sm:$0xff]
    %v1159 = vld [vmem:[#allocation20 + $0x760] sm:$0xff]
    %v1160 = vld [vmem:[#allocation20 + $0x768] sm:$0xff]
    %v1161 = vld [vmem:[#allocation20 + $0x770] sm:$0xff]
    %v1162 = vld [vmem:[#allocation20 + $0x778] sm:$0xff]
    %v1163 = vld [vmem:[#allocation20 + $0x780] sm:$0xff]
    %v1164 = vld [vmem:[#allocation20 + $0x788] sm:$0xff]
    %v1165 = vld [vmem:[#allocation20 + $0x790] sm:$0xff]
    %v1166 = vld [vmem:[#allocation20 + $0x798] sm:$0xff]
    %v1167 = vld [vmem:[#allocation20 + $0x7a0] sm:$0xff]
    %v1168 = vld [vmem:[#allocation20 + $0x7a8] sm:$0xff]
    %v1169 = vld [vmem:[#allocation20 + $0x7b0] sm:$0xff]
    %v1170 = vld [vmem:[#allocation20 + $0x7b8] sm:$0xff]
    %v1171 = vld [vmem:[#allocation20 + $0x7c0] sm:$0xff]
    %v1172 = vld [vmem:[#allocation20 + $0x7c8] sm:$0xff]
    %v1173 = vld [vmem:[#allocation20 + $0x7d0] sm:$0xff]
    %v1174 = vld [vmem:[#allocation20 + $0x7d8] sm:$0xff]
    %v1175 = vld [vmem:[#allocation20 + $0x7e0] sm:$0xff]
    %v1176 = vld [vmem:[#allocation20 + $0x7e8] sm:$0xff]
    %v1177 = vld [vmem:[#allocation20 + $0x7f0] sm:$0xff]
    %v1178 = vld [vmem:[#allocation20 + $0x7f8] sm:$0xff]
    %v1179 = vld [vmem:[#allocation20 + $0x800] sm:$0xff]
    %v1180 = vld [vmem:[#allocation20 + $0x808] sm:$0xff]
    %v1181 = vld [vmem:[#allocation20 + $0x810] sm:$0xff]
    %v1182 = vld [vmem:[#allocation20 + $0x818] sm:$0xff]
    %v1183 = vld [vmem:[#allocation20 + $0x820] sm:$0xff]
    %v1184 = vld [vmem:[#allocation20 + $0x828] sm:$0xff]
    %v1185 = vld [vmem:[#allocation20 + $0x830] sm:$0xff]
    %v1186 = vld [vmem:[#allocation20 + $0x838] sm:$0xff]
    %v1187 = vld [vmem:[#allocation20 + $0x840] sm:$0xff]
    %v1188 = vld [vmem:[#allocation20 + $0x848] sm:$0xff]
    %v1189 = vld [vmem:[#allocation20 + $0x850] sm:$0xff]
    %v1190 = vld [vmem:[#allocation20 + $0x858] sm:$0xff]
    %v1191 = vld [vmem:[#allocation20 + $0x860] sm:$0xff]
    %v1192 = vld [vmem:[#allocation20 + $0x868] sm:$0xff]
    %v1193 = vld [vmem:[#allocation20 + $0x870] sm:$0xff]
    %v1194 = vld [vmem:[#allocation20 + $0x878] sm:$0xff]
    %v1195 = vld [vmem:[#allocation20 + $0x880] sm:$0xff]
    %v1196 = vld [vmem:[#allocation20 + $0x888] sm:$0xff]
    %v1197 = vld [vmem:[#allocation20 + $0x890] sm:$0xff]
    %v1198 = vld [vmem:[#allocation20 + $0x898] sm:$0xff]
    %v1199 = vld [vmem:[#allocation20 + $0x8a0] sm:$0xff]
    %v1200 = vld [vmem:[#allocation20 + $0x8a8] sm:$0xff]
    %v1201 = vld [vmem:[#allocation20 + $0x8b0] sm:$0xff]
    %v1202 = vld [vmem:[#allocation20 + $0x8b8] sm:$0xff]
    %v1203 = vld [vmem:[#allocation20 + $0x8c0] sm:$0xff]
    %v1204 = vld [vmem:[#allocation20 + $0x8c8] sm:$0xff]
    %v1205 = vld [vmem:[#allocation20 + $0x8d0] sm:$0xff]
    %v1206 = vld [vmem:[#allocation20 + $0x8d8] sm:$0xff]
    %v1207 = vld [vmem:[#allocation20 + $0x8e0] sm:$0xff]
    %v1208 = vld [vmem:[#allocation20 + $0x8e8] sm:$0xff]
    %v1209 = vld [vmem:[#allocation20 + $0x8f0] sm:$0xff]
    %v1210 = vld [vmem:[#allocation20 + $0x8f8] sm:$0xff]
    %v1211 = vld [vmem:[#allocation20 + $0x900] sm:$0xff]
    %v1212 = vld [vmem:[#allocation20 + $0x908] sm:$0xff]
    %v1213 = vld [vmem:[#allocation20 + $0x910] sm:$0xff]
    %v1214 = vld [vmem:[#allocation20 + $0x918] sm:$0xff]
    %v1215 = vld [vmem:[#allocation20 + $0x920] sm:$0xff]
    %v1216 = vld [vmem:[#allocation20 + $0x928] sm:$0xff]
    %v1217 = vld [vmem:[#allocation20 + $0x930] sm:$0xff]
    %v1218 = vld [vmem:[#allocation20 + $0x938] sm:$0xff]
    %v1219 = vld [vmem:[#allocation20 + $0x940] sm:$0xff]
    %v1220 = vld [vmem:[#allocation20 + $0x948] sm:$0xff]
    %v1221 = vld [vmem:[#allocation20 + $0x950] sm:$0xff]
    %v1222 = vld [vmem:[#allocation20 + $0x958] sm:$0xff]
    %v1223 = vld [vmem:[#allocation20 + $0x960] sm:$0xff]
    %v1224 = vld [vmem:[#allocation20 + $0x968] sm:$0xff]
    %v1225 = vld [vmem:[#allocation20 + $0x970] sm:$0xff]
    %v1226 = vld [vmem:[#allocation20 + $0x978] sm:$0xff]
    %v1227 = vld [vmem:[#allocation20 + $0x980] sm:$0xff]
    %v1228 = vld [vmem:[#allocation20 + $0x988] sm:$0xff]
    %v1229 = vld [vmem:[#allocation20 + $0x990] sm:$0xff]
    %v1230 = vld [vmem:[#allocation20 + $0x998] sm:$0xff]
    %v1231 = vld [vmem:[#allocation20 + $0x9a0] sm:$0xff]
    %v1232 = vld [vmem:[#allocation20 + $0x9a8] sm:$0xff]
    %v1233 = vld [vmem:[#allocation20 + $0x9b0] sm:$0xff]
    %v1234 = vld [vmem:[#allocation20 + $0x9b8] sm:$0xff]
    %v1235 = vld [vmem:[#allocation20 + $0x9c0] sm:$0xff]
    %v1236 = vld [vmem:[#allocation20 + $0x9c8] sm:$0xff]
    %v1237 = vld [vmem:[#allocation20 + $0x9d0] sm:$0xff]
    %v1238 = vld [vmem:[#allocation20 + $0x9d8] sm:$0xff]
    %v1239 = vld [vmem:[#allocation20 + $0x9e0] sm:$0xff]
    %v1240 = vld [vmem:[#allocation20 + $0x9e8] sm:$0xff]
    %v1241 = vld [vmem:[#allocation20 + $0x9f0] sm:$0xff]
    %v1242 = vld [vmem:[#allocation20 + $0x9f8] sm:$0xff]
    %v1243 = vld [vmem:[#allocation20 + $0xa00] sm:$0xff]
    %v1244 = vld [vmem:[#allocation20 + $0xa08] sm:$0xff]
    %v1245 = vld [vmem:[#allocation20 + $0xa10] sm:$0xff]
    %v1246 = vld [vmem:[#allocation20 + $0xa18] sm:$0xff]
    %v1247 = vld [vmem:[#allocation20 + $0xa20] sm:$0xff]
    %v1248 = vld [vmem:[#allocation20 + $0xa28] sm:$0xff]
    %v1249 = vld [vmem:[#allocation20 + $0xa30] sm:$0xff]
    %v1250 = vld [vmem:[#allocation20 + $0xa38] sm:$0xff]
    %v1251 = vld [vmem:[#allocation20 + $0xa40] sm:$0xff]
    %v1252 = vld [vmem:[#allocation20 + $0xa48] sm:$0xff]
    %v1253 = vld [vmem:[#allocation20 + $0xa50] sm:$0xff]
    %v1254 = vld [vmem:[#allocation20 + $0xa58] sm:$0xff]
    %v1255 = vld [vmem:[#allocation20 + $0xa60] sm:$0xff]
    %v1256 = vld [vmem:[#allocation20 + $0xa68] sm:$0xff]
    %v1257 = vld [vmem:[#allocation20 + $0xa70] sm:$0xff]
    %v1258 = vld [vmem:[#allocation20 + $0xa78] sm:$0xff]
    %v1259 = vld [vmem:[#allocation20 + $0xa80] sm:$0xff]
    %v1260 = vld [vmem:[#allocation20 + $0xa88] sm:$0xff]
    %v1261 = vld [vmem:[#allocation20 + $0xa90] sm:$0xff]
    %v1262 = vld [vmem:[#allocation20 + $0xa98] sm:$0xff]
    %v1263 = vld [vmem:[#allocation20 + $0xaa0] sm:$0xff]
    %v1264 = vld [vmem:[#allocation20 + $0xaa8] sm:$0xff]
    %v1265 = vld [vmem:[#allocation20 + $0xab0] sm:$0xff]
    %v1266 = vld [vmem:[#allocation20 + $0xab8] sm:$0xff]
    %v1267 = vld [vmem:[#allocation20 + $0xac0] sm:$0xff]
    %v1268 = vld [vmem:[#allocation20 + $0xac8] sm:$0xff]
    %v1269 = vld [vmem:[#allocation20 + $0xad0] sm:$0xff]
    %v1270 = vld [vmem:[#allocation20 + $0xad8] sm:$0xff]
    %v1271 = vld [vmem:[#allocation20 + $0xae0] sm:$0xff]
    %v1272 = vld [vmem:[#allocation20 + $0xae8] sm:$0xff]
    %v1273 = vld [vmem:[#allocation20 + $0xaf0] sm:$0xff]
    %v1274 = vld [vmem:[#allocation20 + $0xaf8] sm:$0xff]
    %v1275 = vld [vmem:[#allocation20 + $0xb00] sm:$0xff]
    %v1276 = vld [vmem:[#allocation20 + $0xb08] sm:$0xff]
    %v1277 = vld [vmem:[#allocation20 + $0xb10] sm:$0xff]
    %v1278 = vld [vmem:[#allocation20 + $0xb18] sm:$0xff]
    %v1279 = vld [vmem:[#allocation20 + $0xb20] sm:$0xff]
    %v1280 = vld [vmem:[#allocation20 + $0xb28] sm:$0xff]
    %v1281 = vld [vmem:[#allocation20 + $0xb30] sm:$0xff]
    %v1282 = vld [vmem:[#allocation20 + $0xb38] sm:$0xff]
    %v1283 = vld [vmem:[#allocation20 + $0xb40] sm:$0xff]
    %v1284 = vld [vmem:[#allocation20 + $0xb48] sm:$0xff]
    %v1285 = vld [vmem:[#allocation20 + $0xb50] sm:$0xff]
    %v1286 = vld [vmem:[#allocation20 + $0xb58] sm:$0xff]
    %v1287 = vld [vmem:[#allocation20 + $0xb60] sm:$0xff]
    %v1288 = vld [vmem:[#allocation20 + $0xb68] sm:$0xff]
    %v1289 = vld [vmem:[#allocation20 + $0xb70] sm:$0xff]
    %v1290 = vld [vmem:[#allocation20 + $0xb78] sm:$0xff]
    %v1291 = vld [vmem:[#allocation20 + $0xb80] sm:$0xff]
    %v1292 = vld [vmem:[#allocation20 + $0xb88] sm:$0xff]
    %v1293 = vld [vmem:[#allocation20 + $0xb90] sm:$0xff]
    %v1294 = vld [vmem:[#allocation20 + $0xb98] sm:$0xff]
    %v1295 = vld [vmem:[#allocation20 + $0xba0] sm:$0xff]
    %v1296 = vld [vmem:[#allocation20 + $0xba8] sm:$0xff]
    %v1297 = vld [vmem:[#allocation20 + $0xbb0] sm:$0xff]
    %v1298 = vld [vmem:[#allocation20 + $0xbb8] sm:$0xff]
    %v1299 = vld [vmem:[#allocation20 + $0xbc0] sm:$0xff]
    %v1300 = vld [vmem:[#allocation20 + $0xbc8] sm:$0xff]
    %v1301 = vld [vmem:[#allocation20 + $0xbd0] sm:$0xff]
    %v1302 = vld [vmem:[#allocation20 + $0xbd8] sm:$0xff]
    %v1303 = vld [vmem:[#allocation20 + $0xbe0] sm:$0xff]
    %v1304 = vld [vmem:[#allocation20 + $0xbe8] sm:$0xff]
    %v1305 = vld [vmem:[#allocation20 + $0xbf0] sm:$0xff]
    %v1306 = vld [vmem:[#allocation20 + $0xbf8] sm:$0xff]
    %v1307 = vld [vmem:[#allocation20 + $0xc00] sm:$0xff]
    %v1308 = vld [vmem:[#allocation20 + $0xc08] sm:$0xff]
    %v1309 = vld [vmem:[#allocation20 + $0xc10] sm:$0xff]
    %v1310 = vld [vmem:[#allocation20 + $0xc18] sm:$0xff]
    %v1311 = vld [vmem:[#allocation20 + $0xc20] sm:$0xff]
    %v1312 = vld [vmem:[#allocation20 + $0xc28] sm:$0xff]
    %v1313 = vld [vmem:[#allocation20 + $0xc30] sm:$0xff]
    %v1314 = vld [vmem:[#allocation20 + $0xc38] sm:$0xff]
    %v1315 = vld [vmem:[#allocation20 + $0xc40] sm:$0xff]
    %v1316 = vld [vmem:[#allocation20 + $0xc48] sm:$0xff]
    %v1317 = vld [vmem:[#allocation20 + $0xc50] sm:$0xff]
    %v1318 = vld [vmem:[#allocation20 + $0xc58] sm:$0xff]
    %v1319 = vld [vmem:[#allocation20 + $0xc60] sm:$0xff]
    %v1320 = vld [vmem:[#allocation20 + $0xc68] sm:$0xff]
    %v1321 = vld [vmem:[#allocation20 + $0xc70] sm:$0xff]
    %v1322 = vld [vmem:[#allocation20 + $0xc78] sm:$0xff]
    %v1323 = vld [vmem:[#allocation20 + $0xc80] sm:$0xff]
    %v1324 = vld [vmem:[#allocation20 + $0xc88] sm:$0xff]
    %v1325 = vld [vmem:[#allocation20 + $0xc90] sm:$0xff]
    %v1326 = vld [vmem:[#allocation20 + $0xc98] sm:$0xff]
    %v1327 = vld [vmem:[#allocation20 + $0xca0] sm:$0xff]
    %v1328 = vld [vmem:[#allocation20 + $0xca8] sm:$0xff]
    %v1329 = vld [vmem:[#allocation20 + $0xcb0] sm:$0xff]
    %v1330 = vld [vmem:[#allocation20 + $0xcb8] sm:$0xff]
    %v1331 = vld [vmem:[#allocation20 + $0xcc0] sm:$0xff]
    %v1332 = vld [vmem:[#allocation20 + $0xcc8] sm:$0xff]
    %v1333 = vld [vmem:[#allocation20 + $0xcd0] sm:$0xff]
    %v1334 = vld [vmem:[#allocation20 + $0xcd8] sm:$0xff]
    %v1335 = vld [vmem:[#allocation20 + $0xce0] sm:$0xff]
    %v1336 = vld [vmem:[#allocation20 + $0xce8] sm:$0xff]
    %v1337 = vld [vmem:[#allocation20 + $0xcf0] sm:$0xff]
    %v1338 = vld [vmem:[#allocation20 + $0xcf8] sm:$0xff]
    %v1339 = vld [vmem:[#allocation20 + $0xd00] sm:$0xff]
    %v1340 = vld [vmem:[#allocation20 + $0xd08] sm:$0xff]
    %v1341 = vld [vmem:[#allocation20 + $0xd10] sm:$0xff]
    %v1342 = vld [vmem:[#allocation20 + $0xd18] sm:$0xff]
    %v1343 = vld [vmem:[#allocation20 + $0xd20] sm:$0xff]
    %v1344 = vld [vmem:[#allocation20 + $0xd28] sm:$0xff]
    %v1345 = vld [vmem:[#allocation20 + $0xd30] sm:$0xff]
    %v1346 = vld [vmem:[#allocation20 + $0xd38] sm:$0xff]
    %v1347 = vld [vmem:[#allocation20 + $0xd40] sm:$0xff]
    %v1348 = vld [vmem:[#allocation20 + $0xd48] sm:$0xff]
    %v1349 = vld [vmem:[#allocation20 + $0xd50] sm:$0xff]
    %v1350 = vld [vmem:[#allocation20 + $0xd58] sm:$0xff]
    %v1351 = vld [vmem:[#allocation20 + $0xd60] sm:$0xff]
    %v1352 = vld [vmem:[#allocation20 + $0xd68] sm:$0xff]
    %v1353 = vld [vmem:[#allocation20 + $0xd70] sm:$0xff]
    %v1354 = vld [vmem:[#allocation20 + $0xd78] sm:$0xff]
    %v1355 = vld [vmem:[#allocation20 + $0xd80] sm:$0xff]
    %v1356 = vld [vmem:[#allocation20 + $0xd88] sm:$0xff]
    %v1357 = vld [vmem:[#allocation20 + $0xd90] sm:$0xff]
    %v1358 = vld [vmem:[#allocation20 + $0xd98] sm:$0xff]
    %v1359 = vld [vmem:[#allocation20 + $0xda0] sm:$0xff]
    %v1360 = vld [vmem:[#allocation20 + $0xda8] sm:$0xff]
    %v1361 = vld [vmem:[#allocation20 + $0xdb0] sm:$0xff]
    %v1362 = vld [vmem:[#allocation20 + $0xdb8] sm:$0xff]
    %v1363 = vld [vmem:[#allocation20 + $0xdc0] sm:$0xff]
    %v1364 = vld [vmem:[#allocation20 + $0xdc8] sm:$0xff]
    %v1365 = vld [vmem:[#allocation20 + $0xdd0] sm:$0xff]
    %v1366 = vld [vmem:[#allocation20 + $0xdd8] sm:$0xff]
    %v1367 = vld [vmem:[#allocation20 + $0xde0] sm:$0xff]
    %v1368 = vld [vmem:[#allocation20 + $0xde8] sm:$0xff]
    %v1369 = vld [vmem:[#allocation20 + $0xdf0] sm:$0xff]
    %v1370 = vld [vmem:[#allocation20 + $0xdf8] sm:$0xff]
    %v1371 = vld [vmem:[#allocation20 + $0xe00] sm:$0xff]
    %v1372 = vld [vmem:[#allocation20 + $0xe08] sm:$0xff]
    %v1373 = vld [vmem:[#allocation20 + $0xe10] sm:$0xff]
    %v1374 = vld [vmem:[#allocation20 + $0xe18] sm:$0xff]
    %v1375 = vld [vmem:[#allocation20 + $0xe20] sm:$0xff]
    %v1376 = vld [vmem:[#allocation20 + $0xe28] sm:$0xff]
    %v1377 = vld [vmem:[#allocation20 + $0xe30] sm:$0xff]
    %v1378 = vld [vmem:[#allocation20 + $0xe38] sm:$0xff]
    %v1379 = vld [vmem:[#allocation20 + $0xe40] sm:$0xff]
    %v1380 = vld [vmem:[#allocation20 + $0xe48] sm:$0xff]
    %v1381 = vld [vmem:[#allocation20 + $0xe50] sm:$0xff]
    %v1382 = vld [vmem:[#allocation20 + $0xe58] sm:$0xff]
    %v1383 = vld [vmem:[#allocation20 + $0xe60] sm:$0xff]
    %v1384 = vld [vmem:[#allocation20 + $0xe68] sm:$0xff]
    %v1385 = vld [vmem:[#allocation20 + $0xe70] sm:$0xff]
    %v1386 = vld [vmem:[#allocation20 + $0xe78] sm:$0xff]
    %v1387 = vld [vmem:[#allocation20 + $0xe80] sm:$0xff]
    %v1388 = vld [vmem:[#allocation20 + $0xe88] sm:$0xff]
    %v1389 = vld [vmem:[#allocation20 + $0xe90] sm:$0xff]
    %v1390 = vld [vmem:[#allocation20 + $0xe98] sm:$0xff]
    %v1391 = vld [vmem:[#allocation20 + $0xea0] sm:$0xff]
    %v1392 = vld [vmem:[#allocation20 + $0xea8] sm:$0xff]
    %v1393 = vld [vmem:[#allocation20 + $0xeb0] sm:$0xff]
    %v1394 = vld [vmem:[#allocation20 + $0xeb8] sm:$0xff]
    %v1395 = vld [vmem:[#allocation20 + $0xec0] sm:$0xff]
    %v1396 = vld [vmem:[#allocation20 + $0xec8] sm:$0xff]
    %v1397 = vld [vmem:[#allocation20 + $0xed0] sm:$0xff]
    %v1398 = vld [vmem:[#allocation20 + $0xed8] sm:$0xff]
    %v1399 = vld [vmem:[#allocation20 + $0xee0] sm:$0xff]
    %v1400 = vld [vmem:[#allocation20 + $0xee8] sm:$0xff]
    %v1401 = vld [vmem:[#allocation20 + $0xef0] sm:$0xff]
    %v1402 = vld [vmem:[#allocation20 + $0xef8] sm:$0xff]
    %v1403 = vld [vmem:[#allocation20 + $0xf00] sm:$0xff]
    %v1404 = vld [vmem:[#allocation20 + $0xf08] sm:$0xff]
    %v1405 = vld [vmem:[#allocation20 + $0xf10] sm:$0xff]
    %v1406 = vld [vmem:[#allocation20 + $0xf18] sm:$0xff]
    %v1407 = vld [vmem:[#allocation20 + $0xf20] sm:$0xff]
    %v1408 = vld [vmem:[#allocation20 + $0xf28] sm:$0xff]
    %v1409 = vld [vmem:[#allocation20 + $0xf30] sm:$0xff]
    %v1410 = vld [vmem:[#allocation20 + $0xf38] sm:$0xff]
    %v1411 = vld [vmem:[#allocation20 + $0xf40] sm:$0xff]
    %v1412 = vld [vmem:[#allocation20 + $0xf48] sm:$0xff]
    %v1413 = vld [vmem:[#allocation20 + $0xf50] sm:$0xff]
    %v1414 = vld [vmem:[#allocation20 + $0xf58] sm:$0xff]
    %v1415 = vld [vmem:[#allocation20 + $0xf60] sm:$0xff]
    %v1416 = vld [vmem:[#allocation20 + $0xf68] sm:$0xff]
    %v1417 = vld [vmem:[#allocation20 + $0xf70] sm:$0xff]
    %v1418 = vld [vmem:[#allocation20 + $0xf78] sm:$0xff]
    %v1419 = vld [vmem:[#allocation20 + $0xf80] sm:$0xff]
    %v1420 = vld [vmem:[#allocation20 + $0xf88] sm:$0xff]
    %v1421 = vld [vmem:[#allocation20 + $0xf90] sm:$0xff]
    %v1422 = vld [vmem:[#allocation20 + $0xf98] sm:$0xff]
    %v1423 = vld [vmem:[#allocation20 + $0xfa0] sm:$0xff]
    %v1424 = vld [vmem:[#allocation20 + $0xfa8] sm:$0xff]
    %v1425 = vld [vmem:[#allocation20 + $0xfb0] sm:$0xff]
    %v1426 = vld [vmem:[#allocation20 + $0xfb8] sm:$0xff]
    %v1427 = vld [vmem:[#allocation20 + $0xfc0] sm:$0xff]
    %v1428 = vld [vmem:[#allocation20 + $0xfc8] sm:$0xff]
    %v1429 = vld [vmem:[#allocation20 + $0xfd0] sm:$0xff]
    %v1430 = vld [vmem:[#allocation20 + $0xfd8] sm:$0xff]
    %v1431 = vld [vmem:[#allocation20 + $0xfe0] sm:$0xff]
    %v1432 = vld [vmem:[#allocation20 + $0xfe8] sm:$0xff]
    %v1433 = vld [vmem:[#allocation20 + $0xff0] sm:$0xff]
    %v1434 = vld [vmem:[#allocation20 + $0xff8] sm:$0xff]
    %v1435 = vld [vmem:[#allocation20 + $0x1000] sm:$0xff]
    %v1436 = vld [vmem:[#allocation20 + $0x1008] sm:$0xff]
    %v1437 = vld [vmem:[#allocation20 + $0x1010] sm:$0xff]
    %v1438 = vld [vmem:[#allocation20 + $0x1018] sm:$0xff]
    %v1439 = vld [vmem:[#allocation20 + $0x1020] sm:$0xff]
    %v1440 = vld [vmem:[#allocation20 + $0x1028] sm:$0xff]
    %v1441 = vld [vmem:[#allocation20 + $0x1030] sm:$0xff]
    %v1442 = vld [vmem:[#allocation20 + $0x1038] sm:$0xff]
    %v1443 = vld [vmem:[#allocation20 + $0x1040] sm:$0xff]
    %v1444 = vld [vmem:[#allocation20 + $0x1048] sm:$0xff]
    %v1445 = vld [vmem:[#allocation20 + $0x1050] sm:$0xff]
    %v1446 = vld [vmem:[#allocation20 + $0x1058] sm:$0xff]
    %v1447 = vld [vmem:[#allocation20 + $0x1060] sm:$0xff]
    %v1448 = vld [vmem:[#allocation20 + $0x1068] sm:$0xff]
    %v1449 = vld [vmem:[#allocation20 + $0x1070] sm:$0xff]
    %v1450 = vld [vmem:[#allocation20 + $0x1078] sm:$0xff]
    %v1451 = vld [vmem:[#allocation20 + $0x1080] sm:$0xff]
    %v1452 = vld [vmem:[#allocation20 + $0x1088] sm:$0xff]
    %v1453 = vld [vmem:[#allocation20 + $0x1090] sm:$0xff]
    %v1454 = vld [vmem:[#allocation20 + $0x1098] sm:$0xff]
    %v1455 = vld [vmem:[#allocation20 + $0x10a0] sm:$0xff]
    %v1456 = vld [vmem:[#allocation20 + $0x10a8] sm:$0xff]
    %v1457 = vld [vmem:[#allocation20 + $0x10b0] sm:$0xff]
    %v1458 = vld [vmem:[#allocation20 + $0x10b8] sm:$0xff]
    %v1459 = vld [vmem:[#allocation20 + $0x10c0] sm:$0xff]
    %v1460 = vld [vmem:[#allocation20 + $0x10c8] sm:$0xff]
    %v1461 = vld [vmem:[#allocation20 + $0x10d0] sm:$0xff]
    %v1462 = vld [vmem:[#allocation20 + $0x10d8] sm:$0xff]
    %v1463 = vld [vmem:[#allocation20 + $0x10e0] sm:$0xff]
    %v1464 = vld [vmem:[#allocation20 + $0x10e8] sm:$0xff]
    %v1465 = vld [vmem:[#allocation20 + $0x10f0] sm:$0xff]
    %v1466 = vld [vmem:[#allocation20 + $0x10f8] sm:$0xff]
    %v1467 = vld [vmem:[#allocation20 + $0x1100] sm:$0xff]
    %v1468 = vld [vmem:[#allocation20 + $0x1108] sm:$0xff]
    %v1469 = vld [vmem:[#allocation20 + $0x1110] sm:$0xff]
    %v1470 = vld [vmem:[#allocation20 + $0x1118] sm:$0xff]
    %v1471 = vld [vmem:[#allocation20 + $0x1120] sm:$0xff]
    %v1472 = vld [vmem:[#allocation20 + $0x1128] sm:$0xff]
    %v1473 = vld [vmem:[#allocation20 + $0x1130] sm:$0xff]
    %v1474 = vld [vmem:[#allocation20 + $0x1138] sm:$0xff]
    %v1475 = vld [vmem:[#allocation20 + $0x1140] sm:$0xff]
    %v1476 = vld [vmem:[#allocation20 + $0x1148] sm:$0xff]
    %v1477 = vld [vmem:[#allocation20 + $0x1150] sm:$0xff]
    %v1478 = vld [vmem:[#allocation20 + $0x1158] sm:$0xff]
    %v1479 = vld [vmem:[#allocation20 + $0x1160] sm:$0xff]
    %v1480 = vld [vmem:[#allocation20 + $0x1168] sm:$0xff]
    %v1481 = vld [vmem:[#allocation20 + $0x1170] sm:$0xff]
    %v1482 = vld [vmem:[#allocation20 + $0x1178] sm:$0xff]
    %v1483 = vld [vmem:[#allocation20 + $0x1180] sm:$0xff]
    %v1484 = vld [vmem:[#allocation20 + $0x1188] sm:$0xff]
    %v1485 = vld [vmem:[#allocation20 + $0x1190] sm:$0xff]
    %v1486 = vld [vmem:[#allocation20 + $0x1198] sm:$0xff]
    %v1487 = vld [vmem:[#allocation20 + $0x11a0] sm:$0xff]
    %v1488 = vld [vmem:[#allocation20 + $0x11a8] sm:$0xff]
    %v1489 = vld [vmem:[#allocation20 + $0x11b0] sm:$0xff]
    %v1490 = vld [vmem:[#allocation20 + $0x11b8] sm:$0xff]
    %v1491 = vld [vmem:[#allocation20 + $0x11c0] sm:$0xff]
    %v1492 = vld [vmem:[#allocation20 + $0x11c8] sm:$0xff]
    %v1493 = vld [vmem:[#allocation20 + $0x11d0] sm:$0xff]
    %v1494 = vld [vmem:[#allocation20 + $0x11d8] sm:$0xff]
    %v1495 = vld [vmem:[#allocation20 + $0x11e0] sm:$0xff]
    %v1496 = vld [vmem:[#allocation20 + $0x11e8] sm:$0xff]
    %v1497 = vld [vmem:[#allocation20 + $0x11f0] sm:$0xff]
    %v1498 = vld [vmem:[#allocation20 + $0x11f8] sm:$0xff]
    %v1499 = vld [vmem:[#allocation20 + $0x1200] sm:$0xff]
    %v1500 = vld [vmem:[#allocation20 + $0x1208] sm:$0xff]
    %v1501 = vld [vmem:[#allocation20 + $0x1210] sm:$0xff]
    %v1502 = vld [vmem:[#allocation20 + $0x1218] sm:$0xff]
    %v1503 = vld [vmem:[#allocation20 + $0x1220] sm:$0xff]
    %v1504 = vld [vmem:[#allocation20 + $0x1228] sm:$0xff]
    %v1505 = vld [vmem:[#allocation20 + $0x1230] sm:$0xff]
    %v1506 = vld [vmem:[#allocation20 + $0x1238] sm:$0xff]
    %v1507 = vld [vmem:[#allocation20 + $0x1240] sm:$0xff]
    %v1508 = vld [vmem:[#allocation20 + $0x1248] sm:$0xff]
    %v1509 = vld [vmem:[#allocation20 + $0x1250] sm:$0xff]
    %v1510 = vld [vmem:[#allocation20 + $0x1258] sm:$0xff]
    %v1511 = vld [vmem:[#allocation20 + $0x1260] sm:$0xff]
    %v1512 = vld [vmem:[#allocation20 + $0x1268] sm:$0xff]
    %v1513 = vld [vmem:[#allocation20 + $0x1270] sm:$0xff]
    %v1514 = vld [vmem:[#allocation20 + $0x1278] sm:$0xff]
    %v1515 = vld [vmem:[#allocation20 + $0x1280] sm:$0xff]
    %v1516 = vld [vmem:[#allocation20 + $0x1288] sm:$0xff]
    %v1517 = vld [vmem:[#allocation20 + $0x1290] sm:$0xff]
    %v1518 = vld [vmem:[#allocation20 + $0x1298] sm:$0xff]
    %v1519 = vld [vmem:[#allocation20 + $0x12a0] sm:$0xff]
    %v1520 = vld [vmem:[#allocation20 + $0x12a8] sm:$0xff]
    %v1521 = vld [vmem:[#allocation20 + $0x12b0] sm:$0xff]
    %v1522 = vld [vmem:[#allocation20 + $0x12b8] sm:$0xff]
    %v1523 = vld [vmem:[#allocation20 + $0x12c0] sm:$0xff]
    %v1524 = vld [vmem:[#allocation20 + $0x12c8] sm:$0xff]
    %v1525 = vld [vmem:[#allocation20 + $0x12d0] sm:$0xff]
    %v1526 = vld [vmem:[#allocation20 + $0x12d8] sm:$0xff]
    %v1527 = vld [vmem:[#allocation20 + $0x12e0] sm:$0xff]
    %v1528 = vld [vmem:[#allocation20 + $0x12e8] sm:$0xff]
    %v1529 = vld [vmem:[#allocation20 + $0x12f0] sm:$0xff]
    %v1530 = vld [vmem:[#allocation20 + $0x12f8] sm:$0xff]
    %v1531 = vld [vmem:[#allocation20 + $0x1300] sm:$0xff]
    %v1532 = vld [vmem:[#allocation20 + $0x1308] sm:$0xff]
    %v1533 = vld [vmem:[#allocation20 + $0x1310] sm:$0xff]
    %v1534 = vld [vmem:[#allocation20 + $0x1318] sm:$0xff]
    %v1535 = vld [vmem:[#allocation20 + $0x1320] sm:$0xff]
    %v1536 = vld [vmem:[#allocation20 + $0x1328] sm:$0xff]
    %v1537 = vld [vmem:[#allocation20 + $0x1330] sm:$0xff]
    %v1538 = vld [vmem:[#allocation20 + $0x1338] sm:$0xff]
    %v1539 = vld [vmem:[#allocation20 + $0x1340] sm:$0xff]
    %v1540 = vld [vmem:[#allocation20 + $0x1348] sm:$0xff]
    %v1541 = vld [vmem:[#allocation20 + $0x1350] sm:$0xff]
    %v1542 = vld [vmem:[#allocation20 + $0x1358] sm:$0xff]
    %v1543 = vld [vmem:[#allocation20 + $0x1360] sm:$0xff]
    %v1544 = vld [vmem:[#allocation20 + $0x1368] sm:$0xff]
    %v1545 = vld [vmem:[#allocation20 + $0x1370] sm:$0xff]
    %v1546 = vld [vmem:[#allocation20 + $0x1378] sm:$0xff]
    %v1547 = vld [vmem:[#allocation20 + $0x1380] sm:$0xff]
    %v1548 = vld [vmem:[#allocation20 + $0x1388] sm:$0xff]
    %v1549 = vld [vmem:[#allocation20 + $0x1390] sm:$0xff]
    %v1550 = vld [vmem:[#allocation20 + $0x1398] sm:$0xff]
    %v1551 = vld [vmem:[#allocation20 + $0x13a0] sm:$0xff]
    %v1552 = vld [vmem:[#allocation20 + $0x13a8] sm:$0xff]
    %v1553 = vld [vmem:[#allocation20 + $0x13b0] sm:$0xff]
    %v1554 = vld [vmem:[#allocation20 + $0x13b8] sm:$0xff]
    %v1555 = vld [vmem:[#allocation20 + $0x13c0] sm:$0xff]
    %v1556 = vld [vmem:[#allocation20 + $0x13c8] sm:$0xff]
    %v1557 = vld [vmem:[#allocation20 + $0x13d0] sm:$0xff]
    %v1558 = vld [vmem:[#allocation20 + $0x13d8] sm:$0xff]
    %v1559 = vld [vmem:[#allocation20 + $0x13e0] sm:$0xff]
    %v1560 = vld [vmem:[#allocation20 + $0x13e8] sm:$0xff]
    %v1561 = vld [vmem:[#allocation20 + $0x13f0] sm:$0xff]
    %v1562 = vld [vmem:[#allocation20 + $0x13f8] sm:$0xff]
    %v1563 = vld [vmem:[#allocation22] sm:$0xff]
    %v1564 = vld [vmem:[#allocation22 + $0x8] sm:$0xff]
    %v1567 = vperm.slane %v1563, 0
    %v1568 = vperm.slane %v1563, 1
    %v1569 = vperm.slane %v1563, 2
    %v1570 = vperm.slane %v1563, 3
    %v1571 = vperm.slane %v1563, 4
    %v1572 = vperm.slane %v1563, 5
    %v1573 = vperm.slane %v1563, 6
    %v1574 = vperm.slane %v1563, 7
    %v1575 = vperm.slane %v1564, 0
    %v1576 = vperm.slane %v1564, 1
    %v1577 = vperm.slane %v1564, 2
    %v1578 = vperm.slane %v1564, 3
    %v1579 = vperm.slane %v1564, 4
    %v1580 = vperm.slane %v1564, 5
    %v1581 = vperm.slane %v1564, 6
    %v1582 = vperm.slane %v1564, 7
    %v1603 = vunpack.c.l.b16 %v1047
    %v1604 = vunpack.c.h.b16 %v1047
    %v1605 = vunpack.c.l.b16 %v1048
    %v1606 = vunpack.c.h.b16 %v1048
    %v1607 = vunpack.c.l.b16 %v1049
    %v1608 = vunpack.c.h.b16 %v1049
    %v1609 = vunpack.c.l.b16 %v1050
    %v1610 = vunpack.c.h.b16 %v1050
    %v1611 = vpack.c.b16 %v1607, %v1603
    %v1612 = vpack.c.b16 %v1608, %v1604
    %v1613 = vpack.c.b16 %v1609, %v1605
    %v1614 = vpack.c.b16 %v1610, %v1606
    %v2131 = vunpack.c.l.b16 %v1051
    %v2132 = vunpack.c.h.b16 %v1051
    %v2133 = vunpack.c.l.b16 %v1052
    %v2134 = vunpack.c.h.b16 %v1052
    %v2135 = vunpack.c.l.b16 %v1053
    %v2136 = vunpack.c.h.b16 %v1053
    %v2137 = vunpack.c.l.b16 %v1054
    %v2138 = vunpack.c.h.b16 %v1054
    %v2139 = vunpack.c.l.b16 %v1055
    %v2140 = vunpack.c.h.b16 %v1055
    %v2141 = vunpack.c.l.b16 %v1056
    %v2142 = vunpack.c.h.b16 %v1056
    %v2143 = vunpack.c.l.b16 %v1057
    %v2144 = vunpack.c.h.b16 %v1057
    %v2145 = vunpack.c.l.b16 %v1058
    %v2146 = vunpack.c.h.b16 %v1058
    %v2147 = vunpack.c.l.b16 %v1059
    %v2148 = vunpack.c.h.b16 %v1059
    %v2149 = vunpack.c.l.b16 %v1060
    %v2150 = vunpack.c.h.b16 %v1060
    %v2151 = vunpack.c.l.b16 %v1061
    %v2152 = vunpack.c.h.b16 %v1061
    %v2153 = vunpack.c.l.b16 %v1062
    %v2154 = vunpack.c.h.b16 %v1062
    %v2155 = vunpack.c.l.b16 %v1063
    %v2156 = vunpack.c.h.b16 %v1063
    %v2157 = vunpack.c.l.b16 %v1064
    %v2158 = vunpack.c.h.b16 %v1064
    %v2159 = vunpack.c.l.b16 %v1065
    %v2160 = vunpack.c.h.b16 %v1065
    %v2161 = vunpack.c.l.b16 %v1066
    %v2162 = vunpack.c.h.b16 %v1066
    %v2163 = vunpack.c.l.b16 %v1067
    %v2164 = vunpack.c.h.b16 %v1067
    %v2165 = vunpack.c.l.b16 %v1068
    %v2166 = vunpack.c.h.b16 %v1068
    %v2167 = vunpack.c.l.b16 %v1069
    %v2168 = vunpack.c.h.b16 %v1069
    %v2169 = vunpack.c.l.b16 %v1070
    %v2170 = vunpack.c.h.b16 %v1070
    %v2171 = vunpack.c.l.b16 %v1071
    %v2172 = vunpack.c.h.b16 %v1071
    %v2173 = vunpack.c.l.b16 %v1072
    %v2174 = vunpack.c.h.b16 %v1072
    %v2175 = vunpack.c.l.b16 %v1073
    %v2176 = vunpack.c.h.b16 %v1073
    %v2177 = vunpack.c.l.b16 %v1074
    %v2178 = vunpack.c.h.b16 %v1074
    %v2179 = vunpack.c.l.b16 %v1075
    %v2180 = vunpack.c.h.b16 %v1075
    %v2181 = vunpack.c.l.b16 %v1076
    %v2182 = vunpack.c.h.b16 %v1076
    %v2183 = vunpack.c.l.b16 %v1077
    %v2184 = vunpack.c.h.b16 %v1077
    %v2185 = vunpack.c.l.b16 %v1078
    %v2186 = vunpack.c.h.b16 %v1078
    %v2187 = vunpack.c.l.b16 %v1079
    %v2188 = vunpack.c.h.b16 %v1079
    %v2189 = vunpack.c.l.b16 %v1080
    %v2190 = vunpack.c.h.b16 %v1080
    %v2191 = vunpack.c.l.b16 %v1081
    %v2192 = vunpack.c.h.b16 %v1081
    %v2193 = vunpack.c.l.b16 %v1082
    %v2194 = vunpack.c.h.b16 %v1082
    %v2195 = vunpack.c.l.b16 %v1083
    %v2196 = vunpack.c.h.b16 %v1083
    %v2197 = vunpack.c.l.b16 %v1084
    %v2198 = vunpack.c.h.b16 %v1084
    %v2199 = vunpack.c.l.b16 %v1085
    %v2200 = vunpack.c.h.b16 %v1085
    %v2201 = vunpack.c.l.b16 %v1086
    %v2202 = vunpack.c.h.b16 %v1086
    %v2203 = vunpack.c.l.b16 %v1087
    %v2204 = vunpack.c.h.b16 %v1087
    %v2205 = vunpack.c.l.b16 %v1088
    %v2206 = vunpack.c.h.b16 %v1088
    %v2207 = vunpack.c.l.b16 %v1089
    %v2208 = vunpack.c.h.b16 %v1089
    %v2209 = vunpack.c.l.b16 %v1090
    %v2210 = vunpack.c.h.b16 %v1090
    %v2211 = vunpack.c.l.b16 %v1091
    %v2212 = vunpack.c.h.b16 %v1091
    %v2213 = vunpack.c.l.b16 %v1092
    %v2214 = vunpack.c.h.b16 %v1092
    %v2215 = vunpack.c.l.b16 %v1093
    %v2216 = vunpack.c.h.b16 %v1093
    %v2217 = vunpack.c.l.b16 %v1094
    %v2218 = vunpack.c.h.b16 %v1094
    %v2219 = vunpack.c.l.b16 %v1095
    %v2220 = vunpack.c.h.b16 %v1095
    %v2221 = vunpack.c.l.b16 %v1096
    %v2222 = vunpack.c.h.b16 %v1096
    %v2223 = vunpack.c.l.b16 %v1097
    %v2224 = vunpack.c.h.b16 %v1097
    %v2225 = vunpack.c.l.b16 %v1098
    %v2226 = vunpack.c.h.b16 %v1098
    %v2227 = vunpack.c.l.b16 %v1099
    %v2228 = vunpack.c.h.b16 %v1099
    %v2229 = vunpack.c.l.b16 %v1100
    %v2230 = vunpack.c.h.b16 %v1100
    %v2231 = vunpack.c.l.b16 %v1101
    %v2232 = vunpack.c.h.b16 %v1101
    %v2233 = vunpack.c.l.b16 %v1102
    %v2234 = vunpack.c.h.b16 %v1102
    %v2235 = vunpack.c.l.b16 %v1103
    %v2236 = vunpack.c.h.b16 %v1103
    %v2237 = vunpack.c.l.b16 %v1104
    %v2238 = vunpack.c.h.b16 %v1104
    %v2239 = vunpack.c.l.b16 %v1105
    %v2240 = vunpack.c.h.b16 %v1105
    %v2241 = vunpack.c.l.b16 %v1106
    %v2242 = vunpack.c.h.b16 %v1106
    %v2243 = vunpack.c.l.b16 %v1107
    %v2244 = vunpack.c.h.b16 %v1107
    %v2245 = vunpack.c.l.b16 %v1108
    %v2246 = vunpack.c.h.b16 %v1108
    %v2247 = vunpack.c.l.b16 %v1109
    %v2248 = vunpack.c.h.b16 %v1109
    %v2249 = vunpack.c.l.b16 %v1110
    %v2250 = vunpack.c.h.b16 %v1110
    %v2251 = vunpack.c.l.b16 %v1111
    %v2252 = vunpack.c.h.b16 %v1111
    %v2253 = vunpack.c.l.b16 %v1112
    %v2254 = vunpack.c.h.b16 %v1112
    %v2255 = vunpack.c.l.b16 %v1113
    %v2256 = vunpack.c.h.b16 %v1113
    %v2257 = vunpack.c.l.b16 %v1114
    %v2258 = vunpack.c.h.b16 %v1114
    %v2259 = vunpack.c.l.b16 %v1115
    %v2260 = vunpack.c.h.b16 %v1115
    %v2261 = vunpack.c.l.b16 %v1116
    %v2262 = vunpack.c.h.b16 %v1116
    %v2263 = vunpack.c.l.b16 %v1117
    %v2264 = vunpack.c.h.b16 %v1117
    %v2265 = vunpack.c.l.b16 %v1118
    %v2266 = vunpack.c.h.b16 %v1118
    %v2267 = vunpack.c.l.b16 %v1119
    %v2268 = vunpack.c.h.b16 %v1119
    %v2269 = vunpack.c.l.b16 %v1120
    %v2270 = vunpack.c.h.b16 %v1120
    %v2271 = vunpack.c.l.b16 %v1121
    %v2272 = vunpack.c.h.b16 %v1121
    %v2273 = vunpack.c.l.b16 %v1122
    %v2274 = vunpack.c.h.b16 %v1122
    %v2275 = vunpack.c.l.b16 %v1123
    %v2276 = vunpack.c.h.b16 %v1123
    %v2277 = vunpack.c.l.b16 %v1124
    %v2278 = vunpack.c.h.b16 %v1124
    %v2279 = vunpack.c.l.b16 %v1125
    %v2280 = vunpack.c.h.b16 %v1125
    %v2281 = vunpack.c.l.b16 %v1126
    %v2282 = vunpack.c.h.b16 %v1126
    %v2283 = vunpack.c.l.b16 %v1127
    %v2284 = vunpack.c.h.b16 %v1127
    %v2285 = vunpack.c.l.b16 %v1128
    %v2286 = vunpack.c.h.b16 %v1128
    %v2287 = vunpack.c.l.b16 %v1129
    %v2288 = vunpack.c.h.b16 %v1129
    %v2289 = vunpack.c.l.b16 %v1130
    %v2290 = vunpack.c.h.b16 %v1130
    %v2291 = vunpack.c.l.b16 %v1131
    %v2292 = vunpack.c.h.b16 %v1131
    %v2293 = vunpack.c.l.b16 %v1132
    %v2294 = vunpack.c.h.b16 %v1132
    %v2295 = vunpack.c.l.b16 %v1133
    %v2296 = vunpack.c.h.b16 %v1133
    %v2297 = vunpack.c.l.b16 %v1134
    %v2298 = vunpack.c.h.b16 %v1134
    %v2299 = vunpack.c.l.b16 %v1135
    %v2300 = vunpack.c.h.b16 %v1135
    %v2301 = vunpack.c.l.b16 %v1136
    %v2302 = vunpack.c.h.b16 %v1136
    %v2303 = vunpack.c.l.b16 %v1137
    %v2304 = vunpack.c.h.b16 %v1137
    %v2305 = vunpack.c.l.b16 %v1138
    %v2306 = vunpack.c.h.b16 %v1138
    %v2307 = vunpack.c.l.b16 %v1139
    %v2308 = vunpack.c.h.b16 %v1139
    %v2309 = vunpack.c.l.b16 %v1140
    %v2310 = vunpack.c.h.b16 %v1140
    %v2311 = vunpack.c.l.b16 %v1141
    %v2312 = vunpack.c.h.b16 %v1141
    %v2313 = vunpack.c.l.b16 %v1142
    %v2314 = vunpack.c.h.b16 %v1142
    %v2315 = vunpack.c.l.b16 %v1143
    %v2316 = vunpack.c.h.b16 %v1143
    %v2317 = vunpack.c.l.b16 %v1144
    %v2318 = vunpack.c.h.b16 %v1144
    %v2319 = vunpack.c.l.b16 %v1145
    %v2320 = vunpack.c.h.b16 %v1145
    %v2321 = vunpack.c.l.b16 %v1146
    %v2322 = vunpack.c.h.b16 %v1146
    %v2323 = vunpack.c.l.b16 %v1147
    %v2324 = vunpack.c.h.b16 %v1147
    %v2325 = vunpack.c.l.b16 %v1148
    %v2326 = vunpack.c.h.b16 %v1148
    %v2327 = vunpack.c.l.b16 %v1149
    %v2328 = vunpack.c.h.b16 %v1149
    %v2329 = vunpack.c.l.b16 %v1150
    %v2330 = vunpack.c.h.b16 %v1150
    %v2331 = vunpack.c.l.b16 %v1151
    %v2332 = vunpack.c.h.b16 %v1151
    %v2333 = vunpack.c.l.b16 %v1152
    %v2334 = vunpack.c.h.b16 %v1152
    %v2335 = vunpack.c.l.b16 %v1153
    %v2336 = vunpack.c.h.b16 %v1153
    %v2337 = vunpack.c.l.b16 %v1154
    %v2338 = vunpack.c.h.b16 %v1154
    %v2339 = vunpack.c.l.b16 %v1155
    %v2340 = vunpack.c.h.b16 %v1155
    %v2341 = vunpack.c.l.b16 %v1156
    %v2342 = vunpack.c.h.b16 %v1156
    %v2343 = vunpack.c.l.b16 %v1157
    %v2344 = vunpack.c.h.b16 %v1157
    %v2345 = vunpack.c.l.b16 %v1158
    %v2346 = vunpack.c.h.b16 %v1158
    %v2347 = vunpack.c.l.b16 %v1159
    %v2348 = vunpack.c.h.b16 %v1159
    %v2349 = vunpack.c.l.b16 %v1160
    %v2350 = vunpack.c.h.b16 %v1160
    %v2351 = vunpack.c.l.b16 %v1161
    %v2352 = vunpack.c.h.b16 %v1161
    %v2353 = vunpack.c.l.b16 %v1162
    %v2354 = vunpack.c.h.b16 %v1162
    %v2355 = vunpack.c.l.b16 %v1163
    %v2356 = vunpack.c.h.b16 %v1163
    %v2357 = vunpack.c.l.b16 %v1164
    %v2358 = vunpack.c.h.b16 %v1164
    %v2359 = vunpack.c.l.b16 %v1165
    %v2360 = vunpack.c.h.b16 %v1165
    %v2361 = vunpack.c.l.b16 %v1166
    %v2362 = vunpack.c.h.b16 %v1166
    %v2363 = vunpack.c.l.b16 %v1167
    %v2364 = vunpack.c.h.b16 %v1167
    %v2365 = vunpack.c.l.b16 %v1168
    %v2366 = vunpack.c.h.b16 %v1168
    %v2367 = vunpack.c.l.b16 %v1169
    %v2368 = vunpack.c.h.b16 %v1169
    %v2369 = vunpack.c.l.b16 %v1170
    %v2370 = vunpack.c.h.b16 %v1170
    %v2371 = vunpack.c.l.b16 %v1171
    %v2372 = vunpack.c.h.b16 %v1171
    %v2373 = vunpack.c.l.b16 %v1172
    %v2374 = vunpack.c.h.b16 %v1172
    %v2375 = vunpack.c.l.b16 %v1173
    %v2376 = vunpack.c.h.b16 %v1173
    %v2377 = vunpack.c.l.b16 %v1174
    %v2378 = vunpack.c.h.b16 %v1174
    %v2379 = vunpack.c.l.b16 %v1175
    %v2380 = vunpack.c.h.b16 %v1175
    %v2381 = vunpack.c.l.b16 %v1176
    %v2382 = vunpack.c.h.b16 %v1176
    %v2383 = vunpack.c.l.b16 %v1177
    %v2384 = vunpack.c.h.b16 %v1177
    %v2385 = vunpack.c.l.b16 %v1178
    %v2386 = vunpack.c.h.b16 %v1178
    %v2387 = vunpack.c.l.b16 %v1179
    %v2388 = vunpack.c.h.b16 %v1179
    %v2389 = vunpack.c.l.b16 %v1180
    %v2390 = vunpack.c.h.b16 %v1180
    %v2391 = vunpack.c.l.b16 %v1181
    %v2392 = vunpack.c.h.b16 %v1181
    %v2393 = vunpack.c.l.b16 %v1182
    %v2394 = vunpack.c.h.b16 %v1182
    %v2395 = vunpack.c.l.b16 %v1183
    %v2396 = vunpack.c.h.b16 %v1183
    %v2397 = vunpack.c.l.b16 %v1184
    %v2398 = vunpack.c.h.b16 %v1184
    %v2399 = vunpack.c.l.b16 %v1185
    %v2400 = vunpack.c.h.b16 %v1185
    %v2401 = vunpack.c.l.b16 %v1186
    %v2402 = vunpack.c.h.b16 %v1186
    %v2403 = vunpack.c.l.b16 %v1187
    %v2404 = vunpack.c.h.b16 %v1187
    %v2405 = vunpack.c.l.b16 %v1188
    %v2406 = vunpack.c.h.b16 %v1188
    %v2407 = vunpack.c.l.b16 %v1189
    %v2408 = vunpack.c.h.b16 %v1189
    %v2409 = vunpack.c.l.b16 %v1190
    %v2410 = vunpack.c.h.b16 %v1190
    %v2411 = vunpack.c.l.b16 %v1191
    %v2412 = vunpack.c.h.b16 %v1191
    %v2413 = vunpack.c.l.b16 %v1192
    %v2414 = vunpack.c.h.b16 %v1192
    %v2415 = vunpack.c.l.b16 %v1193
    %v2416 = vunpack.c.h.b16 %v1193
    %v2417 = vunpack.c.l.b16 %v1194
    %v2418 = vunpack.c.h.b16 %v1194
    %v2419 = vunpack.c.l.b16 %v1195
    %v2420 = vunpack.c.h.b16 %v1195
    %v2421 = vunpack.c.l.b16 %v1196
    %v2422 = vunpack.c.h.b16 %v1196
    %v2423 = vunpack.c.l.b16 %v1197
    %v2424 = vunpack.c.h.b16 %v1197
    %v2425 = vunpack.c.l.b16 %v1198
    %v2426 = vunpack.c.h.b16 %v1198
    %v2427 = vunpack.c.l.b16 %v1199
    %v2428 = vunpack.c.h.b16 %v1199
    %v2429 = vunpack.c.l.b16 %v1200
    %v2430 = vunpack.c.h.b16 %v1200
    %v2431 = vunpack.c.l.b16 %v1201
    %v2432 = vunpack.c.h.b16 %v1201
    %v2433 = vunpack.c.l.b16 %v1202
    %v2434 = vunpack.c.h.b16 %v1202
    %v2435 = vunpack.c.l.b16 %v1203
    %v2436 = vunpack.c.h.b16 %v1203
    %v2437 = vunpack.c.l.b16 %v1204
    %v2438 = vunpack.c.h.b16 %v1204
    %v2439 = vunpack.c.l.b16 %v1205
    %v2440 = vunpack.c.h.b16 %v1205
    %v2441 = vunpack.c.l.b16 %v1206
    %v2442 = vunpack.c.h.b16 %v1206
    %v2443 = vunpack.c.l.b16 %v1207
    %v2444 = vunpack.c.h.b16 %v1207
    %v2445 = vunpack.c.l.b16 %v1208
    %v2446 = vunpack.c.h.b16 %v1208
    %v2447 = vunpack.c.l.b16 %v1209
    %v2448 = vunpack.c.h.b16 %v1209
    %v2449 = vunpack.c.l.b16 %v1210
    %v2450 = vunpack.c.h.b16 %v1210
    %v2451 = vunpack.c.l.b16 %v1211
    %v2452 = vunpack.c.h.b16 %v1211
    %v2453 = vunpack.c.l.b16 %v1212
    %v2454 = vunpack.c.h.b16 %v1212
    %v2455 = vunpack.c.l.b16 %v1213
    %v2456 = vunpack.c.h.b16 %v1213
    %v2457 = vunpack.c.l.b16 %v1214
    %v2458 = vunpack.c.h.b16 %v1214
    %v2459 = vunpack.c.l.b16 %v1215
    %v2460 = vunpack.c.h.b16 %v1215
    %v2461 = vunpack.c.l.b16 %v1216
    %v2462 = vunpack.c.h.b16 %v1216
    %v2463 = vunpack.c.l.b16 %v1217
    %v2464 = vunpack.c.h.b16 %v1217
    %v2465 = vunpack.c.l.b16 %v1218
    %v2466 = vunpack.c.h.b16 %v1218
    %v2467 = vunpack.c.l.b16 %v1219
    %v2468 = vunpack.c.h.b16 %v1219
    %v2469 = vunpack.c.l.b16 %v1220
    %v2470 = vunpack.c.h.b16 %v1220
    %v2471 = vunpack.c.l.b16 %v1221
    %v2472 = vunpack.c.h.b16 %v1221
    %v2473 = vunpack.c.l.b16 %v1222
    %v2474 = vunpack.c.h.b16 %v1222
    %v2475 = vunpack.c.l.b16 %v1223
    %v2476 = vunpack.c.h.b16 %v1223
    %v2477 = vunpack.c.l.b16 %v1224
    %v2478 = vunpack.c.h.b16 %v1224
    %v2479 = vunpack.c.l.b16 %v1225
    %v2480 = vunpack.c.h.b16 %v1225
    %v2481 = vunpack.c.l.b16 %v1226
    %v2482 = vunpack.c.h.b16 %v1226
    %v2483 = vunpack.c.l.b16 %v1227
    %v2484 = vunpack.c.h.b16 %v1227
    %v2485 = vunpack.c.l.b16 %v1228
    %v2486 = vunpack.c.h.b16 %v1228
    %v2487 = vunpack.c.l.b16 %v1229
    %v2488 = vunpack.c.h.b16 %v1229
    %v2489 = vunpack.c.l.b16 %v1230
    %v2490 = vunpack.c.h.b16 %v1230
    %v2491 = vunpack.c.l.b16 %v1231
    %v2492 = vunpack.c.h.b16 %v1231
    %v2493 = vunpack.c.l.b16 %v1232
    %v2494 = vunpack.c.h.b16 %v1232
    %v2495 = vunpack.c.l.b16 %v1233
    %v2496 = vunpack.c.h.b16 %v1233
    %v2497 = vunpack.c.l.b16 %v1234
    %v2498 = vunpack.c.h.b16 %v1234
    %v2499 = vunpack.c.l.b16 %v1235
    %v2500 = vunpack.c.h.b16 %v1235
    %v2501 = vunpack.c.l.b16 %v1236
    %v2502 = vunpack.c.h.b16 %v1236
    %v2503 = vunpack.c.l.b16 %v1237
    %v2504 = vunpack.c.h.b16 %v1237
    %v2505 = vunpack.c.l.b16 %v1238
    %v2506 = vunpack.c.h.b16 %v1238
    %v2507 = vunpack.c.l.b16 %v1239
    %v2508 = vunpack.c.h.b16 %v1239
    %v2509 = vunpack.c.l.b16 %v1240
    %v2510 = vunpack.c.h.b16 %v1240
    %v2511 = vunpack.c.l.b16 %v1241
    %v2512 = vunpack.c.h.b16 %v1241
    %v2513 = vunpack.c.l.b16 %v1242
    %v2514 = vunpack.c.h.b16 %v1242
    %v2515 = vunpack.c.l.b16 %v1243
    %v2516 = vunpack.c.h.b16 %v1243
    %v2517 = vunpack.c.l.b16 %v1244
    %v2518 = vunpack.c.h.b16 %v1244
    %v2519 = vunpack.c.l.b16 %v1245
    %v2520 = vunpack.c.h.b16 %v1245
    %v2521 = vunpack.c.l.b16 %v1246
    %v2522 = vunpack.c.h.b16 %v1246
    %v2523 = vunpack.c.l.b16 %v1247
    %v2524 = vunpack.c.h.b16 %v1247
    %v2525 = vunpack.c.l.b16 %v1248
    %v2526 = vunpack.c.h.b16 %v1248
    %v2527 = vunpack.c.l.b16 %v1249
    %v2528 = vunpack.c.h.b16 %v1249
    %v2529 = vunpack.c.l.b16 %v1250
    %v2530 = vunpack.c.h.b16 %v1250
    %v2531 = vunpack.c.l.b16 %v1251
    %v2532 = vunpack.c.h.b16 %v1251
    %v2533 = vunpack.c.l.b16 %v1252
    %v2534 = vunpack.c.h.b16 %v1252
    %v2535 = vunpack.c.l.b16 %v1253
    %v2536 = vunpack.c.h.b16 %v1253
    %v2537 = vunpack.c.l.b16 %v1254
    %v2538 = vunpack.c.h.b16 %v1254
    %v2539 = vunpack.c.l.b16 %v1255
    %v2540 = vunpack.c.h.b16 %v1255
    %v2541 = vunpack.c.l.b16 %v1256
    %v2542 = vunpack.c.h.b16 %v1256
    %v2543 = vunpack.c.l.b16 %v1257
    %v2544 = vunpack.c.h.b16 %v1257
    %v2545 = vunpack.c.l.b16 %v1258
    %v2546 = vunpack.c.h.b16 %v1258
    %v2547 = vunpack.c.l.b16 %v1259
    %v2548 = vunpack.c.h.b16 %v1259
    %v2549 = vunpack.c.l.b16 %v1260
    %v2550 = vunpack.c.h.b16 %v1260
    %v2551 = vunpack.c.l.b16 %v1261
    %v2552 = vunpack.c.h.b16 %v1261
    %v2553 = vunpack.c.l.b16 %v1262
    %v2554 = vunpack.c.h.b16 %v1262
    %v2555 = vunpack.c.l.b16 %v1263
    %v2556 = vunpack.c.h.b16 %v1263
    %v2557 = vunpack.c.l.b16 %v1264
    %v2558 = vunpack.c.h.b16 %v1264
    %v2559 = vunpack.c.l.b16 %v1265
    %v2560 = vunpack.c.h.b16 %v1265
    %v2561 = vunpack.c.l.b16 %v1266
    %v2562 = vunpack.c.h.b16 %v1266
    %v2563 = vunpack.c.l.b16 %v1267
    %v2564 = vunpack.c.h.b16 %v1267
    %v2565 = vunpack.c.l.b16 %v1268
    %v2566 = vunpack.c.h.b16 %v1268
    %v2567 = vunpack.c.l.b16 %v1269
    %v2568 = vunpack.c.h.b16 %v1269
    %v2569 = vunpack.c.l.b16 %v1270
    %v2570 = vunpack.c.h.b16 %v1270
    %v2571 = vunpack.c.l.b16 %v1271
    %v2572 = vunpack.c.h.b16 %v1271
    %v2573 = vunpack.c.l.b16 %v1272
    %v2574 = vunpack.c.h.b16 %v1272
    %v2575 = vunpack.c.l.b16 %v1273
    %v2576 = vunpack.c.h.b16 %v1273
    %v2577 = vunpack.c.l.b16 %v1274
    %v2578 = vunpack.c.h.b16 %v1274
    %v2579 = vunpack.c.l.b16 %v1275
    %v2580 = vunpack.c.h.b16 %v1275
    %v2581 = vunpack.c.l.b16 %v1276
    %v2582 = vunpack.c.h.b16 %v1276
    %v2583 = vunpack.c.l.b16 %v1277
    %v2584 = vunpack.c.h.b16 %v1277
    %v2585 = vunpack.c.l.b16 %v1278
    %v2586 = vunpack.c.h.b16 %v1278
    %v2587 = vunpack.c.l.b16 %v1279
    %v2588 = vunpack.c.h.b16 %v1279
    %v2589 = vunpack.c.l.b16 %v1280
    %v2590 = vunpack.c.h.b16 %v1280
    %v2591 = vunpack.c.l.b16 %v1281
    %v2592 = vunpack.c.h.b16 %v1281
    %v2593 = vunpack.c.l.b16 %v1282
    %v2594 = vunpack.c.h.b16 %v1282
    %v2595 = vunpack.c.l.b16 %v1283
    %v2596 = vunpack.c.h.b16 %v1283
    %v2597 = vunpack.c.l.b16 %v1284
    %v2598 = vunpack.c.h.b16 %v1284
    %v2599 = vunpack.c.l.b16 %v1285
    %v2600 = vunpack.c.h.b16 %v1285
    %v2601 = vunpack.c.l.b16 %v1286
    %v2602 = vunpack.c.h.b16 %v1286
    %v2603 = vunpack.c.l.b16 %v1287
    %v2604 = vunpack.c.h.b16 %v1287
    %v2605 = vunpack.c.l.b16 %v1288
    %v2606 = vunpack.c.h.b16 %v1288
    %v2607 = vunpack.c.l.b16 %v1289
    %v2608 = vunpack.c.h.b16 %v1289
    %v2609 = vunpack.c.l.b16 %v1290
    %v2610 = vunpack.c.h.b16 %v1290
    %v2611 = vunpack.c.l.b16 %v1291
    %v2612 = vunpack.c.h.b16 %v1291
    %v2613 = vunpack.c.l.b16 %v1292
    %v2614 = vunpack.c.h.b16 %v1292
    %v2615 = vunpack.c.l.b16 %v1293
    %v2616 = vunpack.c.h.b16 %v1293
    %v2617 = vunpack.c.l.b16 %v1294
    %v2618 = vunpack.c.h.b16 %v1294
    %v2619 = vunpack.c.l.b16 %v1295
    %v2620 = vunpack.c.h.b16 %v1295
    %v2621 = vunpack.c.l.b16 %v1296
    %v2622 = vunpack.c.h.b16 %v1296
    %v2623 = vunpack.c.l.b16 %v1297
    %v2624 = vunpack.c.h.b16 %v1297
    %v2625 = vunpack.c.l.b16 %v1298
    %v2626 = vunpack.c.h.b16 %v1298
    %v2627 = vunpack.c.l.b16 %v1299
    %v2628 = vunpack.c.h.b16 %v1299
    %v2629 = vunpack.c.l.b16 %v1300
    %v2630 = vunpack.c.h.b16 %v1300
    %v2631 = vunpack.c.l.b16 %v1301
    %v2632 = vunpack.c.h.b16 %v1301
    %v2633 = vunpack.c.l.b16 %v1302
    %v2634 = vunpack.c.h.b16 %v1302
    %v2635 = vunpack.c.l.b16 %v1303
    %v2636 = vunpack.c.h.b16 %v1303
    %v2637 = vunpack.c.l.b16 %v1304
    %v2638 = vunpack.c.h.b16 %v1304
    %v2639 = vunpack.c.l.b16 %v1305
    %v2640 = vunpack.c.h.b16 %v1305
    %v2641 = vunpack.c.l.b16 %v1306
    %v2642 = vunpack.c.h.b16 %v1306
    %v2643 = vunpack.c.l.b16 %v1307
    %v2644 = vunpack.c.h.b16 %v1307
    %v2645 = vunpack.c.l.b16 %v1308
    %v2646 = vunpack.c.h.b16 %v1308
    %v2647 = vunpack.c.l.b16 %v1309
    %v2648 = vunpack.c.h.b16 %v1309
    %v2649 = vunpack.c.l.b16 %v1310
    %v2650 = vunpack.c.h.b16 %v1310
    %v2651 = vunpack.c.l.b16 %v1311
    %v2652 = vunpack.c.h.b16 %v1311
    %v2653 = vunpack.c.l.b16 %v1312
    %v2654 = vunpack.c.h.b16 %v1312
    %v2655 = vunpack.c.l.b16 %v1313
    %v2656 = vunpack.c.h.b16 %v1313
    %v2657 = vunpack.c.l.b16 %v1314
    %v2658 = vunpack.c.h.b16 %v1314
    %v2659 = vunpack.c.l.b16 %v1315
    %v2660 = vunpack.c.h.b16 %v1315
    %v2661 = vunpack.c.l.b16 %v1316
    %v2662 = vunpack.c.h.b16 %v1316
    %v2663 = vunpack.c.l.b16 %v1317
    %v2664 = vunpack.c.h.b16 %v1317
    %v2665 = vunpack.c.l.b16 %v1318
    %v2666 = vunpack.c.h.b16 %v1318
    %v2667 = vunpack.c.l.b16 %v1319
    %v2668 = vunpack.c.h.b16 %v1319
    %v2669 = vunpack.c.l.b16 %v1320
    %v2670 = vunpack.c.h.b16 %v1320
    %v2671 = vunpack.c.l.b16 %v1321
    %v2672 = vunpack.c.h.b16 %v1321
    %v2673 = vunpack.c.l.b16 %v1322
    %v2674 = vunpack.c.h.b16 %v1322
    %v2675 = vunpack.c.l.b16 %v1323
    %v2676 = vunpack.c.h.b16 %v1323
    %v2677 = vunpack.c.l.b16 %v1324
    %v2678 = vunpack.c.h.b16 %v1324
    %v2679 = vunpack.c.l.b16 %v1325
    %v2680 = vunpack.c.h.b16 %v1325
    %v2681 = vunpack.c.l.b16 %v1326
    %v2682 = vunpack.c.h.b16 %v1326
    %v2683 = vunpack.c.l.b16 %v1327
    %v2684 = vunpack.c.h.b16 %v1327
    %v2685 = vunpack.c.l.b16 %v1328
    %v2686 = vunpack.c.h.b16 %v1328
    %v2687 = vunpack.c.l.b16 %v1329
    %v2688 = vunpack.c.h.b16 %v1329
    %v2689 = vunpack.c.l.b16 %v1330
    %v2690 = vunpack.c.h.b16 %v1330
    %v2691 = vunpack.c.l.b16 %v1331
    %v2692 = vunpack.c.h.b16 %v1331
    %v2693 = vunpack.c.l.b16 %v1332
    %v2694 = vunpack.c.h.b16 %v1332
    %v2695 = vunpack.c.l.b16 %v1333
    %v2696 = vunpack.c.h.b16 %v1333
    %v2697 = vunpack.c.l.b16 %v1334
    %v2698 = vunpack.c.h.b16 %v1334
    %v2699 = vunpack.c.l.b16 %v1335
    %v2700 = vunpack.c.h.b16 %v1335
    %v2701 = vunpack.c.l.b16 %v1336
    %v2702 = vunpack.c.h.b16 %v1336
    %v2703 = vunpack.c.l.b16 %v1337
    %v2704 = vunpack.c.h.b16 %v1337
    %v2705 = vunpack.c.l.b16 %v1338
    %v2706 = vunpack.c.h.b16 %v1338
    %v2707 = vunpack.c.l.b16 %v1339
    %v2708 = vunpack.c.h.b16 %v1339
    %v2709 = vunpack.c.l.b16 %v1340
    %v2710 = vunpack.c.h.b16 %v1340
    %v2711 = vunpack.c.l.b16 %v1341
    %v2712 = vunpack.c.h.b16 %v1341
    %v2713 = vunpack.c.l.b16 %v1342
    %v2714 = vunpack.c.h.b16 %v1342
    %v2715 = vunpack.c.l.b16 %v1343
    %v2716 = vunpack.c.h.b16 %v1343
    %v2717 = vunpack.c.l.b16 %v1344
    %v2718 = vunpack.c.h.b16 %v1344
    %v2719 = vunpack.c.l.b16 %v1345
    %v2720 = vunpack.c.h.b16 %v1345
    %v2721 = vunpack.c.l.b16 %v1346
    %v2722 = vunpack.c.h.b16 %v1346
    %v2723 = vunpack.c.l.b16 %v1347
    %v2724 = vunpack.c.h.b16 %v1347
    %v2725 = vunpack.c.l.b16 %v1348
    %v2726 = vunpack.c.h.b16 %v1348
    %v2727 = vunpack.c.l.b16 %v1349
    %v2728 = vunpack.c.h.b16 %v1349
    %v2729 = vunpack.c.l.b16 %v1350
    %v2730 = vunpack.c.h.b16 %v1350
    %v2731 = vunpack.c.l.b16 %v1351
    %v2732 = vunpack.c.h.b16 %v1351
    %v2733 = vunpack.c.l.b16 %v1352
    %v2734 = vunpack.c.h.b16 %v1352
    %v2735 = vunpack.c.l.b16 %v1353
    %v2736 = vunpack.c.h.b16 %v1353
    %v2737 = vunpack.c.l.b16 %v1354
    %v2738 = vunpack.c.h.b16 %v1354
    %v2739 = vunpack.c.l.b16 %v1355
    %v2740 = vunpack.c.h.b16 %v1355
    %v2741 = vunpack.c.l.b16 %v1356
    %v2742 = vunpack.c.h.b16 %v1356
    %v2743 = vunpack.c.l.b16 %v1357
    %v2744 = vunpack.c.h.b16 %v1357
    %v2745 = vunpack.c.l.b16 %v1358
    %v2746 = vunpack.c.h.b16 %v1358
    %v2747 = vunpack.c.l.b16 %v1359
    %v2748 = vunpack.c.h.b16 %v1359
    %v2749 = vunpack.c.l.b16 %v1360
    %v2750 = vunpack.c.h.b16 %v1360
    %v2751 = vunpack.c.l.b16 %v1361
    %v2752 = vunpack.c.h.b16 %v1361
    %v2753 = vunpack.c.l.b16 %v1362
    %v2754 = vunpack.c.h.b16 %v1362
    %v2755 = vunpack.c.l.b16 %v1363
    %v2756 = vunpack.c.h.b16 %v1363
    %v2757 = vunpack.c.l.b16 %v1364
    %v2758 = vunpack.c.h.b16 %v1364
    %v2759 = vunpack.c.l.b16 %v1365
    %v2760 = vunpack.c.h.b16 %v1365
    %v2761 = vunpack.c.l.b16 %v1366
    %v2762 = vunpack.c.h.b16 %v1366
    %v2763 = vunpack.c.l.b16 %v1367
    %v2764 = vunpack.c.h.b16 %v1367
    %v2765 = vunpack.c.l.b16 %v1368
    %v2766 = vunpack.c.h.b16 %v1368
    %v2767 = vunpack.c.l.b16 %v1369
    %v2768 = vunpack.c.h.b16 %v1369
    %v2769 = vunpack.c.l.b16 %v1370
    %v2770 = vunpack.c.h.b16 %v1370
    %v2771 = vunpack.c.l.b16 %v1371
    %v2772 = vunpack.c.h.b16 %v1371
    %v2773 = vunpack.c.l.b16 %v1372
    %v2774 = vunpack.c.h.b16 %v1372
    %v2775 = vunpack.c.l.b16 %v1373
    %v2776 = vunpack.c.h.b16 %v1373
    %v2777 = vunpack.c.l.b16 %v1374
    %v2778 = vunpack.c.h.b16 %v1374
    %v2779 = vunpack.c.l.b16 %v1375
    %v2780 = vunpack.c.h.b16 %v1375
    %v2781 = vunpack.c.l.b16 %v1376
    %v2782 = vunpack.c.h.b16 %v1376
    %v2783 = vunpack.c.l.b16 %v1377
    %v2784 = vunpack.c.h.b16 %v1377
    %v2785 = vunpack.c.l.b16 %v1378
    %v2786 = vunpack.c.h.b16 %v1378
    %v2787 = vunpack.c.l.b16 %v1379
    %v2788 = vunpack.c.h.b16 %v1379
    %v2789 = vunpack.c.l.b16 %v1380
    %v2790 = vunpack.c.h.b16 %v1380
    %v2791 = vunpack.c.l.b16 %v1381
    %v2792 = vunpack.c.h.b16 %v1381
    %v2793 = vunpack.c.l.b16 %v1382
    %v2794 = vunpack.c.h.b16 %v1382
    %v2795 = vunpack.c.l.b16 %v1383
    %v2796 = vunpack.c.h.b16 %v1383
    %v2797 = vunpack.c.l.b16 %v1384
    %v2798 = vunpack.c.h.b16 %v1384
    %v2799 = vunpack.c.l.b16 %v1385
    %v2800 = vunpack.c.h.b16 %v1385
    %v2801 = vunpack.c.l.b16 %v1386
    %v2802 = vunpack.c.h.b16 %v1386
    %v2803 = vunpack.c.l.b16 %v1387
    %v2804 = vunpack.c.h.b16 %v1387
    %v2805 = vunpack.c.l.b16 %v1388
    %v2806 = vunpack.c.h.b16 %v1388
    %v2807 = vunpack.c.l.b16 %v1389
    %v2808 = vunpack.c.h.b16 %v1389
    %v2809 = vunpack.c.l.b16 %v1390
    %v2810 = vunpack.c.h.b16 %v1390
    %v2811 = vunpack.c.l.b16 %v1391
    %v2812 = vunpack.c.h.b16 %v1391
    %v2813 = vunpack.c.l.b16 %v1392
    %v2814 = vunpack.c.h.b16 %v1392
    %v2815 = vunpack.c.l.b16 %v1393
    %v2816 = vunpack.c.h.b16 %v1393
    %v2817 = vunpack.c.l.b16 %v1394
    %v2818 = vunpack.c.h.b16 %v1394
    %v2819 = vunpack.c.l.b16 %v1395
    %v2820 = vunpack.c.h.b16 %v1395
    %v2821 = vunpack.c.l.b16 %v1396
    %v2822 = vunpack.c.h.b16 %v1396
    %v2823 = vunpack.c.l.b16 %v1397
    %v2824 = vunpack.c.h.b16 %v1397
    %v2825 = vunpack.c.l.b16 %v1398
    %v2826 = vunpack.c.h.b16 %v1398
    %v2827 = vunpack.c.l.b16 %v1399
    %v2828 = vunpack.c.h.b16 %v1399
    %v2829 = vunpack.c.l.b16 %v1400
    %v2830 = vunpack.c.h.b16 %v1400
    %v2831 = vunpack.c.l.b16 %v1401
    %v2832 = vunpack.c.h.b16 %v1401
    %v2833 = vunpack.c.l.b16 %v1402
    %v2834 = vunpack.c.h.b16 %v1402
    %v2835 = vunpack.c.l.b16 %v1403
    %v2836 = vunpack.c.h.b16 %v1403
    %v2837 = vunpack.c.l.b16 %v1404
    %v2838 = vunpack.c.h.b16 %v1404
    %v2839 = vunpack.c.l.b16 %v1405
    %v2840 = vunpack.c.h.b16 %v1405
    %v2841 = vunpack.c.l.b16 %v1406
    %v2842 = vunpack.c.h.b16 %v1406
    %v2843 = vunpack.c.l.b16 %v1407
    %v2844 = vunpack.c.h.b16 %v1407
    %v2845 = vunpack.c.l.b16 %v1408
    %v2846 = vunpack.c.h.b16 %v1408
    %v2847 = vunpack.c.l.b16 %v1409
    %v2848 = vunpack.c.h.b16 %v1409
    %v2849 = vunpack.c.l.b16 %v1410
    %v2850 = vunpack.c.h.b16 %v1410
    %v2851 = vunpack.c.l.b16 %v1411
    %v2852 = vunpack.c.h.b16 %v1411
    %v2853 = vunpack.c.l.b16 %v1412
    %v2854 = vunpack.c.h.b16 %v1412
    %v2855 = vunpack.c.l.b16 %v1413
    %v2856 = vunpack.c.h.b16 %v1413
    %v2857 = vunpack.c.l.b16 %v1414
    %v2858 = vunpack.c.h.b16 %v1414
    %v2859 = vunpack.c.l.b16 %v1415
    %v2860 = vunpack.c.h.b16 %v1415
    %v2861 = vunpack.c.l.b16 %v1416
    %v2862 = vunpack.c.h.b16 %v1416
    %v2863 = vunpack.c.l.b16 %v1417
    %v2864 = vunpack.c.h.b16 %v1417
    %v2865 = vunpack.c.l.b16 %v1418
    %v2866 = vunpack.c.h.b16 %v1418
    %v2867 = vunpack.c.l.b16 %v1419
    %v2868 = vunpack.c.h.b16 %v1419
    %v2869 = vunpack.c.l.b16 %v1420
    %v2870 = vunpack.c.h.b16 %v1420
    %v2871 = vunpack.c.l.b16 %v1421
    %v2872 = vunpack.c.h.b16 %v1421
    %v2873 = vunpack.c.l.b16 %v1422
    %v2874 = vunpack.c.h.b16 %v1422
    %v2875 = vunpack.c.l.b16 %v1423
    %v2876 = vunpack.c.h.b16 %v1423
    %v2877 = vunpack.c.l.b16 %v1424
    %v2878 = vunpack.c.h.b16 %v1424
    %v2879 = vunpack.c.l.b16 %v1425
    %v2880 = vunpack.c.h.b16 %v1425
    %v2881 = vunpack.c.l.b16 %v1426
    %v2882 = vunpack.c.h.b16 %v1426
    %v2883 = vunpack.c.l.b16 %v1427
    %v2884 = vunpack.c.h.b16 %v1427
    %v2885 = vunpack.c.l.b16 %v1428
    %v2886 = vunpack.c.h.b16 %v1428
    %v2887 = vunpack.c.l.b16 %v1429
    %v2888 = vunpack.c.h.b16 %v1429
    %v2889 = vunpack.c.l.b16 %v1430
    %v2890 = vunpack.c.h.b16 %v1430
    %v2891 = vunpack.c.l.b16 %v1431
    %v2892 = vunpack.c.h.b16 %v1431
    %v2893 = vunpack.c.l.b16 %v1432
    %v2894 = vunpack.c.h.b16 %v1432
    %v2895 = vunpack.c.l.b16 %v1433
    %v2896 = vunpack.c.h.b16 %v1433
    %v2897 = vunpack.c.l.b16 %v1434
    %v2898 = vunpack.c.h.b16 %v1434
    %v2899 = vunpack.c.l.b16 %v1435
    %v2900 = vunpack.c.h.b16 %v1435
    %v2901 = vunpack.c.l.b16 %v1436
    %v2902 = vunpack.c.h.b16 %v1436
    %v2903 = vunpack.c.l.b16 %v1437
    %v2904 = vunpack.c.h.b16 %v1437
    %v2905 = vunpack.c.l.b16 %v1438
    %v2906 = vunpack.c.h.b16 %v1438
    %v2907 = vunpack.c.l.b16 %v1439
    %v2908 = vunpack.c.h.b16 %v1439
    %v2909 = vunpack.c.l.b16 %v1440
    %v2910 = vunpack.c.h.b16 %v1440
    %v2911 = vunpack.c.l.b16 %v1441
    %v2912 = vunpack.c.h.b16 %v1441
    %v2913 = vunpack.c.l.b16 %v1442
    %v2914 = vunpack.c.h.b16 %v1442
    %v2915 = vunpack.c.l.b16 %v1443
    %v2916 = vunpack.c.h.b16 %v1443
    %v2917 = vunpack.c.l.b16 %v1444
    %v2918 = vunpack.c.h.b16 %v1444
    %v2919 = vunpack.c.l.b16 %v1445
    %v2920 = vunpack.c.h.b16 %v1445
    %v2921 = vunpack.c.l.b16 %v1446
    %v2922 = vunpack.c.h.b16 %v1446
    %v2923 = vunpack.c.l.b16 %v1447
    %v2924 = vunpack.c.h.b16 %v1447
    %v2925 = vunpack.c.l.b16 %v1448
    %v2926 = vunpack.c.h.b16 %v1448
    %v2927 = vunpack.c.l.b16 %v1449
    %v2928 = vunpack.c.h.b16 %v1449
    %v2929 = vunpack.c.l.b16 %v1450
    %v2930 = vunpack.c.h.b16 %v1450
    %v2931 = vunpack.c.l.b16 %v1451
    %v2932 = vunpack.c.h.b16 %v1451
    %v2933 = vunpack.c.l.b16 %v1452
    %v2934 = vunpack.c.h.b16 %v1452
    %v2935 = vunpack.c.l.b16 %v1453
    %v2936 = vunpack.c.h.b16 %v1453
    %v2937 = vunpack.c.l.b16 %v1454
    %v2938 = vunpack.c.h.b16 %v1454
    %v2939 = vunpack.c.l.b16 %v1455
    %v2940 = vunpack.c.h.b16 %v1455
    %v2941 = vunpack.c.l.b16 %v1456
    %v2942 = vunpack.c.h.b16 %v1456
    %v2943 = vunpack.c.l.b16 %v1457
    %v2944 = vunpack.c.h.b16 %v1457
    %v2945 = vunpack.c.l.b16 %v1458
    %v2946 = vunpack.c.h.b16 %v1458
    %v2947 = vunpack.c.l.b16 %v1459
    %v2948 = vunpack.c.h.b16 %v1459
    %v2949 = vunpack.c.l.b16 %v1460
    %v2950 = vunpack.c.h.b16 %v1460
    %v2951 = vunpack.c.l.b16 %v1461
    %v2952 = vunpack.c.h.b16 %v1461
    %v2953 = vunpack.c.l.b16 %v1462
    %v2954 = vunpack.c.h.b16 %v1462
    %v2955 = vunpack.c.l.b16 %v1463
    %v2956 = vunpack.c.h.b16 %v1463
    %v2957 = vunpack.c.l.b16 %v1464
    %v2958 = vunpack.c.h.b16 %v1464
    %v2959 = vunpack.c.l.b16 %v1465
    %v2960 = vunpack.c.h.b16 %v1465
    %v2961 = vunpack.c.l.b16 %v1466
    %v2962 = vunpack.c.h.b16 %v1466
    %v2963 = vunpack.c.l.b16 %v1467
    %v2964 = vunpack.c.h.b16 %v1467
    %v2965 = vunpack.c.l.b16 %v1468
    %v2966 = vunpack.c.h.b16 %v1468
    %v2967 = vunpack.c.l.b16 %v1469
    %v2968 = vunpack.c.h.b16 %v1469
    %v2969 = vunpack.c.l.b16 %v1470
    %v2970 = vunpack.c.h.b16 %v1470
    %v2971 = vunpack.c.l.b16 %v1471
    %v2972 = vunpack.c.h.b16 %v1471
    %v2973 = vunpack.c.l.b16 %v1472
    %v2974 = vunpack.c.h.b16 %v1472
    %v2975 = vunpack.c.l.b16 %v1473
    %v2976 = vunpack.c.h.b16 %v1473
    %v2977 = vunpack.c.l.b16 %v1474
    %v2978 = vunpack.c.h.b16 %v1474
    %v2979 = vunpack.c.l.b16 %v1475
    %v2980 = vunpack.c.h.b16 %v1475
    %v2981 = vunpack.c.l.b16 %v1476
    %v2982 = vunpack.c.h.b16 %v1476
    %v2983 = vunpack.c.l.b16 %v1477
    %v2984 = vunpack.c.h.b16 %v1477
    %v2985 = vunpack.c.l.b16 %v1478
    %v2986 = vunpack.c.h.b16 %v1478
    %v2987 = vunpack.c.l.b16 %v1479
    %v2988 = vunpack.c.h.b16 %v1479
    %v2989 = vunpack.c.l.b16 %v1480
    %v2990 = vunpack.c.h.b16 %v1480
    %v2991 = vunpack.c.l.b16 %v1481
    %v2992 = vunpack.c.h.b16 %v1481
    %v2993 = vunpack.c.l.b16 %v1482
    %v2994 = vunpack.c.h.b16 %v1482
    %v2995 = vunpack.c.l.b16 %v1483
    %v2996 = vunpack.c.h.b16 %v1483
    %v2997 = vunpack.c.l.b16 %v1484
    %v2998 = vunpack.c.h.b16 %v1484
    %v2999 = vunpack.c.l.b16 %v1485
    %v3000 = vunpack.c.h.b16 %v1485
    %v3001 = vunpack.c.l.b16 %v1486
    %v3002 = vunpack.c.h.b16 %v1486
    %v3003 = vunpack.c.l.b16 %v1487
    %v3004 = vunpack.c.h.b16 %v1487
    %v3005 = vunpack.c.l.b16 %v1488
    %v3006 = vunpack.c.h.b16 %v1488
    %v3007 = vunpack.c.l.b16 %v1489
    %v3008 = vunpack.c.h.b16 %v1489
    %v3009 = vunpack.c.l.b16 %v1490
    %v3010 = vunpack.c.h.b16 %v1490
    %v3011 = vunpack.c.l.b16 %v1491
    %v3012 = vunpack.c.h.b16 %v1491
    %v3013 = vunpack.c.l.b16 %v1492
    %v3014 = vunpack.c.h.b16 %v1492
    %v3015 = vunpack.c.l.b16 %v1493
    %v3016 = vunpack.c.h.b16 %v1493
    %v3017 = vunpack.c.l.b16 %v1494
    %v3018 = vunpack.c.h.b16 %v1494
    %v3019 = vunpack.c.l.b16 %v1495
    %v3020 = vunpack.c.h.b16 %v1495
    %v3021 = vunpack.c.l.b16 %v1496
    %v3022 = vunpack.c.h.b16 %v1496
    %v3023 = vunpack.c.l.b16 %v1497
    %v3024 = vunpack.c.h.b16 %v1497
    %v3025 = vunpack.c.l.b16 %v1498
    %v3026 = vunpack.c.h.b16 %v1498
    %v3027 = vunpack.c.l.b16 %v1499
    %v3028 = vunpack.c.h.b16 %v1499
    %v3029 = vunpack.c.l.b16 %v1500
    %v3030 = vunpack.c.h.b16 %v1500
    %v3031 = vunpack.c.l.b16 %v1501
    %v3032 = vunpack.c.h.b16 %v1501
    %v3033 = vunpack.c.l.b16 %v1502
    %v3034 = vunpack.c.h.b16 %v1502
    %v3035 = vunpack.c.l.b16 %v1503
    %v3036 = vunpack.c.h.b16 %v1503
    %v3037 = vunpack.c.l.b16 %v1504
    %v3038 = vunpack.c.h.b16 %v1504
    %v3039 = vunpack.c.l.b16 %v1505
    %v3040 = vunpack.c.h.b16 %v1505
    %v3041 = vunpack.c.l.b16 %v1506
    %v3042 = vunpack.c.h.b16 %v1506
    %v3043 = vunpack.c.l.b16 %v1507
    %v3044 = vunpack.c.h.b16 %v1507
    %v3045 = vunpack.c.l.b16 %v1508
    %v3046 = vunpack.c.h.b16 %v1508
    %v3047 = vunpack.c.l.b16 %v1509
    %v3048 = vunpack.c.h.b16 %v1509
    %v3049 = vunpack.c.l.b16 %v1510
    %v3050 = vunpack.c.h.b16 %v1510
    %v3051 = vunpack.c.l.b16 %v1511
    %v3052 = vunpack.c.h.b16 %v1511
    %v3053 = vunpack.c.l.b16 %v1512
    %v3054 = vunpack.c.h.b16 %v1512
    %v3055 = vunpack.c.l.b16 %v1513
    %v3056 = vunpack.c.h.b16 %v1513
    %v3057 = vunpack.c.l.b16 %v1514
    %v3058 = vunpack.c.h.b16 %v1514
    %v3059 = vunpack.c.l.b16 %v1515
    %v3060 = vunpack.c.h.b16 %v1515
    %v3061 = vunpack.c.l.b16 %v1516
    %v3062 = vunpack.c.h.b16 %v1516
    %v3063 = vunpack.c.l.b16 %v1517
    %v3064 = vunpack.c.h.b16 %v1517
    %v3065 = vunpack.c.l.b16 %v1518
    %v3066 = vunpack.c.h.b16 %v1518
    %v3067 = vunpack.c.l.b16 %v1519
    %v3068 = vunpack.c.h.b16 %v1519
    %v3069 = vunpack.c.l.b16 %v1520
    %v3070 = vunpack.c.h.b16 %v1520
    %v3071 = vunpack.c.l.b16 %v1521
    %v3072 = vunpack.c.h.b16 %v1521
    %v3073 = vunpack.c.l.b16 %v1522
    %v3074 = vunpack.c.h.b16 %v1522
    %v3075 = vunpack.c.l.b16 %v1523
    %v3076 = vunpack.c.h.b16 %v1523
    %v3077 = vunpack.c.l.b16 %v1524
    %v3078 = vunpack.c.h.b16 %v1524
    %v3079 = vunpack.c.l.b16 %v1525
    %v3080 = vunpack.c.h.b16 %v1525
    %v3081 = vunpack.c.l.b16 %v1526
    %v3082 = vunpack.c.h.b16 %v1526
    %v3083 = vunpack.c.l.b16 %v1527
    %v3084 = vunpack.c.h.b16 %v1527
    %v3085 = vunpack.c.l.b16 %v1528
    %v3086 = vunpack.c.h.b16 %v1528
    %v3087 = vunpack.c.l.b16 %v1529
    %v3088 = vunpack.c.h.b16 %v1529
    %v3089 = vunpack.c.l.b16 %v1530
    %v3090 = vunpack.c.h.b16 %v1530
    %v3091 = vunpack.c.l.b16 %v1531
    %v3092 = vunpack.c.h.b16 %v1531
    %v3093 = vunpack.c.l.b16 %v1532
    %v3094 = vunpack.c.h.b16 %v1532
    %v3095 = vunpack.c.l.b16 %v1533
    %v3096 = vunpack.c.h.b16 %v1533
    %v3097 = vunpack.c.l.b16 %v1534
    %v3098 = vunpack.c.h.b16 %v1534
    %v3099 = vunpack.c.l.b16 %v1535
    %v3100 = vunpack.c.h.b16 %v1535
    %v3101 = vunpack.c.l.b16 %v1536
    %v3102 = vunpack.c.h.b16 %v1536
    %v3103 = vunpack.c.l.b16 %v1537
    %v3104 = vunpack.c.h.b16 %v1537
    %v3105 = vunpack.c.l.b16 %v1538
    %v3106 = vunpack.c.h.b16 %v1538
    %v3107 = vunpack.c.l.b16 %v1539
    %v3108 = vunpack.c.h.b16 %v1539
    %v3109 = vunpack.c.l.b16 %v1540
    %v3110 = vunpack.c.h.b16 %v1540
    %v3111 = vunpack.c.l.b16 %v1541
    %v3112 = vunpack.c.h.b16 %v1541
    %v3113 = vunpack.c.l.b16 %v1542
    %v3114 = vunpack.c.h.b16 %v1542
    %v3115 = vunpack.c.l.b16 %v1543
    %v3116 = vunpack.c.h.b16 %v1543
    %v3117 = vunpack.c.l.b16 %v1544
    %v3118 = vunpack.c.h.b16 %v1544
    %v3119 = vunpack.c.l.b16 %v1545
    %v3120 = vunpack.c.h.b16 %v1545
    %v3121 = vunpack.c.l.b16 %v1546
    %v3122 = vunpack.c.h.b16 %v1546
    %v3123 = vunpack.c.l.b16 %v1547
    %v3124 = vunpack.c.h.b16 %v1547
    %v3125 = vunpack.c.l.b16 %v1548
    %v3126 = vunpack.c.h.b16 %v1548
    %v3127 = vunpack.c.l.b16 %v1549
    %v3128 = vunpack.c.h.b16 %v1549
    %v3129 = vunpack.c.l.b16 %v1550
    %v3130 = vunpack.c.h.b16 %v1550
    %v3131 = vunpack.c.l.b16 %v1551
    %v3132 = vunpack.c.h.b16 %v1551
    %v3133 = vunpack.c.l.b16 %v1552
    %v3134 = vunpack.c.h.b16 %v1552
    %v3135 = vunpack.c.l.b16 %v1553
    %v3136 = vunpack.c.h.b16 %v1553
    %v3137 = vunpack.c.l.b16 %v1554
    %v3138 = vunpack.c.h.b16 %v1554
    %v3139 = vunpack.c.l.b16 %v1555
    %v3140 = vunpack.c.h.b16 %v1555
    %v3141 = vunpack.c.l.b16 %v1556
    %v3142 = vunpack.c.h.b16 %v1556
    %v3143 = vunpack.c.l.b16 %v1557
    %v3144 = vunpack.c.h.b16 %v1557
    %v3145 = vunpack.c.l.b16 %v1558
    %v3146 = vunpack.c.h.b16 %v1558
    %v3147 = vunpack.c.l.b16 %v1559
    %v3148 = vunpack.c.h.b16 %v1559
    %v3149 = vunpack.c.l.b16 %v1560
    %v3150 = vunpack.c.h.b16 %v1560
    %v3151 = vunpack.c.l.b16 %v1561
    %v3152 = vunpack.c.h.b16 %v1561
    %v3153 = vunpack.c.l.b16 %v1562
    %v3154 = vunpack.c.h.b16 %v1562
    %v3155 = vpack.c.b16 %v2147, %v2131
    %v3156 = vpack.c.b16 %v2148, %v2132
    %v3157 = vpack.c.b16 %v2149, %v2133
    %v3158 = vpack.c.b16 %v2150, %v2134
    %v3159 = vpack.c.b16 %v2151, %v2135
    %v3160 = vpack.c.b16 %v2152, %v2136
    %v3161 = vpack.c.b16 %v2153, %v2137
    %v3162 = vpack.c.b16 %v2154, %v2138
    %v3163 = vpack.c.b16 %v2155, %v2139
    %v3164 = vpack.c.b16 %v2156, %v2140
    %v3165 = vpack.c.b16 %v2157, %v2141
    %v3166 = vpack.c.b16 %v2158, %v2142
    %v3167 = vpack.c.b16 %v2159, %v2143
    %v3168 = vpack.c.b16 %v2160, %v2144
    %v3169 = vpack.c.b16 %v2161, %v2145
    %v3170 = vpack.c.b16 %v2162, %v2146
    %v3171 = vpack.c.b16 %v2179, %v2163
    %v3172 = vpack.c.b16 %v2180, %v2164
    %v3173 = vpack.c.b16 %v2181, %v2165
    %v3174 = vpack.c.b16 %v2182, %v2166
    %v3175 = vpack.c.b16 %v2183, %v2167
    %v3176 = vpack.c.b16 %v2184, %v2168
    %v3177 = vpack.c.b16 %v2185, %v2169
    %v3178 = vpack.c.b16 %v2186, %v2170
    %v3179 = vpack.c.b16 %v2187, %v2171
    %v3180 = vpack.c.b16 %v2188, %v2172
    %v3181 = vpack.c.b16 %v2189, %v2173
    %v3182 = vpack.c.b16 %v2190, %v2174
    %v3183 = vpack.c.b16 %v2191, %v2175
    %v3184 = vpack.c.b16 %v2192, %v2176
    %v3185 = vpack.c.b16 %v2193, %v2177
    %v3186 = vpack.c.b16 %v2194, %v2178
    %v3187 = vpack.c.b16 %v2211, %v2195
    %v3188 = vpack.c.b16 %v2212, %v2196
    %v3189 = vpack.c.b16 %v2213, %v2197
    %v3190 = vpack.c.b16 %v2214, %v2198
    %v3191 = vpack.c.b16 %v2215, %v2199
    %v3192 = vpack.c.b16 %v2216, %v2200
    %v3193 = vpack.c.b16 %v2217, %v2201
    %v3194 = vpack.c.b16 %v2218, %v2202
    %v3195 = vpack.c.b16 %v2219, %v2203
    %v3196 = vpack.c.b16 %v2220, %v2204
    %v3197 = vpack.c.b16 %v2221, %v2205
    %v3198 = vpack.c.b16 %v2222, %v2206
    %v3199 = vpack.c.b16 %v2223, %v2207
    %v3200 = vpack.c.b16 %v2224, %v2208
    %v3201 = vpack.c.b16 %v2225, %v2209
    %v3202 = vpack.c.b16 %v2226, %v2210
    %v3203 = vpack.c.b16 %v2243, %v2227
    %v3204 = vpack.c.b16 %v2244, %v2228
    %v3205 = vpack.c.b16 %v2245, %v2229
    %v3206 = vpack.c.b16 %v2246, %v2230
    %v3207 = vpack.c.b16 %v2247, %v2231
    %v3208 = vpack.c.b16 %v2248, %v2232
    %v3209 = vpack.c.b16 %v2249, %v2233
    %v3210 = vpack.c.b16 %v2250, %v2234
    %v3211 = vpack.c.b16 %v2251, %v2235
    %v3212 = vpack.c.b16 %v2252, %v2236
    %v3213 = vpack.c.b16 %v2253, %v2237
    %v3214 = vpack.c.b16 %v2254, %v2238
    %v3215 = vpack.c.b16 %v2255, %v2239
    %v3216 = vpack.c.b16 %v2256, %v2240
    %v3217 = vpack.c.b16 %v2257, %v2241
    %v3218 = vpack.c.b16 %v2258, %v2242
    %v3219 = vpack.c.b16 %v2275, %v2259
    %v3220 = vpack.c.b16 %v2276, %v2260
    %v3221 = vpack.c.b16 %v2277, %v2261
    %v3222 = vpack.c.b16 %v2278, %v2262
    %v3223 = vpack.c.b16 %v2279, %v2263
    %v3224 = vpack.c.b16 %v2280, %v2264
    %v3225 = vpack.c.b16 %v2281, %v2265
    %v3226 = vpack.c.b16 %v2282, %v2266
    %v3227 = vpack.c.b16 %v2283, %v2267
    %v3228 = vpack.c.b16 %v2284, %v2268
    %v3229 = vpack.c.b16 %v2285, %v2269
    %v3230 = vpack.c.b16 %v2286, %v2270
    %v3231 = vpack.c.b16 %v2287, %v2271
    %v3232 = vpack.c.b16 %v2288, %v2272
    %v3233 = vpack.c.b16 %v2289, %v2273
    %v3234 = vpack.c.b16 %v2290, %v2274
    %v3235 = vpack.c.b16 %v2307, %v2291
    %v3236 = vpack.c.b16 %v2308, %v2292
    %v3237 = vpack.c.b16 %v2309, %v2293
    %v3238 = vpack.c.b16 %v2310, %v2294
    %v3239 = vpack.c.b16 %v2311, %v2295
    %v3240 = vpack.c.b16 %v2312, %v2296
    %v3241 = vpack.c.b16 %v2313, %v2297
    %v3242 = vpack.c.b16 %v2314, %v2298
    %v3243 = vpack.c.b16 %v2315, %v2299
    %v3244 = vpack.c.b16 %v2316, %v2300
    %v3245 = vpack.c.b16 %v2317, %v2301
    %v3246 = vpack.c.b16 %v2318, %v2302
    %v3247 = vpack.c.b16 %v2319, %v2303
    %v3248 = vpack.c.b16 %v2320, %v2304
    %v3249 = vpack.c.b16 %v2321, %v2305
    %v3250 = vpack.c.b16 %v2322, %v2306
    %v3251 = vpack.c.b16 %v2339, %v2323
    %v3252 = vpack.c.b16 %v2340, %v2324
    %v3253 = vpack.c.b16 %v2341, %v2325
    %v3254 = vpack.c.b16 %v2342, %v2326
    %v3255 = vpack.c.b16 %v2343, %v2327
    %v3256 = vpack.c.b16 %v2344, %v2328
    %v3257 = vpack.c.b16 %v2345, %v2329
    %v3258 = vpack.c.b16 %v2346, %v2330
    %v3259 = vpack.c.b16 %v2347, %v2331
    %v3260 = vpack.c.b16 %v2348, %v2332
    %v3261 = vpack.c.b16 %v2349, %v2333
    %v3262 = vpack.c.b16 %v2350, %v2334
    %v3263 = vpack.c.b16 %v2351, %v2335
    %v3264 = vpack.c.b16 %v2352, %v2336
    %v3265 = vpack.c.b16 %v2353, %v2337
    %v3266 = vpack.c.b16 %v2354, %v2338
    %v3267 = vpack.c.b16 %v2371, %v2355
    %v3268 = vpack.c.b16 %v2372, %v2356
    %v3269 = vpack.c.b16 %v2373, %v2357
    %v3270 = vpack.c.b16 %v2374, %v2358
    %v3271 = vpack.c.b16 %v2375, %v2359
    %v3272 = vpack.c.b16 %v2376, %v2360
    %v3273 = vpack.c.b16 %v2377, %v2361
    %v3274 = vpack.c.b16 %v2378, %v2362
    %v3275 = vpack.c.b16 %v2379, %v2363
    %v3276 = vpack.c.b16 %v2380, %v2364
    %v3277 = vpack.c.b16 %v2381, %v2365
    %v3278 = vpack.c.b16 %v2382, %v2366
    %v3279 = vpack.c.b16 %v2383, %v2367
    %v3280 = vpack.c.b16 %v2384, %v2368
    %v3281 = vpack.c.b16 %v2385, %v2369
    %v3282 = vpack.c.b16 %v2386, %v2370
    %v3283 = vpack.c.b16 %v2403, %v2387
    %v3284 = vpack.c.b16 %v2404, %v2388
    %v3285 = vpack.c.b16 %v2405, %v2389
    %v3286 = vpack.c.b16 %v2406, %v2390
    %v3287 = vpack.c.b16 %v2407, %v2391
    %v3288 = vpack.c.b16 %v2408, %v2392
    %v3289 = vpack.c.b16 %v2409, %v2393
    %v3290 = vpack.c.b16 %v2410, %v2394
    %v3291 = vpack.c.b16 %v2411, %v2395
    %v3292 = vpack.c.b16 %v2412, %v2396
    %v3293 = vpack.c.b16 %v2413, %v2397
    %v3294 = vpack.c.b16 %v2414, %v2398
    %v3295 = vpack.c.b16 %v2415, %v2399
    %v3296 = vpack.c.b16 %v2416, %v2400
    %v3297 = vpack.c.b16 %v2417, %v2401
    %v3298 = vpack.c.b16 %v2418, %v2402
    %v3299 = vpack.c.b16 %v2435, %v2419
    %v3300 = vpack.c.b16 %v2436, %v2420
    %v3301 = vpack.c.b16 %v2437, %v2421
    %v3302 = vpack.c.b16 %v2438, %v2422
    %v3303 = vpack.c.b16 %v2439, %v2423
    %v3304 = vpack.c.b16 %v2440, %v2424
    %v3305 = vpack.c.b16 %v2441, %v2425
    %v3306 = vpack.c.b16 %v2442, %v2426
    %v3307 = vpack.c.b16 %v2443, %v2427
    %v3308 = vpack.c.b16 %v2444, %v2428
    %v3309 = vpack.c.b16 %v2445, %v2429
    %v3310 = vpack.c.b16 %v2446, %v2430
    %v3311 = vpack.c.b16 %v2447, %v2431
    %v3312 = vpack.c.b16 %v2448, %v2432
    %v3313 = vpack.c.b16 %v2449, %v2433
    %v3314 = vpack.c.b16 %v2450, %v2434
    %v3315 = vpack.c.b16 %v2467, %v2451
    %v3316 = vpack.c.b16 %v2468, %v2452
    %v3317 = vpack.c.b16 %v2469, %v2453
    %v3318 = vpack.c.b16 %v2470, %v2454
    %v3319 = vpack.c.b16 %v2471, %v2455
    %v3320 = vpack.c.b16 %v2472, %v2456
    %v3321 = vpack.c.b16 %v2473, %v2457
    %v3322 = vpack.c.b16 %v2474, %v2458
    %v3323 = vpack.c.b16 %v2475, %v2459
    %v3324 = vpack.c.b16 %v2476, %v2460
    %v3325 = vpack.c.b16 %v2477, %v2461
    %v3326 = vpack.c.b16 %v2478, %v2462
    %v3327 = vpack.c.b16 %v2479, %v2463
    %v3328 = vpack.c.b16 %v2480, %v2464
    %v3329 = vpack.c.b16 %v2481, %v2465
    %v3330 = vpack.c.b16 %v2482, %v2466
    %v3331 = vpack.c.b16 %v2499, %v2483
    %v3332 = vpack.c.b16 %v2500, %v2484
    %v3333 = vpack.c.b16 %v2501, %v2485
    %v3334 = vpack.c.b16 %v2502, %v2486
    %v3335 = vpack.c.b16 %v2503, %v2487
    %v3336 = vpack.c.b16 %v2504, %v2488
    %v3337 = vpack.c.b16 %v2505, %v2489
    %v3338 = vpack.c.b16 %v2506, %v2490
    %v3339 = vpack.c.b16 %v2507, %v2491
    %v3340 = vpack.c.b16 %v2508, %v2492
    %v3341 = vpack.c.b16 %v2509, %v2493
    %v3342 = vpack.c.b16 %v2510, %v2494
    %v3343 = vpack.c.b16 %v2511, %v2495
    %v3344 = vpack.c.b16 %v2512, %v2496
    %v3345 = vpack.c.b16 %v2513, %v2497
    %v3346 = vpack.c.b16 %v2514, %v2498
    %v3347 = vpack.c.b16 %v2531, %v2515
    %v3348 = vpack.c.b16 %v2532, %v2516
    %v3349 = vpack.c.b16 %v2533, %v2517
    %v3350 = vpack.c.b16 %v2534, %v2518
    %v3351 = vpack.c.b16 %v2535, %v2519
    %v3352 = vpack.c.b16 %v2536, %v2520
    %v3353 = vpack.c.b16 %v2537, %v2521
    %v3354 = vpack.c.b16 %v2538, %v2522
    %v3355 = vpack.c.b16 %v2539, %v2523
    %v3356 = vpack.c.b16 %v2540, %v2524
    %v3357 = vpack.c.b16 %v2541, %v2525
    %v3358 = vpack.c.b16 %v2542, %v2526
    %v3359 = vpack.c.b16 %v2543, %v2527
    %v3360 = vpack.c.b16 %v2544, %v2528
    %v3361 = vpack.c.b16 %v2545, %v2529
    %v3362 = vpack.c.b16 %v2546, %v2530
    %v3363 = vpack.c.b16 %v2563, %v2547
    %v3364 = vpack.c.b16 %v2564, %v2548
    %v3365 = vpack.c.b16 %v2565, %v2549
    %v3366 = vpack.c.b16 %v2566, %v2550
    %v3367 = vpack.c.b16 %v2567, %v2551
    %v3368 = vpack.c.b16 %v2568, %v2552
    %v3369 = vpack.c.b16 %v2569, %v2553
    %v3370 = vpack.c.b16 %v2570, %v2554
    %v3371 = vpack.c.b16 %v2571, %v2555
    %v3372 = vpack.c.b16 %v2572, %v2556
    %v3373 = vpack.c.b16 %v2573, %v2557
    %v3374 = vpack.c.b16 %v2574, %v2558
    %v3375 = vpack.c.b16 %v2575, %v2559
    %v3376 = vpack.c.b16 %v2576, %v2560
    %v3377 = vpack.c.b16 %v2577, %v2561
    %v3378 = vpack.c.b16 %v2578, %v2562
    %v3379 = vpack.c.b16 %v2595, %v2579
    %v3380 = vpack.c.b16 %v2596, %v2580
    %v3381 = vpack.c.b16 %v2597, %v2581
    %v3382 = vpack.c.b16 %v2598, %v2582
    %v3383 = vpack.c.b16 %v2599, %v2583
    %v3384 = vpack.c.b16 %v2600, %v2584
    %v3385 = vpack.c.b16 %v2601, %v2585
    %v3386 = vpack.c.b16 %v2602, %v2586
    %v3387 = vpack.c.b16 %v2603, %v2587
    %v3388 = vpack.c.b16 %v2604, %v2588
    %v3389 = vpack.c.b16 %v2605, %v2589
    %v3390 = vpack.c.b16 %v2606, %v2590
    %v3391 = vpack.c.b16 %v2607, %v2591
    %v3392 = vpack.c.b16 %v2608, %v2592
    %v3393 = vpack.c.b16 %v2609, %v2593
    %v3394 = vpack.c.b16 %v2610, %v2594
    %v3395 = vpack.c.b16 %v2627, %v2611
    %v3396 = vpack.c.b16 %v2628, %v2612
    %v3397 = vpack.c.b16 %v2629, %v2613
    %v3398 = vpack.c.b16 %v2630, %v2614
    %v3399 = vpack.c.b16 %v2631, %v2615
    %v3400 = vpack.c.b16 %v2632, %v2616
    %v3401 = vpack.c.b16 %v2633, %v2617
    %v3402 = vpack.c.b16 %v2634, %v2618
    %v3403 = vpack.c.b16 %v2635, %v2619
    %v3404 = vpack.c.b16 %v2636, %v2620
    %v3405 = vpack.c.b16 %v2637, %v2621
    %v3406 = vpack.c.b16 %v2638, %v2622
    %v3407 = vpack.c.b16 %v2639, %v2623
    %v3408 = vpack.c.b16 %v2640, %v2624
    %v3409 = vpack.c.b16 %v2641, %v2625
    %v3410 = vpack.c.b16 %v2642, %v2626
    %v3411 = vpack.c.b16 %v2659, %v2643
    %v3412 = vpack.c.b16 %v2660, %v2644
    %v3413 = vpack.c.b16 %v2661, %v2645
    %v3414 = vpack.c.b16 %v2662, %v2646
    %v3415 = vpack.c.b16 %v2663, %v2647
    %v3416 = vpack.c.b16 %v2664, %v2648
    %v3417 = vpack.c.b16 %v2665, %v2649
    %v3418 = vpack.c.b16 %v2666, %v2650
    %v3419 = vpack.c.b16 %v2667, %v2651
    %v3420 = vpack.c.b16 %v2668, %v2652
    %v3421 = vpack.c.b16 %v2669, %v2653
    %v3422 = vpack.c.b16 %v2670, %v2654
    %v3423 = vpack.c.b16 %v2671, %v2655
    %v3424 = vpack.c.b16 %v2672, %v2656
    %v3425 = vpack.c.b16 %v2673, %v2657
    %v3426 = vpack.c.b16 %v2674, %v2658
    %v3427 = vpack.c.b16 %v2691, %v2675
    %v3428 = vpack.c.b16 %v2692, %v2676
    %v3429 = vpack.c.b16 %v2693, %v2677
    %v3430 = vpack.c.b16 %v2694, %v2678
    %v3431 = vpack.c.b16 %v2695, %v2679
    %v3432 = vpack.c.b16 %v2696, %v2680
    %v3433 = vpack.c.b16 %v2697, %v2681
    %v3434 = vpack.c.b16 %v2698, %v2682
    %v3435 = vpack.c.b16 %v2699, %v2683
    %v3436 = vpack.c.b16 %v2700, %v2684
    %v3437 = vpack.c.b16 %v2701, %v2685
    %v3438 = vpack.c.b16 %v2702, %v2686
    %v3439 = vpack.c.b16 %v2703, %v2687
    %v3440 = vpack.c.b16 %v2704, %v2688
    %v3441 = vpack.c.b16 %v2705, %v2689
    %v3442 = vpack.c.b16 %v2706, %v2690
    %v3443 = vpack.c.b16 %v2723, %v2707
    %v3444 = vpack.c.b16 %v2724, %v2708
    %v3445 = vpack.c.b16 %v2725, %v2709
    %v3446 = vpack.c.b16 %v2726, %v2710
    %v3447 = vpack.c.b16 %v2727, %v2711
    %v3448 = vpack.c.b16 %v2728, %v2712
    %v3449 = vpack.c.b16 %v2729, %v2713
    %v3450 = vpack.c.b16 %v2730, %v2714
    %v3451 = vpack.c.b16 %v2731, %v2715
    %v3452 = vpack.c.b16 %v2732, %v2716
    %v3453 = vpack.c.b16 %v2733, %v2717
    %v3454 = vpack.c.b16 %v2734, %v2718
    %v3455 = vpack.c.b16 %v2735, %v2719
    %v3456 = vpack.c.b16 %v2736, %v2720
    %v3457 = vpack.c.b16 %v2737, %v2721
    %v3458 = vpack.c.b16 %v2738, %v2722
    %v3459 = vpack.c.b16 %v2755, %v2739
    %v3460 = vpack.c.b16 %v2756, %v2740
    %v3461 = vpack.c.b16 %v2757, %v2741
    %v3462 = vpack.c.b16 %v2758, %v2742
    %v3463 = vpack.c.b16 %v2759, %v2743
    %v3464 = vpack.c.b16 %v2760, %v2744
    %v3465 = vpack.c.b16 %v2761, %v2745
    %v3466 = vpack.c.b16 %v2762, %v2746
    %v3467 = vpack.c.b16 %v2763, %v2747
    %v3468 = vpack.c.b16 %v2764, %v2748
    %v3469 = vpack.c.b16 %v2765, %v2749
    %v3470 = vpack.c.b16 %v2766, %v2750
    %v3471 = vpack.c.b16 %v2767, %v2751
    %v3472 = vpack.c.b16 %v2768, %v2752
    %v3473 = vpack.c.b16 %v2769, %v2753
    %v3474 = vpack.c.b16 %v2770, %v2754
    %v3475 = vpack.c.b16 %v2787, %v2771
    %v3476 = vpack.c.b16 %v2788, %v2772
    %v3477 = vpack.c.b16 %v2789, %v2773
    %v3478 = vpack.c.b16 %v2790, %v2774
    %v3479 = vpack.c.b16 %v2791, %v2775
    %v3480 = vpack.c.b16 %v2792, %v2776
    %v3481 = vpack.c.b16 %v2793, %v2777
    %v3482 = vpack.c.b16 %v2794, %v2778
    %v3483 = vpack.c.b16 %v2795, %v2779
    %v3484 = vpack.c.b16 %v2796, %v2780
    %v3485 = vpack.c.b16 %v2797, %v2781
    %v3486 = vpack.c.b16 %v2798, %v2782
    %v3487 = vpack.c.b16 %v2799, %v2783
    %v3488 = vpack.c.b16 %v2800, %v2784
    %v3489 = vpack.c.b16 %v2801, %v2785
    %v3490 = vpack.c.b16 %v2802, %v2786
    %v3491 = vpack.c.b16 %v2819, %v2803
    %v3492 = vpack.c.b16 %v2820, %v2804
    %v3493 = vpack.c.b16 %v2821, %v2805
    %v3494 = vpack.c.b16 %v2822, %v2806
    %v3495 = vpack.c.b16 %v2823, %v2807
    %v3496 = vpack.c.b16 %v2824, %v2808
    %v3497 = vpack.c.b16 %v2825, %v2809
    %v3498 = vpack.c.b16 %v2826, %v2810
    %v3499 = vpack.c.b16 %v2827, %v2811
    %v3500 = vpack.c.b16 %v2828, %v2812
    %v3501 = vpack.c.b16 %v2829, %v2813
    %v3502 = vpack.c.b16 %v2830, %v2814
    %v3503 = vpack.c.b16 %v2831, %v2815
    %v3504 = vpack.c.b16 %v2832, %v2816
    %v3505 = vpack.c.b16 %v2833, %v2817
    %v3506 = vpack.c.b16 %v2834, %v2818
    %v3507 = vpack.c.b16 %v2851, %v2835
    %v3508 = vpack.c.b16 %v2852, %v2836
    %v3509 = vpack.c.b16 %v2853, %v2837
    %v3510 = vpack.c.b16 %v2854, %v2838
    %v3511 = vpack.c.b16 %v2855, %v2839
    %v3512 = vpack.c.b16 %v2856, %v2840
    %v3513 = vpack.c.b16 %v2857, %v2841
    %v3514 = vpack.c.b16 %v2858, %v2842
    %v3515 = vpack.c.b16 %v2859, %v2843
    %v3516 = vpack.c.b16 %v2860, %v2844
    %v3517 = vpack.c.b16 %v2861, %v2845
    %v3518 = vpack.c.b16 %v2862, %v2846
    %v3519 = vpack.c.b16 %v2863, %v2847
    %v3520 = vpack.c.b16 %v2864, %v2848
    %v3521 = vpack.c.b16 %v2865, %v2849
    %v3522 = vpack.c.b16 %v2866, %v2850
    %v3523 = vpack.c.b16 %v2883, %v2867
    %v3524 = vpack.c.b16 %v2884, %v2868
    %v3525 = vpack.c.b16 %v2885, %v2869
    %v3526 = vpack.c.b16 %v2886, %v2870
    %v3527 = vpack.c.b16 %v2887, %v2871
    %v3528 = vpack.c.b16 %v2888, %v2872
    %v3529 = vpack.c.b16 %v2889, %v2873
    %v3530 = vpack.c.b16 %v2890, %v2874
    %v3531 = vpack.c.b16 %v2891, %v2875
    %v3532 = vpack.c.b16 %v2892, %v2876
    %v3533 = vpack.c.b16 %v2893, %v2877
    %v3534 = vpack.c.b16 %v2894, %v2878
    %v3535 = vpack.c.b16 %v2895, %v2879
    %v3536 = vpack.c.b16 %v2896, %v2880
    %v3537 = vpack.c.b16 %v2897, %v2881
    %v3538 = vpack.c.b16 %v2898, %v2882
    %v3539 = vpack.c.b16 %v2915, %v2899
    %v3540 = vpack.c.b16 %v2916, %v2900
    %v3541 = vpack.c.b16 %v2917, %v2901
    %v3542 = vpack.c.b16 %v2918, %v2902
    %v3543 = vpack.c.b16 %v2919, %v2903
    %v3544 = vpack.c.b16 %v2920, %v2904
    %v3545 = vpack.c.b16 %v2921, %v2905
    %v3546 = vpack.c.b16 %v2922, %v2906
    %v3547 = vpack.c.b16 %v2923, %v2907
    %v3548 = vpack.c.b16 %v2924, %v2908
    %v3549 = vpack.c.b16 %v2925, %v2909
    %v3550 = vpack.c.b16 %v2926, %v2910
    %v3551 = vpack.c.b16 %v2927, %v2911
    %v3552 = vpack.c.b16 %v2928, %v2912
    %v3553 = vpack.c.b16 %v2929, %v2913
    %v3554 = vpack.c.b16 %v2930, %v2914
    %v3555 = vpack.c.b16 %v2947, %v2931
    %v3556 = vpack.c.b16 %v2948, %v2932
    %v3557 = vpack.c.b16 %v2949, %v2933
    %v3558 = vpack.c.b16 %v2950, %v2934
    %v3559 = vpack.c.b16 %v2951, %v2935
    %v3560 = vpack.c.b16 %v2952, %v2936
    %v3561 = vpack.c.b16 %v2953, %v2937
    %v3562 = vpack.c.b16 %v2954, %v2938
    %v3563 = vpack.c.b16 %v2955, %v2939
    %v3564 = vpack.c.b16 %v2956, %v2940
    %v3565 = vpack.c.b16 %v2957, %v2941
    %v3566 = vpack.c.b16 %v2958, %v2942
    %v3567 = vpack.c.b16 %v2959, %v2943
    %v3568 = vpack.c.b16 %v2960, %v2944
    %v3569 = vpack.c.b16 %v2961, %v2945
    %v3570 = vpack.c.b16 %v2962, %v2946
    %v3571 = vpack.c.b16 %v2979, %v2963
    %v3572 = vpack.c.b16 %v2980, %v2964
    %v3573 = vpack.c.b16 %v2981, %v2965
    %v3574 = vpack.c.b16 %v2982, %v2966
    %v3575 = vpack.c.b16 %v2983, %v2967
    %v3576 = vpack.c.b16 %v2984, %v2968
    %v3577 = vpack.c.b16 %v2985, %v2969
    %v3578 = vpack.c.b16 %v2986, %v2970
    %v3579 = vpack.c.b16 %v2987, %v2971
    %v3580 = vpack.c.b16 %v2988, %v2972
    %v3581 = vpack.c.b16 %v2989, %v2973
    %v3582 = vpack.c.b16 %v2990, %v2974
    %v3583 = vpack.c.b16 %v2991, %v2975
    %v3584 = vpack.c.b16 %v2992, %v2976
    %v3585 = vpack.c.b16 %v2993, %v2977
    %v3586 = vpack.c.b16 %v2994, %v2978
    %v3587 = vpack.c.b16 %v3011, %v2995
    %v3588 = vpack.c.b16 %v3012, %v2996
    %v3589 = vpack.c.b16 %v3013, %v2997
    %v3590 = vpack.c.b16 %v3014, %v2998
    %v3591 = vpack.c.b16 %v3015, %v2999
    %v3592 = vpack.c.b16 %v3016, %v3000
    %v3593 = vpack.c.b16 %v3017, %v3001
    %v3594 = vpack.c.b16 %v3018, %v3002
    %v3595 = vpack.c.b16 %v3019, %v3003
    %v3596 = vpack.c.b16 %v3020, %v3004
    %v3597 = vpack.c.b16 %v3021, %v3005
    %v3598 = vpack.c.b16 %v3022, %v3006
    %v3599 = vpack.c.b16 %v3023, %v3007
    %v3600 = vpack.c.b16 %v3024, %v3008
    %v3601 = vpack.c.b16 %v3025, %v3009
    %v3602 = vpack.c.b16 %v3026, %v3010
    %v3603 = vpack.c.b16 %v3043, %v3027
    %v3604 = vpack.c.b16 %v3044, %v3028
    %v3605 = vpack.c.b16 %v3045, %v3029
    %v3606 = vpack.c.b16 %v3046, %v3030
    %v3607 = vpack.c.b16 %v3047, %v3031
    %v3608 = vpack.c.b16 %v3048, %v3032
    %v3609 = vpack.c.b16 %v3049, %v3033
    %v3610 = vpack.c.b16 %v3050, %v3034
    %v3611 = vpack.c.b16 %v3051, %v3035
    %v3612 = vpack.c.b16 %v3052, %v3036
    %v3613 = vpack.c.b16 %v3053, %v3037
    %v3614 = vpack.c.b16 %v3054, %v3038
    %v3615 = vpack.c.b16 %v3055, %v3039
    %v3616 = vpack.c.b16 %v3056, %v3040
    %v3617 = vpack.c.b16 %v3057, %v3041
    %v3618 = vpack.c.b16 %v3058, %v3042
    %v3619 = vpack.c.b16 %v3075, %v3059
    %v3620 = vpack.c.b16 %v3076, %v3060
    %v3621 = vpack.c.b16 %v3077, %v3061
    %v3622 = vpack.c.b16 %v3078, %v3062
    %v3623 = vpack.c.b16 %v3079, %v3063
    %v3624 = vpack.c.b16 %v3080, %v3064
    %v3625 = vpack.c.b16 %v3081, %v3065
    %v3626 = vpack.c.b16 %v3082, %v3066
    %v3627 = vpack.c.b16 %v3083, %v3067
    %v3628 = vpack.c.b16 %v3084, %v3068
    %v3629 = vpack.c.b16 %v3085, %v3069
    %v3630 = vpack.c.b16 %v3086, %v3070
    %v3631 = vpack.c.b16 %v3087, %v3071
    %v3632 = vpack.c.b16 %v3088, %v3072
    %v3633 = vpack.c.b16 %v3089, %v3073
    %v3634 = vpack.c.b16 %v3090, %v3074
    %v3635 = vpack.c.b16 %v3107, %v3091
    %v3636 = vpack.c.b16 %v3108, %v3092
    %v3637 = vpack.c.b16 %v3109, %v3093
    %v3638 = vpack.c.b16 %v3110, %v3094
    %v3639 = vpack.c.b16 %v3111, %v3095
    %v3640 = vpack.c.b16 %v3112, %v3096
    %v3641 = vpack.c.b16 %v3113, %v3097
    %v3642 = vpack.c.b16 %v3114, %v3098
    %v3643 = vpack.c.b16 %v3115, %v3099
    %v3644 = vpack.c.b16 %v3116, %v3100
    %v3645 = vpack.c.b16 %v3117, %v3101
    %v3646 = vpack.c.b16 %v3118, %v3102
    %v3647 = vpack.c.b16 %v3119, %v3103
    %v3648 = vpack.c.b16 %v3120, %v3104
    %v3649 = vpack.c.b16 %v3121, %v3105
    %v3650 = vpack.c.b16 %v3122, %v3106
    %v3651 = vpack.c.b16 %v3139, %v3123
    %v3652 = vpack.c.b16 %v3140, %v3124
    %v3653 = vpack.c.b16 %v3141, %v3125
    %v3654 = vpack.c.b16 %v3142, %v3126
    %v3655 = vpack.c.b16 %v3143, %v3127
    %v3656 = vpack.c.b16 %v3144, %v3128
    %v3657 = vpack.c.b16 %v3145, %v3129
    %v3658 = vpack.c.b16 %v3146, %v3130
    %v3659 = vpack.c.b16 %v3147, %v3131
    %v3660 = vpack.c.b16 %v3148, %v3132
    %v3661 = vpack.c.b16 %v3149, %v3133
    %v3662 = vpack.c.b16 %v3150, %v3134
    %v3663 = vpack.c.b16 %v3151, %v3135
    %v3664 = vpack.c.b16 %v3152, %v3136
    %v3665 = vpack.c.b16 %v3153, %v3137
    %v3666 = vpack.c.b16 %v3154, %v3138
    %4179 = vmatpush.bf16.msra.mxu0 %v3267
    %4180 = vmatpush.bf16.msra.mxu0 %v3251
    %4181 = vmatpush.bf16.msra.mxu0 %v3235
    %4182 = vmatpush.bf16.msra.mxu0 %v3219
    %4183 = vmatpush.bf16.msra.mxu0 %v3203
    %4184 = vmatpush.bf16.msra.mxu0 %v3187
    %4185 = vmatpush.bf16.msra.mxu0 %v3171
    %4186 = vmatpush.bf16.msra.mxu0 %v3155
    %4187 = vmatmul.bf16.gmra.mxu0 %v1611
    %v4188 = vpop.f32.mrf.mxu0
    %v4189 = vadd.f32 %v1567, %v4188
    %v4190 = vpop.f32.mrf.mxu0
    %v4191 = vadd.f32 %v1567, %v4190
    %4192 = vdwg.mxu0
    %4193 = vmatpush.bf16.msra.mxu0 %v3395
    %4194 = vmatpush.bf16.msra.mxu0 %v3379
    %4195 = vmatpush.bf16.msra.mxu0 %v3363
    %4196 = vmatpush.bf16.msra.mxu0 %v3347
    %4197 = vmatpush.bf16.msra.mxu0 %v3331
    %4198 = vmatpush.bf16.msra.mxu0 %v3315
    %4199 = vmatpush.bf16.msra.mxu0 %v3299
    %4200 = vmatpush.bf16.msra.mxu0 %v3283
    %4201 = vmatmul.bf16.gmra.mxu0 %v1612
    %v4202 = vpop.f32.mrf.mxu0
    %v4203 = vadd.f32 %v4189, %v4202
    %v4204 = vpop.f32.mrf.mxu0
    %v4205 = vadd.f32 %v4191, %v4204
    %4206 = vdwg.mxu0
    %4207 = vmatpush.bf16.msra.mxu0 %v3523
    %4208 = vmatpush.bf16.msra.mxu0 %v3507
    %4209 = vmatpush.bf16.msra.mxu0 %v3491
    %4210 = vmatpush.bf16.msra.mxu0 %v3475
    %4211 = vmatpush.bf16.msra.mxu0 %v3459
    %4212 = vmatpush.bf16.msra.mxu0 %v3443
    %4213 = vmatpush.bf16.msra.mxu0 %v3427
    %4214 = vmatpush.bf16.msra.mxu0 %v3411
    %4215 = vmatmul.bf16.gmra.mxu0 %v1613
    %v4216 = vpop.f32.mrf.mxu0
    %v4217 = vadd.f32 %v4203, %v4216
    %v4218 = vpop.f32.mrf.mxu0
    %v4219 = vadd.f32 %v4205, %v4218
    %4220 = vdwg.mxu0
    %4221 = vmatpush.bf16.msra.mxu0 %v3651
    %4222 = vmatpush.bf16.msra.mxu0 %v3635
    %4223 = vmatpush.bf16.msra.mxu0 %v3619
    %4224 = vmatpush.bf16.msra.mxu0 %v3603
    %4225 = vmatpush.bf16.msra.mxu0 %v3587
    %4226 = vmatpush.bf16.msra.mxu0 %v3571
    %4227 = vmatpush.bf16.msra.mxu0 %v3555
    %4228 = vmatpush.bf16.msra.mxu0 %v3539
    %4229 = vmatmul.bf16.gmra.mxu0 %v1614
    %v4230 = vpop.f32.mrf.mxu0
    %v4231 = vadd.f32 %v4217, %v4230
    %v4232 = vpop.f32.mrf.mxu0
    %v4233 = vadd.f32 %v4219, %v4232
    %4234 = vdwg.mxu0
    %4235 = vmatpush.bf16.msra.mxu0 %v3268
    %4236 = vmatpush.bf16.msra.mxu0 %v3252
    %4237 = vmatpush.bf16.msra.mxu0 %v3236
    %4238 = vmatpush.bf16.msra.mxu0 %v3220
    %4239 = vmatpush.bf16.msra.mxu0 %v3204
    %4240 = vmatpush.bf16.msra.mxu0 %v3188
    %4241 = vmatpush.bf16.msra.mxu0 %v3172
    %4242 = vmatpush.bf16.msra.mxu0 %v3156
    %4243 = vmatmul.bf16.gmra.mxu0 %v1611
    %v4244 = vpop.f32.mrf.mxu0
    %v4245 = vadd.f32 %v1568, %v4244
    %v4246 = vpop.f32.mrf.mxu0
    %v4247 = vadd.f32 %v1568, %v4246
    %4248 = vdwg.mxu0
    %4249 = vmatpush.bf16.msra.mxu0 %v3396
    %4250 = vmatpush.bf16.msra.mxu0 %v3380
    %4251 = vmatpush.bf16.msra.mxu0 %v3364
    %4252 = vmatpush.bf16.msra.mxu0 %v3348
    %4253 = vmatpush.bf16.msra.mxu0 %v3332
    %4254 = vmatpush.bf16.msra.mxu0 %v3316
    %4255 = vmatpush.bf16.msra.mxu0 %v3300
    %4256 = vmatpush.bf16.msra.mxu0 %v3284
    %4257 = vmatmul.bf16.gmra.mxu0 %v1612
    %v4258 = vpop.f32.mrf.mxu0
    %v4259 = vadd.f32 %v4245, %v4258
    %v4260 = vpop.f32.mrf.mxu0
    %v4261 = vadd.f32 %v4247, %v4260
    %4262 = vdwg.mxu0
    %4263 = vmatpush.bf16.msra.mxu0 %v3524
    %4264 = vmatpush.bf16.msra.mxu0 %v3508
    %4265 = vmatpush.bf16.msra.mxu0 %v3492
    %4266 = vmatpush.bf16.msra.mxu0 %v3476
    %4267 = vmatpush.bf16.msra.mxu0 %v3460
    %4268 = vmatpush.bf16.msra.mxu0 %v3444
    %4269 = vmatpush.bf16.msra.mxu0 %v3428
    %4270 = vmatpush.bf16.msra.mxu0 %v3412
    %4271 = vmatmul.bf16.gmra.mxu0 %v1613
    %v4272 = vpop.f32.mrf.mxu0
    %v4273 = vadd.f32 %v4259, %v4272
    %v4274 = vpop.f32.mrf.mxu0
    %v4275 = vadd.f32 %v4261, %v4274
    %4276 = vdwg.mxu0
    %4277 = vmatpush.bf16.msra.mxu0 %v3652
    %4278 = vmatpush.bf16.msra.mxu0 %v3636
    %4279 = vmatpush.bf16.msra.mxu0 %v3620
    %4280 = vmatpush.bf16.msra.mxu0 %v3604
    %4281 = vmatpush.bf16.msra.mxu0 %v3588
    %4282 = vmatpush.bf16.msra.mxu0 %v3572
    %4283 = vmatpush.bf16.msra.mxu0 %v3556
    %4284 = vmatpush.bf16.msra.mxu0 %v3540
    %4285 = vmatmul.bf16.gmra.mxu0 %v1614
    %v4286 = vpop.f32.mrf.mxu0
    %v4287 = vadd.f32 %v4273, %v4286
    %v4288 = vpop.f32.mrf.mxu0
    %v4289 = vadd.f32 %v4275, %v4288
    %4290 = vdwg.mxu0
    %4291 = vmatpush.bf16.msra.mxu0 %v3269
    %4292 = vmatpush.bf16.msra.mxu0 %v3253
    %4293 = vmatpush.bf16.msra.mxu0 %v3237
    %4294 = vmatpush.bf16.msra.mxu0 %v3221
    %4295 = vmatpush.bf16.msra.mxu0 %v3205
    %4296 = vmatpush.bf16.msra.mxu0 %v3189
    %4297 = vmatpush.bf16.msra.mxu0 %v3173
    %4298 = vmatpush.bf16.msra.mxu0 %v3157
    %4299 = vmatmul.bf16.gmra.mxu0 %v1611
    %v4300 = vpop.f32.mrf.mxu0
    %v4301 = vadd.f32 %v1569, %v4300
    %v4302 = vpop.f32.mrf.mxu0
    %v4303 = vadd.f32 %v1569, %v4302
    %4304 = vdwg.mxu0
    %4305 = vmatpush.bf16.msra.mxu0 %v3397
    %4306 = vmatpush.bf16.msra.mxu0 %v3381
    %4307 = vmatpush.bf16.msra.mxu0 %v3365
    %4308 = vmatpush.bf16.msra.mxu0 %v3349
    %4309 = vmatpush.bf16.msra.mxu0 %v3333
    %4310 = vmatpush.bf16.msra.mxu0 %v3317
    %4311 = vmatpush.bf16.msra.mxu0 %v3301
    %4312 = vmatpush.bf16.msra.mxu0 %v3285
    %4313 = vmatmul.bf16.gmra.mxu0 %v1612
    %v4314 = vpop.f32.mrf.mxu0
    %v4315 = vadd.f32 %v4301, %v4314
    %v4316 = vpop.f32.mrf.mxu0
    %v4317 = vadd.f32 %v4303, %v4316
    %4318 = vdwg.mxu0
    %4319 = vmatpush.bf16.msra.mxu0 %v3525
    %4320 = vmatpush.bf16.msra.mxu0 %v3509
    %4321 = vmatpush.bf16.msra.mxu0 %v3493
    %4322 = vmatpush.bf16.msra.mxu0 %v3477
    %4323 = vmatpush.bf16.msra.mxu0 %v3461
    %4324 = vmatpush.bf16.msra.mxu0 %v3445
    %4325 = vmatpush.bf16.msra.mxu0 %v3429
    %4326 = vmatpush.bf16.msra.mxu0 %v3413
    %4327 = vmatmul.bf16.gmra.mxu0 %v1613
    %v4328 = vpop.f32.mrf.mxu0
    %v4329 = vadd.f32 %v4315, %v4328
    %v4330 = vpop.f32.mrf.mxu0
    %v4331 = vadd.f32 %v4317, %v4330
    %4332 = vdwg.mxu0
    %4333 = vmatpush.bf16.msra.mxu0 %v3653
    %4334 = vmatpush.bf16.msra.mxu0 %v3637
    %4335 = vmatpush.bf16.msra.mxu0 %v3621
    %4336 = vmatpush.bf16.msra.mxu0 %v3605
    %4337 = vmatpush.bf16.msra.mxu0 %v3589
    %4338 = vmatpush.bf16.msra.mxu0 %v3573
    %4339 = vmatpush.bf16.msra.mxu0 %v3557
    %4340 = vmatpush.bf16.msra.mxu0 %v3541
    %4341 = vmatmul.bf16.gmra.mxu0 %v1614
    %v4342 = vpop.f32.mrf.mxu0
    %v4343 = vadd.f32 %v4329, %v4342
    %v4344 = vpop.f32.mrf.mxu0
    %v4345 = vadd.f32 %v4331, %v4344
    %4346 = vdwg.mxu0
    %4347 = vmatpush.bf16.msra.mxu0 %v3270
    %4348 = vmatpush.bf16.msra.mxu0 %v3254
    %4349 = vmatpush.bf16.msra.mxu0 %v3238
    %4350 = vmatpush.bf16.msra.mxu0 %v3222
    %4351 = vmatpush.bf16.msra.mxu0 %v3206
    %4352 = vmatpush.bf16.msra.mxu0 %v3190
    %4353 = vmatpush.bf16.msra.mxu0 %v3174
    %4354 = vmatpush.bf16.msra.mxu0 %v3158
    %4355 = vmatmul.bf16.gmra.mxu0 %v1611
    %v4356 = vpop.f32.mrf.mxu0
    %v4357 = vadd.f32 %v1570, %v4356
    %v4358 = vpop.f32.mrf.mxu0
    %v4359 = vadd.f32 %v1570, %v4358
    %4360 = vdwg.mxu0
    %4361 = vmatpush.bf16.msra.mxu0 %v3398
    %4362 = vmatpush.bf16.msra.mxu0 %v3382
    %4363 = vmatpush.bf16.msra.mxu0 %v3366
    %4364 = vmatpush.bf16.msra.mxu0 %v3350
    %4365 = vmatpush.bf16.msra.mxu0 %v3334
    %4366 = vmatpush.bf16.msra.mxu0 %v3318
    %4367 = vmatpush.bf16.msra.mxu0 %v3302
    %4368 = vmatpush.bf16.msra.mxu0 %v3286
    %4369 = vmatmul.bf16.gmra.mxu0 %v1612
    %v4370 = vpop.f32.mrf.mxu0
    %v4371 = vadd.f32 %v4357, %v4370
    %v4372 = vpop.f32.mrf.mxu0
    %v4373 = vadd.f32 %v4359, %v4372
    %4374 = vdwg.mxu0
    %4375 = vmatpush.bf16.msra.mxu0 %v3526
    %4376 = vmatpush.bf16.msra.mxu0 %v3510
    %4377 = vmatpush.bf16.msra.mxu0 %v3494
    %4378 = vmatpush.bf16.msra.mxu0 %v3478
    %4379 = vmatpush.bf16.msra.mxu0 %v3462
    %4380 = vmatpush.bf16.msra.mxu0 %v3446
    %4381 = vmatpush.bf16.msra.mxu0 %v3430
    %4382 = vmatpush.bf16.msra.mxu0 %v3414
    %4383 = vmatmul.bf16.gmra.mxu0 %v1613
    %v4384 = vpop.f32.mrf.mxu0
    %v4385 = vadd.f32 %v4371, %v4384
    %v4386 = vpop.f32.mrf.mxu0
    %v4387 = vadd.f32 %v4373, %v4386
    %4388 = vdwg.mxu0
    %4389 = vmatpush.bf16.msra.mxu0 %v3654
    %4390 = vmatpush.bf16.msra.mxu0 %v3638
    %4391 = vmatpush.bf16.msra.mxu0 %v3622
    %4392 = vmatpush.bf16.msra.mxu0 %v3606
    %4393 = vmatpush.bf16.msra.mxu0 %v3590
    %4394 = vmatpush.bf16.msra.mxu0 %v3574
    %4395 = vmatpush.bf16.msra.mxu0 %v3558
    %4396 = vmatpush.bf16.msra.mxu0 %v3542
    %4397 = vmatmul.bf16.gmra.mxu0 %v1614
    %v4398 = vpop.f32.mrf.mxu0
    %v4399 = vadd.f32 %v4385, %v4398
    %v4400 = vpop.f32.mrf.mxu0
    %v4401 = vadd.f32 %v4387, %v4400
    %4402 = vdwg.mxu0
    %4403 = vmatpush.bf16.msra.mxu0 %v3271
    %4404 = vmatpush.bf16.msra.mxu0 %v3255
    %4405 = vmatpush.bf16.msra.mxu0 %v3239
    %4406 = vmatpush.bf16.msra.mxu0 %v3223
    %4407 = vmatpush.bf16.msra.mxu0 %v3207
    %4408 = vmatpush.bf16.msra.mxu0 %v3191
    %4409 = vmatpush.bf16.msra.mxu0 %v3175
    %4410 = vmatpush.bf16.msra.mxu0 %v3159
    %4411 = vmatmul.bf16.gmra.mxu0 %v1611
    %v4412 = vpop.f32.mrf.mxu0
    %v4413 = vadd.f32 %v1571, %v4412
    %v4414 = vpop.f32.mrf.mxu0
    %v4415 = vadd.f32 %v1571, %v4414
    %4416 = vdwg.mxu0
    %4417 = vmatpush.bf16.msra.mxu0 %v3399
    %4418 = vmatpush.bf16.msra.mxu0 %v3383
    %4419 = vmatpush.bf16.msra.mxu0 %v3367
    %4420 = vmatpush.bf16.msra.mxu0 %v3351
    %4421 = vmatpush.bf16.msra.mxu0 %v3335
    %4422 = vmatpush.bf16.msra.mxu0 %v3319
    %4423 = vmatpush.bf16.msra.mxu0 %v3303
    %4424 = vmatpush.bf16.msra.mxu0 %v3287
    %4425 = vmatmul.bf16.gmra.mxu0 %v1612
    %v4426 = vpop.f32.mrf.mxu0
    %v4427 = vadd.f32 %v4413, %v4426
    %v4428 = vpop.f32.mrf.mxu0
    %v4429 = vadd.f32 %v4415, %v4428
    %4430 = vdwg.mxu0
    %4431 = vmatpush.bf16.msra.mxu0 %v3527
    %4432 = vmatpush.bf16.msra.mxu0 %v3511
    %4433 = vmatpush.bf16.msra.mxu0 %v3495
    %4434 = vmatpush.bf16.msra.mxu0 %v3479
    %4435 = vmatpush.bf16.msra.mxu0 %v3463
    %4436 = vmatpush.bf16.msra.mxu0 %v3447
    %4437 = vmatpush.bf16.msra.mxu0 %v3431
    %4438 = vmatpush.bf16.msra.mxu0 %v3415
    %4439 = vmatmul.bf16.gmra.mxu0 %v1613
    %v4440 = vpop.f32.mrf.mxu0
    %v4441 = vadd.f32 %v4427, %v4440
    %v4442 = vpop.f32.mrf.mxu0
    %v4443 = vadd.f32 %v4429, %v4442
    %4444 = vdwg.mxu0
    %4445 = vmatpush.bf16.msra.mxu0 %v3655
    %4446 = vmatpush.bf16.msra.mxu0 %v3639
    %4447 = vmatpush.bf16.msra.mxu0 %v3623
    %4448 = vmatpush.bf16.msra.mxu0 %v3607
    %4449 = vmatpush.bf16.msra.mxu0 %v3591
    %4450 = vmatpush.bf16.msra.mxu0 %v3575
    %4451 = vmatpush.bf16.msra.mxu0 %v3559
    %4452 = vmatpush.bf16.msra.mxu0 %v3543
    %4453 = vmatmul.bf16.gmra.mxu0 %v1614
    %v4454 = vpop.f32.mrf.mxu0
    %v4455 = vadd.f32 %v4441, %v4454
    %v4456 = vpop.f32.mrf.mxu0
    %v4457 = vadd.f32 %v4443, %v4456
    %4458 = vdwg.mxu0
    %4459 = vmatpush.bf16.msra.mxu0 %v3272
    %4460 = vmatpush.bf16.msra.mxu0 %v3256
    %4461 = vmatpush.bf16.msra.mxu0 %v3240
    %4462 = vmatpush.bf16.msra.mxu0 %v3224
    %4463 = vmatpush.bf16.msra.mxu0 %v3208
    %4464 = vmatpush.bf16.msra.mxu0 %v3192
    %4465 = vmatpush.bf16.msra.mxu0 %v3176
    %4466 = vmatpush.bf16.msra.mxu0 %v3160
    %4467 = vmatmul.bf16.gmra.mxu0 %v1611
    %v4468 = vpop.f32.mrf.mxu0
    %v4469 = vadd.f32 %v1572, %v4468
    %v4470 = vpop.f32.mrf.mxu0
    %v4471 = vadd.f32 %v1572, %v4470
    %4472 = vdwg.mxu0
    %4473 = vmatpush.bf16.msra.mxu0 %v3400
    %4474 = vmatpush.bf16.msra.mxu0 %v3384
    %4475 = vmatpush.bf16.msra.mxu0 %v3368
    %4476 = vmatpush.bf16.msra.mxu0 %v3352
    %4477 = vmatpush.bf16.msra.mxu0 %v3336
    %4478 = vmatpush.bf16.msra.mxu0 %v3320
    %4479 = vmatpush.bf16.msra.mxu0 %v3304
    %4480 = vmatpush.bf16.msra.mxu0 %v3288
    %4481 = vmatmul.bf16.gmra.mxu0 %v1612
    %v4482 = vpop.f32.mrf.mxu0
    %v4483 = vadd.f32 %v4469, %v4482
    %v4484 = vpop.f32.mrf.mxu0
    %v4485 = vadd.f32 %v4471, %v4484
    %4486 = vdwg.mxu0
    %4487 = vmatpush.bf16.msra.mxu0 %v3528
    %4488 = vmatpush.bf16.msra.mxu0 %v3512
    %4489 = vmatpush.bf16.msra.mxu0 %v3496
    %4490 = vmatpush.bf16.msra.mxu0 %v3480
    %4491 = vmatpush.bf16.msra.mxu0 %v3464
    %4492 = vmatpush.bf16.msra.mxu0 %v3448
    %4493 = vmatpush.bf16.msra.mxu0 %v3432
    %4494 = vmatpush.bf16.msra.mxu0 %v3416
    %4495 = vmatmul.bf16.gmra.mxu0 %v1613
    %v4496 = vpop.f32.mrf.mxu0
    %v4497 = vadd.f32 %v4483, %v4496
    %v4498 = vpop.f32.mrf.mxu0
    %v4499 = vadd.f32 %v4485, %v4498
    %4500 = vdwg.mxu0
    %4501 = vmatpush.bf16.msra.mxu0 %v3656
    %4502 = vmatpush.bf16.msra.mxu0 %v3640
    %4503 = vmatpush.bf16.msra.mxu0 %v3624
    %4504 = vmatpush.bf16.msra.mxu0 %v3608
    %4505 = vmatpush.bf16.msra.mxu0 %v3592
    %4506 = vmatpush.bf16.msra.mxu0 %v3576
    %4507 = vmatpush.bf16.msra.mxu0 %v3560
    %4508 = vmatpush.bf16.msra.mxu0 %v3544
    %4509 = vmatmul.bf16.gmra.mxu0 %v1614
    %v4510 = vpop.f32.mrf.mxu0
    %v4511 = vadd.f32 %v4497, %v4510
    %v4512 = vpop.f32.mrf.mxu0
    %v4513 = vadd.f32 %v4499, %v4512
    %4514 = vdwg.mxu0
    %4515 = vmatpush.bf16.msra.mxu0 %v3273
    %4516 = vmatpush.bf16.msra.mxu0 %v3257
    %4517 = vmatpush.bf16.msra.mxu0 %v3241
    %4518 = vmatpush.bf16.msra.mxu0 %v3225
    %4519 = vmatpush.bf16.msra.mxu0 %v3209
    %4520 = vmatpush.bf16.msra.mxu0 %v3193
    %4521 = vmatpush.bf16.msra.mxu0 %v3177
    %4522 = vmatpush.bf16.msra.mxu0 %v3161
    %4523 = vmatmul.bf16.gmra.mxu0 %v1611
    %v4524 = vpop.f32.mrf.mxu0
    %v4525 = vadd.f32 %v1573, %v4524
    %v4526 = vpop.f32.mrf.mxu0
    %v4527 = vadd.f32 %v1573, %v4526
    %4528 = vdwg.mxu0
    %4529 = vmatpush.bf16.msra.mxu0 %v3401
    %4530 = vmatpush.bf16.msra.mxu0 %v3385
    %4531 = vmatpush.bf16.msra.mxu0 %v3369
    %4532 = vmatpush.bf16.msra.mxu0 %v3353
    %4533 = vmatpush.bf16.msra.mxu0 %v3337
    %4534 = vmatpush.bf16.msra.mxu0 %v3321
    %4535 = vmatpush.bf16.msra.mxu0 %v3305
    %4536 = vmatpush.bf16.msra.mxu0 %v3289
    %4537 = vmatmul.bf16.gmra.mxu0 %v1612
    %v4538 = vpop.f32.mrf.mxu0
    %v4539 = vadd.f32 %v4525, %v4538
    %v4540 = vpop.f32.mrf.mxu0
    %v4541 = vadd.f32 %v4527, %v4540
    %4542 = vdwg.mxu0
    %4543 = vmatpush.bf16.msra.mxu0 %v3529
    %4544 = vmatpush.bf16.msra.mxu0 %v3513
    %4545 = vmatpush.bf16.msra.mxu0 %v3497
    %4546 = vmatpush.bf16.msra.mxu0 %v3481
    %4547 = vmatpush.bf16.msra.mxu0 %v3465
    %4548 = vmatpush.bf16.msra.mxu0 %v3449
    %4549 = vmatpush.bf16.msra.mxu0 %v3433
    %4550 = vmatpush.bf16.msra.mxu0 %v3417
    %4551 = vmatmul.bf16.gmra.mxu0 %v1613
    %v4552 = vpop.f32.mrf.mxu0
    %v4553 = vadd.f32 %v4539, %v4552
    %v4554 = vpop.f32.mrf.mxu0
    %v4555 = vadd.f32 %v4541, %v4554
    %4556 = vdwg.mxu0
    %4557 = vmatpush.bf16.msra.mxu0 %v3657
    %4558 = vmatpush.bf16.msra.mxu0 %v3641
    %4559 = vmatpush.bf16.msra.mxu0 %v3625
    %4560 = vmatpush.bf16.msra.mxu0 %v3609
    %4561 = vmatpush.bf16.msra.mxu0 %v3593
    %4562 = vmatpush.bf16.msra.mxu0 %v3577
    %4563 = vmatpush.bf16.msra.mxu0 %v3561
    %4564 = vmatpush.bf16.msra.mxu0 %v3545
    %4565 = vmatmul.bf16.gmra.mxu0 %v1614
    %v4566 = vpop.f32.mrf.mxu0
    %v4567 = vadd.f32 %v4553, %v4566
    %v4568 = vpop.f32.mrf.mxu0
    %v4569 = vadd.f32 %v4555, %v4568
    %4570 = vdwg.mxu0
    %4571 = vmatpush.bf16.msra.mxu0 %v3274
    %4572 = vmatpush.bf16.msra.mxu0 %v3258
    %4573 = vmatpush.bf16.msra.mxu0 %v3242
    %4574 = vmatpush.bf16.msra.mxu0 %v3226
    %4575 = vmatpush.bf16.msra.mxu0 %v3210
    %4576 = vmatpush.bf16.msra.mxu0 %v3194
    %4577 = vmatpush.bf16.msra.mxu0 %v3178
    %4578 = vmatpush.bf16.msra.mxu0 %v3162
    %4579 = vmatmul.bf16.gmra.mxu0 %v1611
    %v4580 = vpop.f32.mrf.mxu0
    %v4581 = vadd.f32 %v1574, %v4580
    %v4582 = vpop.f32.mrf.mxu0
    %v4583 = vadd.f32 %v1574, %v4582
    %4584 = vdwg.mxu0
    %4585 = vmatpush.bf16.msra.mxu0 %v3402
    %4586 = vmatpush.bf16.msra.mxu0 %v3386
    %4587 = vmatpush.bf16.msra.mxu0 %v3370
    %4588 = vmatpush.bf16.msra.mxu0 %v3354
    %4589 = vmatpush.bf16.msra.mxu0 %v3338
    %4590 = vmatpush.bf16.msra.mxu0 %v3322
    %4591 = vmatpush.bf16.msra.mxu0 %v3306
    %4592 = vmatpush.bf16.msra.mxu0 %v3290
    %4593 = vmatmul.bf16.gmra.mxu0 %v1612
    %v4594 = vpop.f32.mrf.mxu0
    %v4595 = vadd.f32 %v4581, %v4594
    %v4596 = vpop.f32.mrf.mxu0
    %v4597 = vadd.f32 %v4583, %v4596
    %4598 = vdwg.mxu0
    %4599 = vmatpush.bf16.msra.mxu0 %v3530
    %4600 = vmatpush.bf16.msra.mxu0 %v3514
    %4601 = vmatpush.bf16.msra.mxu0 %v3498
    %4602 = vmatpush.bf16.msra.mxu0 %v3482
    %4603 = vmatpush.bf16.msra.mxu0 %v3466
    %4604 = vmatpush.bf16.msra.mxu0 %v3450
    %4605 = vmatpush.bf16.msra.mxu0 %v3434
    %4606 = vmatpush.bf16.msra.mxu0 %v3418
    %4607 = vmatmul.bf16.gmra.mxu0 %v1613
    %v4608 = vpop.f32.mrf.mxu0
    %v4609 = vadd.f32 %v4595, %v4608
    %v4610 = vpop.f32.mrf.mxu0
    %v4611 = vadd.f32 %v4597, %v4610
    %4612 = vdwg.mxu0
    %4613 = vmatpush.bf16.msra.mxu0 %v3658
    %4614 = vmatpush.bf16.msra.mxu0 %v3642
    %4615 = vmatpush.bf16.msra.mxu0 %v3626
    %4616 = vmatpush.bf16.msra.mxu0 %v3610
    %4617 = vmatpush.bf16.msra.mxu0 %v3594
    %4618 = vmatpush.bf16.msra.mxu0 %v3578
    %4619 = vmatpush.bf16.msra.mxu0 %v3562
    %4620 = vmatpush.bf16.msra.mxu0 %v3546
    %4621 = vmatmul.bf16.gmra.mxu0 %v1614
    %v4622 = vpop.f32.mrf.mxu0
    %v4623 = vadd.f32 %v4609, %v4622
    %v4624 = vpop.f32.mrf.mxu0
    %v4625 = vadd.f32 %v4611, %v4624
    %4626 = vdwg.mxu0
    %4627 = vmatpush.bf16.msra.mxu0 %v3275
    %4628 = vmatpush.bf16.msra.mxu0 %v3259
    %4629 = vmatpush.bf16.msra.mxu0 %v3243
    %4630 = vmatpush.bf16.msra.mxu0 %v3227
    %4631 = vmatpush.bf16.msra.mxu0 %v3211
    %4632 = vmatpush.bf16.msra.mxu0 %v3195
    %4633 = vmatpush.bf16.msra.mxu0 %v3179
    %4634 = vmatpush.bf16.msra.mxu0 %v3163
    %4635 = vmatmul.bf16.gmra.mxu0 %v1611
    %v4636 = vpop.f32.mrf.mxu0
    %v4637 = vadd.f32 %v1575, %v4636
    %v4638 = vpop.f32.mrf.mxu0
    %v4639 = vadd.f32 %v1575, %v4638
    %4640 = vdwg.mxu0
    %4641 = vmatpush.bf16.msra.mxu0 %v3403
    %4642 = vmatpush.bf16.msra.mxu0 %v3387
    %4643 = vmatpush.bf16.msra.mxu0 %v3371
    %4644 = vmatpush.bf16.msra.mxu0 %v3355
    %4645 = vmatpush.bf16.msra.mxu0 %v3339
    %4646 = vmatpush.bf16.msra.mxu0 %v3323
    %4647 = vmatpush.bf16.msra.mxu0 %v3307
    %4648 = vmatpush.bf16.msra.mxu0 %v3291
    %4649 = vmatmul.bf16.gmra.mxu0 %v1612
    %v4650 = vpop.f32.mrf.mxu0
    %v4651 = vadd.f32 %v4637, %v4650
    %v4652 = vpop.f32.mrf.mxu0
    %v4653 = vadd.f32 %v4639, %v4652
    %4654 = vdwg.mxu0
    %4655 = vmatpush.bf16.msra.mxu0 %v3531
    %4656 = vmatpush.bf16.msra.mxu0 %v3515
    %4657 = vmatpush.bf16.msra.mxu0 %v3499
    %4658 = vmatpush.bf16.msra.mxu0 %v3483
    %4659 = vmatpush.bf16.msra.mxu0 %v3467
    %4660 = vmatpush.bf16.msra.mxu0 %v3451
    %4661 = vmatpush.bf16.msra.mxu0 %v3435
    %4662 = vmatpush.bf16.msra.mxu0 %v3419
    %4663 = vmatmul.bf16.gmra.mxu0 %v1613
    %v4664 = vpop.f32.mrf.mxu0
    %v4665 = vadd.f32 %v4651, %v4664
    %v4666 = vpop.f32.mrf.mxu0
    %v4667 = vadd.f32 %v4653, %v4666
    %4668 = vdwg.mxu0
    %4669 = vmatpush.bf16.msra.mxu0 %v3659
    %4670 = vmatpush.bf16.msra.mxu0 %v3643
    %4671 = vmatpush.bf16.msra.mxu0 %v3627
    %4672 = vmatpush.bf16.msra.mxu0 %v3611
    %4673 = vmatpush.bf16.msra.mxu0 %v3595
    %4674 = vmatpush.bf16.msra.mxu0 %v3579
    %4675 = vmatpush.bf16.msra.mxu0 %v3563
    %4676 = vmatpush.bf16.msra.mxu0 %v3547
    %4677 = vmatmul.bf16.gmra.mxu0 %v1614
    %v4678 = vpop.f32.mrf.mxu0
    %v4679 = vadd.f32 %v4665, %v4678
    %v4680 = vpop.f32.mrf.mxu0
    %v4681 = vadd.f32 %v4667, %v4680
    %4682 = vdwg.mxu0
    %4683 = vmatpush.bf16.msra.mxu0 %v3276
    %4684 = vmatpush.bf16.msra.mxu0 %v3260
    %4685 = vmatpush.bf16.msra.mxu0 %v3244
    %4686 = vmatpush.bf16.msra.mxu0 %v3228
    %4687 = vmatpush.bf16.msra.mxu0 %v3212
    %4688 = vmatpush.bf16.msra.mxu0 %v3196
    %4689 = vmatpush.bf16.msra.mxu0 %v3180
    %4690 = vmatpush.bf16.msra.mxu0 %v3164
    %4691 = vmatmul.bf16.gmra.mxu0 %v1611
    %v4692 = vpop.f32.mrf.mxu0
    %v4693 = vadd.f32 %v1576, %v4692
    %v4694 = vpop.f32.mrf.mxu0
    %v4695 = vadd.f32 %v1576, %v4694
    %4696 = vdwg.mxu0
    %4697 = vmatpush.bf16.msra.mxu0 %v3404
    %4698 = vmatpush.bf16.msra.mxu0 %v3388
    %4699 = vmatpush.bf16.msra.mxu0 %v3372
    %4700 = vmatpush.bf16.msra.mxu0 %v3356
    %4701 = vmatpush.bf16.msra.mxu0 %v3340
    %4702 = vmatpush.bf16.msra.mxu0 %v3324
    %4703 = vmatpush.bf16.msra.mxu0 %v3308
    %4704 = vmatpush.bf16.msra.mxu0 %v3292
    %4705 = vmatmul.bf16.gmra.mxu0 %v1612
    %v4706 = vpop.f32.mrf.mxu0
    %v4707 = vadd.f32 %v4693, %v4706
    %v4708 = vpop.f32.mrf.mxu0
    %v4709 = vadd.f32 %v4695, %v4708
    %4710 = vdwg.mxu0
    %4711 = vmatpush.bf16.msra.mxu0 %v3532
    %4712 = vmatpush.bf16.msra.mxu0 %v3516
    %4713 = vmatpush.bf16.msra.mxu0 %v3500
    %4714 = vmatpush.bf16.msra.mxu0 %v3484
    %4715 = vmatpush.bf16.msra.mxu0 %v3468
    %4716 = vmatpush.bf16.msra.mxu0 %v3452
    %4717 = vmatpush.bf16.msra.mxu0 %v3436
    %4718 = vmatpush.bf16.msra.mxu0 %v3420
    %4719 = vmatmul.bf16.gmra.mxu0 %v1613
    %v4720 = vpop.f32.mrf.mxu0
    %v4721 = vadd.f32 %v4707, %v4720
    %v4722 = vpop.f32.mrf.mxu0
    %v4723 = vadd.f32 %v4709, %v4722
    %4724 = vdwg.mxu0
    %4725 = vmatpush.bf16.msra.mxu0 %v3660
    %4726 = vmatpush.bf16.msra.mxu0 %v3644
    %4727 = vmatpush.bf16.msra.mxu0 %v3628
    %4728 = vmatpush.bf16.msra.mxu0 %v3612
    %4729 = vmatpush.bf16.msra.mxu0 %v3596
    %4730 = vmatpush.bf16.msra.mxu0 %v3580
    %4731 = vmatpush.bf16.msra.mxu0 %v3564
    %4732 = vmatpush.bf16.msra.mxu0 %v3548
    %4733 = vmatmul.bf16.gmra.mxu0 %v1614
    %v4734 = vpop.f32.mrf.mxu0
    %v4735 = vadd.f32 %v4721, %v4734
    %v4736 = vpop.f32.mrf.mxu0
    %v4737 = vadd.f32 %v4723, %v4736
    %4738 = vdwg.mxu0
    %4739 = vmatpush.bf16.msra.mxu0 %v3277
    %4740 = vmatpush.bf16.msra.mxu0 %v3261
    %4741 = vmatpush.bf16.msra.mxu0 %v3245
    %4742 = vmatpush.bf16.msra.mxu0 %v3229
    %4743 = vmatpush.bf16.msra.mxu0 %v3213
    %4744 = vmatpush.bf16.msra.mxu0 %v3197
    %4745 = vmatpush.bf16.msra.mxu0 %v3181
    %4746 = vmatpush.bf16.msra.mxu0 %v3165
    %4747 = vmatmul.bf16.gmra.mxu0 %v1611
    %v4748 = vpop.f32.mrf.mxu0
    %v4749 = vadd.f32 %v1577, %v4748
    %v4750 = vpop.f32.mrf.mxu0
    %v4751 = vadd.f32 %v1577, %v4750
    %4752 = vdwg.mxu0
    %4753 = vmatpush.bf16.msra.mxu0 %v3405
    %4754 = vmatpush.bf16.msra.mxu0 %v3389
    %4755 = vmatpush.bf16.msra.mxu0 %v3373
    %4756 = vmatpush.bf16.msra.mxu0 %v3357
    %4757 = vmatpush.bf16.msra.mxu0 %v3341
    %4758 = vmatpush.bf16.msra.mxu0 %v3325
    %4759 = vmatpush.bf16.msra.mxu0 %v3309
    %4760 = vmatpush.bf16.msra.mxu0 %v3293
    %4761 = vmatmul.bf16.gmra.mxu0 %v1612
    %v4762 = vpop.f32.mrf.mxu0
    %v4763 = vadd.f32 %v4749, %v4762
    %v4764 = vpop.f32.mrf.mxu0
    %v4765 = vadd.f32 %v4751, %v4764
    %4766 = vdwg.mxu0
    %4767 = vmatpush.bf16.msra.mxu0 %v3533
    %4768 = vmatpush.bf16.msra.mxu0 %v3517
    %4769 = vmatpush.bf16.msra.mxu0 %v3501
    %4770 = vmatpush.bf16.msra.mxu0 %v3485
    %4771 = vmatpush.bf16.msra.mxu0 %v3469
    %4772 = vmatpush.bf16.msra.mxu0 %v3453
    %4773 = vmatpush.bf16.msra.mxu0 %v3437
    %4774 = vmatpush.bf16.msra.mxu0 %v3421
    %4775 = vmatmul.bf16.gmra.mxu0 %v1613
    %v4776 = vpop.f32.mrf.mxu0
    %v4777 = vadd.f32 %v4763, %v4776
    %v4778 = vpop.f32.mrf.mxu0
    %v4779 = vadd.f32 %v4765, %v4778
    %4780 = vdwg.mxu0
    %4781 = vmatpush.bf16.msra.mxu0 %v3661
    %4782 = vmatpush.bf16.msra.mxu0 %v3645
    %4783 = vmatpush.bf16.msra.mxu0 %v3629
    %4784 = vmatpush.bf16.msra.mxu0 %v3613
    %4785 = vmatpush.bf16.msra.mxu0 %v3597
    %4786 = vmatpush.bf16.msra.mxu0 %v3581
    %4787 = vmatpush.bf16.msra.mxu0 %v3565
    %4788 = vmatpush.bf16.msra.mxu0 %v3549
    %4789 = vmatmul.bf16.gmra.mxu0 %v1614
    %v4790 = vpop.f32.mrf.mxu0
    %v4791 = vadd.f32 %v4777, %v4790
    %v4792 = vpop.f32.mrf.mxu0
    %v4793 = vadd.f32 %v4779, %v4792
    %4794 = vdwg.mxu0
    %4795 = vmatpush.bf16.msra.mxu0 %v3278
    %4796 = vmatpush.bf16.msra.mxu0 %v3262
    %4797 = vmatpush.bf16.msra.mxu0 %v3246
    %4798 = vmatpush.bf16.msra.mxu0 %v3230
    %4799 = vmatpush.bf16.msra.mxu0 %v3214
    %4800 = vmatpush.bf16.msra.mxu0 %v3198
    %4801 = vmatpush.bf16.msra.mxu0 %v3182
    %4802 = vmatpush.bf16.msra.mxu0 %v3166
    %4803 = vmatmul.bf16.gmra.mxu0 %v1611
    %v4804 = vpop.f32.mrf.mxu0
    %v4805 = vadd.f32 %v1578, %v4804
    %v4806 = vpop.f32.mrf.mxu0
    %v4807 = vadd.f32 %v1578, %v4806
    %4808 = vdwg.mxu0
    %4809 = vmatpush.bf16.msra.mxu0 %v3406
    %4810 = vmatpush.bf16.msra.mxu0 %v3390
    %4811 = vmatpush.bf16.msra.mxu0 %v3374
    %4812 = vmatpush.bf16.msra.mxu0 %v3358
    %4813 = vmatpush.bf16.msra.mxu0 %v3342
    %4814 = vmatpush.bf16.msra.mxu0 %v3326
    %4815 = vmatpush.bf16.msra.mxu0 %v3310
    %4816 = vmatpush.bf16.msra.mxu0 %v3294
    %4817 = vmatmul.bf16.gmra.mxu0 %v1612
    %v4818 = vpop.f32.mrf.mxu0
    %v4819 = vadd.f32 %v4805, %v4818
    %v4820 = vpop.f32.mrf.mxu0
    %v4821 = vadd.f32 %v4807, %v4820
    %4822 = vdwg.mxu0
    %4823 = vmatpush.bf16.msra.mxu0 %v3534
    %4824 = vmatpush.bf16.msra.mxu0 %v3518
    %4825 = vmatpush.bf16.msra.mxu0 %v3502
    %4826 = vmatpush.bf16.msra.mxu0 %v3486
    %4827 = vmatpush.bf16.msra.mxu0 %v3470
    %4828 = vmatpush.bf16.msra.mxu0 %v3454
    %4829 = vmatpush.bf16.msra.mxu0 %v3438
    %4830 = vmatpush.bf16.msra.mxu0 %v3422
    %4831 = vmatmul.bf16.gmra.mxu0 %v1613
    %v4832 = vpop.f32.mrf.mxu0
    %v4833 = vadd.f32 %v4819, %v4832
    %v4834 = vpop.f32.mrf.mxu0
    %v4835 = vadd.f32 %v4821, %v4834
    %4836 = vdwg.mxu0
    %4837 = vmatpush.bf16.msra.mxu0 %v3662
    %4838 = vmatpush.bf16.msra.mxu0 %v3646
    %4839 = vmatpush.bf16.msra.mxu0 %v3630
    %4840 = vmatpush.bf16.msra.mxu0 %v3614
    %4841 = vmatpush.bf16.msra.mxu0 %v3598
    %4842 = vmatpush.bf16.msra.mxu0 %v3582
    %4843 = vmatpush.bf16.msra.mxu0 %v3566
    %4844 = vmatpush.bf16.msra.mxu0 %v3550
    %4845 = vmatmul.bf16.gmra.mxu0 %v1614
    %v4846 = vpop.f32.mrf.mxu0
    %v4847 = vadd.f32 %v4833, %v4846
    %v4848 = vpop.f32.mrf.mxu0
    %v4849 = vadd.f32 %v4835, %v4848
    %4850 = vdwg.mxu0
    %4851 = vmatpush.bf16.msra.mxu0 %v3279
    %4852 = vmatpush.bf16.msra.mxu0 %v3263
    %4853 = vmatpush.bf16.msra.mxu0 %v3247
    %4854 = vmatpush.bf16.msra.mxu0 %v3231
    %4855 = vmatpush.bf16.msra.mxu0 %v3215
    %4856 = vmatpush.bf16.msra.mxu0 %v3199
    %4857 = vmatpush.bf16.msra.mxu0 %v3183
    %4858 = vmatpush.bf16.msra.mxu0 %v3167
    %4859 = vmatmul.bf16.gmra.mxu0 %v1611
    %v4860 = vpop.f32.mrf.mxu0
    %v4861 = vadd.f32 %v1579, %v4860
    %v4862 = vpop.f32.mrf.mxu0
    %v4863 = vadd.f32 %v1579, %v4862
    %4864 = vdwg.mxu0
    %4865 = vmatpush.bf16.msra.mxu0 %v3407
    %4866 = vmatpush.bf16.msra.mxu0 %v3391
    %4867 = vmatpush.bf16.msra.mxu0 %v3375
    %4868 = vmatpush.bf16.msra.mxu0 %v3359
    %4869 = vmatpush.bf16.msra.mxu0 %v3343
    %4870 = vmatpush.bf16.msra.mxu0 %v3327
    %4871 = vmatpush.bf16.msra.mxu0 %v3311
    %4872 = vmatpush.bf16.msra.mxu0 %v3295
    %4873 = vmatmul.bf16.gmra.mxu0 %v1612
    %v4874 = vpop.f32.mrf.mxu0
    %v4875 = vadd.f32 %v4861, %v4874
    %v4876 = vpop.f32.mrf.mxu0
    %v4877 = vadd.f32 %v4863, %v4876
    %4878 = vdwg.mxu0
    %4879 = vmatpush.bf16.msra.mxu0 %v3535
    %4880 = vmatpush.bf16.msra.mxu0 %v3519
    %4881 = vmatpush.bf16.msra.mxu0 %v3503
    %4882 = vmatpush.bf16.msra.mxu0 %v3487
    %4883 = vmatpush.bf16.msra.mxu0 %v3471
    %4884 = vmatpush.bf16.msra.mxu0 %v3455
    %4885 = vmatpush.bf16.msra.mxu0 %v3439
    %4886 = vmatpush.bf16.msra.mxu0 %v3423
    %4887 = vmatmul.bf16.gmra.mxu0 %v1613
    %v4888 = vpop.f32.mrf.mxu0
    %v4889 = vadd.f32 %v4875, %v4888
    %v4890 = vpop.f32.mrf.mxu0
    %v4891 = vadd.f32 %v4877, %v4890
    %4892 = vdwg.mxu0
    %4893 = vmatpush.bf16.msra.mxu0 %v3663
    %4894 = vmatpush.bf16.msra.mxu0 %v3647
    %4895 = vmatpush.bf16.msra.mxu0 %v3631
    %4896 = vmatpush.bf16.msra.mxu0 %v3615
    %4897 = vmatpush.bf16.msra.mxu0 %v3599
    %4898 = vmatpush.bf16.msra.mxu0 %v3583
    %4899 = vmatpush.bf16.msra.mxu0 %v3567
    %4900 = vmatpush.bf16.msra.mxu0 %v3551
    %4901 = vmatmul.bf16.gmra.mxu0 %v1614
    %v4902 = vpop.f32.mrf.mxu0
    %v4903 = vadd.f32 %v4889, %v4902
    %v4904 = vpop.f32.mrf.mxu0
    %v4905 = vadd.f32 %v4891, %v4904
    %4906 = vdwg.mxu0
    %4907 = vmatpush.bf16.msra.mxu0 %v3280
    %4908 = vmatpush.bf16.msra.mxu0 %v3264
    %4909 = vmatpush.bf16.msra.mxu0 %v3248
    %4910 = vmatpush.bf16.msra.mxu0 %v3232
    %4911 = vmatpush.bf16.msra.mxu0 %v3216
    %4912 = vmatpush.bf16.msra.mxu0 %v3200
    %4913 = vmatpush.bf16.msra.mxu0 %v3184
    %4914 = vmatpush.bf16.msra.mxu0 %v3168
    %4915 = vmatmul.bf16.gmra.mxu0 %v1611
    %v4916 = vpop.f32.mrf.mxu0
    %v4917 = vadd.f32 %v1580, %v4916
    %v4918 = vpop.f32.mrf.mxu0
    %v4919 = vadd.f32 %v1580, %v4918
    %4920 = vdwg.mxu0
    %4921 = vmatpush.bf16.msra.mxu0 %v3408
    %4922 = vmatpush.bf16.msra.mxu0 %v3392
    %4923 = vmatpush.bf16.msra.mxu0 %v3376
    %4924 = vmatpush.bf16.msra.mxu0 %v3360
    %4925 = vmatpush.bf16.msra.mxu0 %v3344
    %4926 = vmatpush.bf16.msra.mxu0 %v3328
    %4927 = vmatpush.bf16.msra.mxu0 %v3312
    %4928 = vmatpush.bf16.msra.mxu0 %v3296
    %4929 = vmatmul.bf16.gmra.mxu0 %v1612
    %v4930 = vpop.f32.mrf.mxu0
    %v4931 = vadd.f32 %v4917, %v4930
    %v4932 = vpop.f32.mrf.mxu0
    %v4933 = vadd.f32 %v4919, %v4932
    %4934 = vdwg.mxu0
    %4935 = vmatpush.bf16.msra.mxu0 %v3536
    %4936 = vmatpush.bf16.msra.mxu0 %v3520
    %4937 = vmatpush.bf16.msra.mxu0 %v3504
    %4938 = vmatpush.bf16.msra.mxu0 %v3488
    %4939 = vmatpush.bf16.msra.mxu0 %v3472
    %4940 = vmatpush.bf16.msra.mxu0 %v3456
    %4941 = vmatpush.bf16.msra.mxu0 %v3440
    %4942 = vmatpush.bf16.msra.mxu0 %v3424
    %4943 = vmatmul.bf16.gmra.mxu0 %v1613
    %v4944 = vpop.f32.mrf.mxu0
    %v4945 = vadd.f32 %v4931, %v4944
    %v4946 = vpop.f32.mrf.mxu0
    %v4947 = vadd.f32 %v4933, %v4946
    %4948 = vdwg.mxu0
    %4949 = vmatpush.bf16.msra.mxu0 %v3664
    %4950 = vmatpush.bf16.msra.mxu0 %v3648
    %4951 = vmatpush.bf16.msra.mxu0 %v3632
    %4952 = vmatpush.bf16.msra.mxu0 %v3616
    %4953 = vmatpush.bf16.msra.mxu0 %v3600
    %4954 = vmatpush.bf16.msra.mxu0 %v3584
    %4955 = vmatpush.bf16.msra.mxu0 %v3568
    %4956 = vmatpush.bf16.msra.mxu0 %v3552
    %4957 = vmatmul.bf16.gmra.mxu0 %v1614
    %v4958 = vpop.f32.mrf.mxu0
    %v4959 = vadd.f32 %v4945, %v4958
    %v4960 = vpop.f32.mrf.mxu0
    %v4961 = vadd.f32 %v4947, %v4960
    %4962 = vdwg.mxu0
    %4963 = vmatpush.bf16.msra.mxu0 %v3281
    %4964 = vmatpush.bf16.msra.mxu0 %v3265
    %4965 = vmatpush.bf16.msra.mxu0 %v3249
    %4966 = vmatpush.bf16.msra.mxu0 %v3233
    %4967 = vmatpush.bf16.msra.mxu0 %v3217
    %4968 = vmatpush.bf16.msra.mxu0 %v3201
    %4969 = vmatpush.bf16.msra.mxu0 %v3185
    %4970 = vmatpush.bf16.msra.mxu0 %v3169
    %4971 = vmatmul.bf16.gmra.mxu0 %v1611
    %v4972 = vpop.f32.mrf.mxu0
    %v4973 = vadd.f32 %v1581, %v4972
    %v4974 = vpop.f32.mrf.mxu0
    %v4975 = vadd.f32 %v1581, %v4974
    %4976 = vdwg.mxu0
    %4977 = vmatpush.bf16.msra.mxu0 %v3409
    %4978 = vmatpush.bf16.msra.mxu0 %v3393
    %4979 = vmatpush.bf16.msra.mxu0 %v3377
    %4980 = vmatpush.bf16.msra.mxu0 %v3361
    %4981 = vmatpush.bf16.msra.mxu0 %v3345
    %4982 = vmatpush.bf16.msra.mxu0 %v3329
    %4983 = vmatpush.bf16.msra.mxu0 %v3313
    %4984 = vmatpush.bf16.msra.mxu0 %v3297
    %4985 = vmatmul.bf16.gmra.mxu0 %v1612
    %v4986 = vpop.f32.mrf.mxu0
    %v4987 = vadd.f32 %v4973, %v4986
    %v4988 = vpop.f32.mrf.mxu0
    %v4989 = vadd.f32 %v4975, %v4988
    %4990 = vdwg.mxu0
    %4991 = vmatpush.bf16.msra.mxu0 %v3537
    %4992 = vmatpush.bf16.msra.mxu0 %v3521
    %4993 = vmatpush.bf16.msra.mxu0 %v3505
    %4994 = vmatpush.bf16.msra.mxu0 %v3489
    %4995 = vmatpush.bf16.msra.mxu0 %v3473
    %4996 = vmatpush.bf16.msra.mxu0 %v3457
    %4997 = vmatpush.bf16.msra.mxu0 %v3441
    %4998 = vmatpush.bf16.msra.mxu0 %v3425
    %4999 = vmatmul.bf16.gmra.mxu0 %v1613
    %v5000 = vpop.f32.mrf.mxu0
    %v5001 = vadd.f32 %v4987, %v5000
    %v5002 = vpop.f32.mrf.mxu0
    %v5003 = vadd.f32 %v4989, %v5002
    %5004 = vdwg.mxu0
    %5005 = vmatpush.bf16.msra.mxu0 %v3665
    %5006 = vmatpush.bf16.msra.mxu0 %v3649
    %5007 = vmatpush.bf16.msra.mxu0 %v3633
    %5008 = vmatpush.bf16.msra.mxu0 %v3617
    %5009 = vmatpush.bf16.msra.mxu0 %v3601
    %5010 = vmatpush.bf16.msra.mxu0 %v3585
    %5011 = vmatpush.bf16.msra.mxu0 %v3569
    %5012 = vmatpush.bf16.msra.mxu0 %v3553
    %5013 = vmatmul.bf16.gmra.mxu0 %v1614
    %v5014 = vpop.f32.mrf.mxu0
    %v5015 = vadd.f32 %v5001, %v5014
    %v5016 = vpop.f32.mrf.mxu0
    %v5017 = vadd.f32 %v5003, %v5016
    %5018 = vdwg.mxu0
    %5019 = vmatpush.bf16.msra.mxu0 %v3282
    %5020 = vmatpush.bf16.msra.mxu0 %v3266
    %5021 = vmatpush.bf16.msra.mxu0 %v3250
    %5022 = vmatpush.bf16.msra.mxu0 %v3234
    %5023 = vmatpush.bf16.msra.mxu0 %v3218
    %5024 = vmatpush.bf16.msra.mxu0 %v3202
    %5025 = vmatpush.bf16.msra.mxu0 %v3186
    %5026 = vmatpush.bf16.msra.mxu0 %v3170
    %5027 = vmatmul.bf16.gmra.mxu0 %v1611
    %v5028 = vpop.f32.mrf.mxu0
    %v5029 = vadd.f32 %v1582, %v5028
    %v5030 = vpop.f32.mrf.mxu0
    %v5031 = vadd.f32 %v1582, %v5030
    %5032 = vdwg.mxu0
    %5033 = vmatpush.bf16.msra.mxu0 %v3410
    %5034 = vmatpush.bf16.msra.mxu0 %v3394
    %5035 = vmatpush.bf16.msra.mxu0 %v3378
    %5036 = vmatpush.bf16.msra.mxu0 %v3362
    %5037 = vmatpush.bf16.msra.mxu0 %v3346
    %5038 = vmatpush.bf16.msra.mxu0 %v3330
    %5039 = vmatpush.bf16.msra.mxu0 %v3314
    %5040 = vmatpush.bf16.msra.mxu0 %v3298
    %5041 = vmatmul.bf16.gmra.mxu0 %v1612
    %v5042 = vpop.f32.mrf.mxu0
    %v5043 = vadd.f32 %v5029, %v5042
    %v5044 = vpop.f32.mrf.mxu0
    %v5045 = vadd.f32 %v5031, %v5044
    %5046 = vdwg.mxu0
    %5047 = vmatpush.bf16.msra.mxu0 %v3538
    %5048 = vmatpush.bf16.msra.mxu0 %v3522
    %5049 = vmatpush.bf16.msra.mxu0 %v3506
    %5050 = vmatpush.bf16.msra.mxu0 %v3490
    %5051 = vmatpush.bf16.msra.mxu0 %v3474
    %5052 = vmatpush.bf16.msra.mxu0 %v3458
    %5053 = vmatpush.bf16.msra.mxu0 %v3442
    %5054 = vmatpush.bf16.msra.mxu0 %v3426
    %5055 = vmatmul.bf16.gmra.mxu0 %v1613
    %v5056 = vpop.f32.mrf.mxu0
    %v5057 = vadd.f32 %v5043, %v5056
    %v5058 = vpop.f32.mrf.mxu0
    %v5059 = vadd.f32 %v5045, %v5058
    %5060 = vdwg.mxu0
    %5061 = vmatpush.bf16.msra.mxu0 %v3666
    %5062 = vmatpush.bf16.msra.mxu0 %v3650
    %5063 = vmatpush.bf16.msra.mxu0 %v3634
    %5064 = vmatpush.bf16.msra.mxu0 %v3618
    %5065 = vmatpush.bf16.msra.mxu0 %v3602
    %5066 = vmatpush.bf16.msra.mxu0 %v3586
    %5067 = vmatpush.bf16.msra.mxu0 %v3570
    %5068 = vmatpush.bf16.msra.mxu0 %v3554
    %5069 = vmatmul.bf16.gmra.mxu0 %v1614
    %v5070 = vpop.f32.mrf.mxu0
    %v5071 = vadd.f32 %v5057, %v5070
    %v5072 = vpop.f32.mrf.mxu0
    %v5073 = vadd.f32 %v5059, %v5072
    %5074 = vdwg.mxu0
    %v5075 = vld [vmem:[#allocation20] sm:$0xff]
    %v5076 = vld [vmem:[#allocation20 + $0x8] sm:$0xff]
    %v5077 = vld [vmem:[#allocation20 + $0x10] sm:$0xff]
    %v5078 = vld [vmem:[#allocation20 + $0x18] sm:$0xff]
    %v5079 = vld [vmem:[#allocation20 + $0x20] sm:$0xff]
    %v5080 = vld [vmem:[#allocation20 + $0x28] sm:$0xff]
    %v5081 = vld [vmem:[#allocation20 + $0x30] sm:$0xff]
    %v5082 = vld [vmem:[#allocation20 + $0x38] sm:$0xff]
    %v5083 = vld [vmem:[#allocation20 + $0x40] sm:$0xff]
    %v5084 = vld [vmem:[#allocation20 + $0x48] sm:$0xff]
    %v5085 = vld [vmem:[#allocation20 + $0x50] sm:$0xff]
    %v5086 = vld [vmem:[#allocation20 + $0x58] sm:$0xff]
    %v5087 = vld [vmem:[#allocation20 + $0x60] sm:$0xff]
    %v5088 = vld [vmem:[#allocation20 + $0x68] sm:$0xff]
    %v5089 = vld [vmem:[#allocation20 + $0x70] sm:$0xff]
    %v5090 = vld [vmem:[#allocation20 + $0x78] sm:$0xff]
    %v5091 = vld [vmem:[#allocation20 + $0x80] sm:$0xff]
    %v5092 = vld [vmem:[#allocation20 + $0x88] sm:$0xff]
    %v5093 = vld [vmem:[#allocation20 + $0x90] sm:$0xff]
    %v5094 = vld [vmem:[#allocation20 + $0x98] sm:$0xff]
    %v5095 = vld [vmem:[#allocation20 + $0xa0] sm:$0xff]
    %v5096 = vld [vmem:[#allocation20 + $0xa8] sm:$0xff]
    %v5097 = vld [vmem:[#allocation20 + $0xb0] sm:$0xff]
    %v5098 = vld [vmem:[#allocation20 + $0xb8] sm:$0xff]
    %v5099 = vld [vmem:[#allocation20 + $0xc0] sm:$0xff]
    %v5100 = vld [vmem:[#allocation20 + $0xc8] sm:$0xff]
    %v5101 = vld [vmem:[#allocation20 + $0xd0] sm:$0xff]
    %v5102 = vld [vmem:[#allocation20 + $0xd8] sm:$0xff]
    %v5103 = vld [vmem:[#allocation20 + $0xe0] sm:$0xff]
    %v5104 = vld [vmem:[#allocation20 + $0xe8] sm:$0xff]
    %v5105 = vld [vmem:[#allocation20 + $0xf0] sm:$0xff]
    %v5106 = vld [vmem:[#allocation20 + $0xf8] sm:$0xff]
    %v5107 = vld [vmem:[#allocation20 + $0x100] sm:$0xff]
    %v5108 = vld [vmem:[#allocation20 + $0x108] sm:$0xff]
    %v5109 = vld [vmem:[#allocation20 + $0x110] sm:$0xff]
    %v5110 = vld [vmem:[#allocation20 + $0x118] sm:$0xff]
    %v5111 = vld [vmem:[#allocation20 + $0x120] sm:$0xff]
    %v5112 = vld [vmem:[#allocation20 + $0x128] sm:$0xff]
    %v5113 = vld [vmem:[#allocation20 + $0x130] sm:$0xff]
    %v5114 = vld [vmem:[#allocation20 + $0x138] sm:$0xff]
    %v5115 = vld [vmem:[#allocation20 + $0x140] sm:$0xff]
    %v5116 = vld [vmem:[#allocation20 + $0x148] sm:$0xff]
    %v5117 = vld [vmem:[#allocation20 + $0x150] sm:$0xff]
    %v5118 = vld [vmem:[#allocation20 + $0x158] sm:$0xff]
    %v5119 = vld [vmem:[#allocation20 + $0x160] sm:$0xff]
    %v5120 = vld [vmem:[#allocation20 + $0x168] sm:$0xff]
    %v5121 = vld [vmem:[#allocation20 + $0x170] sm:$0xff]
    %v5122 = vld [vmem:[#allocation20 + $0x178] sm:$0xff]
    %v5123 = vld [vmem:[#allocation20 + $0x180] sm:$0xff]
    %v5124 = vld [vmem:[#allocation20 + $0x188] sm:$0xff]
    %v5125 = vld [vmem:[#allocation20 + $0x190] sm:$0xff]
    %v5126 = vld [vmem:[#allocation20 + $0x198] sm:$0xff]
    %v5127 = vld [vmem:[#allocation20 + $0x1a0] sm:$0xff]
    %v5128 = vld [vmem:[#allocation20 + $0x1a8] sm:$0xff]
    %v5129 = vld [vmem:[#allocation20 + $0x1b0] sm:$0xff]
    %v5130 = vld [vmem:[#allocation20 + $0x1b8] sm:$0xff]
    %v5131 = vld [vmem:[#allocation20 + $0x1c0] sm:$0xff]
    %v5132 = vld [vmem:[#allocation20 + $0x1c8] sm:$0xff]
    %v5133 = vld [vmem:[#allocation20 + $0x1d0] sm:$0xff]
    %v5134 = vld [vmem:[#allocation20 + $0x1d8] sm:$0xff]
    %v5135 = vld [vmem:[#allocation20 + $0x1e0] sm:$0xff]
    %v5136 = vld [vmem:[#allocation20 + $0x1e8] sm:$0xff]
    %v5137 = vld [vmem:[#allocation20 + $0x1f0] sm:$0xff]
    %v5138 = vld [vmem:[#allocation20 + $0x1f8] sm:$0xff]
    %v5139 = vpack.c.bf16 %v1044, %v1043
    %v5204 = vunpack.c.l.b16 %v5075
    %v5205 = vunpack.c.h.b16 %v5075
    %v5206 = vunpack.c.l.b16 %v5076
    %v5207 = vunpack.c.h.b16 %v5076
    %v5208 = vunpack.c.l.b16 %v5077
    %v5209 = vunpack.c.h.b16 %v5077
    %v5210 = vunpack.c.l.b16 %v5078
    %v5211 = vunpack.c.h.b16 %v5078
    %v5212 = vunpack.c.l.b16 %v5079
    %v5213 = vunpack.c.h.b16 %v5079
    %v5214 = vunpack.c.l.b16 %v5080
    %v5215 = vunpack.c.h.b16 %v5080
    %v5216 = vunpack.c.l.b16 %v5081
    %v5217 = vunpack.c.h.b16 %v5081
    %v5218 = vunpack.c.l.b16 %v5082
    %v5219 = vunpack.c.h.b16 %v5082
    %v5220 = vunpack.c.l.b16 %v5083
    %v5221 = vunpack.c.h.b16 %v5083
    %v5222 = vunpack.c.l.b16 %v5084
    %v5223 = vunpack.c.h.b16 %v5084
    %v5224 = vunpack.c.l.b16 %v5085
    %v5225 = vunpack.c.h.b16 %v5085
    %v5226 = vunpack.c.l.b16 %v5086
    %v5227 = vunpack.c.h.b16 %v5086
    %v5228 = vunpack.c.l.b16 %v5087
    %v5229 = vunpack.c.h.b16 %v5087
    %v5230 = vunpack.c.l.b16 %v5088
    %v5231 = vunpack.c.h.b16 %v5088
    %v5232 = vunpack.c.l.b16 %v5089
    %v5233 = vunpack.c.h.b16 %v5089
    %v5234 = vunpack.c.l.b16 %v5090
    %v5235 = vunpack.c.h.b16 %v5090
    %v5236 = vunpack.c.l.b16 %v5091
    %v5237 = vunpack.c.h.b16 %v5091
    %v5238 = vunpack.c.l.b16 %v5092
    %v5239 = vunpack.c.h.b16 %v5092
    %v5240 = vunpack.c.l.b16 %v5093
    %v5241 = vunpack.c.h.b16 %v5093
    %v5242 = vunpack.c.l.b16 %v5094
    %v5243 = vunpack.c.h.b16 %v5094
    %v5244 = vunpack.c.l.b16 %v5095
    %v5245 = vunpack.c.h.b16 %v5095
    %v5246 = vunpack.c.l.b16 %v5096
    %v5247 = vunpack.c.h.b16 %v5096
    %v5248 = vunpack.c.l.b16 %v5097
    %v5249 = vunpack.c.h.b16 %v5097
    %v5250 = vunpack.c.l.b16 %v5098
    %v5251 = vunpack.c.h.b16 %v5098
    %v5252 = vunpack.c.l.b16 %v5099
    %v5253 = vunpack.c.h.b16 %v5099
    %v5254 = vunpack.c.l.b16 %v5100
    %v5255 = vunpack.c.h.b16 %v5100
    %v5256 = vunpack.c.l.b16 %v5101
    %v5257 = vunpack.c.h.b16 %v5101
    %v5258 = vunpack.c.l.b16 %v5102
    %v5259 = vunpack.c.h.b16 %v5102
    %v5260 = vunpack.c.l.b16 %v5103
    %v5261 = vunpack.c.h.b16 %v5103
    %v5262 = vunpack.c.l.b16 %v5104
    %v5263 = vunpack.c.h.b16 %v5104
    %v5264 = vunpack.c.l.b16 %v5105
    %v5265 = vunpack.c.h.b16 %v5105
    %v5266 = vunpack.c.l.b16 %v5106
    %v5267 = vunpack.c.h.b16 %v5106
    %v5268 = vunpack.c.l.b16 %v5107
    %v5269 = vunpack.c.h.b16 %v5107
    %v5270 = vunpack.c.l.b16 %v5108
    %v5271 = vunpack.c.h.b16 %v5108
    %v5272 = vunpack.c.l.b16 %v5109
    %v5273 = vunpack.c.h.b16 %v5109
    %v5274 = vunpack.c.l.b16 %v5110
    %v5275 = vunpack.c.h.b16 %v5110
    %v5276 = vunpack.c.l.b16 %v5111
    %v5277 = vunpack.c.h.b16 %v5111
    %v5278 = vunpack.c.l.b16 %v5112
    %v5279 = vunpack.c.h.b16 %v5112
    %v5280 = vunpack.c.l.b16 %v5113
    %v5281 = vunpack.c.h.b16 %v5113
    %v5282 = vunpack.c.l.b16 %v5114
    %v5283 = vunpack.c.h.b16 %v5114
    %v5284 = vunpack.c.l.b16 %v5115
    %v5285 = vunpack.c.h.b16 %v5115
    %v5286 = vunpack.c.l.b16 %v5116
    %v5287 = vunpack.c.h.b16 %v5116
    %v5288 = vunpack.c.l.b16 %v5117
    %v5289 = vunpack.c.h.b16 %v5117
    %v5290 = vunpack.c.l.b16 %v5118
    %v5291 = vunpack.c.h.b16 %v5118
    %v5292 = vunpack.c.l.b16 %v5119
    %v5293 = vunpack.c.h.b16 %v5119
    %v5294 = vunpack.c.l.b16 %v5120
    %v5295 = vunpack.c.h.b16 %v5120
    %v5296 = vunpack.c.l.b16 %v5121
    %v5297 = vunpack.c.h.b16 %v5121
    %v5298 = vunpack.c.l.b16 %v5122
    %v5299 = vunpack.c.h.b16 %v5122
    %v5300 = vunpack.c.l.b16 %v5123
    %v5301 = vunpack.c.h.b16 %v5123
    %v5302 = vunpack.c.l.b16 %v5124
    %v5303 = vunpack.c.h.b16 %v5124
    %v5304 = vunpack.c.l.b16 %v5125
    %v5305 = vunpack.c.h.b16 %v5125
    %v5306 = vunpack.c.l.b16 %v5126
    %v5307 = vunpack.c.h.b16 %v5126
    %v5308 = vunpack.c.l.b16 %v5127
    %v5309 = vunpack.c.h.b16 %v5127
    %v5310 = vunpack.c.l.b16 %v5128
    %v5311 = vunpack.c.h.b16 %v5128
    %v5312 = vunpack.c.l.b16 %v5129
    %v5313 = vunpack.c.h.b16 %v5129
    %v5314 = vunpack.c.l.b16 %v5130
    %v5315 = vunpack.c.h.b16 %v5130
    %v5316 = vunpack.c.l.b16 %v5131
    %v5317 = vunpack.c.h.b16 %v5131
    %v5318 = vunpack.c.l.b16 %v5132
    %v5319 = vunpack.c.h.b16 %v5132
    %v5320 = vunpack.c.l.b16 %v5133
    %v5321 = vunpack.c.h.b16 %v5133
    %v5322 = vunpack.c.l.b16 %v5134
    %v5323 = vunpack.c.h.b16 %v5134
    %v5324 = vunpack.c.l.b16 %v5135
    %v5325 = vunpack.c.h.b16 %v5135
    %v5326 = vunpack.c.l.b16 %v5136
    %v5327 = vunpack.c.h.b16 %v5136
    %v5328 = vunpack.c.l.b16 %v5137
    %v5329 = vunpack.c.h.b16 %v5137
    %v5330 = vunpack.c.l.b16 %v5138
    %v5331 = vunpack.c.h.b16 %v5138
    %v5332 = vpack.c.b16 %v5220, %v5204
    %v5333 = vpack.c.b16 %v5221, %v5205
    %v5334 = vpack.c.b16 %v5222, %v5206
    %v5335 = vpack.c.b16 %v5223, %v5207
    %v5336 = vpack.c.b16 %v5224, %v5208
    %v5337 = vpack.c.b16 %v5225, %v5209
    %v5338 = vpack.c.b16 %v5226, %v5210
    %v5339 = vpack.c.b16 %v5227, %v5211
    %v5340 = vpack.c.b16 %v5228, %v5212
    %v5341 = vpack.c.b16 %v5229, %v5213
    %v5342 = vpack.c.b16 %v5230, %v5214
    %v5343 = vpack.c.b16 %v5231, %v5215
    %v5344 = vpack.c.b16 %v5232, %v5216
    %v5345 = vpack.c.b16 %v5233, %v5217
    %v5346 = vpack.c.b16 %v5234, %v5218
    %v5347 = vpack.c.b16 %v5235, %v5219
    %v5348 = vpack.c.b16 %v5252, %v5236
    %v5349 = vpack.c.b16 %v5253, %v5237
    %v5350 = vpack.c.b16 %v5254, %v5238
    %v5351 = vpack.c.b16 %v5255, %v5239
    %v5352 = vpack.c.b16 %v5256, %v5240
    %v5353 = vpack.c.b16 %v5257, %v5241
    %v5354 = vpack.c.b16 %v5258, %v5242
    %v5355 = vpack.c.b16 %v5259, %v5243
    %v5356 = vpack.c.b16 %v5260, %v5244
    %v5357 = vpack.c.b16 %v5261, %v5245
    %v5358 = vpack.c.b16 %v5262, %v5246
    %v5359 = vpack.c.b16 %v5263, %v5247
    %v5360 = vpack.c.b16 %v5264, %v5248
    %v5361 = vpack.c.b16 %v5265, %v5249
    %v5362 = vpack.c.b16 %v5266, %v5250
    %v5363 = vpack.c.b16 %v5267, %v5251
    %v5364 = vpack.c.b16 %v5284, %v5268
    %v5365 = vpack.c.b16 %v5285, %v5269
    %v5366 = vpack.c.b16 %v5286, %v5270
    %v5367 = vpack.c.b16 %v5287, %v5271
    %v5368 = vpack.c.b16 %v5288, %v5272
    %v5369 = vpack.c.b16 %v5289, %v5273
    %v5370 = vpack.c.b16 %v5290, %v5274
    %v5371 = vpack.c.b16 %v5291, %v5275
    %v5372 = vpack.c.b16 %v5292, %v5276
    %v5373 = vpack.c.b16 %v5293, %v5277
    %v5374 = vpack.c.b16 %v5294, %v5278
    %v5375 = vpack.c.b16 %v5295, %v5279
    %v5376 = vpack.c.b16 %v5296, %v5280
    %v5377 = vpack.c.b16 %v5297, %v5281
    %v5378 = vpack.c.b16 %v5298, %v5282
    %v5379 = vpack.c.b16 %v5299, %v5283
    %v5380 = vpack.c.b16 %v5316, %v5300
    %v5381 = vpack.c.b16 %v5317, %v5301
    %v5382 = vpack.c.b16 %v5318, %v5302
    %v5383 = vpack.c.b16 %v5319, %v5303
    %v5384 = vpack.c.b16 %v5320, %v5304
    %v5385 = vpack.c.b16 %v5321, %v5305
    %v5386 = vpack.c.b16 %v5322, %v5306
    %v5387 = vpack.c.b16 %v5323, %v5307
    %v5388 = vpack.c.b16 %v5324, %v5308
    %v5389 = vpack.c.b16 %v5325, %v5309
    %v5390 = vpack.c.b16 %v5326, %v5310
    %v5391 = vpack.c.b16 %v5327, %v5311
    %v5392 = vpack.c.b16 %v5328, %v5312
    %v5393 = vpack.c.b16 %v5329, %v5313
    %v5394 = vpack.c.b16 %v5330, %v5314
    %v5395 = vpack.c.b16 %v5331, %v5315
    %vm5460 = vcmask 523264
    %v5462 = vsel %vm5460, %v5139, 0
    %5464 = vmatpush.bf16.msra.mxu0 0
    %5465 = vmatpush.bf16.msra.mxu0 0
    %5466 = vmatpush.bf16.msra.mxu0 0
    %5467 = vmatpush.bf16.msra.mxu0 0
    %5468 = vmatpush.bf16.msra.mxu0 %v5380
    %5469 = vmatpush.bf16.msra.mxu0 %v5364
    %5470 = vmatpush.bf16.msra.mxu0 %v5348
    %5471 = vmatpush.bf16.msra.mxu0 %v5332
    %5472 = vmatmul.bf16.gmra.mxu0 %v5462
    %v5473 = vpop.f32.mrf.mxu0
    %v5474 = vadd.f32 0.0, %v5473
    %v5475 = vpop.f32.mrf.mxu0
    %v5476 = vadd.f32 0.0, %v5475
    %5477 = vdwg.mxu0
    %5478 = vmatpush.bf16.msra.mxu0 0
    %5479 = vmatpush.bf16.msra.mxu0 0
    %5480 = vmatpush.bf16.msra.mxu0 0
    %5481 = vmatpush.bf16.msra.mxu0 0
    %5482 = vmatpush.bf16.msra.mxu0 %v5381
    %5483 = vmatpush.bf16.msra.mxu0 %v5365
    %5484 = vmatpush.bf16.msra.mxu0 %v5349
    %5485 = vmatpush.bf16.msra.mxu0 %v5333
    %5486 = vmatmul.bf16.gmra.mxu0 %v5462
    %v5487 = vpop.f32.mrf.mxu0
    %v5488 = vadd.f32 0.0, %v5487
    %v5489 = vpop.f32.mrf.mxu0
    %v5490 = vadd.f32 0.0, %v5489
    %5491 = vdwg.mxu0
    %5492 = vmatpush.bf16.msra.mxu0 0
    %5493 = vmatpush.bf16.msra.mxu0 0
    %5494 = vmatpush.bf16.msra.mxu0 0
    %5495 = vmatpush.bf16.msra.mxu0 0
    %5496 = vmatpush.bf16.msra.mxu0 %v5382
    %5497 = vmatpush.bf16.msra.mxu0 %v5366
    %5498 = vmatpush.bf16.msra.mxu0 %v5350
    %5499 = vmatpush.bf16.msra.mxu0 %v5334
    %5500 = vmatmul.bf16.gmra.mxu0 %v5462
    %v5501 = vpop.f32.mrf.mxu0
    %v5502 = vadd.f32 0.0, %v5501
    %v5503 = vpop.f32.mrf.mxu0
    %v5504 = vadd.f32 0.0, %v5503
    %5505 = vdwg.mxu0
    %5506 = vmatpush.bf16.msra.mxu0 0
    %5507 = vmatpush.bf16.msra.mxu0 0
    %5508 = vmatpush.bf16.msra.mxu0 0
    %5509 = vmatpush.bf16.msra.mxu0 0
    %5510 = vmatpush.bf16.msra.mxu0 %v5383
    %5511 = vmatpush.bf16.msra.mxu0 %v5367
    %5512 = vmatpush.bf16.msra.mxu0 %v5351
    %5513 = vmatpush.bf16.msra.mxu0 %v5335
    %5514 = vmatmul.bf16.gmra.mxu0 %v5462
    %v5515 = vpop.f32.mrf.mxu0
    %v5516 = vadd.f32 0.0, %v5515
    %v5517 = vpop.f32.mrf.mxu0
    %v5518 = vadd.f32 0.0, %v5517
    %5519 = vdwg.mxu0
    %5520 = vmatpush.bf16.msra.mxu0 0
    %5521 = vmatpush.bf16.msra.mxu0 0
    %5522 = vmatpush.bf16.msra.mxu0 0
    %5523 = vmatpush.bf16.msra.mxu0 0
    %5524 = vmatpush.bf16.msra.mxu0 %v5384
    %5525 = vmatpush.bf16.msra.mxu0 %v5368
    %5526 = vmatpush.bf16.msra.mxu0 %v5352
    %5527 = vmatpush.bf16.msra.mxu0 %v5336
    %5528 = vmatmul.bf16.gmra.mxu0 %v5462
    %v5529 = vpop.f32.mrf.mxu0
    %v5530 = vadd.f32 0.0, %v5529
    %v5531 = vpop.f32.mrf.mxu0
    %v5532 = vadd.f32 0.0, %v5531
    %5533 = vdwg.mxu0
    %5534 = vmatpush.bf16.msra.mxu0 0
    %5535 = vmatpush.bf16.msra.mxu0 0
    %5536 = vmatpush.bf16.msra.mxu0 0
    %5537 = vmatpush.bf16.msra.mxu0 0
    %5538 = vmatpush.bf16.msra.mxu0 %v5385
    %5539 = vmatpush.bf16.msra.mxu0 %v5369
    %5540 = vmatpush.bf16.msra.mxu0 %v5353
    %5541 = vmatpush.bf16.msra.mxu0 %v5337
    %5542 = vmatmul.bf16.gmra.mxu0 %v5462
    %v5543 = vpop.f32.mrf.mxu0
    %v5544 = vadd.f32 0.0, %v5543
    %v5545 = vpop.f32.mrf.mxu0
    %v5546 = vadd.f32 0.0, %v5545
    %5547 = vdwg.mxu0
    %5548 = vmatpush.bf16.msra.mxu0 0
    %5549 = vmatpush.bf16.msra.mxu0 0
    %5550 = vmatpush.bf16.msra.mxu0 0
    %5551 = vmatpush.bf16.msra.mxu0 0
    %5552 = vmatpush.bf16.msra.mxu0 %v5386
    %5553 = vmatpush.bf16.msra.mxu0 %v5370
    %5554 = vmatpush.bf16.msra.mxu0 %v5354
    %5555 = vmatpush.bf16.msra.mxu0 %v5338
    %5556 = vmatmul.bf16.gmra.mxu0 %v5462
    %v5557 = vpop.f32.mrf.mxu0
    %v5558 = vadd.f32 0.0, %v5557
    %v5559 = vpop.f32.mrf.mxu0
    %v5560 = vadd.f32 0.0, %v5559
    %5561 = vdwg.mxu0
    %5562 = vmatpush.bf16.msra.mxu0 0
    %5563 = vmatpush.bf16.msra.mxu0 0
    %5564 = vmatpush.bf16.msra.mxu0 0
    %5565 = vmatpush.bf16.msra.mxu0 0
    %5566 = vmatpush.bf16.msra.mxu0 %v5387
    %5567 = vmatpush.bf16.msra.mxu0 %v5371
    %5568 = vmatpush.bf16.msra.mxu0 %v5355
    %5569 = vmatpush.bf16.msra.mxu0 %v5339
    %5570 = vmatmul.bf16.gmra.mxu0 %v5462
    %v5571 = vpop.f32.mrf.mxu0
    %v5572 = vadd.f32 0.0, %v5571
    %v5573 = vpop.f32.mrf.mxu0
    %v5574 = vadd.f32 0.0, %v5573
    %5575 = vdwg.mxu0
    %5576 = vmatpush.bf16.msra.mxu0 0
    %5577 = vmatpush.bf16.msra.mxu0 0
    %5578 = vmatpush.bf16.msra.mxu0 0
    %5579 = vmatpush.bf16.msra.mxu0 0
    %5580 = vmatpush.bf16.msra.mxu0 %v5388
    %5581 = vmatpush.bf16.msra.mxu0 %v5372
    %5582 = vmatpush.bf16.msra.mxu0 %v5356
    %5583 = vmatpush.bf16.msra.mxu0 %v5340
    %5584 = vmatmul.bf16.gmra.mxu0 %v5462
    %v5585 = vpop.f32.mrf.mxu0
    %v5586 = vadd.f32 0.0, %v5585
    %v5587 = vpop.f32.mrf.mxu0
    %v5588 = vadd.f32 0.0, %v5587
    %5589 = vdwg.mxu0
    %5590 = vmatpush.bf16.msra.mxu0 0
    %5591 = vmatpush.bf16.msra.mxu0 0
    %5592 = vmatpush.bf16.msra.mxu0 0
    %5593 = vmatpush.bf16.msra.mxu0 0
    %5594 = vmatpush.bf16.msra.mxu0 %v5389
    %5595 = vmatpush.bf16.msra.mxu0 %v5373
    %5596 = vmatpush.bf16.msra.mxu0 %v5357
    %5597 = vmatpush.bf16.msra.mxu0 %v5341
    %5598 = vmatmul.bf16.gmra.mxu0 %v5462
    %v5599 = vpop.f32.mrf.mxu0
    %v5600 = vadd.f32 0.0, %v5599
    %v5601 = vpop.f32.mrf.mxu0
    %v5602 = vadd.f32 0.0, %v5601
    %5603 = vdwg.mxu0
    %5604 = vmatpush.bf16.msra.mxu0 0
    %5605 = vmatpush.bf16.msra.mxu0 0
    %5606 = vmatpush.bf16.msra.mxu0 0
    %5607 = vmatpush.bf16.msra.mxu0 0
    %5608 = vmatpush.bf16.msra.mxu0 %v5390
    %5609 = vmatpush.bf16.msra.mxu0 %v5374
    %5610 = vmatpush.bf16.msra.mxu0 %v5358
    %5611 = vmatpush.bf16.msra.mxu0 %v5342
    %5612 = vmatmul.bf16.gmra.mxu0 %v5462
    %v5613 = vpop.f32.mrf.mxu0
    %v5614 = vadd.f32 0.0, %v5613
    %v5615 = vpop.f32.mrf.mxu0
    %v5616 = vadd.f32 0.0, %v5615
    %5617 = vdwg.mxu0
    %5618 = vmatpush.bf16.msra.mxu0 0
    %5619 = vmatpush.bf16.msra.mxu0 0
    %5620 = vmatpush.bf16.msra.mxu0 0
    %5621 = vmatpush.bf16.msra.mxu0 0
    %5622 = vmatpush.bf16.msra.mxu0 %v5391
    %5623 = vmatpush.bf16.msra.mxu0 %v5375
    %5624 = vmatpush.bf16.msra.mxu0 %v5359
    %5625 = vmatpush.bf16.msra.mxu0 %v5343
    %5626 = vmatmul.bf16.gmra.mxu0 %v5462
    %v5627 = vpop.f32.mrf.mxu0
    %v5628 = vadd.f32 0.0, %v5627
    %v5629 = vpop.f32.mrf.mxu0
    %v5630 = vadd.f32 0.0, %v5629
    %5631 = vdwg.mxu0
    %5632 = vmatpush.bf16.msra.mxu0 0
    %5633 = vmatpush.bf16.msra.mxu0 0
    %5634 = vmatpush.bf16.msra.mxu0 0
    %5635 = vmatpush.bf16.msra.mxu0 0
    %5636 = vmatpush.bf16.msra.mxu0 %v5392
    %5637 = vmatpush.bf16.msra.mxu0 %v5376
    %5638 = vmatpush.bf16.msra.mxu0 %v5360
    %5639 = vmatpush.bf16.msra.mxu0 %v5344
    %5640 = vmatmul.bf16.gmra.mxu0 %v5462
    %v5641 = vpop.f32.mrf.mxu0
    %v5642 = vadd.f32 0.0, %v5641
    %v5643 = vpop.f32.mrf.mxu0
    %v5644 = vadd.f32 0.0, %v5643
    %5645 = vdwg.mxu0
    %5646 = vmatpush.bf16.msra.mxu0 0
    %5647 = vmatpush.bf16.msra.mxu0 0
    %5648 = vmatpush.bf16.msra.mxu0 0
    %5649 = vmatpush.bf16.msra.mxu0 0
    %5650 = vmatpush.bf16.msra.mxu0 %v5393
    %5651 = vmatpush.bf16.msra.mxu0 %v5377
    %5652 = vmatpush.bf16.msra.mxu0 %v5361
    %5653 = vmatpush.bf16.msra.mxu0 %v5345
    %5654 = vmatmul.bf16.gmra.mxu0 %v5462
    %v5655 = vpop.f32.mrf.mxu0
    %v5656 = vadd.f32 0.0, %v5655
    %v5657 = vpop.f32.mrf.mxu0
    %v5658 = vadd.f32 0.0, %v5657
    %5659 = vdwg.mxu0
    %5660 = vmatpush.bf16.msra.mxu0 0
    %5661 = vmatpush.bf16.msra.mxu0 0
    %5662 = vmatpush.bf16.msra.mxu0 0
    %5663 = vmatpush.bf16.msra.mxu0 0
    %5664 = vmatpush.bf16.msra.mxu0 %v5394
    %5665 = vmatpush.bf16.msra.mxu0 %v5378
    %5666 = vmatpush.bf16.msra.mxu0 %v5362
    %5667 = vmatpush.bf16.msra.mxu0 %v5346
    %5668 = vmatmul.bf16.gmra.mxu0 %v5462
    %v5669 = vpop.f32.mrf.mxu0
    %v5670 = vadd.f32 0.0, %v5669
    %v5671 = vpop.f32.mrf.mxu0
    %v5672 = vadd.f32 0.0, %v5671
    %5673 = vdwg.mxu0
    %5674 = vmatpush.bf16.msra.mxu0 0
    %5675 = vmatpush.bf16.msra.mxu0 0
    %5676 = vmatpush.bf16.msra.mxu0 0
    %5677 = vmatpush.bf16.msra.mxu0 0
    %5678 = vmatpush.bf16.msra.mxu0 %v5395
    %5679 = vmatpush.bf16.msra.mxu0 %v5379
    %5680 = vmatpush.bf16.msra.mxu0 %v5363
    %5681 = vmatpush.bf16.msra.mxu0 %v5347
    %5682 = vmatmul.bf16.gmra.mxu0 %v5462
    %v5683 = vpop.f32.mrf.mxu0
    %v5684 = vadd.f32 0.0, %v5683
    %v5685 = vpop.f32.mrf.mxu0
    %v5686 = vadd.f32 0.0, %v5685
    %5687 = vdwg.mxu0
    %v5688 = vadd.f32 %v4231, %v5474
    %v5689 = vadd.f32 %v4287, %v5488
    %v5690 = vadd.f32 %v4343, %v5502
    %v5691 = vadd.f32 %v4399, %v5516
    %v5692 = vadd.f32 %v4455, %v5530
    %v5693 = vadd.f32 %v4511, %v5544
    %v5694 = vadd.f32 %v4567, %v5558
    %v5695 = vadd.f32 %v4623, %v5572
    %v5696 = vadd.f32 %v4679, %v5586
    %v5697 = vadd.f32 %v4735, %v5600
    %v5698 = vadd.f32 %v4791, %v5614
    %v5699 = vadd.f32 %v4847, %v5628
    %v5700 = vadd.f32 %v4903, %v5642
    %v5701 = vadd.f32 %v4959, %v5656
    %v5702 = vadd.f32 %v5015, %v5670
    %v5703 = vadd.f32 %v5071, %v5684
    %v5704 = vadd.f32 %v4233, %v5476
    %v5705 = vadd.f32 %v4289, %v5490
    %v5706 = vadd.f32 %v4345, %v5504
    %v5707 = vadd.f32 %v4401, %v5518
    %v5708 = vadd.f32 %v4457, %v5532
    %v5709 = vadd.f32 %v4513, %v5546
    %v5710 = vadd.f32 %v4569, %v5560
    %v5711 = vadd.f32 %v4625, %v5574
    %v5712 = vadd.f32 %v4681, %v5588
    %v5713 = vadd.f32 %v4737, %v5602
    %v5714 = vadd.f32 %v4793, %v5616
    %v5715 = vadd.f32 %v4849, %v5630
    %v5716 = vadd.f32 %v4905, %v5644
    %v5717 = vadd.f32 %v4961, %v5658
    %v5718 = vadd.f32 %v5017, %v5672
    %v5719 = vadd.f32 %v5073, %v5686
    %v5720 = vld [vmem:[#allocation20 + $0x200] sm:$0xff]
    %v5721 = vld [vmem:[#allocation20 + $0x208] sm:$0xff]
    %v5722 = vld [vmem:[#allocation20 + $0x210] sm:$0xff]
    %v5723 = vld [vmem:[#allocation20 + $0x218] sm:$0xff]
    %v5724 = vld [vmem:[#allocation20 + $0x220] sm:$0xff]
    %v5725 = vld [vmem:[#allocation20 + $0x228] sm:$0xff]
    %v5726 = vld [vmem:[#allocation20 + $0x230] sm:$0xff]
    %v5727 = vld [vmem:[#allocation20 + $0x238] sm:$0xff]
    %v5728 = vld [vmem:[#allocation20 + $0x240] sm:$0xff]
    %v5729 = vld [vmem:[#allocation20 + $0x248] sm:$0xff]
    %v5730 = vld [vmem:[#allocation20 + $0x250] sm:$0xff]
    %v5731 = vld [vmem:[#allocation20 + $0x258] sm:$0xff]
    %v5732 = vld [vmem:[#allocation20 + $0x260] sm:$0xff]
    %v5733 = vld [vmem:[#allocation20 + $0x268] sm:$0xff]
    %v5734 = vld [vmem:[#allocation20 + $0x270] sm:$0xff]
    %v5735 = vld [vmem:[#allocation20 + $0x278] sm:$0xff]
    %v5736 = vld [vmem:[#allocation20 + $0x280] sm:$0xff]
    %v5737 = vld [vmem:[#allocation20 + $0x288] sm:$0xff]
    %v5738 = vld [vmem:[#allocation20 + $0x290] sm:$0xff]
    %v5739 = vld [vmem:[#allocation20 + $0x298] sm:$0xff]
    %v5740 = vld [vmem:[#allocation20 + $0x2a0] sm:$0xff]
    %v5741 = vld [vmem:[#allocation20 + $0x2a8] sm:$0xff]
    %v5742 = vld [vmem:[#allocation20 + $0x2b0] sm:$0xff]
    %v5743 = vld [vmem:[#allocation20 + $0x2b8] sm:$0xff]
    %v5744 = vld [vmem:[#allocation20 + $0x2c0] sm:$0xff]
    %v5745 = vld [vmem:[#allocation20 + $0x2c8] sm:$0xff]
    %v5746 = vld [vmem:[#allocation20 + $0x2d0] sm:$0xff]
    %v5747 = vld [vmem:[#allocation20 + $0x2d8] sm:$0xff]
    %v5748 = vld [vmem:[#allocation20 + $0x2e0] sm:$0xff]
    %v5749 = vld [vmem:[#allocation20 + $0x2e8] sm:$0xff]
    %v5750 = vld [vmem:[#allocation20 + $0x2f0] sm:$0xff]
    %v5751 = vld [vmem:[#allocation20 + $0x2f8] sm:$0xff]
    %v5752 = vld [vmem:[#allocation20 + $0x300] sm:$0xff]
    %v5753 = vld [vmem:[#allocation20 + $0x308] sm:$0xff]
    %v5754 = vld [vmem:[#allocation20 + $0x310] sm:$0xff]
    %v5755 = vld [vmem:[#allocation20 + $0x318] sm:$0xff]
    %v5756 = vld [vmem:[#allocation20 + $0x320] sm:$0xff]
    %v5757 = vld [vmem:[#allocation20 + $0x328] sm:$0xff]
    %v5758 = vld [vmem:[#allocation20 + $0x330] sm:$0xff]
    %v5759 = vld [vmem:[#allocation20 + $0x338] sm:$0xff]
    %v5760 = vld [vmem:[#allocation20 + $0x340] sm:$0xff]
    %v5761 = vld [vmem:[#allocation20 + $0x348] sm:$0xff]
    %v5762 = vld [vmem:[#allocation20 + $0x350] sm:$0xff]
    %v5763 = vld [vmem:[#allocation20 + $0x358] sm:$0xff]
    %v5764 = vld [vmem:[#allocation20 + $0x360] sm:$0xff]
    %v5765 = vld [vmem:[#allocation20 + $0x368] sm:$0xff]
    %v5766 = vld [vmem:[#allocation20 + $0x370] sm:$0xff]
    %v5767 = vld [vmem:[#allocation20 + $0x378] sm:$0xff]
    %v5768 = vld [vmem:[#allocation20 + $0x380] sm:$0xff]
    %v5769 = vld [vmem:[#allocation20 + $0x388] sm:$0xff]
    %v5770 = vld [vmem:[#allocation20 + $0x390] sm:$0xff]
    %v5771 = vld [vmem:[#allocation20 + $0x398] sm:$0xff]
    %v5772 = vld [vmem:[#allocation20 + $0x3a0] sm:$0xff]
    %v5773 = vld [vmem:[#allocation20 + $0x3a8] sm:$0xff]
    %v5774 = vld [vmem:[#allocation20 + $0x3b0] sm:$0xff]
    %v5775 = vld [vmem:[#allocation20 + $0x3b8] sm:$0xff]
    %v5776 = vld [vmem:[#allocation20 + $0x3c0] sm:$0xff]
    %v5777 = vld [vmem:[#allocation20 + $0x3c8] sm:$0xff]
    %v5778 = vld [vmem:[#allocation20 + $0x3d0] sm:$0xff]
    %v5779 = vld [vmem:[#allocation20 + $0x3d8] sm:$0xff]
    %v5780 = vld [vmem:[#allocation20 + $0x3e0] sm:$0xff]
    %v5781 = vld [vmem:[#allocation20 + $0x3e8] sm:$0xff]
    %v5782 = vld [vmem:[#allocation20 + $0x3f0] sm:$0xff]
    %v5783 = vld [vmem:[#allocation20 + $0x3f8] sm:$0xff]
    %v5784 = vpack.c.bf16 %v1046, %v1045
    %v5849 = vunpack.c.l.b16 %v5720
    %v5850 = vunpack.c.h.b16 %v5720
    %v5851 = vunpack.c.l.b16 %v5721
    %v5852 = vunpack.c.h.b16 %v5721
    %v5853 = vunpack.c.l.b16 %v5722
    %v5854 = vunpack.c.h.b16 %v5722
    %v5855 = vunpack.c.l.b16 %v5723
    %v5856 = vunpack.c.h.b16 %v5723
    %v5857 = vunpack.c.l.b16 %v5724
    %v5858 = vunpack.c.h.b16 %v5724
    %v5859 = vunpack.c.l.b16 %v5725
    %v5860 = vunpack.c.h.b16 %v5725
    %v5861 = vunpack.c.l.b16 %v5726
    %v5862 = vunpack.c.h.b16 %v5726
    %v5863 = vunpack.c.l.b16 %v5727
    %v5864 = vunpack.c.h.b16 %v5727
    %v5865 = vunpack.c.l.b16 %v5728
    %v5866 = vunpack.c.h.b16 %v5728
    %v5867 = vunpack.c.l.b16 %v5729
    %v5868 = vunpack.c.h.b16 %v5729
    %v5869 = vunpack.c.l.b16 %v5730
    %v5870 = vunpack.c.h.b16 %v5730
    %v5871 = vunpack.c.l.b16 %v5731
    %v5872 = vunpack.c.h.b16 %v5731
    %v5873 = vunpack.c.l.b16 %v5732
    %v5874 = vunpack.c.h.b16 %v5732
    %v5875 = vunpack.c.l.b16 %v5733
    %v5876 = vunpack.c.h.b16 %v5733
    %v5877 = vunpack.c.l.b16 %v5734
    %v5878 = vunpack.c.h.b16 %v5734
    %v5879 = vunpack.c.l.b16 %v5735
    %v5880 = vunpack.c.h.b16 %v5735
    %v5881 = vunpack.c.l.b16 %v5736
    %v5882 = vunpack.c.h.b16 %v5736
    %v5883 = vunpack.c.l.b16 %v5737
    %v5884 = vunpack.c.h.b16 %v5737
    %v5885 = vunpack.c.l.b16 %v5738
    %v5886 = vunpack.c.h.b16 %v5738
    %v5887 = vunpack.c.l.b16 %v5739
    %v5888 = vunpack.c.h.b16 %v5739
    %v5889 = vunpack.c.l.b16 %v5740
    %v5890 = vunpack.c.h.b16 %v5740
    %v5891 = vunpack.c.l.b16 %v5741
    %v5892 = vunpack.c.h.b16 %v5741
    %v5893 = vunpack.c.l.b16 %v5742
    %v5894 = vunpack.c.h.b16 %v5742
    %v5895 = vunpack.c.l.b16 %v5743
    %v5896 = vunpack.c.h.b16 %v5743
    %v5897 = vunpack.c.l.b16 %v5744
    %v5898 = vunpack.c.h.b16 %v5744
    %v5899 = vunpack.c.l.b16 %v5745
    %v5900 = vunpack.c.h.b16 %v5745
    %v5901 = vunpack.c.l.b16 %v5746
    %v5902 = vunpack.c.h.b16 %v5746
    %v5903 = vunpack.c.l.b16 %v5747
    %v5904 = vunpack.c.h.b16 %v5747
    %v5905 = vunpack.c.l.b16 %v5748
    %v5906 = vunpack.c.h.b16 %v5748
    %v5907 = vunpack.c.l.b16 %v5749
    %v5908 = vunpack.c.h.b16 %v5749
    %v5909 = vunpack.c.l.b16 %v5750
    %v5910 = vunpack.c.h.b16 %v5750
    %v5911 = vunpack.c.l.b16 %v5751
    %v5912 = vunpack.c.h.b16 %v5751
    %v5913 = vunpack.c.l.b16 %v5752
    %v5914 = vunpack.c.h.b16 %v5752
    %v5915 = vunpack.c.l.b16 %v5753
    %v5916 = vunpack.c.h.b16 %v5753
    %v5917 = vunpack.c.l.b16 %v5754
    %v5918 = vunpack.c.h.b16 %v5754
    %v5919 = vunpack.c.l.b16 %v5755
    %v5920 = vunpack.c.h.b16 %v5755
    %v5921 = vunpack.c.l.b16 %v5756
    %v5922 = vunpack.c.h.b16 %v5756
    %v5923 = vunpack.c.l.b16 %v5757
    %v5924 = vunpack.c.h.b16 %v5757
    %v5925 = vunpack.c.l.b16 %v5758
    %v5926 = vunpack.c.h.b16 %v5758
    %v5927 = vunpack.c.l.b16 %v5759
    %v5928 = vunpack.c.h.b16 %v5759
    %v5929 = vunpack.c.l.b16 %v5760
    %v5930 = vunpack.c.h.b16 %v5760
    %v5931 = vunpack.c.l.b16 %v5761
    %v5932 = vunpack.c.h.b16 %v5761
    %v5933 = vunpack.c.l.b16 %v5762
    %v5934 = vunpack.c.h.b16 %v5762
    %v5935 = vunpack.c.l.b16 %v5763
    %v5936 = vunpack.c.h.b16 %v5763
    %v5937 = vunpack.c.l.b16 %v5764
    %v5938 = vunpack.c.h.b16 %v5764
    %v5939 = vunpack.c.l.b16 %v5765
    %v5940 = vunpack.c.h.b16 %v5765
    %v5941 = vunpack.c.l.b16 %v5766
    %v5942 = vunpack.c.h.b16 %v5766
    %v5943 = vunpack.c.l.b16 %v5767
    %v5944 = vunpack.c.h.b16 %v5767
    %v5945 = vunpack.c.l.b16 %v5768
    %v5946 = vunpack.c.h.b16 %v5768
    %v5947 = vunpack.c.l.b16 %v5769
    %v5948 = vunpack.c.h.b16 %v5769
    %v5949 = vunpack.c.l.b16 %v5770
    %v5950 = vunpack.c.h.b16 %v5770
    %v5951 = vunpack.c.l.b16 %v5771
    %v5952 = vunpack.c.h.b16 %v5771
    %v5953 = vunpack.c.l.b16 %v5772
    %v5954 = vunpack.c.h.b16 %v5772
    %v5955 = vunpack.c.l.b16 %v5773
    %v5956 = vunpack.c.h.b16 %v5773
    %v5957 = vunpack.c.l.b16 %v5774
    %v5958 = vunpack.c.h.b16 %v5774
    %v5959 = vunpack.c.l.b16 %v5775
    %v5960 = vunpack.c.h.b16 %v5775
    %v5961 = vunpack.c.l.b16 %v5776
    %v5962 = vunpack.c.h.b16 %v5776
    %v5963 = vunpack.c.l.b16 %v5777
    %v5964 = vunpack.c.h.b16 %v5777
    %v5965 = vunpack.c.l.b16 %v5778
    %v5966 = vunpack.c.h.b16 %v5778
    %v5967 = vunpack.c.l.b16 %v5779
    %v5968 = vunpack.c.h.b16 %v5779
    %v5969 = vunpack.c.l.b16 %v5780
    %v5970 = vunpack.c.h.b16 %v5780
    %v5971 = vunpack.c.l.b16 %v5781
    %v5972 = vunpack.c.h.b16 %v5781
    %v5973 = vunpack.c.l.b16 %v5782
    %v5974 = vunpack.c.h.b16 %v5782
    %v5975 = vunpack.c.l.b16 %v5783
    %v5976 = vunpack.c.h.b16 %v5783
    %v5977 = vpack.c.b16 %v5865, %v5849
    %v5978 = vpack.c.b16 %v5866, %v5850
    %v5979 = vpack.c.b16 %v5867, %v5851
    %v5980 = vpack.c.b16 %v5868, %v5852
    %v5981 = vpack.c.b16 %v5869, %v5853
    %v5982 = vpack.c.b16 %v5870, %v5854
    %v5983 = vpack.c.b16 %v5871, %v5855
    %v5984 = vpack.c.b16 %v5872, %v5856
    %v5985 = vpack.c.b16 %v5873, %v5857
    %v5986 = vpack.c.b16 %v5874, %v5858
    %v5987 = vpack.c.b16 %v5875, %v5859
    %v5988 = vpack.c.b16 %v5876, %v5860
    %v5989 = vpack.c.b16 %v5877, %v5861
    %v5990 = vpack.c.b16 %v5878, %v5862
    %v5991 = vpack.c.b16 %v5879, %v5863
    %v5992 = vpack.c.b16 %v5880, %v5864
    %v5993 = vpack.c.b16 %v5897, %v5881
    %v5994 = vpack.c.b16 %v5898, %v5882
    %v5995 = vpack.c.b16 %v5899, %v5883
    %v5996 = vpack.c.b16 %v5900, %v5884
    %v5997 = vpack.c.b16 %v5901, %v5885
    %v5998 = vpack.c.b16 %v5902, %v5886
    %v5999 = vpack.c.b16 %v5903, %v5887
    %v6000 = vpack.c.b16 %v5904, %v5888
    %v6001 = vpack.c.b16 %v5905, %v5889
    %v6002 = vpack.c.b16 %v5906, %v5890
    %v6003 = vpack.c.b16 %v5907, %v5891
    %v6004 = vpack.c.b16 %v5908, %v5892
    %v6005 = vpack.c.b16 %v5909, %v5893
    %v6006 = vpack.c.b16 %v5910, %v5894
    %v6007 = vpack.c.b16 %v5911, %v5895
    %v6008 = vpack.c.b16 %v5912, %v5896
    %v6009 = vpack.c.b16 %v5929, %v5913
    %v6010 = vpack.c.b16 %v5930, %v5914
    %v6011 = vpack.c.b16 %v5931, %v5915
    %v6012 = vpack.c.b16 %v5932, %v5916
    %v6013 = vpack.c.b16 %v5933, %v5917
    %v6014 = vpack.c.b16 %v5934, %v5918
    %v6015 = vpack.c.b16 %v5935, %v5919
    %v6016 = vpack.c.b16 %v5936, %v5920
    %v6017 = vpack.c.b16 %v5937, %v5921
    %v6018 = vpack.c.b16 %v5938, %v5922
    %v6019 = vpack.c.b16 %v5939, %v5923
    %v6020 = vpack.c.b16 %v5940, %v5924
    %v6021 = vpack.c.b16 %v5941, %v5925
    %v6022 = vpack.c.b16 %v5942, %v5926
    %v6023 = vpack.c.b16 %v5943, %v5927
    %v6024 = vpack.c.b16 %v5944, %v5928
    %v6025 = vpack.c.b16 %v5961, %v5945
    %v6026 = vpack.c.b16 %v5962, %v5946
    %v6027 = vpack.c.b16 %v5963, %v5947
    %v6028 = vpack.c.b16 %v5964, %v5948
    %v6029 = vpack.c.b16 %v5965, %v5949
    %v6030 = vpack.c.b16 %v5966, %v5950
    %v6031 = vpack.c.b16 %v5967, %v5951
    %v6032 = vpack.c.b16 %v5968, %v5952
    %v6033 = vpack.c.b16 %v5969, %v5953
    %v6034 = vpack.c.b16 %v5970, %v5954
    %v6035 = vpack.c.b16 %v5971, %v5955
    %v6036 = vpack.c.b16 %v5972, %v5956
    %v6037 = vpack.c.b16 %v5973, %v5957
    %v6038 = vpack.c.b16 %v5974, %v5958
    %v6039 = vpack.c.b16 %v5975, %v5959
    %v6040 = vpack.c.b16 %v5976, %v5960
    %v6106 = vsel %vm5460, %v5784, 0
    %6108 = vmatpush.bf16.msra.mxu0 0
    %6109 = vmatpush.bf16.msra.mxu0 0
    %6110 = vmatpush.bf16.msra.mxu0 0
    %6111 = vmatpush.bf16.msra.mxu0 0
    %6112 = vmatpush.bf16.msra.mxu0 %v6025
    %6113 = vmatpush.bf16.msra.mxu0 %v6009
    %6114 = vmatpush.bf16.msra.mxu0 %v5993
    %6115 = vmatpush.bf16.msra.mxu0 %v5977
    %6116 = vmatmul.bf16.gmra.mxu0 %v6106
    %v6117 = vpop.f32.mrf.mxu0
    %v6118 = vadd.f32 0.0, %v6117
    %v6119 = vpop.f32.mrf.mxu0
    %v6120 = vadd.f32 0.0, %v6119
    %6121 = vdwg.mxu0
    %6122 = vmatpush.bf16.msra.mxu0 0
    %6123 = vmatpush.bf16.msra.mxu0 0
    %6124 = vmatpush.bf16.msra.mxu0 0
    %6125 = vmatpush.bf16.msra.mxu0 0
    %6126 = vmatpush.bf16.msra.mxu0 %v6026
    %6127 = vmatpush.bf16.msra.mxu0 %v6010
    %6128 = vmatpush.bf16.msra.mxu0 %v5994
    %6129 = vmatpush.bf16.msra.mxu0 %v5978
    %6130 = vmatmul.bf16.gmra.mxu0 %v6106
    %v6131 = vpop.f32.mrf.mxu0
    %v6132 = vadd.f32 0.0, %v6131
    %v6133 = vpop.f32.mrf.mxu0
    %v6134 = vadd.f32 0.0, %v6133
    %6135 = vdwg.mxu0
    %6136 = vmatpush.bf16.msra.mxu0 0
    %6137 = vmatpush.bf16.msra.mxu0 0
    %6138 = vmatpush.bf16.msra.mxu0 0
    %6139 = vmatpush.bf16.msra.mxu0 0
    %6140 = vmatpush.bf16.msra.mxu0 %v6027
    %6141 = vmatpush.bf16.msra.mxu0 %v6011
    %6142 = vmatpush.bf16.msra.mxu0 %v5995
    %6143 = vmatpush.bf16.msra.mxu0 %v5979
    %6144 = vmatmul.bf16.gmra.mxu0 %v6106
    %v6145 = vpop.f32.mrf.mxu0
    %v6146 = vadd.f32 0.0, %v6145
    %v6147 = vpop.f32.mrf.mxu0
    %v6148 = vadd.f32 0.0, %v6147
    %6149 = vdwg.mxu0
    %6150 = vmatpush.bf16.msra.mxu0 0
    %6151 = vmatpush.bf16.msra.mxu0 0
    %6152 = vmatpush.bf16.msra.mxu0 0
    %6153 = vmatpush.bf16.msra.mxu0 0
    %6154 = vmatpush.bf16.msra.mxu0 %v6028
    %6155 = vmatpush.bf16.msra.mxu0 %v6012
    %6156 = vmatpush.bf16.msra.mxu0 %v5996
    %6157 = vmatpush.bf16.msra.mxu0 %v5980
    %6158 = vmatmul.bf16.gmra.mxu0 %v6106
    %v6159 = vpop.f32.mrf.mxu0
    %v6160 = vadd.f32 0.0, %v6159
    %v6161 = vpop.f32.mrf.mxu0
    %v6162 = vadd.f32 0.0, %v6161
    %6163 = vdwg.mxu0
    %6164 = vmatpush.bf16.msra.mxu0 0
    %6165 = vmatpush.bf16.msra.mxu0 0
    %6166 = vmatpush.bf16.msra.mxu0 0
    %6167 = vmatpush.bf16.msra.mxu0 0
    %6168 = vmatpush.bf16.msra.mxu0 %v6029
    %6169 = vmatpush.bf16.msra.mxu0 %v6013
    %6170 = vmatpush.bf16.msra.mxu0 %v5997
    %6171 = vmatpush.bf16.msra.mxu0 %v5981
    %6172 = vmatmul.bf16.gmra.mxu0 %v6106
    %v6173 = vpop.f32.mrf.mxu0
    %v6174 = vadd.f32 0.0, %v6173
    %v6175 = vpop.f32.mrf.mxu0
    %v6176 = vadd.f32 0.0, %v6175
    %6177 = vdwg.mxu0
    %6178 = vmatpush.bf16.msra.mxu0 0
    %6179 = vmatpush.bf16.msra.mxu0 0
    %6180 = vmatpush.bf16.msra.mxu0 0
    %6181 = vmatpush.bf16.msra.mxu0 0
    %6182 = vmatpush.bf16.msra.mxu0 %v6030
    %6183 = vmatpush.bf16.msra.mxu0 %v6014
    %6184 = vmatpush.bf16.msra.mxu0 %v5998
    %6185 = vmatpush.bf16.msra.mxu0 %v5982
    %6186 = vmatmul.bf16.gmra.mxu0 %v6106
    %v6187 = vpop.f32.mrf.mxu0
    %v6188 = vadd.f32 0.0, %v6187
    %v6189 = vpop.f32.mrf.mxu0
    %v6190 = vadd.f32 0.0, %v6189
    %6191 = vdwg.mxu0
    %6192 = vmatpush.bf16.msra.mxu0 0
    %6193 = vmatpush.bf16.msra.mxu0 0
    %6194 = vmatpush.bf16.msra.mxu0 0
    %6195 = vmatpush.bf16.msra.mxu0 0
    %6196 = vmatpush.bf16.msra.mxu0 %v6031
    %6197 = vmatpush.bf16.msra.mxu0 %v6015
    %6198 = vmatpush.bf16.msra.mxu0 %v5999
    %6199 = vmatpush.bf16.msra.mxu0 %v5983
    %6200 = vmatmul.bf16.gmra.mxu0 %v6106
    %v6201 = vpop.f32.mrf.mxu0
    %v6202 = vadd.f32 0.0, %v6201
    %v6203 = vpop.f32.mrf.mxu0
    %v6204 = vadd.f32 0.0, %v6203
    %6205 = vdwg.mxu0
    %6206 = vmatpush.bf16.msra.mxu0 0
    %6207 = vmatpush.bf16.msra.mxu0 0
    %6208 = vmatpush.bf16.msra.mxu0 0
    %6209 = vmatpush.bf16.msra.mxu0 0
    %6210 = vmatpush.bf16.msra.mxu0 %v6032
    %6211 = vmatpush.bf16.msra.mxu0 %v6016
    %6212 = vmatpush.bf16.msra.mxu0 %v6000
    %6213 = vmatpush.bf16.msra.mxu0 %v5984
    %6214 = vmatmul.bf16.gmra.mxu0 %v6106
    %v6215 = vpop.f32.mrf.mxu0
    %v6216 = vadd.f32 0.0, %v6215
    %v6217 = vpop.f32.mrf.mxu0
    %v6218 = vadd.f32 0.0, %v6217
    %6219 = vdwg.mxu0
    %6220 = vmatpush.bf16.msra.mxu0 0
    %6221 = vmatpush.bf16.msra.mxu0 0
    %6222 = vmatpush.bf16.msra.mxu0 0
    %6223 = vmatpush.bf16.msra.mxu0 0
    %6224 = vmatpush.bf16.msra.mxu0 %v6033
    %6225 = vmatpush.bf16.msra.mxu0 %v6017
    %6226 = vmatpush.bf16.msra.mxu0 %v6001
    %6227 = vmatpush.bf16.msra.mxu0 %v5985
    %6228 = vmatmul.bf16.gmra.mxu0 %v6106
    %v6229 = vpop.f32.mrf.mxu0
    %v6230 = vadd.f32 0.0, %v6229
    %v6231 = vpop.f32.mrf.mxu0
    %v6232 = vadd.f32 0.0, %v6231
    %6233 = vdwg.mxu0
    %6234 = vmatpush.bf16.msra.mxu0 0
    %6235 = vmatpush.bf16.msra.mxu0 0
    %6236 = vmatpush.bf16.msra.mxu0 0
    %6237 = vmatpush.bf16.msra.mxu0 0
    %6238 = vmatpush.bf16.msra.mxu0 %v6034
    %6239 = vmatpush.bf16.msra.mxu0 %v6018
    %6240 = vmatpush.bf16.msra.mxu0 %v6002
    %6241 = vmatpush.bf16.msra.mxu0 %v5986
    %6242 = vmatmul.bf16.gmra.mxu0 %v6106
    %v6243 = vpop.f32.mrf.mxu0
    %v6244 = vadd.f32 0.0, %v6243
    %v6245 = vpop.f32.mrf.mxu0
    %v6246 = vadd.f32 0.0, %v6245
    %6247 = vdwg.mxu0
    %6248 = vmatpush.bf16.msra.mxu0 0
    %6249 = vmatpush.bf16.msra.mxu0 0
    %6250 = vmatpush.bf16.msra.mxu0 0
    %6251 = vmatpush.bf16.msra.mxu0 0
    %6252 = vmatpush.bf16.msra.mxu0 %v6035
    %6253 = vmatpush.bf16.msra.mxu0 %v6019
    %6254 = vmatpush.bf16.msra.mxu0 %v6003
    %6255 = vmatpush.bf16.msra.mxu0 %v5987
    %6256 = vmatmul.bf16.gmra.mxu0 %v6106
    %v6257 = vpop.f32.mrf.mxu0
    %v6258 = vadd.f32 0.0, %v6257
    %v6259 = vpop.f32.mrf.mxu0
    %v6260 = vadd.f32 0.0, %v6259
    %6261 = vdwg.mxu0
    %6262 = vmatpush.bf16.msra.mxu0 0
    %6263 = vmatpush.bf16.msra.mxu0 0
    %6264 = vmatpush.bf16.msra.mxu0 0
    %6265 = vmatpush.bf16.msra.mxu0 0
    %6266 = vmatpush.bf16.msra.mxu0 %v6036
    %6267 = vmatpush.bf16.msra.mxu0 %v6020
    %6268 = vmatpush.bf16.msra.mxu0 %v6004
    %6269 = vmatpush.bf16.msra.mxu0 %v5988
    %6270 = vmatmul.bf16.gmra.mxu0 %v6106
    %v6271 = vpop.f32.mrf.mxu0
    %v6272 = vadd.f32 0.0, %v6271
    %v6273 = vpop.f32.mrf.mxu0
    %v6274 = vadd.f32 0.0, %v6273
    %6275 = vdwg.mxu0
    %6276 = vmatpush.bf16.msra.mxu0 0
    %6277 = vmatpush.bf16.msra.mxu0 0
    %6278 = vmatpush.bf16.msra.mxu0 0
    %6279 = vmatpush.bf16.msra.mxu0 0
    %6280 = vmatpush.bf16.msra.mxu0 %v6037
    %6281 = vmatpush.bf16.msra.mxu0 %v6021
    %6282 = vmatpush.bf16.msra.mxu0 %v6005
    %6283 = vmatpush.bf16.msra.mxu0 %v5989
    %6284 = vmatmul.bf16.gmra.mxu0 %v6106
    %v6285 = vpop.f32.mrf.mxu0
    %v6286 = vadd.f32 0.0, %v6285
    %v6287 = vpop.f32.mrf.mxu0
    %v6288 = vadd.f32 0.0, %v6287
    %6289 = vdwg.mxu0
    %6290 = vmatpush.bf16.msra.mxu0 0
    %6291 = vmatpush.bf16.msra.mxu0 0
    %6292 = vmatpush.bf16.msra.mxu0 0
    %6293 = vmatpush.bf16.msra.mxu0 0
    %6294 = vmatpush.bf16.msra.mxu0 %v6038
    %6295 = vmatpush.bf16.msra.mxu0 %v6022
    %6296 = vmatpush.bf16.msra.mxu0 %v6006
    %6297 = vmatpush.bf16.msra.mxu0 %v5990
    %6298 = vmatmul.bf16.gmra.mxu0 %v6106
    %v6299 = vpop.f32.mrf.mxu0
    %v6300 = vadd.f32 0.0, %v6299
    %v6301 = vpop.f32.mrf.mxu0
    %v6302 = vadd.f32 0.0, %v6301
    %6303 = vdwg.mxu0
    %6304 = vmatpush.bf16.msra.mxu0 0
    %6305 = vmatpush.bf16.msra.mxu0 0
    %6306 = vmatpush.bf16.msra.mxu0 0
    %6307 = vmatpush.bf16.msra.mxu0 0
    %6308 = vmatpush.bf16.msra.mxu0 %v6039
    %6309 = vmatpush.bf16.msra.mxu0 %v6023
    %6310 = vmatpush.bf16.msra.mxu0 %v6007
    %6311 = vmatpush.bf16.msra.mxu0 %v5991
    %6312 = vmatmul.bf16.gmra.mxu0 %v6106
    %v6313 = vpop.f32.mrf.mxu0
    %v6314 = vadd.f32 0.0, %v6313
    %v6315 = vpop.f32.mrf.mxu0
    %v6316 = vadd.f32 0.0, %v6315
    %6317 = vdwg.mxu0
    %6318 = vmatpush.bf16.msra.mxu0 0
    %6319 = vmatpush.bf16.msra.mxu0 0
    %6320 = vmatpush.bf16.msra.mxu0 0
    %6321 = vmatpush.bf16.msra.mxu0 0
    %6322 = vmatpush.bf16.msra.mxu0 %v6040
    %6323 = vmatpush.bf16.msra.mxu0 %v6024
    %6324 = vmatpush.bf16.msra.mxu0 %v6008
    %6325 = vmatpush.bf16.msra.mxu0 %v5992
    %6326 = vmatmul.bf16.gmra.mxu0 %v6106
    %v6327 = vpop.f32.mrf.mxu0
    %v6328 = vadd.f32 0.0, %v6327
    %v6329 = vpop.f32.mrf.mxu0
    %v6330 = vadd.f32 0.0, %v6329
    %6331 = vdwg.mxu0
    %v6332 = vadd.f32 %v5688, %v6118
    %v6333 = vadd.f32 %v5689, %v6132
    %v6334 = vadd.f32 %v5690, %v6146
    %v6335 = vadd.f32 %v5691, %v6160
    %v6336 = vadd.f32 %v5692, %v6174
    %v6337 = vadd.f32 %v5693, %v6188
    %v6338 = vadd.f32 %v5694, %v6202
    %v6339 = vadd.f32 %v5695, %v6216
    %v6340 = vadd.f32 %v5696, %v6230
    %v6341 = vadd.f32 %v5697, %v6244
    %v6342 = vadd.f32 %v5698, %v6258
    %v6343 = vadd.f32 %v5699, %v6272
    %v6344 = vadd.f32 %v5700, %v6286
    %v6345 = vadd.f32 %v5701, %v6300
    %v6346 = vadd.f32 %v5702, %v6314
    %v6347 = vadd.f32 %v5703, %v6328
    %v6348 = vadd.f32 %v5704, %v6120
    %v6349 = vadd.f32 %v5705, %v6134
    %v6350 = vadd.f32 %v5706, %v6148
    %v6351 = vadd.f32 %v5707, %v6162
    %v6352 = vadd.f32 %v5708, %v6176
    %v6353 = vadd.f32 %v5709, %v6190
    %v6354 = vadd.f32 %v5710, %v6204
    %v6355 = vadd.f32 %v5711, %v6218
    %v6356 = vadd.f32 %v5712, %v6232
    %v6357 = vadd.f32 %v5713, %v6246
    %v6358 = vadd.f32 %v5714, %v6260
    %v6359 = vadd.f32 %v5715, %v6274
    %v6360 = vadd.f32 %v5716, %v6288
    %v6361 = vadd.f32 %v5717, %v6302
    %v6362 = vadd.f32 %v5718, %v6316
    %v6363 = vadd.f32 %v5719, %v6330
    %v6364 = vxor.u32 %v6332, 2147483648
    %v6365 = vxor.u32 %v6333, 2147483648
    %v6366 = vxor.u32 %v6334, 2147483648
    %v6367 = vxor.u32 %v6335, 2147483648
    %v6368 = vxor.u32 %v6348, 2147483648
    %v6369 = vxor.u32 %v6349, 2147483648
    %v6370 = vxor.u32 %v6350, 2147483648
    %v6371 = vxor.u32 %v6351, 2147483648
    %v6372 = vmul.f32 %v6364, 1.442695
    %v6373 = vpow.pop %v6372
    %v6374 = vmul.f32 %v6365, 1.442695
    %v6375 = vpow.pop %v6374
    %v6376 = vmul.f32 %v6366, 1.442695
    %v6377 = vpow.pop %v6376
    %v6378 = vmul.f32 %v6367, 1.442695
    %v6379 = vpow.pop %v6378
    %v6380 = vmul.f32 %v6368, 1.442695
    %v6381 = vpow.pop %v6380
    %v6382 = vmul.f32 %v6369, 1.442695
    %v6383 = vpow.pop %v6382
    %v6384 = vmul.f32 %v6370, 1.442695
    %v6385 = vpow.pop %v6384
    %v6386 = vmul.f32 %v6371, 1.442695
    %v6387 = vpow.pop %v6386
    %v6388 = vadd.f32 %v6373, 1.0
    %v6389 = vadd.f32 %v6375, 1.0
    %v6390 = vadd.f32 %v6377, 1.0
    %v6391 = vadd.f32 %v6379, 1.0
    %v6392 = vadd.f32 %v6381, 1.0
    %v6393 = vadd.f32 %v6383, 1.0
    %v6394 = vadd.f32 %v6385, 1.0
    %v6395 = vadd.f32 %v6387, 1.0
    %v6396 = vrcp.pop %v6388
    %v6397 = vmul.f32 %v6388, %v6396
    %v6398 = vsub.f32 1.0, %v6397
    %v6399 = vmul.f32 %v6396, %v6398
    %v6400 = vadd.f32 %v6396, %v6399
    %vm6401 = vweird.f32 %v6388
    %vm6402 = vweird.f32 %v6396
    %vm6403 = vmor %vm6401, %vm6402
    %v6404 = vsel %vm6403, %v6396, %v6400
    %v6405 = vand.u32 2147483647, %v6388
    %vm6406 = vcmp.eq.f32.partialorder %v6405, 8.507059e+37
    %v6407 = vand.u32 %v6388, 2147483648
    %v6408 = vor.u32 1.1754944e-38, %v6407
    %v6409 = vsel %vm6406, %v6408, %v6404
    %v6410 = vmul.f32 1.0, %v6409
    %v6411 = vrcp.pop %v6389
    %v6412 = vmul.f32 %v6389, %v6411
    %v6413 = vsub.f32 1.0, %v6412
    %v6414 = vmul.f32 %v6411, %v6413
    %v6415 = vadd.f32 %v6411, %v6414
    %vm6416 = vweird.f32 %v6389
    %vm6417 = vweird.f32 %v6411
    %vm6418 = vmor %vm6416, %vm6417
    %v6419 = vsel %vm6418, %v6411, %v6415
    %v6420 = vand.u32 2147483647, %v6389
    %vm6421 = vcmp.eq.f32.partialorder %v6420, 8.507059e+37
    %v6422 = vand.u32 %v6389, 2147483648
    %v6423 = vor.u32 1.1754944e-38, %v6422
    %v6424 = vsel %vm6421, %v6423, %v6419
    %v6425 = vmul.f32 1.0, %v6424
    %v6426 = vrcp.pop %v6390
    %v6427 = vmul.f32 %v6390, %v6426
    %v6428 = vsub.f32 1.0, %v6427
    %v6429 = vmul.f32 %v6426, %v6428
    %v6430 = vadd.f32 %v6426, %v6429
    %vm6431 = vweird.f32 %v6390
    %vm6432 = vweird.f32 %v6426
    %vm6433 = vmor %vm6431, %vm6432
    %v6434 = vsel %vm6433, %v6426, %v6430
    %v6435 = vand.u32 2147483647, %v6390
    %vm6436 = vcmp.eq.f32.partialorder %v6435, 8.507059e+37
    %v6437 = vand.u32 %v6390, 2147483648
    %v6438 = vor.u32 1.1754944e-38, %v6437
    %v6439 = vsel %vm6436, %v6438, %v6434
    %v6440 = vmul.f32 1.0, %v6439
    %v6441 = vrcp.pop %v6391
    %v6442 = vmul.f32 %v6391, %v6441
    %v6443 = vsub.f32 1.0, %v6442
    %v6444 = vmul.f32 %v6441, %v6443
    %v6445 = vadd.f32 %v6441, %v6444
    %vm6446 = vweird.f32 %v6391
    %vm6447 = vweird.f32 %v6441
    %vm6448 = vmor %vm6446, %vm6447
    %v6449 = vsel %vm6448, %v6441, %v6445
    %v6450 = vand.u32 2147483647, %v6391
    %vm6451 = vcmp.eq.f32.partialorder %v6450, 8.507059e+37
    %v6452 = vand.u32 %v6391, 2147483648
    %v6453 = vor.u32 1.1754944e-38, %v6452
    %v6454 = vsel %vm6451, %v6453, %v6449
    %v6455 = vmul.f32 1.0, %v6454
    %v6456 = vrcp.pop %v6392
    %v6457 = vmul.f32 %v6392, %v6456
    %v6458 = vsub.f32 1.0, %v6457
    %v6459 = vmul.f32 %v6456, %v6458
    %v6460 = vadd.f32 %v6456, %v6459
    %vm6461 = vweird.f32 %v6392
    %vm6462 = vweird.f32 %v6456
    %vm6463 = vmor %vm6461, %vm6462
    %v6464 = vsel %vm6463, %v6456, %v6460
    %v6465 = vand.u32 2147483647, %v6392
    %vm6466 = vcmp.eq.f32.partialorder %v6465, 8.507059e+37
    %v6467 = vand.u32 %v6392, 2147483648
    %v6468 = vor.u32 1.1754944e-38, %v6467
    %v6469 = vsel %vm6466, %v6468, %v6464
    %v6470 = vmul.f32 1.0, %v6469
    %v6471 = vrcp.pop %v6393
    %v6472 = vmul.f32 %v6393, %v6471
    %v6473 = vsub.f32 1.0, %v6472
    %v6474 = vmul.f32 %v6471, %v6473
    %v6475 = vadd.f32 %v6471, %v6474
    %vm6476 = vweird.f32 %v6393
    %vm6477 = vweird.f32 %v6471
    %vm6478 = vmor %vm6476, %vm6477
    %v6479 = vsel %vm6478, %v6471, %v6475
    %v6480 = vand.u32 2147483647, %v6393
    %vm6481 = vcmp.eq.f32.partialorder %v6480, 8.507059e+37
    %v6482 = vand.u32 %v6393, 2147483648
    %v6483 = vor.u32 1.1754944e-38, %v6482
    %v6484 = vsel %vm6481, %v6483, %v6479
    %v6485 = vmul.f32 1.0, %v6484
    %v6486 = vrcp.pop %v6394
    %v6487 = vmul.f32 %v6394, %v6486
    %v6488 = vsub.f32 1.0, %v6487
    %v6489 = vmul.f32 %v6486, %v6488
    %v6490 = vadd.f32 %v6486, %v6489
    %vm6491 = vweird.f32 %v6394
    %vm6492 = vweird.f32 %v6486
    %vm6493 = vmor %vm6491, %vm6492
    %v6494 = vsel %vm6493, %v6486, %v6490
    %v6495 = vand.u32 2147483647, %v6394
    %vm6496 = vcmp.eq.f32.partialorder %v6495, 8.507059e+37
    %v6497 = vand.u32 %v6394, 2147483648
    %v6498 = vor.u32 1.1754944e-38, %v6497
    %v6499 = vsel %vm6496, %v6498, %v6494
    %v6500 = vmul.f32 1.0, %v6499
    %v6501 = vrcp.pop %v6395
    %v6502 = vmul.f32 %v6395, %v6501
    %v6503 = vsub.f32 1.0, %v6502
    %v6504 = vmul.f32 %v6501, %v6503
    %v6505 = vadd.f32 %v6501, %v6504
    %vm6506 = vweird.f32 %v6395
    %vm6507 = vweird.f32 %v6501
    %vm6508 = vmor %vm6506, %vm6507
    %v6509 = vsel %vm6508, %v6501, %v6505
    %v6510 = vand.u32 2147483647, %v6395
    %vm6511 = vcmp.eq.f32.partialorder %v6510, 8.507059e+37
    %v6512 = vand.u32 %v6395, 2147483648
    %v6513 = vor.u32 1.1754944e-38, %v6512
    %v6514 = vsel %vm6511, %v6513, %v6509
    %v6515 = vmul.f32 1.0, %v6514
    %v6516 = vxor.u32 %v6336, 2147483648
    %v6517 = vxor.u32 %v6337, 2147483648
    %v6518 = vxor.u32 %v6338, 2147483648
    %v6519 = vxor.u32 %v6339, 2147483648
    %v6520 = vxor.u32 %v6352, 2147483648
    %v6521 = vxor.u32 %v6353, 2147483648
    %v6522 = vxor.u32 %v6354, 2147483648
    %v6523 = vxor.u32 %v6355, 2147483648
    %v6524 = vmul.f32 %v6516, 1.442695
    %v6525 = vpow.pop %v6524
    %v6526 = vmul.f32 %v6517, 1.442695
    %v6527 = vpow.pop %v6526
    %v6528 = vmul.f32 %v6518, 1.442695
    %v6529 = vpow.pop %v6528
    %v6530 = vmul.f32 %v6519, 1.442695
    %v6531 = vpow.pop %v6530
    %v6532 = vmul.f32 %v6520, 1.442695
    %v6533 = vpow.pop %v6532
    %v6534 = vmul.f32 %v6521, 1.442695
    %v6535 = vpow.pop %v6534
    %v6536 = vmul.f32 %v6522, 1.442695
    %v6537 = vpow.pop %v6536
    %v6538 = vmul.f32 %v6523, 1.442695
    %v6539 = vpow.pop %v6538
    %v6540 = vadd.f32 %v6525, 1.0
    %v6541 = vadd.f32 %v6527, 1.0
    %v6542 = vadd.f32 %v6529, 1.0
    %v6543 = vadd.f32 %v6531, 1.0
    %v6544 = vadd.f32 %v6533, 1.0
    %v6545 = vadd.f32 %v6535, 1.0
    %v6546 = vadd.f32 %v6537, 1.0
    %v6547 = vadd.f32 %v6539, 1.0
    %v6548 = vrcp.pop %v6540
    %v6549 = vmul.f32 %v6540, %v6548
    %v6550 = vsub.f32 1.0, %v6549
    %v6551 = vmul.f32 %v6548, %v6550
    %v6552 = vadd.f32 %v6548, %v6551
    %vm6553 = vweird.f32 %v6540
    %vm6554 = vweird.f32 %v6548
    %vm6555 = vmor %vm6553, %vm6554
    %v6556 = vsel %vm6555, %v6548, %v6552
    %v6557 = vand.u32 2147483647, %v6540
    %vm6558 = vcmp.eq.f32.partialorder %v6557, 8.507059e+37
    %v6559 = vand.u32 %v6540, 2147483648
    %v6560 = vor.u32 1.1754944e-38, %v6559
    %v6561 = vsel %vm6558, %v6560, %v6556
    %v6562 = vmul.f32 1.0, %v6561
    %v6563 = vrcp.pop %v6541
    %v6564 = vmul.f32 %v6541, %v6563
    %v6565 = vsub.f32 1.0, %v6564
    %v6566 = vmul.f32 %v6563, %v6565
    %v6567 = vadd.f32 %v6563, %v6566
    %vm6568 = vweird.f32 %v6541
    %vm6569 = vweird.f32 %v6563
    %vm6570 = vmor %vm6568, %vm6569
    %v6571 = vsel %vm6570, %v6563, %v6567
    %v6572 = vand.u32 2147483647, %v6541
    %vm6573 = vcmp.eq.f32.partialorder %v6572, 8.507059e+37
    %v6574 = vand.u32 %v6541, 2147483648
    %v6575 = vor.u32 1.1754944e-38, %v6574
    %v6576 = vsel %vm6573, %v6575, %v6571
    %v6577 = vmul.f32 1.0, %v6576
    %v6578 = vrcp.pop %v6542
    %v6579 = vmul.f32 %v6542, %v6578
    %v6580 = vsub.f32 1.0, %v6579
    %v6581 = vmul.f32 %v6578, %v6580
    %v6582 = vadd.f32 %v6578, %v6581
    %vm6583 = vweird.f32 %v6542
    %vm6584 = vweird.f32 %v6578
    %vm6585 = vmor %vm6583, %vm6584
    %v6586 = vsel %vm6585, %v6578, %v6582
    %v6587 = vand.u32 2147483647, %v6542
    %vm6588 = vcmp.eq.f32.partialorder %v6587, 8.507059e+37
    %v6589 = vand.u32 %v6542, 2147483648
    %v6590 = vor.u32 1.1754944e-38, %v6589
    %v6591 = vsel %vm6588, %v6590, %v6586
    %v6592 = vmul.f32 1.0, %v6591
    %v6593 = vrcp.pop %v6543
    %v6594 = vmul.f32 %v6543, %v6593
    %v6595 = vsub.f32 1.0, %v6594
    %v6596 = vmul.f32 %v6593, %v6595
    %v6597 = vadd.f32 %v6593, %v6596
    %vm6598 = vweird.f32 %v6543
    %vm6599 = vweird.f32 %v6593
    %vm6600 = vmor %vm6598, %vm6599
    %v6601 = vsel %vm6600, %v6593, %v6597
    %v6602 = vand.u32 2147483647, %v6543
    %vm6603 = vcmp.eq.f32.partialorder %v6602, 8.507059e+37
    %v6604 = vand.u32 %v6543, 2147483648
    %v6605 = vor.u32 1.1754944e-38, %v6604
    %v6606 = vsel %vm6603, %v6605, %v6601
    %v6607 = vmul.f32 1.0, %v6606
    %v6608 = vrcp.pop %v6544
    %v6609 = vmul.f32 %v6544, %v6608
    %v6610 = vsub.f32 1.0, %v6609
    %v6611 = vmul.f32 %v6608, %v6610
    %v6612 = vadd.f32 %v6608, %v6611
    %vm6613 = vweird.f32 %v6544
    %vm6614 = vweird.f32 %v6608
    %vm6615 = vmor %vm6613, %vm6614
    %v6616 = vsel %vm6615, %v6608, %v6612
    %v6617 = vand.u32 2147483647, %v6544
    %vm6618 = vcmp.eq.f32.partialorder %v6617, 8.507059e+37
    %v6619 = vand.u32 %v6544, 2147483648
    %v6620 = vor.u32 1.1754944e-38, %v6619
    %v6621 = vsel %vm6618, %v6620, %v6616
    %v6622 = vmul.f32 1.0, %v6621
    %v6623 = vrcp.pop %v6545
    %v6624 = vmul.f32 %v6545, %v6623
    %v6625 = vsub.f32 1.0, %v6624
    %v6626 = vmul.f32 %v6623, %v6625
    %v6627 = vadd.f32 %v6623, %v6626
    %vm6628 = vweird.f32 %v6545
    %vm6629 = vweird.f32 %v6623
    %vm6630 = vmor %vm6628, %vm6629
    %v6631 = vsel %vm6630, %v6623, %v6627
    %v6632 = vand.u32 2147483647, %v6545
    %vm6633 = vcmp.eq.f32.partialorder %v6632, 8.507059e+37
    %v6634 = vand.u32 %v6545, 2147483648
    %v6635 = vor.u32 1.1754944e-38, %v6634
    %v6636 = vsel %vm6633, %v6635, %v6631
    %v6637 = vmul.f32 1.0, %v6636
    %v6638 = vrcp.pop %v6546
    %v6639 = vmul.f32 %v6546, %v6638
    %v6640 = vsub.f32 1.0, %v6639
    %v6641 = vmul.f32 %v6638, %v6640
    %v6642 = vadd.f32 %v6638, %v6641
    %vm6643 = vweird.f32 %v6546
    %vm6644 = vweird.f32 %v6638
    %vm6645 = vmor %vm6643, %vm6644
    %v6646 = vsel %vm6645, %v6638, %v6642
    %v6647 = vand.u32 2147483647, %v6546
    %vm6648 = vcmp.eq.f32.partialorder %v6647, 8.507059e+37
    %v6649 = vand.u32 %v6546, 2147483648
    %v6650 = vor.u32 1.1754944e-38, %v6649
    %v6651 = vsel %vm6648, %v6650, %v6646
    %v6652 = vmul.f32 1.0, %v6651
    %v6653 = vrcp.pop %v6547
    %v6654 = vmul.f32 %v6547, %v6653
    %v6655 = vsub.f32 1.0, %v6654
    %v6656 = vmul.f32 %v6653, %v6655
    %v6657 = vadd.f32 %v6653, %v6656
    %vm6658 = vweird.f32 %v6547
    %vm6659 = vweird.f32 %v6653
    %vm6660 = vmor %vm6658, %vm6659
    %v6661 = vsel %vm6660, %v6653, %v6657
    %v6662 = vand.u32 2147483647, %v6547
    %vm6663 = vcmp.eq.f32.partialorder %v6662, 8.507059e+37
    %v6664 = vand.u32 %v6547, 2147483648
    %v6665 = vor.u32 1.1754944e-38, %v6664
    %v6666 = vsel %vm6663, %v6665, %v6661
    %v6667 = vmul.f32 1.0, %v6666
    %v6668 = vtanh.pop %v6340
    %v6669 = vtanh.pop %v6341
    %v6670 = vtanh.pop %v6342
    %v6671 = vtanh.pop %v6343
    %v6672 = vtanh.pop %v6356
    %v6673 = vtanh.pop %v6357
    %v6674 = vtanh.pop %v6358
    %v6675 = vtanh.pop %v6359
    %v6676 = vxor.u32 %v6344, 2147483648
    %v6677 = vxor.u32 %v6345, 2147483648
    %v6678 = vxor.u32 %v6346, 2147483648
    %v6679 = vxor.u32 %v6347, 2147483648
    %v6680 = vxor.u32 %v6360, 2147483648
    %v6681 = vxor.u32 %v6361, 2147483648
    %v6682 = vxor.u32 %v6362, 2147483648
    %v6683 = vxor.u32 %v6363, 2147483648
    %v6684 = vmul.f32 %v6676, 1.442695
    %v6685 = vpow.pop %v6684
    %v6686 = vmul.f32 %v6677, 1.442695
    %v6687 = vpow.pop %v6686
    %v6688 = vmul.f32 %v6678, 1.442695
    %v6689 = vpow.pop %v6688
    %v6690 = vmul.f32 %v6679, 1.442695
    %v6691 = vpow.pop %v6690
    %v6692 = vmul.f32 %v6680, 1.442695
    %v6693 = vpow.pop %v6692
    %v6694 = vmul.f32 %v6681, 1.442695
    %v6695 = vpow.pop %v6694
    %v6696 = vmul.f32 %v6682, 1.442695
    %v6697 = vpow.pop %v6696
    %v6698 = vmul.f32 %v6683, 1.442695
    %v6699 = vpow.pop %v6698
    %v6700 = vadd.f32 %v6685, 1.0
    %v6701 = vadd.f32 %v6687, 1.0
    %v6702 = vadd.f32 %v6689, 1.0
    %v6703 = vadd.f32 %v6691, 1.0
    %v6704 = vadd.f32 %v6693, 1.0
    %v6705 = vadd.f32 %v6695, 1.0
    %v6706 = vadd.f32 %v6697, 1.0
    %v6707 = vadd.f32 %v6699, 1.0
    %v6708 = vrcp.pop %v6700
    %v6709 = vmul.f32 %v6700, %v6708
    %v6710 = vsub.f32 1.0, %v6709
    %v6711 = vmul.f32 %v6708, %v6710
    %v6712 = vadd.f32 %v6708, %v6711
    %vm6713 = vweird.f32 %v6700
    %vm6714 = vweird.f32 %v6708
    %vm6715 = vmor %vm6713, %vm6714
    %v6716 = vsel %vm6715, %v6708, %v6712
    %v6717 = vand.u32 2147483647, %v6700
    %vm6718 = vcmp.eq.f32.partialorder %v6717, 8.507059e+37
    %v6719 = vand.u32 %v6700, 2147483648
    %v6720 = vor.u32 1.1754944e-38, %v6719
    %v6721 = vsel %vm6718, %v6720, %v6716
    %v6722 = vmul.f32 1.0, %v6721
    %v6723 = vrcp.pop %v6701
    %v6724 = vmul.f32 %v6701, %v6723
    %v6725 = vsub.f32 1.0, %v6724
    %v6726 = vmul.f32 %v6723, %v6725
    %v6727 = vadd.f32 %v6723, %v6726
    %vm6728 = vweird.f32 %v6701
    %vm6729 = vweird.f32 %v6723
    %vm6730 = vmor %vm6728, %vm6729
    %v6731 = vsel %vm6730, %v6723, %v6727
    %v6732 = vand.u32 2147483647, %v6701
    %vm6733 = vcmp.eq.f32.partialorder %v6732, 8.507059e+37
    %v6734 = vand.u32 %v6701, 2147483648
    %v6735 = vor.u32 1.1754944e-38, %v6734
    %v6736 = vsel %vm6733, %v6735, %v6731
    %v6737 = vmul.f32 1.0, %v6736
    %v6738 = vrcp.pop %v6702
    %v6739 = vmul.f32 %v6702, %v6738
    %v6740 = vsub.f32 1.0, %v6739
    %v6741 = vmul.f32 %v6738, %v6740
    %v6742 = vadd.f32 %v6738, %v6741
    %vm6743 = vweird.f32 %v6702
    %vm6744 = vweird.f32 %v6738
    %vm6745 = vmor %vm6743, %vm6744
    %v6746 = vsel %vm6745, %v6738, %v6742
    %v6747 = vand.u32 2147483647, %v6702
    %vm6748 = vcmp.eq.f32.partialorder %v6747, 8.507059e+37
    %v6749 = vand.u32 %v6702, 2147483648
    %v6750 = vor.u32 1.1754944e-38, %v6749
    %v6751 = vsel %vm6748, %v6750, %v6746
    %v6752 = vmul.f32 1.0, %v6751
    %v6753 = vrcp.pop %v6703
    %v6754 = vmul.f32 %v6703, %v6753
    %v6755 = vsub.f32 1.0, %v6754
    %v6756 = vmul.f32 %v6753, %v6755
    %v6757 = vadd.f32 %v6753, %v6756
    %vm6758 = vweird.f32 %v6703
    %vm6759 = vweird.f32 %v6753
    %vm6760 = vmor %vm6758, %vm6759
    %v6761 = vsel %vm6760, %v6753, %v6757
    %v6762 = vand.u32 2147483647, %v6703
    %vm6763 = vcmp.eq.f32.partialorder %v6762, 8.507059e+37
    %v6764 = vand.u32 %v6703, 2147483648
    %v6765 = vor.u32 1.1754944e-38, %v6764
    %v6766 = vsel %vm6763, %v6765, %v6761
    %v6767 = vmul.f32 1.0, %v6766
    %v6768 = vrcp.pop %v6704
    %v6769 = vmul.f32 %v6704, %v6768
    %v6770 = vsub.f32 1.0, %v6769
    %v6771 = vmul.f32 %v6768, %v6770
    %v6772 = vadd.f32 %v6768, %v6771
    %vm6773 = vweird.f32 %v6704
    %vm6774 = vweird.f32 %v6768
    %vm6775 = vmor %vm6773, %vm6774
    %v6776 = vsel %vm6775, %v6768, %v6772
    %v6777 = vand.u32 2147483647, %v6704
    %vm6778 = vcmp.eq.f32.partialorder %v6777, 8.507059e+37
    %v6779 = vand.u32 %v6704, 2147483648
    %v6780 = vor.u32 1.1754944e-38, %v6779
    %v6781 = vsel %vm6778, %v6780, %v6776
    %v6782 = vmul.f32 1.0, %v6781
    %v6783 = vrcp.pop %v6705
    %v6784 = vmul.f32 %v6705, %v6783
    %v6785 = vsub.f32 1.0, %v6784
    %v6786 = vmul.f32 %v6783, %v6785
    %v6787 = vadd.f32 %v6783, %v6786
    %vm6788 = vweird.f32 %v6705
    %vm6789 = vweird.f32 %v6783
    %vm6790 = vmor %vm6788, %vm6789
    %v6791 = vsel %vm6790, %v6783, %v6787
    %v6792 = vand.u32 2147483647, %v6705
    %vm6793 = vcmp.eq.f32.partialorder %v6792, 8.507059e+37
    %v6794 = vand.u32 %v6705, 2147483648
    %v6795 = vor.u32 1.1754944e-38, %v6794
    %v6796 = vsel %vm6793, %v6795, %v6791
    %v6797 = vmul.f32 1.0, %v6796
    %v6798 = vrcp.pop %v6706
    %v6799 = vmul.f32 %v6706, %v6798
    %v6800 = vsub.f32 1.0, %v6799
    %v6801 = vmul.f32 %v6798, %v6800
    %v6802 = vadd.f32 %v6798, %v6801
    %vm6803 = vweird.f32 %v6706
    %vm6804 = vweird.f32 %v6798
    %vm6805 = vmor %vm6803, %vm6804
    %v6806 = vsel %vm6805, %v6798, %v6802
    %v6807 = vand.u32 2147483647, %v6706
    %vm6808 = vcmp.eq.f32.partialorder %v6807, 8.507059e+37
    %v6809 = vand.u32 %v6706, 2147483648
    %v6810 = vor.u32 1.1754944e-38, %v6809
    %v6811 = vsel %vm6808, %v6810, %v6806
    %v6812 = vmul.f32 1.0, %v6811
    %v6813 = vrcp.pop %v6707
    %v6814 = vmul.f32 %v6707, %v6813
    %v6815 = vsub.f32 1.0, %v6814
    %v6816 = vmul.f32 %v6813, %v6815
    %v6817 = vadd.f32 %v6813, %v6816
    %vm6818 = vweird.f32 %v6707
    %vm6819 = vweird.f32 %v6813
    %vm6820 = vmor %vm6818, %vm6819
    %v6821 = vsel %vm6820, %v6813, %v6817
    %v6822 = vand.u32 2147483647, %v6707
    %vm6823 = vcmp.eq.f32.partialorder %v6822, 8.507059e+37
    %v6824 = vand.u32 %v6707, 2147483648
    %v6825 = vor.u32 1.1754944e-38, %v6824
    %v6826 = vsel %vm6823, %v6825, %v6821
    %v6827 = vmul.f32 1.0, %v6826
    %v6828 = vld [vmem:[%s3] sm:$0xff]
    %v6829 = vld [vmem:[%s3 + $0x8] sm:$0xff]
    %v6830 = vld [vmem:[%s3 + $0x10] sm:$0xff]
    %v6831 = vld [vmem:[%s3 + $0x18] sm:$0xff]
    %v6832 = vld [vmem:[%s3 + $0x20] sm:$0xff]
    %v6833 = vld [vmem:[%s3 + $0x28] sm:$0xff]
    %v6834 = vld [vmem:[%s3 + $0x30] sm:$0xff]
    %v6835 = vld [vmem:[%s3 + $0x38] sm:$0xff]
    %v6836 = vmul.f32 %v6562, %v6828
    %v6837 = vmul.f32 %v6577, %v6829
    %v6838 = vmul.f32 %v6592, %v6830
    %v6839 = vmul.f32 %v6607, %v6831
    %v6840 = vmul.f32 %v6622, %v6832
    %v6841 = vmul.f32 %v6637, %v6833
    %v6842 = vmul.f32 %v6652, %v6834
    %v6843 = vmul.f32 %v6667, %v6835
    %v6844 = vmul.f32 %v6410, %v6668
    %v6845 = vmul.f32 %v6425, %v6669
    %v6846 = vmul.f32 %v6440, %v6670
    %v6847 = vmul.f32 %v6455, %v6671
    %v6848 = vmul.f32 %v6470, %v6672
    %v6849 = vmul.f32 %v6485, %v6673
    %v6850 = vmul.f32 %v6500, %v6674
    %v6851 = vmul.f32 %v6515, %v6675
    %v6852 = vadd.f32 %v6836, %v6844
    %v6853 = vadd.f32 %v6837, %v6845
    %v6854 = vadd.f32 %v6838, %v6846
    %v6855 = vadd.f32 %v6839, %v6847
    %v6856 = vadd.f32 %v6840, %v6848
    %v6857 = vadd.f32 %v6841, %v6849
    %v6858 = vadd.f32 %v6842, %v6850
    %v6859 = vadd.f32 %v6843, %v6851
    %v6860 = vtanh.pop %v6852
    %v6861 = vtanh.pop %v6853
    %v6862 = vtanh.pop %v6854
    %v6863 = vtanh.pop %v6855
    %v6864 = vtanh.pop %v6856
    %v6865 = vtanh.pop %v6857
    %v6866 = vtanh.pop %v6858
    %v6867 = vtanh.pop %v6859
    %v6868 = vmul.f32 %v6722, %v6860
    %v6869 = vmul.f32 %v6737, %v6861
    %v6870 = vmul.f32 %v6752, %v6862
    %v6871 = vmul.f32 %v6767, %v6863
    %v6872 = vmul.f32 %v6782, %v6864
    %v6873 = vmul.f32 %v6797, %v6865
    %v6874 = vmul.f32 %v6812, %v6866
    %v6875 = vmul.f32 %v6827, %v6867
    %v6876 = vld [vmem:[#allocation23] sm:$0xff]
    %v6877 = vld [vmem:[#allocation23 + $0x8] sm:$0xff]
    %v6878 = vld [vmem:[#allocation23 + $0x10] sm:$0xff]
    %v6879 = vld [vmem:[#allocation23 + $0x18] sm:$0xff]
    %v6880 = vld [vmem:[#allocation23 + $0x20] sm:$0xff]
    %v6881 = vld [vmem:[#allocation23 + $0x28] sm:$0xff]
    %v6882 = vld [vmem:[#allocation23 + $0x30] sm:$0xff]
    %v6883 = vld [vmem:[#allocation23 + $0x38] sm:$0xff]
    %v6884 = vld [vmem:[#allocation23 + $0x40] sm:$0xff]
    %v6885 = vld [vmem:[#allocation23 + $0x48] sm:$0xff]
    %v6886 = vld [vmem:[#allocation23 + $0x50] sm:$0xff]
    %v6887 = vld [vmem:[#allocation23 + $0x58] sm:$0xff]
    %v6888 = vld [vmem:[#allocation23 + $0x60] sm:$0xff]
    %v6889 = vld [vmem:[#allocation23 + $0x68] sm:$0xff]
    %v6890 = vld [vmem:[#allocation23 + $0x70] sm:$0xff]
    %v6891 = vld [vmem:[#allocation23 + $0x78] sm:$0xff]
    %v6892 = vld [vmem:[#allocation23 + $0x80] sm:$0xff]
    %v6893 = vld [vmem:[#allocation23 + $0x88] sm:$0xff]
    %v6894 = vld [vmem:[#allocation23 + $0x90] sm:$0xff]
    %v6895 = vld [vmem:[#allocation23 + $0x98] sm:$0xff]
    %v6896 = vld [vmem:[#allocation23 + $0xa0] sm:$0xff]
    %v6897 = vld [vmem:[#allocation23 + $0xa8] sm:$0xff]
    %v6898 = vld [vmem:[#allocation23 + $0xb0] sm:$0xff]
    %v6899 = vld [vmem:[#allocation23 + $0xb8] sm:$0xff]
    %v6900 = vld [vmem:[#allocation23 + $0xc0] sm:$0xff]
    %v6901 = vld [vmem:[#allocation23 + $0xc8] sm:$0xff]
    %v6902 = vld [vmem:[#allocation23 + $0xd0] sm:$0xff]
    %v6903 = vld [vmem:[#allocation23 + $0xd8] sm:$0xff]
    %v6904 = vld [vmem:[#allocation23 + $0xe0] sm:$0xff]
    %v6905 = vld [vmem:[#allocation23 + $0xe8] sm:$0xff]
    %v6906 = vld [vmem:[#allocation23 + $0xf0] sm:$0xff]
    %v6907 = vld [vmem:[#allocation23 + $0xf8] sm:$0xff]
    %v6908 = vld [vmem:[#allocation23 + $0x100] sm:$0xff]
    %v6909 = vld [vmem:[#allocation23 + $0x108] sm:$0xff]
    %v6910 = vld [vmem:[#allocation23 + $0x110] sm:$0xff]
    %v6911 = vld [vmem:[#allocation23 + $0x118] sm:$0xff]
    %v6912 = vld [vmem:[#allocation23 + $0x120] sm:$0xff]
    %v6913 = vld [vmem:[#allocation23 + $0x128] sm:$0xff]
    %v6914 = vld [vmem:[#allocation23 + $0x130] sm:$0xff]
    %v6915 = vld [vmem:[#allocation23 + $0x138] sm:$0xff]
    %v6916 = vld [vmem:[#allocation23 + $0x140] sm:$0xff]
    %v6917 = vld [vmem:[#allocation23 + $0x148] sm:$0xff]
    %v6918 = vld [vmem:[#allocation23 + $0x150] sm:$0xff]
    %v6919 = vld [vmem:[#allocation23 + $0x158] sm:$0xff]
    %v6920 = vld [vmem:[#allocation23 + $0x160] sm:$0xff]
    %v6921 = vld [vmem:[#allocation23 + $0x168] sm:$0xff]
    %v6922 = vld [vmem:[#allocation23 + $0x170] sm:$0xff]
    %v6923 = vld [vmem:[#allocation23 + $0x178] sm:$0xff]
    %v6924 = vld [vmem:[#allocation23 + $0x180] sm:$0xff]
    %v6925 = vld [vmem:[#allocation23 + $0x188] sm:$0xff]
    %v6926 = vld [vmem:[#allocation23 + $0x190] sm:$0xff]
    %v6927 = vld [vmem:[#allocation23 + $0x198] sm:$0xff]
    %v6928 = vld [vmem:[#allocation23 + $0x1a0] sm:$0xff]
    %v6929 = vld [vmem:[#allocation23 + $0x1a8] sm:$0xff]
    %v6930 = vld [vmem:[#allocation23 + $0x1b0] sm:$0xff]
    %v6931 = vld [vmem:[#allocation23 + $0x1b8] sm:$0xff]
    %v6932 = vld [vmem:[#allocation23 + $0x1c0] sm:$0xff]
    %v6933 = vld [vmem:[#allocation23 + $0x1c8] sm:$0xff]
    %v6934 = vld [vmem:[#allocation23 + $0x1d0] sm:$0xff]
    %v6935 = vld [vmem:[#allocation23 + $0x1d8] sm:$0xff]
    %v6936 = vld [vmem:[#allocation23 + $0x1e0] sm:$0xff]
    %v6937 = vld [vmem:[#allocation23 + $0x1e8] sm:$0xff]
    %v6938 = vld [vmem:[#allocation23 + $0x1f0] sm:$0xff]
    %v6939 = vld [vmem:[#allocation23 + $0x1f8] sm:$0xff]
    %v6940 = vld [vmem:[#allocation23 + $0x200] sm:$0xff]
    %v6941 = vld [vmem:[#allocation23 + $0x208] sm:$0xff]
    %v6942 = vld [vmem:[#allocation23 + $0x210] sm:$0xff]
    %v6943 = vld [vmem:[#allocation23 + $0x218] sm:$0xff]
    %v6944 = vld [vmem:[#allocation23 + $0x220] sm:$0xff]
    %v6945 = vld [vmem:[#allocation23 + $0x228] sm:$0xff]
    %v6946 = vld [vmem:[#allocation23 + $0x230] sm:$0xff]
    %v6947 = vld [vmem:[#allocation23 + $0x238] sm:$0xff]
    %v6948 = vld [vmem:[#allocation23 + $0x240] sm:$0xff]
    %v6949 = vld [vmem:[#allocation23 + $0x248] sm:$0xff]
    %v6950 = vld [vmem:[#allocation23 + $0x250] sm:$0xff]
    %v6951 = vld [vmem:[#allocation23 + $0x258] sm:$0xff]
    %v6952 = vld [vmem:[#allocation23 + $0x260] sm:$0xff]
    %v6953 = vld [vmem:[#allocation23 + $0x268] sm:$0xff]
    %v6954 = vld [vmem:[#allocation23 + $0x270] sm:$0xff]
    %v6955 = vld [vmem:[#allocation23 + $0x278] sm:$0xff]
    %v6956 = vld [vmem:[#allocation23 + $0x280] sm:$0xff]
    %v6957 = vld [vmem:[#allocation23 + $0x288] sm:$0xff]
    %v6958 = vld [vmem:[#allocation23 + $0x290] sm:$0xff]
    %v6959 = vld [vmem:[#allocation23 + $0x298] sm:$0xff]
    %v6960 = vld [vmem:[#allocation23 + $0x2a0] sm:$0xff]
    %v6961 = vld [vmem:[#allocation23 + $0x2a8] sm:$0xff]
    %v6962 = vld [vmem:[#allocation23 + $0x2b0] sm:$0xff]
    %v6963 = vld [vmem:[#allocation23 + $0x2b8] sm:$0xff]
    %v6964 = vld [vmem:[#allocation23 + $0x2c0] sm:$0xff]
    %v6965 = vld [vmem:[#allocation23 + $0x2c8] sm:$0xff]
    %v6966 = vld [vmem:[#allocation23 + $0x2d0] sm:$0xff]
    %v6967 = vld [vmem:[#allocation23 + $0x2d8] sm:$0xff]
    %v6968 = vld [vmem:[#allocation23 + $0x2e0] sm:$0xff]
    %v6969 = vld [vmem:[#allocation23 + $0x2e8] sm:$0xff]
    %v6970 = vld [vmem:[#allocation23 + $0x2f0] sm:$0xff]
    %v6971 = vld [vmem:[#allocation23 + $0x2f8] sm:$0xff]
    %v6972 = vld [vmem:[#allocation23 + $0x300] sm:$0xff]
    %v6973 = vld [vmem:[#allocation23 + $0x308] sm:$0xff]
    %v6974 = vld [vmem:[#allocation23 + $0x310] sm:$0xff]
    %v6975 = vld [vmem:[#allocation23 + $0x318] sm:$0xff]
    %v6976 = vld [vmem:[#allocation23 + $0x320] sm:$0xff]
    %v6977 = vld [vmem:[#allocation23 + $0x328] sm:$0xff]
    %v6978 = vld [vmem:[#allocation23 + $0x330] sm:$0xff]
    %v6979 = vld [vmem:[#allocation23 + $0x338] sm:$0xff]
    %v6980 = vld [vmem:[#allocation23 + $0x340] sm:$0xff]
    %v6981 = vld [vmem:[#allocation23 + $0x348] sm:$0xff]
    %v6982 = vld [vmem:[#allocation23 + $0x350] sm:$0xff]
    %v6983 = vld [vmem:[#allocation23 + $0x358] sm:$0xff]
    %v6984 = vld [vmem:[#allocation23 + $0x360] sm:$0xff]
    %v6985 = vld [vmem:[#allocation23 + $0x368] sm:$0xff]
    %v6986 = vld [vmem:[#allocation23 + $0x370] sm:$0xff]
    %v6987 = vld [vmem:[#allocation23 + $0x378] sm:$0xff]
    %v6988 = vld [vmem:[#allocation23 + $0x380] sm:$0xff]
    %v6989 = vld [vmem:[#allocation23 + $0x388] sm:$0xff]
    %v6990 = vld [vmem:[#allocation23 + $0x390] sm:$0xff]
    %v6991 = vld [vmem:[#allocation23 + $0x398] sm:$0xff]
    %v6992 = vld [vmem:[#allocation23 + $0x3a0] sm:$0xff]
    %v6993 = vld [vmem:[#allocation23 + $0x3a8] sm:$0xff]
    %v6994 = vld [vmem:[#allocation23 + $0x3b0] sm:$0xff]
    %v6995 = vld [vmem:[#allocation23 + $0x3b8] sm:$0xff]
    %v6996 = vld [vmem:[#allocation23 + $0x3c0] sm:$0xff]
    %v6997 = vld [vmem:[#allocation23 + $0x3c8] sm:$0xff]
    %v6998 = vld [vmem:[#allocation23 + $0x3d0] sm:$0xff]
    %v6999 = vld [vmem:[#allocation23 + $0x3d8] sm:$0xff]
    %v7000 = vld [vmem:[#allocation23 + $0x3e0] sm:$0xff]
    %v7001 = vld [vmem:[#allocation23 + $0x3e8] sm:$0xff]
    %v7002 = vld [vmem:[#allocation23 + $0x3f0] sm:$0xff]
    %v7003 = vld [vmem:[#allocation23 + $0x3f8] sm:$0xff]
    %v7004 = vld [vmem:[#allocation23 + $0x400] sm:$0xff]
    %v7005 = vld [vmem:[#allocation23 + $0x408] sm:$0xff]
    %v7006 = vld [vmem:[#allocation23 + $0x410] sm:$0xff]
    %v7007 = vld [vmem:[#allocation23 + $0x418] sm:$0xff]
    %v7008 = vld [vmem:[#allocation23 + $0x420] sm:$0xff]
    %v7009 = vld [vmem:[#allocation23 + $0x428] sm:$0xff]
    %v7010 = vld [vmem:[#allocation23 + $0x430] sm:$0xff]
    %v7011 = vld [vmem:[#allocation23 + $0x438] sm:$0xff]
    %v7012 = vld [vmem:[#allocation23 + $0x440] sm:$0xff]
    %v7013 = vld [vmem:[#allocation23 + $0x448] sm:$0xff]
    %v7014 = vld [vmem:[#allocation23 + $0x450] sm:$0xff]
    %v7015 = vld [vmem:[#allocation23 + $0x458] sm:$0xff]
    %v7016 = vld [vmem:[#allocation23 + $0x460] sm:$0xff]
    %v7017 = vld [vmem:[#allocation23 + $0x468] sm:$0xff]
    %v7018 = vld [vmem:[#allocation23 + $0x470] sm:$0xff]
    %v7019 = vld [vmem:[#allocation23 + $0x478] sm:$0xff]
    %v7020 = vld [vmem:[#allocation23 + $0x480] sm:$0xff]
    %v7021 = vld [vmem:[#allocation23 + $0x488] sm:$0xff]
    %v7022 = vld [vmem:[#allocation23 + $0x490] sm:$0xff]
    %v7023 = vld [vmem:[#allocation23 + $0x498] sm:$0xff]
    %v7024 = vld [vmem:[#allocation23 + $0x4a0] sm:$0xff]
    %v7025 = vld [vmem:[#allocation23 + $0x4a8] sm:$0xff]
    %v7026 = vld [vmem:[#allocation23 + $0x4b0] sm:$0xff]
    %v7027 = vld [vmem:[#allocation23 + $0x4b8] sm:$0xff]
    %v7028 = vld [vmem:[#allocation23 + $0x4c0] sm:$0xff]
    %v7029 = vld [vmem:[#allocation23 + $0x4c8] sm:$0xff]
    %v7030 = vld [vmem:[#allocation23 + $0x4d0] sm:$0xff]
    %v7031 = vld [vmem:[#allocation23 + $0x4d8] sm:$0xff]
    %v7032 = vld [vmem:[#allocation23 + $0x4e0] sm:$0xff]
    %v7033 = vld [vmem:[#allocation23 + $0x4e8] sm:$0xff]
    %v7034 = vld [vmem:[#allocation23 + $0x4f0] sm:$0xff]
    %v7035 = vld [vmem:[#allocation23 + $0x4f8] sm:$0xff]
    %v7036 = vld [vmem:[#allocation23 + $0x500] sm:$0xff]
    %v7037 = vld [vmem:[#allocation23 + $0x508] sm:$0xff]
    %v7038 = vld [vmem:[#allocation23 + $0x510] sm:$0xff]
    %v7039 = vld [vmem:[#allocation23 + $0x518] sm:$0xff]
    %v7040 = vld [vmem:[#allocation23 + $0x520] sm:$0xff]
    %v7041 = vld [vmem:[#allocation23 + $0x528] sm:$0xff]
    %v7042 = vld [vmem:[#allocation23 + $0x530] sm:$0xff]
    %v7043 = vld [vmem:[#allocation23 + $0x538] sm:$0xff]
    %v7044 = vld [vmem:[#allocation23 + $0x540] sm:$0xff]
    %v7045 = vld [vmem:[#allocation23 + $0x548] sm:$0xff]
    %v7046 = vld [vmem:[#allocation23 + $0x550] sm:$0xff]
    %v7047 = vld [vmem:[#allocation23 + $0x558] sm:$0xff]
    %v7048 = vld [vmem:[#allocation23 + $0x560] sm:$0xff]
    %v7049 = vld [vmem:[#allocation23 + $0x568] sm:$0xff]
    %v7050 = vld [vmem:[#allocation23 + $0x570] sm:$0xff]
    %v7051 = vld [vmem:[#allocation23 + $0x578] sm:$0xff]
    %v7052 = vld [vmem:[#allocation23 + $0x580] sm:$0xff]
    %v7053 = vld [vmem:[#allocation23 + $0x588] sm:$0xff]
    %v7054 = vld [vmem:[#allocation23 + $0x590] sm:$0xff]
    %v7055 = vld [vmem:[#allocation23 + $0x598] sm:$0xff]
    %v7056 = vld [vmem:[#allocation23 + $0x5a0] sm:$0xff]
    %v7057 = vld [vmem:[#allocation23 + $0x5a8] sm:$0xff]
    %v7058 = vld [vmem:[#allocation23 + $0x5b0] sm:$0xff]
    %v7059 = vld [vmem:[#allocation23 + $0x5b8] sm:$0xff]
    %v7060 = vld [vmem:[#allocation23 + $0x5c0] sm:$0xff]
    %v7061 = vld [vmem:[#allocation23 + $0x5c8] sm:$0xff]
    %v7062 = vld [vmem:[#allocation23 + $0x5d0] sm:$0xff]
    %v7063 = vld [vmem:[#allocation23 + $0x5d8] sm:$0xff]
    %v7064 = vld [vmem:[#allocation23 + $0x5e0] sm:$0xff]
    %v7065 = vld [vmem:[#allocation23 + $0x5e8] sm:$0xff]
    %v7066 = vld [vmem:[#allocation23 + $0x5f0] sm:$0xff]
    %v7067 = vld [vmem:[#allocation23 + $0x5f8] sm:$0xff]
    %v7068 = vld [vmem:[#allocation23 + $0x600] sm:$0xff]
    %v7069 = vld [vmem:[#allocation23 + $0x608] sm:$0xff]
    %v7070 = vld [vmem:[#allocation23 + $0x610] sm:$0xff]
    %v7071 = vld [vmem:[#allocation23 + $0x618] sm:$0xff]
    %v7072 = vld [vmem:[#allocation23 + $0x620] sm:$0xff]
    %v7073 = vld [vmem:[#allocation23 + $0x628] sm:$0xff]
    %v7074 = vld [vmem:[#allocation23 + $0x630] sm:$0xff]
    %v7075 = vld [vmem:[#allocation23 + $0x638] sm:$0xff]
    %v7076 = vld [vmem:[#allocation23 + $0x640] sm:$0xff]
    %v7077 = vld [vmem:[#allocation23 + $0x648] sm:$0xff]
    %v7078 = vld [vmem:[#allocation23 + $0x650] sm:$0xff]
    %v7079 = vld [vmem:[#allocation23 + $0x658] sm:$0xff]
    %v7080 = vld [vmem:[#allocation23 + $0x660] sm:$0xff]
    %v7081 = vld [vmem:[#allocation23 + $0x668] sm:$0xff]
    %v7082 = vld [vmem:[#allocation23 + $0x670] sm:$0xff]
    %v7083 = vld [vmem:[#allocation23 + $0x678] sm:$0xff]
    %v7084 = vld [vmem:[#allocation23 + $0x680] sm:$0xff]
    %v7085 = vld [vmem:[#allocation23 + $0x688] sm:$0xff]
    %v7086 = vld [vmem:[#allocation23 + $0x690] sm:$0xff]
    %v7087 = vld [vmem:[#allocation23 + $0x698] sm:$0xff]
    %v7088 = vld [vmem:[#allocation23 + $0x6a0] sm:$0xff]
    %v7089 = vld [vmem:[#allocation23 + $0x6a8] sm:$0xff]
    %v7090 = vld [vmem:[#allocation23 + $0x6b0] sm:$0xff]
    %v7091 = vld [vmem:[#allocation23 + $0x6b8] sm:$0xff]
    %v7092 = vld [vmem:[#allocation23 + $0x6c0] sm:$0xff]
    %v7093 = vld [vmem:[#allocation23 + $0x6c8] sm:$0xff]
    %v7094 = vld [vmem:[#allocation23 + $0x6d0] sm:$0xff]
    %v7095 = vld [vmem:[#allocation23 + $0x6d8] sm:$0xff]
    %v7096 = vld [vmem:[#allocation23 + $0x6e0] sm:$0xff]
    %v7097 = vld [vmem:[#allocation23 + $0x6e8] sm:$0xff]
    %v7098 = vld [vmem:[#allocation23 + $0x6f0] sm:$0xff]
    %v7099 = vld [vmem:[#allocation23 + $0x6f8] sm:$0xff]
    %v7100 = vld [vmem:[#allocation23 + $0x700] sm:$0xff]
    %v7101 = vld [vmem:[#allocation23 + $0x708] sm:$0xff]
    %v7102 = vld [vmem:[#allocation23 + $0x710] sm:$0xff]
    %v7103 = vld [vmem:[#allocation23 + $0x718] sm:$0xff]
    %v7104 = vld [vmem:[#allocation23 + $0x720] sm:$0xff]
    %v7105 = vld [vmem:[#allocation23 + $0x728] sm:$0xff]
    %v7106 = vld [vmem:[#allocation23 + $0x730] sm:$0xff]
    %v7107 = vld [vmem:[#allocation23 + $0x738] sm:$0xff]
    %v7108 = vld [vmem:[#allocation23 + $0x740] sm:$0xff]
    %v7109 = vld [vmem:[#allocation23 + $0x748] sm:$0xff]
    %v7110 = vld [vmem:[#allocation23 + $0x750] sm:$0xff]
    %v7111 = vld [vmem:[#allocation23 + $0x758] sm:$0xff]
    %v7112 = vld [vmem:[#allocation23 + $0x760] sm:$0xff]
    %v7113 = vld [vmem:[#allocation23 + $0x768] sm:$0xff]
    %v7114 = vld [vmem:[#allocation23 + $0x770] sm:$0xff]
    %v7115 = vld [vmem:[#allocation23 + $0x778] sm:$0xff]
    %v7116 = vld [vmem:[#allocation23 + $0x780] sm:$0xff]
    %v7117 = vld [vmem:[#allocation23 + $0x788] sm:$0xff]
    %v7118 = vld [vmem:[#allocation23 + $0x790] sm:$0xff]
    %v7119 = vld [vmem:[#allocation23 + $0x798] sm:$0xff]
    %v7120 = vld [vmem:[#allocation23 + $0x7a0] sm:$0xff]
    %v7121 = vld [vmem:[#allocation23 + $0x7a8] sm:$0xff]
    %v7122 = vld [vmem:[#allocation23 + $0x7b0] sm:$0xff]
    %v7123 = vld [vmem:[#allocation23 + $0x7b8] sm:$0xff]
    %v7124 = vld [vmem:[#allocation23 + $0x7c0] sm:$0xff]
    %v7125 = vld [vmem:[#allocation23 + $0x7c8] sm:$0xff]
    %v7126 = vld [vmem:[#allocation23 + $0x7d0] sm:$0xff]
    %v7127 = vld [vmem:[#allocation23 + $0x7d8] sm:$0xff]
    %v7128 = vld [vmem:[#allocation23 + $0x7e0] sm:$0xff]
    %v7129 = vld [vmem:[#allocation23 + $0x7e8] sm:$0xff]
    %v7130 = vld [vmem:[#allocation23 + $0x7f0] sm:$0xff]
    %v7131 = vld [vmem:[#allocation23 + $0x7f8] sm:$0xff]
    %v7132 = vpack.c.bf16 %v6872, %v6868
    %v7133 = vpack.c.bf16 %v6873, %v6869
    %v7134 = vpack.c.bf16 %v6874, %v6870
    %v7135 = vpack.c.bf16 %v6875, %v6871
    %v7136 = vld [vmem:[#allocation25] sm:$0xff]
    %v7138 = vperm.slane %v7136, 0
    %v7139 = vperm.slane %v7136, 1
    %v7140 = vperm.slane %v7136, 2
    %v7141 = vperm.slane %v7136, 3
    %v7142 = vperm.slane %v7136, 4
    %v7143 = vperm.slane %v7136, 5
    %v7144 = vperm.slane %v7136, 6
    %v7145 = vperm.slane %v7136, 7
    %v7410 = vunpack.c.l.b16 %v6876
    %v7411 = vunpack.c.h.b16 %v6876
    %v7412 = vunpack.c.l.b16 %v6877
    %v7413 = vunpack.c.h.b16 %v6877
    %v7414 = vunpack.c.l.b16 %v6878
    %v7415 = vunpack.c.h.b16 %v6878
    %v7416 = vunpack.c.l.b16 %v6879
    %v7417 = vunpack.c.h.b16 %v6879
    %v7418 = vunpack.c.l.b16 %v6880
    %v7419 = vunpack.c.h.b16 %v6880
    %v7420 = vunpack.c.l.b16 %v6881
    %v7421 = vunpack.c.h.b16 %v6881
    %v7422 = vunpack.c.l.b16 %v6882
    %v7423 = vunpack.c.h.b16 %v6882
    %v7424 = vunpack.c.l.b16 %v6883
    %v7425 = vunpack.c.h.b16 %v6883
    %v7426 = vunpack.c.l.b16 %v6884
    %v7427 = vunpack.c.h.b16 %v6884
    %v7428 = vunpack.c.l.b16 %v6885
    %v7429 = vunpack.c.h.b16 %v6885
    %v7430 = vunpack.c.l.b16 %v6886
    %v7431 = vunpack.c.h.b16 %v6886
    %v7432 = vunpack.c.l.b16 %v6887
    %v7433 = vunpack.c.h.b16 %v6887
    %v7434 = vunpack.c.l.b16 %v6888
    %v7435 = vunpack.c.h.b16 %v6888
    %v7436 = vunpack.c.l.b16 %v6889
    %v7437 = vunpack.c.h.b16 %v6889
    %v7438 = vunpack.c.l.b16 %v6890
    %v7439 = vunpack.c.h.b16 %v6890
    %v7440 = vunpack.c.l.b16 %v6891
    %v7441 = vunpack.c.h.b16 %v6891
    %v7442 = vunpack.c.l.b16 %v6892
    %v7443 = vunpack.c.h.b16 %v6892
    %v7444 = vunpack.c.l.b16 %v6893
    %v7445 = vunpack.c.h.b16 %v6893
    %v7446 = vunpack.c.l.b16 %v6894
    %v7447 = vunpack.c.h.b16 %v6894
    %v7448 = vunpack.c.l.b16 %v6895
    %v7449 = vunpack.c.h.b16 %v6895
    %v7450 = vunpack.c.l.b16 %v6896
    %v7451 = vunpack.c.h.b16 %v6896
    %v7452 = vunpack.c.l.b16 %v6897
    %v7453 = vunpack.c.h.b16 %v6897
    %v7454 = vunpack.c.l.b16 %v6898
    %v7455 = vunpack.c.h.b16 %v6898
    %v7456 = vunpack.c.l.b16 %v6899
    %v7457 = vunpack.c.h.b16 %v6899
    %v7458 = vunpack.c.l.b16 %v6900
    %v7459 = vunpack.c.h.b16 %v6900
    %v7460 = vunpack.c.l.b16 %v6901
    %v7461 = vunpack.c.h.b16 %v6901
    %v7462 = vunpack.c.l.b16 %v6902
    %v7463 = vunpack.c.h.b16 %v6902
    %v7464 = vunpack.c.l.b16 %v6903
    %v7465 = vunpack.c.h.b16 %v6903
    %v7466 = vunpack.c.l.b16 %v6904
    %v7467 = vunpack.c.h.b16 %v6904
    %v7468 = vunpack.c.l.b16 %v6905
    %v7469 = vunpack.c.h.b16 %v6905
    %v7470 = vunpack.c.l.b16 %v6906
    %v7471 = vunpack.c.h.b16 %v6906
    %v7472 = vunpack.c.l.b16 %v6907
    %v7473 = vunpack.c.h.b16 %v6907
    %v7474 = vunpack.c.l.b16 %v6908
    %v7475 = vunpack.c.h.b16 %v6908
    %v7476 = vunpack.c.l.b16 %v6909
    %v7477 = vunpack.c.h.b16 %v6909
    %v7478 = vunpack.c.l.b16 %v6910
    %v7479 = vunpack.c.h.b16 %v6910
    %v7480 = vunpack.c.l.b16 %v6911
    %v7481 = vunpack.c.h.b16 %v6911
    %v7482 = vunpack.c.l.b16 %v6912
    %v7483 = vunpack.c.h.b16 %v6912
    %v7484 = vunpack.c.l.b16 %v6913
    %v7485 = vunpack.c.h.b16 %v6913
    %v7486 = vunpack.c.l.b16 %v6914
    %v7487 = vunpack.c.h.b16 %v6914
    %v7488 = vunpack.c.l.b16 %v6915
    %v7489 = vunpack.c.h.b16 %v6915
    %v7490 = vunpack.c.l.b16 %v6916
    %v7491 = vunpack.c.h.b16 %v6916
    %v7492 = vunpack.c.l.b16 %v6917
    %v7493 = vunpack.c.h.b16 %v6917
    %v7494 = vunpack.c.l.b16 %v6918
    %v7495 = vunpack.c.h.b16 %v6918
    %v7496 = vunpack.c.l.b16 %v6919
    %v7497 = vunpack.c.h.b16 %v6919
    %v7498 = vunpack.c.l.b16 %v6920
    %v7499 = vunpack.c.h.b16 %v6920
    %v7500 = vunpack.c.l.b16 %v6921
    %v7501 = vunpack.c.h.b16 %v6921
    %v7502 = vunpack.c.l.b16 %v6922
    %v7503 = vunpack.c.h.b16 %v6922
    %v7504 = vunpack.c.l.b16 %v6923
    %v7505 = vunpack.c.h.b16 %v6923
    %v7506 = vunpack.c.l.b16 %v6924
    %v7507 = vunpack.c.h.b16 %v6924
    %v7508 = vunpack.c.l.b16 %v6925
    %v7509 = vunpack.c.h.b16 %v6925
    %v7510 = vunpack.c.l.b16 %v6926
    %v7511 = vunpack.c.h.b16 %v6926
    %v7512 = vunpack.c.l.b16 %v6927
    %v7513 = vunpack.c.h.b16 %v6927
    %v7514 = vunpack.c.l.b16 %v6928
    %v7515 = vunpack.c.h.b16 %v6928
    %v7516 = vunpack.c.l.b16 %v6929
    %v7517 = vunpack.c.h.b16 %v6929
    %v7518 = vunpack.c.l.b16 %v6930
    %v7519 = vunpack.c.h.b16 %v6930
    %v7520 = vunpack.c.l.b16 %v6931
    %v7521 = vunpack.c.h.b16 %v6931
    %v7522 = vunpack.c.l.b16 %v6932
    %v7523 = vunpack.c.h.b16 %v6932
    %v7524 = vunpack.c.l.b16 %v6933
    %v7525 = vunpack.c.h.b16 %v6933
    %v7526 = vunpack.c.l.b16 %v6934
    %v7527 = vunpack.c.h.b16 %v6934
    %v7528 = vunpack.c.l.b16 %v6935
    %v7529 = vunpack.c.h.b16 %v6935
    %v7530 = vunpack.c.l.b16 %v6936
    %v7531 = vunpack.c.h.b16 %v6936
    %v7532 = vunpack.c.l.b16 %v6937
    %v7533 = vunpack.c.h.b16 %v6937
    %v7534 = vunpack.c.l.b16 %v6938
    %v7535 = vunpack.c.h.b16 %v6938
    %v7536 = vunpack.c.l.b16 %v6939
    %v7537 = vunpack.c.h.b16 %v6939
    %v7538 = vunpack.c.l.b16 %v6940
    %v7539 = vunpack.c.h.b16 %v6940
    %v7540 = vunpack.c.l.b16 %v6941
    %v7541 = vunpack.c.h.b16 %v6941
    %v7542 = vunpack.c.l.b16 %v6942
    %v7543 = vunpack.c.h.b16 %v6942
    %v7544 = vunpack.c.l.b16 %v6943
    %v7545 = vunpack.c.h.b16 %v6943
    %v7546 = vunpack.c.l.b16 %v6944
    %v7547 = vunpack.c.h.b16 %v6944
    %v7548 = vunpack.c.l.b16 %v6945
    %v7549 = vunpack.c.h.b16 %v6945
    %v7550 = vunpack.c.l.b16 %v6946
    %v7551 = vunpack.c.h.b16 %v6946
    %v7552 = vunpack.c.l.b16 %v6947
    %v7553 = vunpack.c.h.b16 %v6947
    %v7554 = vunpack.c.l.b16 %v6948
    %v7555 = vunpack.c.h.b16 %v6948
    %v7556 = vunpack.c.l.b16 %v6949
    %v7557 = vunpack.c.h.b16 %v6949
    %v7558 = vunpack.c.l.b16 %v6950
    %v7559 = vunpack.c.h.b16 %v6950
    %v7560 = vunpack.c.l.b16 %v6951
    %v7561 = vunpack.c.h.b16 %v6951
    %v7562 = vunpack.c.l.b16 %v6952
    %v7563 = vunpack.c.h.b16 %v6952
    %v7564 = vunpack.c.l.b16 %v6953
    %v7565 = vunpack.c.h.b16 %v6953
    %v7566 = vunpack.c.l.b16 %v6954
    %v7567 = vunpack.c.h.b16 %v6954
    %v7568 = vunpack.c.l.b16 %v6955
    %v7569 = vunpack.c.h.b16 %v6955
    %v7570 = vunpack.c.l.b16 %v6956
    %v7571 = vunpack.c.h.b16 %v6956
    %v7572 = vunpack.c.l.b16 %v6957
    %v7573 = vunpack.c.h.b16 %v6957
    %v7574 = vunpack.c.l.b16 %v6958
    %v7575 = vunpack.c.h.b16 %v6958
    %v7576 = vunpack.c.l.b16 %v6959
    %v7577 = vunpack.c.h.b16 %v6959
    %v7578 = vunpack.c.l.b16 %v6960
    %v7579 = vunpack.c.h.b16 %v6960
    %v7580 = vunpack.c.l.b16 %v6961
    %v7581 = vunpack.c.h.b16 %v6961
    %v7582 = vunpack.c.l.b16 %v6962
    %v7583 = vunpack.c.h.b16 %v6962
    %v7584 = vunpack.c.l.b16 %v6963
    %v7585 = vunpack.c.h.b16 %v6963
    %v7586 = vunpack.c.l.b16 %v6964
    %v7587 = vunpack.c.h.b16 %v6964
    %v7588 = vunpack.c.l.b16 %v6965
    %v7589 = vunpack.c.h.b16 %v6965
    %v7590 = vunpack.c.l.b16 %v6966
    %v7591 = vunpack.c.h.b16 %v6966
    %v7592 = vunpack.c.l.b16 %v6967
    %v7593 = vunpack.c.h.b16 %v6967
    %v7594 = vunpack.c.l.b16 %v6968
    %v7595 = vunpack.c.h.b16 %v6968
    %v7596 = vunpack.c.l.b16 %v6969
    %v7597 = vunpack.c.h.b16 %v6969
    %v7598 = vunpack.c.l.b16 %v6970
    %v7599 = vunpack.c.h.b16 %v6970
    %v7600 = vunpack.c.l.b16 %v6971
    %v7601 = vunpack.c.h.b16 %v6971
    %v7602 = vunpack.c.l.b16 %v6972
    %v7603 = vunpack.c.h.b16 %v6972
    %v7604 = vunpack.c.l.b16 %v6973
    %v7605 = vunpack.c.h.b16 %v6973
    %v7606 = vunpack.c.l.b16 %v6974
    %v7607 = vunpack.c.h.b16 %v6974
    %v7608 = vunpack.c.l.b16 %v6975
    %v7609 = vunpack.c.h.b16 %v6975
    %v7610 = vunpack.c.l.b16 %v6976
    %v7611 = vunpack.c.h.b16 %v6976
    %v7612 = vunpack.c.l.b16 %v6977
    %v7613 = vunpack.c.h.b16 %v6977
    %v7614 = vunpack.c.l.b16 %v6978
    %v7615 = vunpack.c.h.b16 %v6978
    %v7616 = vunpack.c.l.b16 %v6979
    %v7617 = vunpack.c.h.b16 %v6979
    %v7618 = vunpack.c.l.b16 %v6980
    %v7619 = vunpack.c.h.b16 %v6980
    %v7620 = vunpack.c.l.b16 %v6981
    %v7621 = vunpack.c.h.b16 %v6981
    %v7622 = vunpack.c.l.b16 %v6982
    %v7623 = vunpack.c.h.b16 %v6982
    %v7624 = vunpack.c.l.b16 %v6983
    %v7625 = vunpack.c.h.b16 %v6983
    %v7626 = vunpack.c.l.b16 %v6984
    %v7627 = vunpack.c.h.b16 %v6984
    %v7628 = vunpack.c.l.b16 %v6985
    %v7629 = vunpack.c.h.b16 %v6985
    %v7630 = vunpack.c.l.b16 %v6986
    %v7631 = vunpack.c.h.b16 %v6986
    %v7632 = vunpack.c.l.b16 %v6987
    %v7633 = vunpack.c.h.b16 %v6987
    %v7634 = vunpack.c.l.b16 %v6988
    %v7635 = vunpack.c.h.b16 %v6988
    %v7636 = vunpack.c.l.b16 %v6989
    %v7637 = vunpack.c.h.b16 %v6989
    %v7638 = vunpack.c.l.b16 %v6990
    %v7639 = vunpack.c.h.b16 %v6990
    %v7640 = vunpack.c.l.b16 %v6991
    %v7641 = vunpack.c.h.b16 %v6991
    %v7642 = vunpack.c.l.b16 %v6992
    %v7643 = vunpack.c.h.b16 %v6992
    %v7644 = vunpack.c.l.b16 %v6993
    %v7645 = vunpack.c.h.b16 %v6993
    %v7646 = vunpack.c.l.b16 %v6994
    %v7647 = vunpack.c.h.b16 %v6994
    %v7648 = vunpack.c.l.b16 %v6995
    %v7649 = vunpack.c.h.b16 %v6995
    %v7650 = vunpack.c.l.b16 %v6996
    %v7651 = vunpack.c.h.b16 %v6996
    %v7652 = vunpack.c.l.b16 %v6997
    %v7653 = vunpack.c.h.b16 %v6997
    %v7654 = vunpack.c.l.b16 %v6998
    %v7655 = vunpack.c.h.b16 %v6998
    %v7656 = vunpack.c.l.b16 %v6999
    %v7657 = vunpack.c.h.b16 %v6999
    %v7658 = vunpack.c.l.b16 %v7000
    %v7659 = vunpack.c.h.b16 %v7000
    %v7660 = vunpack.c.l.b16 %v7001
    %v7661 = vunpack.c.h.b16 %v7001
    %v7662 = vunpack.c.l.b16 %v7002
    %v7663 = vunpack.c.h.b16 %v7002
    %v7664 = vunpack.c.l.b16 %v7003
    %v7665 = vunpack.c.h.b16 %v7003
    %v7666 = vunpack.c.l.b16 %v7004
    %v7667 = vunpack.c.h.b16 %v7004
    %v7668 = vunpack.c.l.b16 %v7005
    %v7669 = vunpack.c.h.b16 %v7005
    %v7670 = vunpack.c.l.b16 %v7006
    %v7671 = vunpack.c.h.b16 %v7006
    %v7672 = vunpack.c.l.b16 %v7007
    %v7673 = vunpack.c.h.b16 %v7007
    %v7674 = vunpack.c.l.b16 %v7008
    %v7675 = vunpack.c.h.b16 %v7008
    %v7676 = vunpack.c.l.b16 %v7009
    %v7677 = vunpack.c.h.b16 %v7009
    %v7678 = vunpack.c.l.b16 %v7010
    %v7679 = vunpack.c.h.b16 %v7010
    %v7680 = vunpack.c.l.b16 %v7011
    %v7681 = vunpack.c.h.b16 %v7011
    %v7682 = vunpack.c.l.b16 %v7012
    %v7683 = vunpack.c.h.b16 %v7012
    %v7684 = vunpack.c.l.b16 %v7013
    %v7685 = vunpack.c.h.b16 %v7013
    %v7686 = vunpack.c.l.b16 %v7014
    %v7687 = vunpack.c.h.b16 %v7014
    %v7688 = vunpack.c.l.b16 %v7015
    %v7689 = vunpack.c.h.b16 %v7015
    %v7690 = vunpack.c.l.b16 %v7016
    %v7691 = vunpack.c.h.b16 %v7016
    %v7692 = vunpack.c.l.b16 %v7017
    %v7693 = vunpack.c.h.b16 %v7017
    %v7694 = vunpack.c.l.b16 %v7018
    %v7695 = vunpack.c.h.b16 %v7018
    %v7696 = vunpack.c.l.b16 %v7019
    %v7697 = vunpack.c.h.b16 %v7019
    %v7698 = vunpack.c.l.b16 %v7020
    %v7699 = vunpack.c.h.b16 %v7020
    %v7700 = vunpack.c.l.b16 %v7021
    %v7701 = vunpack.c.h.b16 %v7021
    %v7702 = vunpack.c.l.b16 %v7022
    %v7703 = vunpack.c.h.b16 %v7022
    %v7704 = vunpack.c.l.b16 %v7023
    %v7705 = vunpack.c.h.b16 %v7023
    %v7706 = vunpack.c.l.b16 %v7024
    %v7707 = vunpack.c.h.b16 %v7024
    %v7708 = vunpack.c.l.b16 %v7025
    %v7709 = vunpack.c.h.b16 %v7025
    %v7710 = vunpack.c.l.b16 %v7026
    %v7711 = vunpack.c.h.b16 %v7026
    %v7712 = vunpack.c.l.b16 %v7027
    %v7713 = vunpack.c.h.b16 %v7027
    %v7714 = vunpack.c.l.b16 %v7028
    %v7715 = vunpack.c.h.b16 %v7028
    %v7716 = vunpack.c.l.b16 %v7029
    %v7717 = vunpack.c.h.b16 %v7029
    %v7718 = vunpack.c.l.b16 %v7030
    %v7719 = vunpack.c.h.b16 %v7030
    %v7720 = vunpack.c.l.b16 %v7031
    %v7721 = vunpack.c.h.b16 %v7031
    %v7722 = vunpack.c.l.b16 %v7032
    %v7723 = vunpack.c.h.b16 %v7032
    %v7724 = vunpack.c.l.b16 %v7033
    %v7725 = vunpack.c.h.b16 %v7033
    %v7726 = vunpack.c.l.b16 %v7034
    %v7727 = vunpack.c.h.b16 %v7034
    %v7728 = vunpack.c.l.b16 %v7035
    %v7729 = vunpack.c.h.b16 %v7035
    %v7730 = vunpack.c.l.b16 %v7036
    %v7731 = vunpack.c.h.b16 %v7036
    %v7732 = vunpack.c.l.b16 %v7037
    %v7733 = vunpack.c.h.b16 %v7037
    %v7734 = vunpack.c.l.b16 %v7038
    %v7735 = vunpack.c.h.b16 %v7038
    %v7736 = vunpack.c.l.b16 %v7039
    %v7737 = vunpack.c.h.b16 %v7039
    %v7738 = vunpack.c.l.b16 %v7040
    %v7739 = vunpack.c.h.b16 %v7040
    %v7740 = vunpack.c.l.b16 %v7041
    %v7741 = vunpack.c.h.b16 %v7041
    %v7742 = vunpack.c.l.b16 %v7042
    %v7743 = vunpack.c.h.b16 %v7042
    %v7744 = vunpack.c.l.b16 %v7043
    %v7745 = vunpack.c.h.b16 %v7043
    %v7746 = vunpack.c.l.b16 %v7044
    %v7747 = vunpack.c.h.b16 %v7044
    %v7748 = vunpack.c.l.b16 %v7045
    %v7749 = vunpack.c.h.b16 %v7045
    %v7750 = vunpack.c.l.b16 %v7046
    %v7751 = vunpack.c.h.b16 %v7046
    %v7752 = vunpack.c.l.b16 %v7047
    %v7753 = vunpack.c.h.b16 %v7047
    %v7754 = vunpack.c.l.b16 %v7048
    %v7755 = vunpack.c.h.b16 %v7048
    %v7756 = vunpack.c.l.b16 %v7049
    %v7757 = vunpack.c.h.b16 %v7049
    %v7758 = vunpack.c.l.b16 %v7050
    %v7759 = vunpack.c.h.b16 %v7050
    %v7760 = vunpack.c.l.b16 %v7051
    %v7761 = vunpack.c.h.b16 %v7051
    %v7762 = vunpack.c.l.b16 %v7052
    %v7763 = vunpack.c.h.b16 %v7052
    %v7764 = vunpack.c.l.b16 %v7053
    %v7765 = vunpack.c.h.b16 %v7053
    %v7766 = vunpack.c.l.b16 %v7054
    %v7767 = vunpack.c.h.b16 %v7054
    %v7768 = vunpack.c.l.b16 %v7055
    %v7769 = vunpack.c.h.b16 %v7055
    %v7770 = vunpack.c.l.b16 %v7056
    %v7771 = vunpack.c.h.b16 %v7056
    %v7772 = vunpack.c.l.b16 %v7057
    %v7773 = vunpack.c.h.b16 %v7057
    %v7774 = vunpack.c.l.b16 %v7058
    %v7775 = vunpack.c.h.b16 %v7058
    %v7776 = vunpack.c.l.b16 %v7059
    %v7777 = vunpack.c.h.b16 %v7059
    %v7778 = vunpack.c.l.b16 %v7060
    %v7779 = vunpack.c.h.b16 %v7060
    %v7780 = vunpack.c.l.b16 %v7061
    %v7781 = vunpack.c.h.b16 %v7061
    %v7782 = vunpack.c.l.b16 %v7062
    %v7783 = vunpack.c.h.b16 %v7062
    %v7784 = vunpack.c.l.b16 %v7063
    %v7785 = vunpack.c.h.b16 %v7063
    %v7786 = vunpack.c.l.b16 %v7064
    %v7787 = vunpack.c.h.b16 %v7064
    %v7788 = vunpack.c.l.b16 %v7065
    %v7789 = vunpack.c.h.b16 %v7065
    %v7790 = vunpack.c.l.b16 %v7066
    %v7791 = vunpack.c.h.b16 %v7066
    %v7792 = vunpack.c.l.b16 %v7067
    %v7793 = vunpack.c.h.b16 %v7067
    %v7794 = vunpack.c.l.b16 %v7068
    %v7795 = vunpack.c.h.b16 %v7068
    %v7796 = vunpack.c.l.b16 %v7069
    %v7797 = vunpack.c.h.b16 %v7069
    %v7798 = vunpack.c.l.b16 %v7070
    %v7799 = vunpack.c.h.b16 %v7070
    %v7800 = vunpack.c.l.b16 %v7071
    %v7801 = vunpack.c.h.b16 %v7071
    %v7802 = vunpack.c.l.b16 %v7072
    %v7803 = vunpack.c.h.b16 %v7072
    %v7804 = vunpack.c.l.b16 %v7073
    %v7805 = vunpack.c.h.b16 %v7073
    %v7806 = vunpack.c.l.b16 %v7074
    %v7807 = vunpack.c.h.b16 %v7074
    %v7808 = vunpack.c.l.b16 %v7075
    %v7809 = vunpack.c.h.b16 %v7075
    %v7810 = vunpack.c.l.b16 %v7076
    %v7811 = vunpack.c.h.b16 %v7076
    %v7812 = vunpack.c.l.b16 %v7077
    %v7813 = vunpack.c.h.b16 %v7077
    %v7814 = vunpack.c.l.b16 %v7078
    %v7815 = vunpack.c.h.b16 %v7078
    %v7816 = vunpack.c.l.b16 %v7079
    %v7817 = vunpack.c.h.b16 %v7079
    %v7818 = vunpack.c.l.b16 %v7080
    %v7819 = vunpack.c.h.b16 %v7080
    %v7820 = vunpack.c.l.b16 %v7081
    %v7821 = vunpack.c.h.b16 %v7081
    %v7822 = vunpack.c.l.b16 %v7082
    %v7823 = vunpack.c.h.b16 %v7082
    %v7824 = vunpack.c.l.b16 %v7083
    %v7825 = vunpack.c.h.b16 %v7083
    %v7826 = vunpack.c.l.b16 %v7084
    %v7827 = vunpack.c.h.b16 %v7084
    %v7828 = vunpack.c.l.b16 %v7085
    %v7829 = vunpack.c.h.b16 %v7085
    %v7830 = vunpack.c.l.b16 %v7086
    %v7831 = vunpack.c.h.b16 %v7086
    %v7832 = vunpack.c.l.b16 %v7087
    %v7833 = vunpack.c.h.b16 %v7087
    %v7834 = vunpack.c.l.b16 %v7088
    %v7835 = vunpack.c.h.b16 %v7088
    %v7836 = vunpack.c.l.b16 %v7089
    %v7837 = vunpack.c.h.b16 %v7089
    %v7838 = vunpack.c.l.b16 %v7090
    %v7839 = vunpack.c.h.b16 %v7090
    %v7840 = vunpack.c.l.b16 %v7091
    %v7841 = vunpack.c.h.b16 %v7091
    %v7842 = vunpack.c.l.b16 %v7092
    %v7843 = vunpack.c.h.b16 %v7092
    %v7844 = vunpack.c.l.b16 %v7093
    %v7845 = vunpack.c.h.b16 %v7093
    %v7846 = vunpack.c.l.b16 %v7094
    %v7847 = vunpack.c.h.b16 %v7094
    %v7848 = vunpack.c.l.b16 %v7095
    %v7849 = vunpack.c.h.b16 %v7095
    %v7850 = vunpack.c.l.b16 %v7096
    %v7851 = vunpack.c.h.b16 %v7096
    %v7852 = vunpack.c.l.b16 %v7097
    %v7853 = vunpack.c.h.b16 %v7097
    %v7854 = vunpack.c.l.b16 %v7098
    %v7855 = vunpack.c.h.b16 %v7098
    %v7856 = vunpack.c.l.b16 %v7099
    %v7857 = vunpack.c.h.b16 %v7099
    %v7858 = vunpack.c.l.b16 %v7100
    %v7859 = vunpack.c.h.b16 %v7100
    %v7860 = vunpack.c.l.b16 %v7101
    %v7861 = vunpack.c.h.b16 %v7101
    %v7862 = vunpack.c.l.b16 %v7102
    %v7863 = vunpack.c.h.b16 %v7102
    %v7864 = vunpack.c.l.b16 %v7103
    %v7865 = vunpack.c.h.b16 %v7103
    %v7866 = vunpack.c.l.b16 %v7104
    %v7867 = vunpack.c.h.b16 %v7104
    %v7868 = vunpack.c.l.b16 %v7105
    %v7869 = vunpack.c.h.b16 %v7105
    %v7870 = vunpack.c.l.b16 %v7106
    %v7871 = vunpack.c.h.b16 %v7106
    %v7872 = vunpack.c.l.b16 %v7107
    %v7873 = vunpack.c.h.b16 %v7107
    %v7874 = vunpack.c.l.b16 %v7108
    %v7875 = vunpack.c.h.b16 %v7108
    %v7876 = vunpack.c.l.b16 %v7109
    %v7877 = vunpack.c.h.b16 %v7109
    %v7878 = vunpack.c.l.b16 %v7110
    %v7879 = vunpack.c.h.b16 %v7110
    %v7880 = vunpack.c.l.b16 %v7111
    %v7881 = vunpack.c.h.b16 %v7111
    %v7882 = vunpack.c.l.b16 %v7112
    %v7883 = vunpack.c.h.b16 %v7112
    %v7884 = vunpack.c.l.b16 %v7113
    %v7885 = vunpack.c.h.b16 %v7113
    %v7886 = vunpack.c.l.b16 %v7114
    %v7887 = vunpack.c.h.b16 %v7114
    %v7888 = vunpack.c.l.b16 %v7115
    %v7889 = vunpack.c.h.b16 %v7115
    %v7890 = vunpack.c.l.b16 %v7116
    %v7891 = vunpack.c.h.b16 %v7116
    %v7892 = vunpack.c.l.b16 %v7117
    %v7893 = vunpack.c.h.b16 %v7117
    %v7894 = vunpack.c.l.b16 %v7118
    %v7895 = vunpack.c.h.b16 %v7118
    %v7896 = vunpack.c.l.b16 %v7119
    %v7897 = vunpack.c.h.b16 %v7119
    %v7898 = vunpack.c.l.b16 %v7120
    %v7899 = vunpack.c.h.b16 %v7120
    %v7900 = vunpack.c.l.b16 %v7121
    %v7901 = vunpack.c.h.b16 %v7121
    %v7902 = vunpack.c.l.b16 %v7122
    %v7903 = vunpack.c.h.b16 %v7122
    %v7904 = vunpack.c.l.b16 %v7123
    %v7905 = vunpack.c.h.b16 %v7123
    %v7906 = vunpack.c.l.b16 %v7124
    %v7907 = vunpack.c.h.b16 %v7124
    %v7908 = vunpack.c.l.b16 %v7125
    %v7909 = vunpack.c.h.b16 %v7125
    %v7910 = vunpack.c.l.b16 %v7126
    %v7911 = vunpack.c.h.b16 %v7126
    %v7912 = vunpack.c.l.b16 %v7127
    %v7913 = vunpack.c.h.b16 %v7127
    %v7914 = vunpack.c.l.b16 %v7128
    %v7915 = vunpack.c.h.b16 %v7128
    %v7916 = vunpack.c.l.b16 %v7129
    %v7917 = vunpack.c.h.b16 %v7129
    %v7918 = vunpack.c.l.b16 %v7130
    %v7919 = vunpack.c.h.b16 %v7130
    %v7920 = vunpack.c.l.b16 %v7131
    %v7921 = vunpack.c.h.b16 %v7131
    %v7922 = vpack.c.b16 %v7418, %v7410
    %v7923 = vpack.c.b16 %v7419, %v7411
    %v7924 = vpack.c.b16 %v7420, %v7412
    %v7925 = vpack.c.b16 %v7421, %v7413
    %v7926 = vpack.c.b16 %v7422, %v7414
    %v7927 = vpack.c.b16 %v7423, %v7415
    %v7928 = vpack.c.b16 %v7424, %v7416
    %v7929 = vpack.c.b16 %v7425, %v7417
    %v7930 = vpack.c.b16 %v7434, %v7426
    %v7931 = vpack.c.b16 %v7435, %v7427
    %v7932 = vpack.c.b16 %v7436, %v7428
    %v7933 = vpack.c.b16 %v7437, %v7429
    %v7934 = vpack.c.b16 %v7438, %v7430
    %v7935 = vpack.c.b16 %v7439, %v7431
    %v7936 = vpack.c.b16 %v7440, %v7432
    %v7937 = vpack.c.b16 %v7441, %v7433
    %v7938 = vpack.c.b16 %v7450, %v7442
    %v7939 = vpack.c.b16 %v7451, %v7443
    %v7940 = vpack.c.b16 %v7452, %v7444
    %v7941 = vpack.c.b16 %v7453, %v7445
    %v7942 = vpack.c.b16 %v7454, %v7446
    %v7943 = vpack.c.b16 %v7455, %v7447
    %v7944 = vpack.c.b16 %v7456, %v7448
    %v7945 = vpack.c.b16 %v7457, %v7449
    %v7946 = vpack.c.b16 %v7466, %v7458
    %v7947 = vpack.c.b16 %v7467, %v7459
    %v7948 = vpack.c.b16 %v7468, %v7460
    %v7949 = vpack.c.b16 %v7469, %v7461
    %v7950 = vpack.c.b16 %v7470, %v7462
    %v7951 = vpack.c.b16 %v7471, %v7463
    %v7952 = vpack.c.b16 %v7472, %v7464
    %v7953 = vpack.c.b16 %v7473, %v7465
    %v7954 = vpack.c.b16 %v7482, %v7474
    %v7955 = vpack.c.b16 %v7483, %v7475
    %v7956 = vpack.c.b16 %v7484, %v7476
    %v7957 = vpack.c.b16 %v7485, %v7477
    %v7958 = vpack.c.b16 %v7486, %v7478
    %v7959 = vpack.c.b16 %v7487, %v7479
    %v7960 = vpack.c.b16 %v7488, %v7480
    %v7961 = vpack.c.b16 %v7489, %v7481
    %v7962 = vpack.c.b16 %v7498, %v7490
    %v7963 = vpack.c.b16 %v7499, %v7491
    %v7964 = vpack.c.b16 %v7500, %v7492
    %v7965 = vpack.c.b16 %v7501, %v7493
    %v7966 = vpack.c.b16 %v7502, %v7494
    %v7967 = vpack.c.b16 %v7503, %v7495
    %v7968 = vpack.c.b16 %v7504, %v7496
    %v7969 = vpack.c.b16 %v7505, %v7497
    %v7970 = vpack.c.b16 %v7514, %v7506
    %v7971 = vpack.c.b16 %v7515, %v7507
    %v7972 = vpack.c.b16 %v7516, %v7508
    %v7973 = vpack.c.b16 %v7517, %v7509
    %v7974 = vpack.c.b16 %v7518, %v7510
    %v7975 = vpack.c.b16 %v7519, %v7511
    %v7976 = vpack.c.b16 %v7520, %v7512
    %v7977 = vpack.c.b16 %v7521, %v7513
    %v7978 = vpack.c.b16 %v7530, %v7522
    %v7979 = vpack.c.b16 %v7531, %v7523
    %v7980 = vpack.c.b16 %v7532, %v7524
    %v7981 = vpack.c.b16 %v7533, %v7525
    %v7982 = vpack.c.b16 %v7534, %v7526
    %v7983 = vpack.c.b16 %v7535, %v7527
    %v7984 = vpack.c.b16 %v7536, %v7528
    %v7985 = vpack.c.b16 %v7537, %v7529
    %v7986 = vpack.c.b16 %v7546, %v7538
    %v7987 = vpack.c.b16 %v7547, %v7539
    %v7988 = vpack.c.b16 %v7548, %v7540
    %v7989 = vpack.c.b16 %v7549, %v7541
    %v7990 = vpack.c.b16 %v7550, %v7542
    %v7991 = vpack.c.b16 %v7551, %v7543
    %v7992 = vpack.c.b16 %v7552, %v7544
    %v7993 = vpack.c.b16 %v7553, %v7545
    %v7994 = vpack.c.b16 %v7562, %v7554
    %v7995 = vpack.c.b16 %v7563, %v7555
    %v7996 = vpack.c.b16 %v7564, %v7556
    %v7997 = vpack.c.b16 %v7565, %v7557
    %v7998 = vpack.c.b16 %v7566, %v7558
    %v7999 = vpack.c.b16 %v7567, %v7559
    %v8000 = vpack.c.b16 %v7568, %v7560
    %v8001 = vpack.c.b16 %v7569, %v7561
    %v8002 = vpack.c.b16 %v7578, %v7570
    %v8003 = vpack.c.b16 %v7579, %v7571
    %v8004 = vpack.c.b16 %v7580, %v7572
    %v8005 = vpack.c.b16 %v7581, %v7573
    %v8006 = vpack.c.b16 %v7582, %v7574
    %v8007 = vpack.c.b16 %v7583, %v7575
    %v8008 = vpack.c.b16 %v7584, %v7576
    %v8009 = vpack.c.b16 %v7585, %v7577
    %v8010 = vpack.c.b16 %v7594, %v7586
    %v8011 = vpack.c.b16 %v7595, %v7587
    %v8012 = vpack.c.b16 %v7596, %v7588
    %v8013 = vpack.c.b16 %v7597, %v7589
    %v8014 = vpack.c.b16 %v7598, %v7590
    %v8015 = vpack.c.b16 %v7599, %v7591
    %v8016 = vpack.c.b16 %v7600, %v7592
    %v8017 = vpack.c.b16 %v7601, %v7593
    %v8018 = vpack.c.b16 %v7610, %v7602
    %v8019 = vpack.c.b16 %v7611, %v7603
    %v8020 = vpack.c.b16 %v7612, %v7604
    %v8021 = vpack.c.b16 %v7613, %v7605
    %v8022 = vpack.c.b16 %v7614, %v7606
    %v8023 = vpack.c.b16 %v7615, %v7607
    %v8024 = vpack.c.b16 %v7616, %v7608
    %v8025 = vpack.c.b16 %v7617, %v7609
    %v8026 = vpack.c.b16 %v7626, %v7618
    %v8027 = vpack.c.b16 %v7627, %v7619
    %v8028 = vpack.c.b16 %v7628, %v7620
    %v8029 = vpack.c.b16 %v7629, %v7621
    %v8030 = vpack.c.b16 %v7630, %v7622
    %v8031 = vpack.c.b16 %v7631, %v7623
    %v8032 = vpack.c.b16 %v7632, %v7624
    %v8033 = vpack.c.b16 %v7633, %v7625
    %v8034 = vpack.c.b16 %v7642, %v7634
    %v8035 = vpack.c.b16 %v7643, %v7635
    %v8036 = vpack.c.b16 %v7644, %v7636
    %v8037 = vpack.c.b16 %v7645, %v7637
    %v8038 = vpack.c.b16 %v7646, %v7638
    %v8039 = vpack.c.b16 %v7647, %v7639
    %v8040 = vpack.c.b16 %v7648, %v7640
    %v8041 = vpack.c.b16 %v7649, %v7641
    %v8042 = vpack.c.b16 %v7658, %v7650
    %v8043 = vpack.c.b16 %v7659, %v7651
    %v8044 = vpack.c.b16 %v7660, %v7652
    %v8045 = vpack.c.b16 %v7661, %v7653
    %v8046 = vpack.c.b16 %v7662, %v7654
    %v8047 = vpack.c.b16 %v7663, %v7655
    %v8048 = vpack.c.b16 %v7664, %v7656
    %v8049 = vpack.c.b16 %v7665, %v7657
    %v8050 = vpack.c.b16 %v7674, %v7666
    %v8051 = vpack.c.b16 %v7675, %v7667
    %v8052 = vpack.c.b16 %v7676, %v7668
    %v8053 = vpack.c.b16 %v7677, %v7669
    %v8054 = vpack.c.b16 %v7678, %v7670
    %v8055 = vpack.c.b16 %v7679, %v7671
    %v8056 = vpack.c.b16 %v7680, %v7672
    %v8057 = vpack.c.b16 %v7681, %v7673
    %v8058 = vpack.c.b16 %v7690, %v7682
    %v8059 = vpack.c.b16 %v7691, %v7683
    %v8060 = vpack.c.b16 %v7692, %v7684
    %v8061 = vpack.c.b16 %v7693, %v7685
    %v8062 = vpack.c.b16 %v7694, %v7686
    %v8063 = vpack.c.b16 %v7695, %v7687
    %v8064 = vpack.c.b16 %v7696, %v7688
    %v8065 = vpack.c.b16 %v7697, %v7689
    %v8066 = vpack.c.b16 %v7706, %v7698
    %v8067 = vpack.c.b16 %v7707, %v7699
    %v8068 = vpack.c.b16 %v7708, %v7700
    %v8069 = vpack.c.b16 %v7709, %v7701
    %v8070 = vpack.c.b16 %v7710, %v7702
    %v8071 = vpack.c.b16 %v7711, %v7703
    %v8072 = vpack.c.b16 %v7712, %v7704
    %v8073 = vpack.c.b16 %v7713, %v7705
    %v8074 = vpack.c.b16 %v7722, %v7714
    %v8075 = vpack.c.b16 %v7723, %v7715
    %v8076 = vpack.c.b16 %v7724, %v7716
    %v8077 = vpack.c.b16 %v7725, %v7717
    %v8078 = vpack.c.b16 %v7726, %v7718
    %v8079 = vpack.c.b16 %v7727, %v7719
    %v8080 = vpack.c.b16 %v7728, %v7720
    %v8081 = vpack.c.b16 %v7729, %v7721
    %v8082 = vpack.c.b16 %v7738, %v7730
    %v8083 = vpack.c.b16 %v7739, %v7731
    %v8084 = vpack.c.b16 %v7740, %v7732
    %v8085 = vpack.c.b16 %v7741, %v7733
    %v8086 = vpack.c.b16 %v7742, %v7734
    %v8087 = vpack.c.b16 %v7743, %v7735
    %v8088 = vpack.c.b16 %v7744, %v7736
    %v8089 = vpack.c.b16 %v7745, %v7737
    %v8090 = vpack.c.b16 %v7754, %v7746
    %v8091 = vpack.c.b16 %v7755, %v7747
    %v8092 = vpack.c.b16 %v7756, %v7748
    %v8093 = vpack.c.b16 %v7757, %v7749
    %v8094 = vpack.c.b16 %v7758, %v7750
    %v8095 = vpack.c.b16 %v7759, %v7751
    %v8096 = vpack.c.b16 %v7760, %v7752
    %v8097 = vpack.c.b16 %v7761, %v7753
    %v8098 = vpack.c.b16 %v7770, %v7762
    %v8099 = vpack.c.b16 %v7771, %v7763
    %v8100 = vpack.c.b16 %v7772, %v7764
    %v8101 = vpack.c.b16 %v7773, %v7765
    %v8102 = vpack.c.b16 %v7774, %v7766
    %v8103 = vpack.c.b16 %v7775, %v7767
    %v8104 = vpack.c.b16 %v7776, %v7768
    %v8105 = vpack.c.b16 %v7777, %v7769
    %v8106 = vpack.c.b16 %v7786, %v7778
    %v8107 = vpack.c.b16 %v7787, %v7779
    %v8108 = vpack.c.b16 %v7788, %v7780
    %v8109 = vpack.c.b16 %v7789, %v7781
    %v8110 = vpack.c.b16 %v7790, %v7782
    %v8111 = vpack.c.b16 %v7791, %v7783
    %v8112 = vpack.c.b16 %v7792, %v7784
    %v8113 = vpack.c.b16 %v7793, %v7785
    %v8114 = vpack.c.b16 %v7802, %v7794
    %v8115 = vpack.c.b16 %v7803, %v7795
    %v8116 = vpack.c.b16 %v7804, %v7796
    %v8117 = vpack.c.b16 %v7805, %v7797
    %v8118 = vpack.c.b16 %v7806, %v7798
    %v8119 = vpack.c.b16 %v7807, %v7799
    %v8120 = vpack.c.b16 %v7808, %v7800
    %v8121 = vpack.c.b16 %v7809, %v7801
    %v8122 = vpack.c.b16 %v7818, %v7810
    %v8123 = vpack.c.b16 %v7819, %v7811
    %v8124 = vpack.c.b16 %v7820, %v7812
    %v8125 = vpack.c.b16 %v7821, %v7813
    %v8126 = vpack.c.b16 %v7822, %v7814
    %v8127 = vpack.c.b16 %v7823, %v7815
    %v8128 = vpack.c.b16 %v7824, %v7816
    %v8129 = vpack.c.b16 %v7825, %v7817
    %v8130 = vpack.c.b16 %v7834, %v7826
    %v8131 = vpack.c.b16 %v7835, %v7827
    %v8132 = vpack.c.b16 %v7836, %v7828
    %v8133 = vpack.c.b16 %v7837, %v7829
    %v8134 = vpack.c.b16 %v7838, %v7830
    %v8135 = vpack.c.b16 %v7839, %v7831
    %v8136 = vpack.c.b16 %v7840, %v7832
    %v8137 = vpack.c.b16 %v7841, %v7833
    %v8138 = vpack.c.b16 %v7850, %v7842
    %v8139 = vpack.c.b16 %v7851, %v7843
    %v8140 = vpack.c.b16 %v7852, %v7844
    %v8141 = vpack.c.b16 %v7853, %v7845
    %v8142 = vpack.c.b16 %v7854, %v7846
    %v8143 = vpack.c.b16 %v7855, %v7847
    %v8144 = vpack.c.b16 %v7856, %v7848
    %v8145 = vpack.c.b16 %v7857, %v7849
    %v8146 = vpack.c.b16 %v7866, %v7858
    %v8147 = vpack.c.b16 %v7867, %v7859
    %v8148 = vpack.c.b16 %v7868, %v7860
    %v8149 = vpack.c.b16 %v7869, %v7861
    %v8150 = vpack.c.b16 %v7870, %v7862
    %v8151 = vpack.c.b16 %v7871, %v7863
    %v8152 = vpack.c.b16 %v7872, %v7864
    %v8153 = vpack.c.b16 %v7873, %v7865
    %v8154 = vpack.c.b16 %v7882, %v7874
    %v8155 = vpack.c.b16 %v7883, %v7875
    %v8156 = vpack.c.b16 %v7884, %v7876
    %v8157 = vpack.c.b16 %v7885, %v7877
    %v8158 = vpack.c.b16 %v7886, %v7878
    %v8159 = vpack.c.b16 %v7887, %v7879
    %v8160 = vpack.c.b16 %v7888, %v7880
    %v8161 = vpack.c.b16 %v7889, %v7881
    %v8162 = vpack.c.b16 %v7898, %v7890
    %v8163 = vpack.c.b16 %v7899, %v7891
    %v8164 = vpack.c.b16 %v7900, %v7892
    %v8165 = vpack.c.b16 %v7901, %v7893
    %v8166 = vpack.c.b16 %v7902, %v7894
    %v8167 = vpack.c.b16 %v7903, %v7895
    %v8168 = vpack.c.b16 %v7904, %v7896
    %v8169 = vpack.c.b16 %v7905, %v7897
    %v8170 = vpack.c.b16 %v7914, %v7906
    %v8171 = vpack.c.b16 %v7915, %v7907
    %v8172 = vpack.c.b16 %v7916, %v7908
    %v8173 = vpack.c.b16 %v7917, %v7909
    %v8174 = vpack.c.b16 %v7918, %v7910
    %v8175 = vpack.c.b16 %v7919, %v7911
    %v8176 = vpack.c.b16 %v7920, %v7912
    %v8177 = vpack.c.b16 %v7921, %v7913
    %8434 = vmatpush.bf16.msra.mxu0 %v7978
    %8435 = vmatpush.bf16.msra.mxu0 %v7970
    %8436 = vmatpush.bf16.msra.mxu0 %v7962
    %8437 = vmatpush.bf16.msra.mxu0 %v7954
    %8438 = vmatpush.bf16.msra.mxu0 %v7946
    %8439 = vmatpush.bf16.msra.mxu0 %v7938
    %8440 = vmatpush.bf16.msra.mxu0 %v7930
    %8441 = vmatpush.bf16.msra.mxu0 %v7922
    %8442 = vmatmul.bf16.gmra.mxu0 %v7132
    %v8443 = vpop.f32.mrf.mxu0
    %v8444 = vadd.f32 %v7138, %v8443
    %v8445 = vpop.f32.mrf.mxu0
    %v8446 = vadd.f32 %v7138, %v8445
    %8447 = vdwg.mxu0
    %8448 = vmatpush.bf16.msra.mxu0 %v8042
    %8449 = vmatpush.bf16.msra.mxu0 %v8034
    %8450 = vmatpush.bf16.msra.mxu0 %v8026
    %8451 = vmatpush.bf16.msra.mxu0 %v8018
    %8452 = vmatpush.bf16.msra.mxu0 %v8010
    %8453 = vmatpush.bf16.msra.mxu0 %v8002
    %8454 = vmatpush.bf16.msra.mxu0 %v7994
    %8455 = vmatpush.bf16.msra.mxu0 %v7986
    %8456 = vmatmul.bf16.gmra.mxu0 %v7133
    %v8457 = vpop.f32.mrf.mxu0
    %v8458 = vadd.f32 %v8444, %v8457
    %v8459 = vpop.f32.mrf.mxu0
    %v8460 = vadd.f32 %v8446, %v8459
    %8461 = vdwg.mxu0
    %8462 = vmatpush.bf16.msra.mxu0 %v8106
    %8463 = vmatpush.bf16.msra.mxu0 %v8098
    %8464 = vmatpush.bf16.msra.mxu0 %v8090
    %8465 = vmatpush.bf16.msra.mxu0 %v8082
    %8466 = vmatpush.bf16.msra.mxu0 %v8074
    %8467 = vmatpush.bf16.msra.mxu0 %v8066
    %8468 = vmatpush.bf16.msra.mxu0 %v8058
    %8469 = vmatpush.bf16.msra.mxu0 %v8050
    %8470 = vmatmul.bf16.gmra.mxu0 %v7134
    %v8471 = vpop.f32.mrf.mxu0
    %v8472 = vadd.f32 %v8458, %v8471
    %v8473 = vpop.f32.mrf.mxu0
    %v8474 = vadd.f32 %v8460, %v8473
    %8475 = vdwg.mxu0
    %8476 = vmatpush.bf16.msra.mxu0 %v8170
    %8477 = vmatpush.bf16.msra.mxu0 %v8162
    %8478 = vmatpush.bf16.msra.mxu0 %v8154
    %8479 = vmatpush.bf16.msra.mxu0 %v8146
    %8480 = vmatpush.bf16.msra.mxu0 %v8138
    %8481 = vmatpush.bf16.msra.mxu0 %v8130
    %8482 = vmatpush.bf16.msra.mxu0 %v8122
    %8483 = vmatpush.bf16.msra.mxu0 %v8114
    %8484 = vmatmul.bf16.gmra.mxu0 %v7135
    %v8485 = vpop.f32.mrf.mxu0
    %v8486 = vadd.f32 %v8472, %v8485
    %v8487 = vpop.f32.mrf.mxu0
    %v8488 = vadd.f32 %v8474, %v8487
    %8489 = vdwg.mxu0
    %8490 = vmatpush.bf16.msra.mxu0 %v7979
    %8491 = vmatpush.bf16.msra.mxu0 %v7971
    %8492 = vmatpush.bf16.msra.mxu0 %v7963
    %8493 = vmatpush.bf16.msra.mxu0 %v7955
    %8494 = vmatpush.bf16.msra.mxu0 %v7947
    %8495 = vmatpush.bf16.msra.mxu0 %v7939
    %8496 = vmatpush.bf16.msra.mxu0 %v7931
    %8497 = vmatpush.bf16.msra.mxu0 %v7923
    %8498 = vmatmul.bf16.gmra.mxu0 %v7132
    %v8499 = vpop.f32.mrf.mxu0
    %v8500 = vadd.f32 %v7139, %v8499
    %v8501 = vpop.f32.mrf.mxu0
    %v8502 = vadd.f32 %v7139, %v8501
    %8503 = vdwg.mxu0
    %8504 = vmatpush.bf16.msra.mxu0 %v8043
    %8505 = vmatpush.bf16.msra.mxu0 %v8035
    %8506 = vmatpush.bf16.msra.mxu0 %v8027
    %8507 = vmatpush.bf16.msra.mxu0 %v8019
    %8508 = vmatpush.bf16.msra.mxu0 %v8011
    %8509 = vmatpush.bf16.msra.mxu0 %v8003
    %8510 = vmatpush.bf16.msra.mxu0 %v7995
    %8511 = vmatpush.bf16.msra.mxu0 %v7987
    %8512 = vmatmul.bf16.gmra.mxu0 %v7133
    %v8513 = vpop.f32.mrf.mxu0
    %v8514 = vadd.f32 %v8500, %v8513
    %v8515 = vpop.f32.mrf.mxu0
    %v8516 = vadd.f32 %v8502, %v8515
    %8517 = vdwg.mxu0
    %8518 = vmatpush.bf16.msra.mxu0 %v8107
    %8519 = vmatpush.bf16.msra.mxu0 %v8099
    %8520 = vmatpush.bf16.msra.mxu0 %v8091
    %8521 = vmatpush.bf16.msra.mxu0 %v8083
    %8522 = vmatpush.bf16.msra.mxu0 %v8075
    %8523 = vmatpush.bf16.msra.mxu0 %v8067
    %8524 = vmatpush.bf16.msra.mxu0 %v8059
    %8525 = vmatpush.bf16.msra.mxu0 %v8051
    %8526 = vmatmul.bf16.gmra.mxu0 %v7134
    %v8527 = vpop.f32.mrf.mxu0
    %v8528 = vadd.f32 %v8514, %v8527
    %v8529 = vpop.f32.mrf.mxu0
    %v8530 = vadd.f32 %v8516, %v8529
    %8531 = vdwg.mxu0
    %8532 = vmatpush.bf16.msra.mxu0 %v8171
    %8533 = vmatpush.bf16.msra.mxu0 %v8163
    %8534 = vmatpush.bf16.msra.mxu0 %v8155
    %8535 = vmatpush.bf16.msra.mxu0 %v8147
    %8536 = vmatpush.bf16.msra.mxu0 %v8139
    %8537 = vmatpush.bf16.msra.mxu0 %v8131
    %8538 = vmatpush.bf16.msra.mxu0 %v8123
    %8539 = vmatpush.bf16.msra.mxu0 %v8115
    %8540 = vmatmul.bf16.gmra.mxu0 %v7135
    %v8541 = vpop.f32.mrf.mxu0
    %v8542 = vadd.f32 %v8528, %v8541
    %v8543 = vpop.f32.mrf.mxu0
    %v8544 = vadd.f32 %v8530, %v8543
    %8545 = vdwg.mxu0
    %8546 = vmatpush.bf16.msra.mxu0 %v7980
    %8547 = vmatpush.bf16.msra.mxu0 %v7972
    %8548 = vmatpush.bf16.msra.mxu0 %v7964
    %8549 = vmatpush.bf16.msra.mxu0 %v7956
    %8550 = vmatpush.bf16.msra.mxu0 %v7948
    %8551 = vmatpush.bf16.msra.mxu0 %v7940
    %8552 = vmatpush.bf16.msra.mxu0 %v7932
    %8553 = vmatpush.bf16.msra.mxu0 %v7924
    %8554 = vmatmul.bf16.gmra.mxu0 %v7132
    %v8555 = vpop.f32.mrf.mxu0
    %v8556 = vadd.f32 %v7140, %v8555
    %v8557 = vpop.f32.mrf.mxu0
    %v8558 = vadd.f32 %v7140, %v8557
    %8559 = vdwg.mxu0
    %8560 = vmatpush.bf16.msra.mxu0 %v8044
    %8561 = vmatpush.bf16.msra.mxu0 %v8036
    %8562 = vmatpush.bf16.msra.mxu0 %v8028
    %8563 = vmatpush.bf16.msra.mxu0 %v8020
    %8564 = vmatpush.bf16.msra.mxu0 %v8012
    %8565 = vmatpush.bf16.msra.mxu0 %v8004
    %8566 = vmatpush.bf16.msra.mxu0 %v7996
    %8567 = vmatpush.bf16.msra.mxu0 %v7988
    %8568 = vmatmul.bf16.gmra.mxu0 %v7133
    %v8569 = vpop.f32.mrf.mxu0
    %v8570 = vadd.f32 %v8556, %v8569
    %v8571 = vpop.f32.mrf.mxu0
    %v8572 = vadd.f32 %v8558, %v8571
    %8573 = vdwg.mxu0
    %8574 = vmatpush.bf16.msra.mxu0 %v8108
    %8575 = vmatpush.bf16.msra.mxu0 %v8100
    %8576 = vmatpush.bf16.msra.mxu0 %v8092
    %8577 = vmatpush.bf16.msra.mxu0 %v8084
    %8578 = vmatpush.bf16.msra.mxu0 %v8076
    %8579 = vmatpush.bf16.msra.mxu0 %v8068
    %8580 = vmatpush.bf16.msra.mxu0 %v8060
    %8581 = vmatpush.bf16.msra.mxu0 %v8052
    %8582 = vmatmul.bf16.gmra.mxu0 %v7134
    %v8583 = vpop.f32.mrf.mxu0
    %v8584 = vadd.f32 %v8570, %v8583
    %v8585 = vpop.f32.mrf.mxu0
    %v8586 = vadd.f32 %v8572, %v8585
    %8587 = vdwg.mxu0
    %8588 = vmatpush.bf16.msra.mxu0 %v8172
    %8589 = vmatpush.bf16.msra.mxu0 %v8164
    %8590 = vmatpush.bf16.msra.mxu0 %v8156
    %8591 = vmatpush.bf16.msra.mxu0 %v8148
    %8592 = vmatpush.bf16.msra.mxu0 %v8140
    %8593 = vmatpush.bf16.msra.mxu0 %v8132
    %8594 = vmatpush.bf16.msra.mxu0 %v8124
    %8595 = vmatpush.bf16.msra.mxu0 %v8116
    %8596 = vmatmul.bf16.gmra.mxu0 %v7135
    %v8597 = vpop.f32.mrf.mxu0
    %v8598 = vadd.f32 %v8584, %v8597
    %v8599 = vpop.f32.mrf.mxu0
    %v8600 = vadd.f32 %v8586, %v8599
    %8601 = vdwg.mxu0
    %8602 = vmatpush.bf16.msra.mxu0 %v7981
    %8603 = vmatpush.bf16.msra.mxu0 %v7973
    %8604 = vmatpush.bf16.msra.mxu0 %v7965
    %8605 = vmatpush.bf16.msra.mxu0 %v7957
    %8606 = vmatpush.bf16.msra.mxu0 %v7949
    %8607 = vmatpush.bf16.msra.mxu0 %v7941
    %8608 = vmatpush.bf16.msra.mxu0 %v7933
    %8609 = vmatpush.bf16.msra.mxu0 %v7925
    %8610 = vmatmul.bf16.gmra.mxu0 %v7132
    %v8611 = vpop.f32.mrf.mxu0
    %v8612 = vadd.f32 %v7141, %v8611
    %v8613 = vpop.f32.mrf.mxu0
    %v8614 = vadd.f32 %v7141, %v8613
    %8615 = vdwg.mxu0
    %8616 = vmatpush.bf16.msra.mxu0 %v8045
    %8617 = vmatpush.bf16.msra.mxu0 %v8037
    %8618 = vmatpush.bf16.msra.mxu0 %v8029
    %8619 = vmatpush.bf16.msra.mxu0 %v8021
    %8620 = vmatpush.bf16.msra.mxu0 %v8013
    %8621 = vmatpush.bf16.msra.mxu0 %v8005
    %8622 = vmatpush.bf16.msra.mxu0 %v7997
    %8623 = vmatpush.bf16.msra.mxu0 %v7989
    %8624 = vmatmul.bf16.gmra.mxu0 %v7133
    %v8625 = vpop.f32.mrf.mxu0
    %v8626 = vadd.f32 %v8612, %v8625
    %v8627 = vpop.f32.mrf.mxu0
    %v8628 = vadd.f32 %v8614, %v8627
    %8629 = vdwg.mxu0
    %8630 = vmatpush.bf16.msra.mxu0 %v8109
    %8631 = vmatpush.bf16.msra.mxu0 %v8101
    %8632 = vmatpush.bf16.msra.mxu0 %v8093
    %8633 = vmatpush.bf16.msra.mxu0 %v8085
    %8634 = vmatpush.bf16.msra.mxu0 %v8077
    %8635 = vmatpush.bf16.msra.mxu0 %v8069
    %8636 = vmatpush.bf16.msra.mxu0 %v8061
    %8637 = vmatpush.bf16.msra.mxu0 %v8053
    %8638 = vmatmul.bf16.gmra.mxu0 %v7134
    %v8639 = vpop.f32.mrf.mxu0
    %v8640 = vadd.f32 %v8626, %v8639
    %v8641 = vpop.f32.mrf.mxu0
    %v8642 = vadd.f32 %v8628, %v8641
    %8643 = vdwg.mxu0
    %8644 = vmatpush.bf16.msra.mxu0 %v8173
    %8645 = vmatpush.bf16.msra.mxu0 %v8165
    %8646 = vmatpush.bf16.msra.mxu0 %v8157
    %8647 = vmatpush.bf16.msra.mxu0 %v8149
    %8648 = vmatpush.bf16.msra.mxu0 %v8141
    %8649 = vmatpush.bf16.msra.mxu0 %v8133
    %8650 = vmatpush.bf16.msra.mxu0 %v8125
    %8651 = vmatpush.bf16.msra.mxu0 %v8117
    %8652 = vmatmul.bf16.gmra.mxu0 %v7135
    %v8653 = vpop.f32.mrf.mxu0
    %v8654 = vadd.f32 %v8640, %v8653
    %v8655 = vpop.f32.mrf.mxu0
    %v8656 = vadd.f32 %v8642, %v8655
    %8657 = vdwg.mxu0
    %8658 = vmatpush.bf16.msra.mxu0 %v7982
    %8659 = vmatpush.bf16.msra.mxu0 %v7974
    %8660 = vmatpush.bf16.msra.mxu0 %v7966
    %8661 = vmatpush.bf16.msra.mxu0 %v7958
    %8662 = vmatpush.bf16.msra.mxu0 %v7950
    %8663 = vmatpush.bf16.msra.mxu0 %v7942
    %8664 = vmatpush.bf16.msra.mxu0 %v7934
    %8665 = vmatpush.bf16.msra.mxu0 %v7926
    %8666 = vmatmul.bf16.gmra.mxu0 %v7132
    %v8667 = vpop.f32.mrf.mxu0
    %v8668 = vadd.f32 %v7142, %v8667
    %v8669 = vpop.f32.mrf.mxu0
    %v8670 = vadd.f32 %v7142, %v8669
    %8671 = vdwg.mxu0
    %8672 = vmatpush.bf16.msra.mxu0 %v8046
    %8673 = vmatpush.bf16.msra.mxu0 %v8038
    %8674 = vmatpush.bf16.msra.mxu0 %v8030
    %8675 = vmatpush.bf16.msra.mxu0 %v8022
    %8676 = vmatpush.bf16.msra.mxu0 %v8014
    %8677 = vmatpush.bf16.msra.mxu0 %v8006
    %8678 = vmatpush.bf16.msra.mxu0 %v7998
    %8679 = vmatpush.bf16.msra.mxu0 %v7990
    %8680 = vmatmul.bf16.gmra.mxu0 %v7133
    %v8681 = vpop.f32.mrf.mxu0
    %v8682 = vadd.f32 %v8668, %v8681
    %v8683 = vpop.f32.mrf.mxu0
    %v8684 = vadd.f32 %v8670, %v8683
    %8685 = vdwg.mxu0
    %8686 = vmatpush.bf16.msra.mxu0 %v8110
    %8687 = vmatpush.bf16.msra.mxu0 %v8102
    %8688 = vmatpush.bf16.msra.mxu0 %v8094
    %8689 = vmatpush.bf16.msra.mxu0 %v8086
    %8690 = vmatpush.bf16.msra.mxu0 %v8078
    %8691 = vmatpush.bf16.msra.mxu0 %v8070
    %8692 = vmatpush.bf16.msra.mxu0 %v8062
    %8693 = vmatpush.bf16.msra.mxu0 %v8054
    %8694 = vmatmul.bf16.gmra.mxu0 %v7134
    %v8695 = vpop.f32.mrf.mxu0
    %v8696 = vadd.f32 %v8682, %v8695
    %v8697 = vpop.f32.mrf.mxu0
    %v8698 = vadd.f32 %v8684, %v8697
    %8699 = vdwg.mxu0
    %8700 = vmatpush.bf16.msra.mxu0 %v8174
    %8701 = vmatpush.bf16.msra.mxu0 %v8166
    %8702 = vmatpush.bf16.msra.mxu0 %v8158
    %8703 = vmatpush.bf16.msra.mxu0 %v8150
    %8704 = vmatpush.bf16.msra.mxu0 %v8142
    %8705 = vmatpush.bf16.msra.mxu0 %v8134
    %8706 = vmatpush.bf16.msra.mxu0 %v8126
    %8707 = vmatpush.bf16.msra.mxu0 %v8118
    %8708 = vmatmul.bf16.gmra.mxu0 %v7135
    %v8709 = vpop.f32.mrf.mxu0
    %v8710 = vadd.f32 %v8696, %v8709
    %v8711 = vpop.f32.mrf.mxu0
    %v8712 = vadd.f32 %v8698, %v8711
    %8713 = vdwg.mxu0
    %8714 = vmatpush.bf16.msra.mxu0 %v7983
    %8715 = vmatpush.bf16.msra.mxu0 %v7975
    %8716 = vmatpush.bf16.msra.mxu0 %v7967
    %8717 = vmatpush.bf16.msra.mxu0 %v7959
    %8718 = vmatpush.bf16.msra.mxu0 %v7951
    %8719 = vmatpush.bf16.msra.mxu0 %v7943
    %8720 = vmatpush.bf16.msra.mxu0 %v7935
    %8721 = vmatpush.bf16.msra.mxu0 %v7927
    %8722 = vmatmul.bf16.gmra.mxu0 %v7132
    %v8723 = vpop.f32.mrf.mxu0
    %v8724 = vadd.f32 %v7143, %v8723
    %v8725 = vpop.f32.mrf.mxu0
    %v8726 = vadd.f32 %v7143, %v8725
    %8727 = vdwg.mxu0
    %8728 = vmatpush.bf16.msra.mxu0 %v8047
    %8729 = vmatpush.bf16.msra.mxu0 %v8039
    %8730 = vmatpush.bf16.msra.mxu0 %v8031
    %8731 = vmatpush.bf16.msra.mxu0 %v8023
    %8732 = vmatpush.bf16.msra.mxu0 %v8015
    %8733 = vmatpush.bf16.msra.mxu0 %v8007
    %8734 = vmatpush.bf16.msra.mxu0 %v7999
    %8735 = vmatpush.bf16.msra.mxu0 %v7991
    %8736 = vmatmul.bf16.gmra.mxu0 %v7133
    %v8737 = vpop.f32.mrf.mxu0
    %v8738 = vadd.f32 %v8724, %v8737
    %v8739 = vpop.f32.mrf.mxu0
    %v8740 = vadd.f32 %v8726, %v8739
    %8741 = vdwg.mxu0
    %8742 = vmatpush.bf16.msra.mxu0 %v8111
    %8743 = vmatpush.bf16.msra.mxu0 %v8103
    %8744 = vmatpush.bf16.msra.mxu0 %v8095
    %8745 = vmatpush.bf16.msra.mxu0 %v8087
    %8746 = vmatpush.bf16.msra.mxu0 %v8079
    %8747 = vmatpush.bf16.msra.mxu0 %v8071
    %8748 = vmatpush.bf16.msra.mxu0 %v8063
    %8749 = vmatpush.bf16.msra.mxu0 %v8055
    %8750 = vmatmul.bf16.gmra.mxu0 %v7134
    %v8751 = vpop.f32.mrf.mxu0
    %v8752 = vadd.f32 %v8738, %v8751
    %v8753 = vpop.f32.mrf.mxu0
    %v8754 = vadd.f32 %v8740, %v8753
    %8755 = vdwg.mxu0
    %8756 = vmatpush.bf16.msra.mxu0 %v8175
    %8757 = vmatpush.bf16.msra.mxu0 %v8167
    %8758 = vmatpush.bf16.msra.mxu0 %v8159
    %8759 = vmatpush.bf16.msra.mxu0 %v8151
    %8760 = vmatpush.bf16.msra.mxu0 %v8143
    %8761 = vmatpush.bf16.msra.mxu0 %v8135
    %8762 = vmatpush.bf16.msra.mxu0 %v8127
    %8763 = vmatpush.bf16.msra.mxu0 %v8119
    %8764 = vmatmul.bf16.gmra.mxu0 %v7135
    %v8765 = vpop.f32.mrf.mxu0
    %v8766 = vadd.f32 %v8752, %v8765
    %v8767 = vpop.f32.mrf.mxu0
    %v8768 = vadd.f32 %v8754, %v8767
    %8769 = vdwg.mxu0
    %8770 = vmatpush.bf16.msra.mxu0 %v7984
    %8771 = vmatpush.bf16.msra.mxu0 %v7976
    %8772 = vmatpush.bf16.msra.mxu0 %v7968
    %8773 = vmatpush.bf16.msra.mxu0 %v7960
    %8774 = vmatpush.bf16.msra.mxu0 %v7952
    %8775 = vmatpush.bf16.msra.mxu0 %v7944
    %8776 = vmatpush.bf16.msra.mxu0 %v7936
    %8777 = vmatpush.bf16.msra.mxu0 %v7928
    %8778 = vmatmul.bf16.gmra.mxu0 %v7132
    %v8779 = vpop.f32.mrf.mxu0
    %v8780 = vadd.f32 %v7144, %v8779
    %v8781 = vpop.f32.mrf.mxu0
    %v8782 = vadd.f32 %v7144, %v8781
    %8783 = vdwg.mxu0
    %8784 = vmatpush.bf16.msra.mxu0 %v8048
    %8785 = vmatpush.bf16.msra.mxu0 %v8040
    %8786 = vmatpush.bf16.msra.mxu0 %v8032
    %8787 = vmatpush.bf16.msra.mxu0 %v8024
    %8788 = vmatpush.bf16.msra.mxu0 %v8016
    %8789 = vmatpush.bf16.msra.mxu0 %v8008
    %8790 = vmatpush.bf16.msra.mxu0 %v8000
    %8791 = vmatpush.bf16.msra.mxu0 %v7992
    %8792 = vmatmul.bf16.gmra.mxu0 %v7133
    %v8793 = vpop.f32.mrf.mxu0
    %v8794 = vadd.f32 %v8780, %v8793
    %v8795 = vpop.f32.mrf.mxu0
    %v8796 = vadd.f32 %v8782, %v8795
    %8797 = vdwg.mxu0
    %8798 = vmatpush.bf16.msra.mxu0 %v8112
    %8799 = vmatpush.bf16.msra.mxu0 %v8104
    %8800 = vmatpush.bf16.msra.mxu0 %v8096
    %8801 = vmatpush.bf16.msra.mxu0 %v8088
    %8802 = vmatpush.bf16.msra.mxu0 %v8080
    %8803 = vmatpush.bf16.msra.mxu0 %v8072
    %8804 = vmatpush.bf16.msra.mxu0 %v8064
    %8805 = vmatpush.bf16.msra.mxu0 %v8056
    %8806 = vmatmul.bf16.gmra.mxu0 %v7134
    %v8807 = vpop.f32.mrf.mxu0
    %v8808 = vadd.f32 %v8794, %v8807
    %v8809 = vpop.f32.mrf.mxu0
    %v8810 = vadd.f32 %v8796, %v8809
    %8811 = vdwg.mxu0
    %8812 = vmatpush.bf16.msra.mxu0 %v8176
    %8813 = vmatpush.bf16.msra.mxu0 %v8168
    %8814 = vmatpush.bf16.msra.mxu0 %v8160
    %8815 = vmatpush.bf16.msra.mxu0 %v8152
    %8816 = vmatpush.bf16.msra.mxu0 %v8144
    %8817 = vmatpush.bf16.msra.mxu0 %v8136
    %8818 = vmatpush.bf16.msra.mxu0 %v8128
    %8819 = vmatpush.bf16.msra.mxu0 %v8120
    %8820 = vmatmul.bf16.gmra.mxu0 %v7135
    %v8821 = vpop.f32.mrf.mxu0
    %v8822 = vadd.f32 %v8808, %v8821
    %v8823 = vpop.f32.mrf.mxu0
    %v8824 = vadd.f32 %v8810, %v8823
    %8825 = vdwg.mxu0
    %8826 = vmatpush.bf16.msra.mxu0 %v7985
    %8827 = vmatpush.bf16.msra.mxu0 %v7977
    %8828 = vmatpush.bf16.msra.mxu0 %v7969
    %8829 = vmatpush.bf16.msra.mxu0 %v7961
    %8830 = vmatpush.bf16.msra.mxu0 %v7953
    %8831 = vmatpush.bf16.msra.mxu0 %v7945
    %8832 = vmatpush.bf16.msra.mxu0 %v7937
    %8833 = vmatpush.bf16.msra.mxu0 %v7929
    %8834 = vmatmul.bf16.gmra.mxu0 %v7132
    %v8835 = vpop.f32.mrf.mxu0
    %v8836 = vadd.f32 %v7145, %v8835
    %v8837 = vpop.f32.mrf.mxu0
    %v8838 = vadd.f32 %v7145, %v8837
    %8839 = vdwg.mxu0
    %8840 = vmatpush.bf16.msra.mxu0 %v8049
    %8841 = vmatpush.bf16.msra.mxu0 %v8041
    %8842 = vmatpush.bf16.msra.mxu0 %v8033
    %8843 = vmatpush.bf16.msra.mxu0 %v8025
    %8844 = vmatpush.bf16.msra.mxu0 %v8017
    %8845 = vmatpush.bf16.msra.mxu0 %v8009
    %8846 = vmatpush.bf16.msra.mxu0 %v8001
    %8847 = vmatpush.bf16.msra.mxu0 %v7993
    %8848 = vmatmul.bf16.gmra.mxu0 %v7133
    %v8849 = vpop.f32.mrf.mxu0
    %v8850 = vadd.f32 %v8836, %v8849
    %v8851 = vpop.f32.mrf.mxu0
    %v8852 = vadd.f32 %v8838, %v8851
    %8853 = vdwg.mxu0
    %8854 = vmatpush.bf16.msra.mxu0 %v8113
    %8855 = vmatpush.bf16.msra.mxu0 %v8105
    %8856 = vmatpush.bf16.msra.mxu0 %v8097
    %8857 = vmatpush.bf16.msra.mxu0 %v8089
    %8858 = vmatpush.bf16.msra.mxu0 %v8081
    %8859 = vmatpush.bf16.msra.mxu0 %v8073
    %8860 = vmatpush.bf16.msra.mxu0 %v8065
    %8861 = vmatpush.bf16.msra.mxu0 %v8057
    %8862 = vmatmul.bf16.gmra.mxu0 %v7134
    %v8863 = vpop.f32.mrf.mxu0
    %v8864 = vadd.f32 %v8850, %v8863
    %v8865 = vpop.f32.mrf.mxu0
    %v8866 = vadd.f32 %v8852, %v8865
    %8867 = vdwg.mxu0
    %8868 = vmatpush.bf16.msra.mxu0 %v8177
    %8869 = vmatpush.bf16.msra.mxu0 %v8169
    %8870 = vmatpush.bf16.msra.mxu0 %v8161
    %8871 = vmatpush.bf16.msra.mxu0 %v8153
    %8872 = vmatpush.bf16.msra.mxu0 %v8145
    %8873 = vmatpush.bf16.msra.mxu0 %v8137
    %8874 = vmatpush.bf16.msra.mxu0 %v8129
    %8875 = vmatpush.bf16.msra.mxu0 %v8121
    %8876 = vmatmul.bf16.gmra.mxu0 %v7135
    %v8877 = vpop.f32.mrf.mxu0
    %v8878 = vadd.f32 %v8864, %v8877
    %v8879 = vpop.f32.mrf.mxu0
    %v8880 = vadd.f32 %v8866, %v8879
    %8881 = vdwg.mxu0
    %v8882 = vmax.f32 %v8486, 0.0
    %v8883 = vmax.f32 %v8542, 0.0
    %v8884 = vmax.f32 %v8598, 0.0
    %v8885 = vmax.f32 %v8654, 0.0
    %v8886 = vmax.f32 %v8710, 0.0
    %v8887 = vmax.f32 %v8766, 0.0
    %v8888 = vmax.f32 %v8822, 0.0
    %v8889 = vmax.f32 %v8878, 0.0
    %v8890 = vmax.f32 %v8488, 0.0
    %v8891 = vmax.f32 %v8544, 0.0
    %v8892 = vmax.f32 %v8600, 0.0
    %v8893 = vmax.f32 %v8656, 0.0
    %v8894 = vmax.f32 %v8712, 0.0
    %v8895 = vmax.f32 %v8768, 0.0
    %v8896 = vmax.f32 %v8824, 0.0
    %v8897 = vmax.f32 %v8880, 0.0
    %v8898 = vld [vmem:[#allocation26] sm:$0xff]
    %v8899 = vld [vmem:[#allocation26 + $0x8] sm:$0xff]
    %v8900 = vld [vmem:[#allocation26 + $0x10] sm:$0xff]
    %v8901 = vld [vmem:[#allocation26 + $0x18] sm:$0xff]
    %v8902 = vld [vmem:[#allocation26 + $0x20] sm:$0xff]
    %v8903 = vld [vmem:[#allocation26 + $0x28] sm:$0xff]
    %v8904 = vld [vmem:[#allocation26 + $0x30] sm:$0xff]
    %v8905 = vld [vmem:[#allocation26 + $0x38] sm:$0xff]
    %v8906 = vld [vmem:[#allocation26 + $0x40] sm:$0xff]
    %v8907 = vld [vmem:[#allocation26 + $0x48] sm:$0xff]
    %v8908 = vld [vmem:[#allocation26 + $0x50] sm:$0xff]
    %v8909 = vld [vmem:[#allocation26 + $0x58] sm:$0xff]
    %v8910 = vld [vmem:[#allocation26 + $0x60] sm:$0xff]
    %v8911 = vld [vmem:[#allocation26 + $0x68] sm:$0xff]
    %v8912 = vld [vmem:[#allocation26 + $0x70] sm:$0xff]
    %v8913 = vld [vmem:[#allocation26 + $0x78] sm:$0xff]
    %v8914 = vld [vmem:[#allocation26 + $0x80] sm:$0xff]
    %v8915 = vld [vmem:[#allocation26 + $0x88] sm:$0xff]
    %v8916 = vld [vmem:[#allocation26 + $0x90] sm:$0xff]
    %v8917 = vld [vmem:[#allocation26 + $0x98] sm:$0xff]
    %v8918 = vld [vmem:[#allocation26 + $0xa0] sm:$0xff]
    %v8919 = vld [vmem:[#allocation26 + $0xa8] sm:$0xff]
    %v8920 = vld [vmem:[#allocation26 + $0xb0] sm:$0xff]
    %v8921 = vld [vmem:[#allocation26 + $0xb8] sm:$0xff]
    %v8922 = vld [vmem:[#allocation26 + $0xc0] sm:$0xff]
    %v8923 = vld [vmem:[#allocation26 + $0xc8] sm:$0xff]
    %v8924 = vld [vmem:[#allocation26 + $0xd0] sm:$0xff]
    %v8925 = vld [vmem:[#allocation26 + $0xd8] sm:$0xff]
    %v8926 = vld [vmem:[#allocation26 + $0xe0] sm:$0xff]
    %v8927 = vld [vmem:[#allocation26 + $0xe8] sm:$0xff]
    %v8928 = vld [vmem:[#allocation26 + $0xf0] sm:$0xff]
    %v8929 = vld [vmem:[#allocation26 + $0xf8] sm:$0xff]
    %v8930 = vld [vmem:[#allocation26 + $0x100] sm:$0xff]
    %v8931 = vld [vmem:[#allocation26 + $0x108] sm:$0xff]
    %v8932 = vld [vmem:[#allocation26 + $0x110] sm:$0xff]
    %v8933 = vld [vmem:[#allocation26 + $0x118] sm:$0xff]
    %v8934 = vld [vmem:[#allocation26 + $0x120] sm:$0xff]
    %v8935 = vld [vmem:[#allocation26 + $0x128] sm:$0xff]
    %v8936 = vld [vmem:[#allocation26 + $0x130] sm:$0xff]
    %v8937 = vld [vmem:[#allocation26 + $0x138] sm:$0xff]
    %v8938 = vld [vmem:[#allocation26 + $0x140] sm:$0xff]
    %v8939 = vld [vmem:[#allocation26 + $0x148] sm:$0xff]
    %v8940 = vld [vmem:[#allocation26 + $0x150] sm:$0xff]
    %v8941 = vld [vmem:[#allocation26 + $0x158] sm:$0xff]
    %v8942 = vld [vmem:[#allocation26 + $0x160] sm:$0xff]
    %v8943 = vld [vmem:[#allocation26 + $0x168] sm:$0xff]
    %v8944 = vld [vmem:[#allocation26 + $0x170] sm:$0xff]
    %v8945 = vld [vmem:[#allocation26 + $0x178] sm:$0xff]
    %v8946 = vld [vmem:[#allocation26 + $0x180] sm:$0xff]
    %v8947 = vld [vmem:[#allocation26 + $0x188] sm:$0xff]
    %v8948 = vld [vmem:[#allocation26 + $0x190] sm:$0xff]
    %v8949 = vld [vmem:[#allocation26 + $0x198] sm:$0xff]
    %v8950 = vld [vmem:[#allocation26 + $0x1a0] sm:$0xff]
    %v8951 = vld [vmem:[#allocation26 + $0x1a8] sm:$0xff]
    %v8952 = vld [vmem:[#allocation26 + $0x1b0] sm:$0xff]
    %v8953 = vld [vmem:[#allocation26 + $0x1b8] sm:$0xff]
    %v8954 = vld [vmem:[#allocation26 + $0x1c0] sm:$0xff]
    %v8955 = vld [vmem:[#allocation26 + $0x1c8] sm:$0xff]
    %v8956 = vld [vmem:[#allocation26 + $0x1d0] sm:$0xff]
    %v8957 = vld [vmem:[#allocation26 + $0x1d8] sm:$0xff]
    %v8958 = vld [vmem:[#allocation26 + $0x1e0] sm:$0xff]
    %v8959 = vld [vmem:[#allocation26 + $0x1e8] sm:$0xff]
    %v8960 = vld [vmem:[#allocation26 + $0x1f0] sm:$0xff]
    %v8961 = vld [vmem:[#allocation26 + $0x1f8] sm:$0xff]
    %v8962 = vld [vmem:[#allocation26 + $0x200] sm:$0xff]
    %v8963 = vld [vmem:[#allocation26 + $0x208] sm:$0xff]
    %v8964 = vld [vmem:[#allocation26 + $0x210] sm:$0xff]
    %v8965 = vld [vmem:[#allocation26 + $0x218] sm:$0xff]
    %v8966 = vld [vmem:[#allocation26 + $0x220] sm:$0xff]
    %v8967 = vld [vmem:[#allocation26 + $0x228] sm:$0xff]
    %v8968 = vld [vmem:[#allocation26 + $0x230] sm:$0xff]
    %v8969 = vld [vmem:[#allocation26 + $0x238] sm:$0xff]
    %v8970 = vld [vmem:[#allocation26 + $0x240] sm:$0xff]
    %v8971 = vld [vmem:[#allocation26 + $0x248] sm:$0xff]
    %v8972 = vld [vmem:[#allocation26 + $0x250] sm:$0xff]
    %v8973 = vld [vmem:[#allocation26 + $0x258] sm:$0xff]
    %v8974 = vld [vmem:[#allocation26 + $0x260] sm:$0xff]
    %v8975 = vld [vmem:[#allocation26 + $0x268] sm:$0xff]
    %v8976 = vld [vmem:[#allocation26 + $0x270] sm:$0xff]
    %v8977 = vld [vmem:[#allocation26 + $0x278] sm:$0xff]
    %v8978 = vld [vmem:[#allocation26 + $0x280] sm:$0xff]
    %v8979 = vld [vmem:[#allocation26 + $0x288] sm:$0xff]
    %v8980 = vld [vmem:[#allocation26 + $0x290] sm:$0xff]
    %v8981 = vld [vmem:[#allocation26 + $0x298] sm:$0xff]
    %v8982 = vld [vmem:[#allocation26 + $0x2a0] sm:$0xff]
    %v8983 = vld [vmem:[#allocation26 + $0x2a8] sm:$0xff]
    %v8984 = vld [vmem:[#allocation26 + $0x2b0] sm:$0xff]
    %v8985 = vld [vmem:[#allocation26 + $0x2b8] sm:$0xff]
    %v8986 = vld [vmem:[#allocation26 + $0x2c0] sm:$0xff]
    %v8987 = vld [vmem:[#allocation26 + $0x2c8] sm:$0xff]
    %v8988 = vld [vmem:[#allocation26 + $0x2d0] sm:$0xff]
    %v8989 = vld [vmem:[#allocation26 + $0x2d8] sm:$0xff]
    %v8990 = vld [vmem:[#allocation26 + $0x2e0] sm:$0xff]
    %v8991 = vld [vmem:[#allocation26 + $0x2e8] sm:$0xff]
    %v8992 = vld [vmem:[#allocation26 + $0x2f0] sm:$0xff]
    %v8993 = vld [vmem:[#allocation26 + $0x2f8] sm:$0xff]
    %v8994 = vld [vmem:[#allocation26 + $0x300] sm:$0xff]
    %v8995 = vld [vmem:[#allocation26 + $0x308] sm:$0xff]
    %v8996 = vld [vmem:[#allocation26 + $0x310] sm:$0xff]
    %v8997 = vld [vmem:[#allocation26 + $0x318] sm:$0xff]
    %v8998 = vld [vmem:[#allocation26 + $0x320] sm:$0xff]
    %v8999 = vld [vmem:[#allocation26 + $0x328] sm:$0xff]
    %v9000 = vld [vmem:[#allocation26 + $0x330] sm:$0xff]
    %v9001 = vld [vmem:[#allocation26 + $0x338] sm:$0xff]
    %v9002 = vld [vmem:[#allocation26 + $0x340] sm:$0xff]
    %v9003 = vld [vmem:[#allocation26 + $0x348] sm:$0xff]
    %v9004 = vld [vmem:[#allocation26 + $0x350] sm:$0xff]
    %v9005 = vld [vmem:[#allocation26 + $0x358] sm:$0xff]
    %v9006 = vld [vmem:[#allocation26 + $0x360] sm:$0xff]
    %v9007 = vld [vmem:[#allocation26 + $0x368] sm:$0xff]
    %v9008 = vld [vmem:[#allocation26 + $0x370] sm:$0xff]
    %v9009 = vld [vmem:[#allocation26 + $0x378] sm:$0xff]
    %v9010 = vld [vmem:[#allocation26 + $0x380] sm:$0xff]
    %v9011 = vld [vmem:[#allocation26 + $0x388] sm:$0xff]
    %v9012 = vld [vmem:[#allocation26 + $0x390] sm:$0xff]
    %v9013 = vld [vmem:[#allocation26 + $0x398] sm:$0xff]
    %v9014 = vld [vmem:[#allocation26 + $0x3a0] sm:$0xff]
    %v9015 = vld [vmem:[#allocation26 + $0x3a8] sm:$0xff]
    %v9016 = vld [vmem:[#allocation26 + $0x3b0] sm:$0xff]
    %v9017 = vld [vmem:[#allocation26 + $0x3b8] sm:$0xff]
    %v9018 = vld [vmem:[#allocation26 + $0x3c0] sm:$0xff]
    %v9019 = vld [vmem:[#allocation26 + $0x3c8] sm:$0xff]
    %v9020 = vld [vmem:[#allocation26 + $0x3d0] sm:$0xff]
    %v9021 = vld [vmem:[#allocation26 + $0x3d8] sm:$0xff]
    %v9022 = vld [vmem:[#allocation26 + $0x3e0] sm:$0xff]
    %v9023 = vld [vmem:[#allocation26 + $0x3e8] sm:$0xff]
    %v9024 = vld [vmem:[#allocation26 + $0x3f0] sm:$0xff]
    %v9025 = vld [vmem:[#allocation26 + $0x3f8] sm:$0xff]
    %v9026 = vpack.c.bf16 %v8890, %v8882
    %v9027 = vpack.c.bf16 %v8891, %v8883
    %v9028 = vpack.c.bf16 %v8892, %v8884
    %v9029 = vpack.c.bf16 %v8893, %v8885
    %v9030 = vld [vmem:[#allocation28] sm:$0xf]
    %v9032 = vperm.slane %v9030, 0
    %v9033 = vperm.slane %v9030, 1
    %v9034 = vperm.slane %v9030, 2
    %v9035 = vperm.slane %v9030, 3
    %v9168 = vunpack.c.l.b16 %v8898
    %v9169 = vunpack.c.h.b16 %v8898
    %v9170 = vunpack.c.l.b16 %v8899
    %v9171 = vunpack.c.h.b16 %v8899
    %v9172 = vunpack.c.l.b16 %v8900
    %v9173 = vunpack.c.h.b16 %v8900
    %v9174 = vunpack.c.l.b16 %v8901
    %v9175 = vunpack.c.h.b16 %v8901
    %v9176 = vunpack.c.l.b16 %v8902
    %v9177 = vunpack.c.h.b16 %v8902
    %v9178 = vunpack.c.l.b16 %v8903
    %v9179 = vunpack.c.h.b16 %v8903
    %v9180 = vunpack.c.l.b16 %v8904
    %v9181 = vunpack.c.h.b16 %v8904
    %v9182 = vunpack.c.l.b16 %v8905
    %v9183 = vunpack.c.h.b16 %v8905
    %v9184 = vunpack.c.l.b16 %v8906
    %v9185 = vunpack.c.h.b16 %v8906
    %v9186 = vunpack.c.l.b16 %v8907
    %v9187 = vunpack.c.h.b16 %v8907
    %v9188 = vunpack.c.l.b16 %v8908
    %v9189 = vunpack.c.h.b16 %v8908
    %v9190 = vunpack.c.l.b16 %v8909
    %v9191 = vunpack.c.h.b16 %v8909
    %v9192 = vunpack.c.l.b16 %v8910
    %v9193 = vunpack.c.h.b16 %v8910
    %v9194 = vunpack.c.l.b16 %v8911
    %v9195 = vunpack.c.h.b16 %v8911
    %v9196 = vunpack.c.l.b16 %v8912
    %v9197 = vunpack.c.h.b16 %v8912
    %v9198 = vunpack.c.l.b16 %v8913
    %v9199 = vunpack.c.h.b16 %v8913
    %v9200 = vunpack.c.l.b16 %v8914
    %v9201 = vunpack.c.h.b16 %v8914
    %v9202 = vunpack.c.l.b16 %v8915
    %v9203 = vunpack.c.h.b16 %v8915
    %v9204 = vunpack.c.l.b16 %v8916
    %v9205 = vunpack.c.h.b16 %v8916
    %v9206 = vunpack.c.l.b16 %v8917
    %v9207 = vunpack.c.h.b16 %v8917
    %v9208 = vunpack.c.l.b16 %v8918
    %v9209 = vunpack.c.h.b16 %v8918
    %v9210 = vunpack.c.l.b16 %v8919
    %v9211 = vunpack.c.h.b16 %v8919
    %v9212 = vunpack.c.l.b16 %v8920
    %v9213 = vunpack.c.h.b16 %v8920
    %v9214 = vunpack.c.l.b16 %v8921
    %v9215 = vunpack.c.h.b16 %v8921
    %v9216 = vunpack.c.l.b16 %v8922
    %v9217 = vunpack.c.h.b16 %v8922
    %v9218 = vunpack.c.l.b16 %v8923
    %v9219 = vunpack.c.h.b16 %v8923
    %v9220 = vunpack.c.l.b16 %v8924
    %v9221 = vunpack.c.h.b16 %v8924
    %v9222 = vunpack.c.l.b16 %v8925
    %v9223 = vunpack.c.h.b16 %v8925
    %v9224 = vunpack.c.l.b16 %v8926
    %v9225 = vunpack.c.h.b16 %v8926
    %v9226 = vunpack.c.l.b16 %v8927
    %v9227 = vunpack.c.h.b16 %v8927
    %v9228 = vunpack.c.l.b16 %v8928
    %v9229 = vunpack.c.h.b16 %v8928
    %v9230 = vunpack.c.l.b16 %v8929
    %v9231 = vunpack.c.h.b16 %v8929
    %v9232 = vunpack.c.l.b16 %v8930
    %v9233 = vunpack.c.h.b16 %v8930
    %v9234 = vunpack.c.l.b16 %v8931
    %v9235 = vunpack.c.h.b16 %v8931
    %v9236 = vunpack.c.l.b16 %v8932
    %v9237 = vunpack.c.h.b16 %v8932
    %v9238 = vunpack.c.l.b16 %v8933
    %v9239 = vunpack.c.h.b16 %v8933
    %v9240 = vunpack.c.l.b16 %v8934
    %v9241 = vunpack.c.h.b16 %v8934
    %v9242 = vunpack.c.l.b16 %v8935
    %v9243 = vunpack.c.h.b16 %v8935
    %v9244 = vunpack.c.l.b16 %v8936
    %v9245 = vunpack.c.h.b16 %v8936
    %v9246 = vunpack.c.l.b16 %v8937
    %v9247 = vunpack.c.h.b16 %v8937
    %v9248 = vunpack.c.l.b16 %v8938
    %v9249 = vunpack.c.h.b16 %v8938
    %v9250 = vunpack.c.l.b16 %v8939
    %v9251 = vunpack.c.h.b16 %v8939
    %v9252 = vunpack.c.l.b16 %v8940
    %v9253 = vunpack.c.h.b16 %v8940
    %v9254 = vunpack.c.l.b16 %v8941
    %v9255 = vunpack.c.h.b16 %v8941
    %v9256 = vunpack.c.l.b16 %v8942
    %v9257 = vunpack.c.h.b16 %v8942
    %v9258 = vunpack.c.l.b16 %v8943
    %v9259 = vunpack.c.h.b16 %v8943
    %v9260 = vunpack.c.l.b16 %v8944
    %v9261 = vunpack.c.h.b16 %v8944
    %v9262 = vunpack.c.l.b16 %v8945
    %v9263 = vunpack.c.h.b16 %v8945
    %v9264 = vunpack.c.l.b16 %v8946
    %v9265 = vunpack.c.h.b16 %v8946
    %v9266 = vunpack.c.l.b16 %v8947
    %v9267 = vunpack.c.h.b16 %v8947
    %v9268 = vunpack.c.l.b16 %v8948
    %v9269 = vunpack.c.h.b16 %v8948
    %v9270 = vunpack.c.l.b16 %v8949
    %v9271 = vunpack.c.h.b16 %v8949
    %v9272 = vunpack.c.l.b16 %v8950
    %v9273 = vunpack.c.h.b16 %v8950
    %v9274 = vunpack.c.l.b16 %v8951
    %v9275 = vunpack.c.h.b16 %v8951
    %v9276 = vunpack.c.l.b16 %v8952
    %v9277 = vunpack.c.h.b16 %v8952
    %v9278 = vunpack.c.l.b16 %v8953
    %v9279 = vunpack.c.h.b16 %v8953
    %v9280 = vunpack.c.l.b16 %v8954
    %v9281 = vunpack.c.h.b16 %v8954
    %v9282 = vunpack.c.l.b16 %v8955
    %v9283 = vunpack.c.h.b16 %v8955
    %v9284 = vunpack.c.l.b16 %v8956
    %v9285 = vunpack.c.h.b16 %v8956
    %v9286 = vunpack.c.l.b16 %v8957
    %v9287 = vunpack.c.h.b16 %v8957
    %v9288 = vunpack.c.l.b16 %v8958
    %v9289 = vunpack.c.h.b16 %v8958
    %v9290 = vunpack.c.l.b16 %v8959
    %v9291 = vunpack.c.h.b16 %v8959
    %v9292 = vunpack.c.l.b16 %v8960
    %v9293 = vunpack.c.h.b16 %v8960
    %v9294 = vunpack.c.l.b16 %v8961
    %v9295 = vunpack.c.h.b16 %v8961
    %v9296 = vunpack.c.l.b16 %v8962
    %v9297 = vunpack.c.h.b16 %v8962
    %v9298 = vunpack.c.l.b16 %v8963
    %v9299 = vunpack.c.h.b16 %v8963
    %v9300 = vunpack.c.l.b16 %v8964
    %v9301 = vunpack.c.h.b16 %v8964
    %v9302 = vunpack.c.l.b16 %v8965
    %v9303 = vunpack.c.h.b16 %v8965
    %v9304 = vunpack.c.l.b16 %v8966
    %v9305 = vunpack.c.h.b16 %v8966
    %v9306 = vunpack.c.l.b16 %v8967
    %v9307 = vunpack.c.h.b16 %v8967
    %v9308 = vunpack.c.l.b16 %v8968
    %v9309 = vunpack.c.h.b16 %v8968
    %v9310 = vunpack.c.l.b16 %v8969
    %v9311 = vunpack.c.h.b16 %v8969
    %v9312 = vunpack.c.l.b16 %v8970
    %v9313 = vunpack.c.h.b16 %v8970
    %v9314 = vunpack.c.l.b16 %v8971
    %v9315 = vunpack.c.h.b16 %v8971
    %v9316 = vunpack.c.l.b16 %v8972
    %v9317 = vunpack.c.h.b16 %v8972
    %v9318 = vunpack.c.l.b16 %v8973
    %v9319 = vunpack.c.h.b16 %v8973
    %v9320 = vunpack.c.l.b16 %v8974
    %v9321 = vunpack.c.h.b16 %v8974
    %v9322 = vunpack.c.l.b16 %v8975
    %v9323 = vunpack.c.h.b16 %v8975
    %v9324 = vunpack.c.l.b16 %v8976
    %v9325 = vunpack.c.h.b16 %v8976
    %v9326 = vunpack.c.l.b16 %v8977
    %v9327 = vunpack.c.h.b16 %v8977
    %v9328 = vunpack.c.l.b16 %v8978
    %v9329 = vunpack.c.h.b16 %v8978
    %v9330 = vunpack.c.l.b16 %v8979
    %v9331 = vunpack.c.h.b16 %v8979
    %v9332 = vunpack.c.l.b16 %v8980
    %v9333 = vunpack.c.h.b16 %v8980
    %v9334 = vunpack.c.l.b16 %v8981
    %v9335 = vunpack.c.h.b16 %v8981
    %v9336 = vunpack.c.l.b16 %v8982
    %v9337 = vunpack.c.h.b16 %v8982
    %v9338 = vunpack.c.l.b16 %v8983
    %v9339 = vunpack.c.h.b16 %v8983
    %v9340 = vunpack.c.l.b16 %v8984
    %v9341 = vunpack.c.h.b16 %v8984
    %v9342 = vunpack.c.l.b16 %v8985
    %v9343 = vunpack.c.h.b16 %v8985
    %v9344 = vunpack.c.l.b16 %v8986
    %v9345 = vunpack.c.h.b16 %v8986
    %v9346 = vunpack.c.l.b16 %v8987
    %v9347 = vunpack.c.h.b16 %v8987
    %v9348 = vunpack.c.l.b16 %v8988
    %v9349 = vunpack.c.h.b16 %v8988
    %v9350 = vunpack.c.l.b16 %v8989
    %v9351 = vunpack.c.h.b16 %v8989
    %v9352 = vunpack.c.l.b16 %v8990
    %v9353 = vunpack.c.h.b16 %v8990
    %v9354 = vunpack.c.l.b16 %v8991
    %v9355 = vunpack.c.h.b16 %v8991
    %v9356 = vunpack.c.l.b16 %v8992
    %v9357 = vunpack.c.h.b16 %v8992
    %v9358 = vunpack.c.l.b16 %v8993
    %v9359 = vunpack.c.h.b16 %v8993
    %v9360 = vunpack.c.l.b16 %v8994
    %v9361 = vunpack.c.h.b16 %v8994
    %v9362 = vunpack.c.l.b16 %v8995
    %v9363 = vunpack.c.h.b16 %v8995
    %v9364 = vunpack.c.l.b16 %v8996
    %v9365 = vunpack.c.h.b16 %v8996
    %v9366 = vunpack.c.l.b16 %v8997
    %v9367 = vunpack.c.h.b16 %v8997
    %v9368 = vunpack.c.l.b16 %v8998
    %v9369 = vunpack.c.h.b16 %v8998
    %v9370 = vunpack.c.l.b16 %v8999
    %v9371 = vunpack.c.h.b16 %v8999
    %v9372 = vunpack.c.l.b16 %v9000
    %v9373 = vunpack.c.h.b16 %v9000
    %v9374 = vunpack.c.l.b16 %v9001
    %v9375 = vunpack.c.h.b16 %v9001
    %v9376 = vunpack.c.l.b16 %v9002
    %v9377 = vunpack.c.h.b16 %v9002
    %v9378 = vunpack.c.l.b16 %v9003
    %v9379 = vunpack.c.h.b16 %v9003
    %v9380 = vunpack.c.l.b16 %v9004
    %v9381 = vunpack.c.h.b16 %v9004
    %v9382 = vunpack.c.l.b16 %v9005
    %v9383 = vunpack.c.h.b16 %v9005
    %v9384 = vunpack.c.l.b16 %v9006
    %v9385 = vunpack.c.h.b16 %v9006
    %v9386 = vunpack.c.l.b16 %v9007
    %v9387 = vunpack.c.h.b16 %v9007
    %v9388 = vunpack.c.l.b16 %v9008
    %v9389 = vunpack.c.h.b16 %v9008
    %v9390 = vunpack.c.l.b16 %v9009
    %v9391 = vunpack.c.h.b16 %v9009
    %v9392 = vunpack.c.l.b16 %v9010
    %v9393 = vunpack.c.h.b16 %v9010
    %v9394 = vunpack.c.l.b16 %v9011
    %v9395 = vunpack.c.h.b16 %v9011
    %v9396 = vunpack.c.l.b16 %v9012
    %v9397 = vunpack.c.h.b16 %v9012
    %v9398 = vunpack.c.l.b16 %v9013
    %v9399 = vunpack.c.h.b16 %v9013
    %v9400 = vunpack.c.l.b16 %v9014
    %v9401 = vunpack.c.h.b16 %v9014
    %v9402 = vunpack.c.l.b16 %v9015
    %v9403 = vunpack.c.h.b16 %v9015
    %v9404 = vunpack.c.l.b16 %v9016
    %v9405 = vunpack.c.h.b16 %v9016
    %v9406 = vunpack.c.l.b16 %v9017
    %v9407 = vunpack.c.h.b16 %v9017
    %v9408 = vunpack.c.l.b16 %v9018
    %v9409 = vunpack.c.h.b16 %v9018
    %v9410 = vunpack.c.l.b16 %v9019
    %v9411 = vunpack.c.h.b16 %v9019
    %v9412 = vunpack.c.l.b16 %v9020
    %v9413 = vunpack.c.h.b16 %v9020
    %v9414 = vunpack.c.l.b16 %v9021
    %v9415 = vunpack.c.h.b16 %v9021
    %v9416 = vunpack.c.l.b16 %v9022
    %v9417 = vunpack.c.h.b16 %v9022
    %v9418 = vunpack.c.l.b16 %v9023
    %v9419 = vunpack.c.h.b16 %v9023
    %v9420 = vunpack.c.l.b16 %v9024
    %v9421 = vunpack.c.h.b16 %v9024
    %v9422 = vunpack.c.l.b16 %v9025
    %v9423 = vunpack.c.h.b16 %v9025
    %v9424 = vpack.c.b16 %v9172, %v9168
    %v9425 = vpack.c.b16 %v9173, %v9169
    %v9426 = vpack.c.b16 %v9174, %v9170
    %v9427 = vpack.c.b16 %v9175, %v9171
    %v9428 = vpack.c.b16 %v9180, %v9176
    %v9429 = vpack.c.b16 %v9181, %v9177
    %v9430 = vpack.c.b16 %v9182, %v9178
    %v9431 = vpack.c.b16 %v9183, %v9179
    %v9432 = vpack.c.b16 %v9188, %v9184
    %v9433 = vpack.c.b16 %v9189, %v9185
    %v9434 = vpack.c.b16 %v9190, %v9186
    %v9435 = vpack.c.b16 %v9191, %v9187
    %v9436 = vpack.c.b16 %v9196, %v9192
    %v9437 = vpack.c.b16 %v9197, %v9193
    %v9438 = vpack.c.b16 %v9198, %v9194
    %v9439 = vpack.c.b16 %v9199, %v9195
    %v9440 = vpack.c.b16 %v9204, %v9200
    %v9441 = vpack.c.b16 %v9205, %v9201
    %v9442 = vpack.c.b16 %v9206, %v9202
    %v9443 = vpack.c.b16 %v9207, %v9203
    %v9444 = vpack.c.b16 %v9212, %v9208
    %v9445 = vpack.c.b16 %v9213, %v9209
    %v9446 = vpack.c.b16 %v9214, %v9210
    %v9447 = vpack.c.b16 %v9215, %v9211
    %v9448 = vpack.c.b16 %v9220, %v9216
    %v9449 = vpack.c.b16 %v9221, %v9217
    %v9450 = vpack.c.b16 %v9222, %v9218
    %v9451 = vpack.c.b16 %v9223, %v9219
    %v9452 = vpack.c.b16 %v9228, %v9224
    %v9453 = vpack.c.b16 %v9229, %v9225
    %v9454 = vpack.c.b16 %v9230, %v9226
    %v9455 = vpack.c.b16 %v9231, %v9227
    %v9456 = vpack.c.b16 %v9236, %v9232
    %v9457 = vpack.c.b16 %v9237, %v9233
    %v9458 = vpack.c.b16 %v9238, %v9234
    %v9459 = vpack.c.b16 %v9239, %v9235
    %v9460 = vpack.c.b16 %v9244, %v9240
    %v9461 = vpack.c.b16 %v9245, %v9241
    %v9462 = vpack.c.b16 %v9246, %v9242
    %v9463 = vpack.c.b16 %v9247, %v9243
    %v9464 = vpack.c.b16 %v9252, %v9248
    %v9465 = vpack.c.b16 %v9253, %v9249
    %v9466 = vpack.c.b16 %v9254, %v9250
    %v9467 = vpack.c.b16 %v9255, %v9251
    %v9468 = vpack.c.b16 %v9260, %v9256
    %v9469 = vpack.c.b16 %v9261, %v9257
    %v9470 = vpack.c.b16 %v9262, %v9258
    %v9471 = vpack.c.b16 %v9263, %v9259
    %v9472 = vpack.c.b16 %v9268, %v9264
    %v9473 = vpack.c.b16 %v9269, %v9265
    %v9474 = vpack.c.b16 %v9270, %v9266
    %v9475 = vpack.c.b16 %v9271, %v9267
    %v9476 = vpack.c.b16 %v9276, %v9272
    %v9477 = vpack.c.b16 %v9277, %v9273
    %v9478 = vpack.c.b16 %v9278, %v9274
    %v9479 = vpack.c.b16 %v9279, %v9275
    %v9480 = vpack.c.b16 %v9284, %v9280
    %v9481 = vpack.c.b16 %v9285, %v9281
    %v9482 = vpack.c.b16 %v9286, %v9282
    %v9483 = vpack.c.b16 %v9287, %v9283
    %v9484 = vpack.c.b16 %v9292, %v9288
    %v9485 = vpack.c.b16 %v9293, %v9289
    %v9486 = vpack.c.b16 %v9294, %v9290
    %v9487 = vpack.c.b16 %v9295, %v9291
    %v9488 = vpack.c.b16 %v9300, %v9296
    %v9489 = vpack.c.b16 %v9301, %v9297
    %v9490 = vpack.c.b16 %v9302, %v9298
    %v9491 = vpack.c.b16 %v9303, %v9299
    %v9492 = vpack.c.b16 %v9308, %v9304
    %v9493 = vpack.c.b16 %v9309, %v9305
    %v9494 = vpack.c.b16 %v9310, %v9306
    %v9495 = vpack.c.b16 %v9311, %v9307
    %v9496 = vpack.c.b16 %v9316, %v9312
    %v9497 = vpack.c.b16 %v9317, %v9313
    %v9498 = vpack.c.b16 %v9318, %v9314
    %v9499 = vpack.c.b16 %v9319, %v9315
    %v9500 = vpack.c.b16 %v9324, %v9320
    %v9501 = vpack.c.b16 %v9325, %v9321
    %v9502 = vpack.c.b16 %v9326, %v9322
    %v9503 = vpack.c.b16 %v9327, %v9323
    %v9504 = vpack.c.b16 %v9332, %v9328
    %v9505 = vpack.c.b16 %v9333, %v9329
    %v9506 = vpack.c.b16 %v9334, %v9330
    %v9507 = vpack.c.b16 %v9335, %v9331
    %v9508 = vpack.c.b16 %v9340, %v9336
    %v9509 = vpack.c.b16 %v9341, %v9337
    %v9510 = vpack.c.b16 %v9342, %v9338
    %v9511 = vpack.c.b16 %v9343, %v9339
    %v9512 = vpack.c.b16 %v9348, %v9344
    %v9513 = vpack.c.b16 %v9349, %v9345
    %v9514 = vpack.c.b16 %v9350, %v9346
    %v9515 = vpack.c.b16 %v9351, %v9347
    %v9516 = vpack.c.b16 %v9356, %v9352
    %v9517 = vpack.c.b16 %v9357, %v9353
    %v9518 = vpack.c.b16 %v9358, %v9354
    %v9519 = vpack.c.b16 %v9359, %v9355
    %v9520 = vpack.c.b16 %v9364, %v9360
    %v9521 = vpack.c.b16 %v9365, %v9361
    %v9522 = vpack.c.b16 %v9366, %v9362
    %v9523 = vpack.c.b16 %v9367, %v9363
    %v9524 = vpack.c.b16 %v9372, %v9368
    %v9525 = vpack.c.b16 %v9373, %v9369
    %v9526 = vpack.c.b16 %v9374, %v9370
    %v9527 = vpack.c.b16 %v9375, %v9371
    %v9528 = vpack.c.b16 %v9380, %v9376
    %v9529 = vpack.c.b16 %v9381, %v9377
    %v9530 = vpack.c.b16 %v9382, %v9378
    %v9531 = vpack.c.b16 %v9383, %v9379
    %v9532 = vpack.c.b16 %v9388, %v9384
    %v9533 = vpack.c.b16 %v9389, %v9385
    %v9534 = vpack.c.b16 %v9390, %v9386
    %v9535 = vpack.c.b16 %v9391, %v9387
    %v9536 = vpack.c.b16 %v9396, %v9392
    %v9537 = vpack.c.b16 %v9397, %v9393
    %v9538 = vpack.c.b16 %v9398, %v9394
    %v9539 = vpack.c.b16 %v9399, %v9395
    %v9540 = vpack.c.b16 %v9404, %v9400
    %v9541 = vpack.c.b16 %v9405, %v9401
    %v9542 = vpack.c.b16 %v9406, %v9402
    %v9543 = vpack.c.b16 %v9407, %v9403
    %v9544 = vpack.c.b16 %v9412, %v9408
    %v9545 = vpack.c.b16 %v9413, %v9409
    %v9546 = vpack.c.b16 %v9414, %v9410
    %v9547 = vpack.c.b16 %v9415, %v9411
    %v9548 = vpack.c.b16 %v9420, %v9416
    %v9549 = vpack.c.b16 %v9421, %v9417
    %v9550 = vpack.c.b16 %v9422, %v9418
    %v9551 = vpack.c.b16 %v9423, %v9419
    %9680 = vmatpush.bf16.msra.mxu0 %v9452
    %9681 = vmatpush.bf16.msra.mxu0 %v9448
    %9682 = vmatpush.bf16.msra.mxu0 %v9444
    %9683 = vmatpush.bf16.msra.mxu0 %v9440
    %9684 = vmatpush.bf16.msra.mxu0 %v9436
    %9685 = vmatpush.bf16.msra.mxu0 %v9432
    %9686 = vmatpush.bf16.msra.mxu0 %v9428
    %9687 = vmatpush.bf16.msra.mxu0 %v9424
    %9688 = vmatmul.bf16.gmra.mxu0 %v9026
    %v9689 = vpop.f32.mrf.mxu0
    %v9690 = vadd.f32 %v9032, %v9689
    %v9691 = vpop.f32.mrf.mxu0
    %v9692 = vadd.f32 %v9032, %v9691
    %9693 = vdwg.mxu0
    %9694 = vmatpush.bf16.msra.mxu0 %v9484
    %9695 = vmatpush.bf16.msra.mxu0 %v9480
    %9696 = vmatpush.bf16.msra.mxu0 %v9476
    %9697 = vmatpush.bf16.msra.mxu0 %v9472
    %9698 = vmatpush.bf16.msra.mxu0 %v9468
    %9699 = vmatpush.bf16.msra.mxu0 %v9464
    %9700 = vmatpush.bf16.msra.mxu0 %v9460
    %9701 = vmatpush.bf16.msra.mxu0 %v9456
    %9702 = vmatmul.bf16.gmra.mxu0 %v9027
    %v9703 = vpop.f32.mrf.mxu0
    %v9704 = vadd.f32 %v9690, %v9703
    %v9705 = vpop.f32.mrf.mxu0
    %v9706 = vadd.f32 %v9692, %v9705
    %9707 = vdwg.mxu0
    %9708 = vmatpush.bf16.msra.mxu0 %v9516
    %9709 = vmatpush.bf16.msra.mxu0 %v9512
    %9710 = vmatpush.bf16.msra.mxu0 %v9508
    %9711 = vmatpush.bf16.msra.mxu0 %v9504
    %9712 = vmatpush.bf16.msra.mxu0 %v9500
    %9713 = vmatpush.bf16.msra.mxu0 %v9496
    %9714 = vmatpush.bf16.msra.mxu0 %v9492
    %9715 = vmatpush.bf16.msra.mxu0 %v9488
    %9716 = vmatmul.bf16.gmra.mxu0 %v9028
    %v9717 = vpop.f32.mrf.mxu0
    %v9718 = vadd.f32 %v9704, %v9717
    %v9719 = vpop.f32.mrf.mxu0
    %v9720 = vadd.f32 %v9706, %v9719
    %9721 = vdwg.mxu0
    %9722 = vmatpush.bf16.msra.mxu0 %v9548
    %9723 = vmatpush.bf16.msra.mxu0 %v9544
    %9724 = vmatpush.bf16.msra.mxu0 %v9540
    %9725 = vmatpush.bf16.msra.mxu0 %v9536
    %9726 = vmatpush.bf16.msra.mxu0 %v9532
    %9727 = vmatpush.bf16.msra.mxu0 %v9528
    %9728 = vmatpush.bf16.msra.mxu0 %v9524
    %9729 = vmatpush.bf16.msra.mxu0 %v9520
    %9730 = vmatmul.bf16.gmra.mxu0 %v9029
    %v9731 = vpop.f32.mrf.mxu0
    %v9732 = vadd.f32 %v9718, %v9731
    %v9733 = vpop.f32.mrf.mxu0
    %v9734 = vadd.f32 %v9720, %v9733
    %9735 = vdwg.mxu0
    %9736 = vmatpush.bf16.msra.mxu0 %v9453
    %9737 = vmatpush.bf16.msra.mxu0 %v9449
    %9738 = vmatpush.bf16.msra.mxu0 %v9445
    %9739 = vmatpush.bf16.msra.mxu0 %v9441
    %9740 = vmatpush.bf16.msra.mxu0 %v9437
    %9741 = vmatpush.bf16.msra.mxu0 %v9433
    %9742 = vmatpush.bf16.msra.mxu0 %v9429
    %9743 = vmatpush.bf16.msra.mxu0 %v9425
    %9744 = vmatmul.bf16.gmra.mxu0 %v9026
    %v9745 = vpop.f32.mrf.mxu0
    %v9746 = vadd.f32 %v9033, %v9745
    %v9747 = vpop.f32.mrf.mxu0
    %v9748 = vadd.f32 %v9033, %v9747
    %9749 = vdwg.mxu0
    %9750 = vmatpush.bf16.msra.mxu0 %v9485
    %9751 = vmatpush.bf16.msra.mxu0 %v9481
    %9752 = vmatpush.bf16.msra.mxu0 %v9477
    %9753 = vmatpush.bf16.msra.mxu0 %v9473
    %9754 = vmatpush.bf16.msra.mxu0 %v9469
    %9755 = vmatpush.bf16.msra.mxu0 %v9465
    %9756 = vmatpush.bf16.msra.mxu0 %v9461
    %9757 = vmatpush.bf16.msra.mxu0 %v9457
    %9758 = vmatmul.bf16.gmra.mxu0 %v9027
    %v9759 = vpop.f32.mrf.mxu0
    %v9760 = vadd.f32 %v9746, %v9759
    %v9761 = vpop.f32.mrf.mxu0
    %v9762 = vadd.f32 %v9748, %v9761
    %9763 = vdwg.mxu0
    %9764 = vmatpush.bf16.msra.mxu0 %v9517
    %9765 = vmatpush.bf16.msra.mxu0 %v9513
    %9766 = vmatpush.bf16.msra.mxu0 %v9509
    %9767 = vmatpush.bf16.msra.mxu0 %v9505
    %9768 = vmatpush.bf16.msra.mxu0 %v9501
    %9769 = vmatpush.bf16.msra.mxu0 %v9497
    %9770 = vmatpush.bf16.msra.mxu0 %v9493
    %9771 = vmatpush.bf16.msra.mxu0 %v9489
    %9772 = vmatmul.bf16.gmra.mxu0 %v9028
    %v9773 = vpop.f32.mrf.mxu0
    %v9774 = vadd.f32 %v9760, %v9773
    %v9775 = vpop.f32.mrf.mxu0
    %v9776 = vadd.f32 %v9762, %v9775
    %9777 = vdwg.mxu0
    %9778 = vmatpush.bf16.msra.mxu0 %v9549
    %9779 = vmatpush.bf16.msra.mxu0 %v9545
    %9780 = vmatpush.bf16.msra.mxu0 %v9541
    %9781 = vmatpush.bf16.msra.mxu0 %v9537
    %9782 = vmatpush.bf16.msra.mxu0 %v9533
    %9783 = vmatpush.bf16.msra.mxu0 %v9529
    %9784 = vmatpush.bf16.msra.mxu0 %v9525
    %9785 = vmatpush.bf16.msra.mxu0 %v9521
    %9786 = vmatmul.bf16.gmra.mxu0 %v9029
    %v9787 = vpop.f32.mrf.mxu0
    %v9788 = vadd.f32 %v9774, %v9787
    %v9789 = vpop.f32.mrf.mxu0
    %v9790 = vadd.f32 %v9776, %v9789
    %9791 = vdwg.mxu0
    %9792 = vmatpush.bf16.msra.mxu0 %v9454
    %9793 = vmatpush.bf16.msra.mxu0 %v9450
    %9794 = vmatpush.bf16.msra.mxu0 %v9446
    %9795 = vmatpush.bf16.msra.mxu0 %v9442
    %9796 = vmatpush.bf16.msra.mxu0 %v9438
    %9797 = vmatpush.bf16.msra.mxu0 %v9434
    %9798 = vmatpush.bf16.msra.mxu0 %v9430
    %9799 = vmatpush.bf16.msra.mxu0 %v9426
    %9800 = vmatmul.bf16.gmra.mxu0 %v9026
    %v9801 = vpop.f32.mrf.mxu0
    %v9802 = vadd.f32 %v9034, %v9801
    %v9803 = vpop.f32.mrf.mxu0
    %v9804 = vadd.f32 %v9034, %v9803
    %9805 = vdwg.mxu0
    %9806 = vmatpush.bf16.msra.mxu0 %v9486
    %9807 = vmatpush.bf16.msra.mxu0 %v9482
    %9808 = vmatpush.bf16.msra.mxu0 %v9478
    %9809 = vmatpush.bf16.msra.mxu0 %v9474
    %9810 = vmatpush.bf16.msra.mxu0 %v9470
    %9811 = vmatpush.bf16.msra.mxu0 %v9466
    %9812 = vmatpush.bf16.msra.mxu0 %v9462
    %9813 = vmatpush.bf16.msra.mxu0 %v9458
    %9814 = vmatmul.bf16.gmra.mxu0 %v9027
    %v9815 = vpop.f32.mrf.mxu0
    %v9816 = vadd.f32 %v9802, %v9815
    %v9817 = vpop.f32.mrf.mxu0
    %v9818 = vadd.f32 %v9804, %v9817
    %9819 = vdwg.mxu0
    %9820 = vmatpush.bf16.msra.mxu0 %v9518
    %9821 = vmatpush.bf16.msra.mxu0 %v9514
    %9822 = vmatpush.bf16.msra.mxu0 %v9510
    %9823 = vmatpush.bf16.msra.mxu0 %v9506
    %9824 = vmatpush.bf16.msra.mxu0 %v9502
    %9825 = vmatpush.bf16.msra.mxu0 %v9498
    %9826 = vmatpush.bf16.msra.mxu0 %v9494
    %9827 = vmatpush.bf16.msra.mxu0 %v9490
    %9828 = vmatmul.bf16.gmra.mxu0 %v9028
    %v9829 = vpop.f32.mrf.mxu0
    %v9830 = vadd.f32 %v9816, %v9829
    %v9831 = vpop.f32.mrf.mxu0
    %v9832 = vadd.f32 %v9818, %v9831
    %9833 = vdwg.mxu0
    %9834 = vmatpush.bf16.msra.mxu0 %v9550
    %9835 = vmatpush.bf16.msra.mxu0 %v9546
    %9836 = vmatpush.bf16.msra.mxu0 %v9542
    %9837 = vmatpush.bf16.msra.mxu0 %v9538
    %9838 = vmatpush.bf16.msra.mxu0 %v9534
    %9839 = vmatpush.bf16.msra.mxu0 %v9530
    %9840 = vmatpush.bf16.msra.mxu0 %v9526
    %9841 = vmatpush.bf16.msra.mxu0 %v9522
    %9842 = vmatmul.bf16.gmra.mxu0 %v9029
    %v9843 = vpop.f32.mrf.mxu0
    %v9844 = vadd.f32 %v9830, %v9843
    %v9845 = vpop.f32.mrf.mxu0
    %v9846 = vadd.f32 %v9832, %v9845
    %9847 = vdwg.mxu0
    %9848 = vmatpush.bf16.msra.mxu0 %v9455
    %9849 = vmatpush.bf16.msra.mxu0 %v9451
    %9850 = vmatpush.bf16.msra.mxu0 %v9447
    %9851 = vmatpush.bf16.msra.mxu0 %v9443
    %9852 = vmatpush.bf16.msra.mxu0 %v9439
    %9853 = vmatpush.bf16.msra.mxu0 %v9435
    %9854 = vmatpush.bf16.msra.mxu0 %v9431
    %9855 = vmatpush.bf16.msra.mxu0 %v9427
    %9856 = vmatmul.bf16.gmra.mxu0 %v9026
    %v9857 = vpop.f32.mrf.mxu0
    %v9858 = vadd.f32 %v9035, %v9857
    %v9859 = vpop.f32.mrf.mxu0
    %v9860 = vadd.f32 %v9035, %v9859
    %9861 = vdwg.mxu0
    %9862 = vmatpush.bf16.msra.mxu0 %v9487
    %9863 = vmatpush.bf16.msra.mxu0 %v9483
    %9864 = vmatpush.bf16.msra.mxu0 %v9479
    %9865 = vmatpush.bf16.msra.mxu0 %v9475
    %9866 = vmatpush.bf16.msra.mxu0 %v9471
    %9867 = vmatpush.bf16.msra.mxu0 %v9467
    %9868 = vmatpush.bf16.msra.mxu0 %v9463
    %9869 = vmatpush.bf16.msra.mxu0 %v9459
    %9870 = vmatmul.bf16.gmra.mxu0 %v9027
    %v9871 = vpop.f32.mrf.mxu0
    %v9872 = vadd.f32 %v9858, %v9871
    %v9873 = vpop.f32.mrf.mxu0
    %v9874 = vadd.f32 %v9860, %v9873
    %9875 = vdwg.mxu0
    %9876 = vmatpush.bf16.msra.mxu0 %v9519
    %9877 = vmatpush.bf16.msra.mxu0 %v9515
    %9878 = vmatpush.bf16.msra.mxu0 %v9511
    %9879 = vmatpush.bf16.msra.mxu0 %v9507
    %9880 = vmatpush.bf16.msra.mxu0 %v9503
    %9881 = vmatpush.bf16.msra.mxu0 %v9499
    %9882 = vmatpush.bf16.msra.mxu0 %v9495
    %9883 = vmatpush.bf16.msra.mxu0 %v9491
    %9884 = vmatmul.bf16.gmra.mxu0 %v9028
    %v9885 = vpop.f32.mrf.mxu0
    %v9886 = vadd.f32 %v9872, %v9885
    %v9887 = vpop.f32.mrf.mxu0
    %v9888 = vadd.f32 %v9874, %v9887
    %9889 = vdwg.mxu0
    %9890 = vmatpush.bf16.msra.mxu0 %v9551
    %9891 = vmatpush.bf16.msra.mxu0 %v9547
    %9892 = vmatpush.bf16.msra.mxu0 %v9543
    %9893 = vmatpush.bf16.msra.mxu0 %v9539
    %9894 = vmatpush.bf16.msra.mxu0 %v9535
    %9895 = vmatpush.bf16.msra.mxu0 %v9531
    %9896 = vmatpush.bf16.msra.mxu0 %v9527
    %9897 = vmatpush.bf16.msra.mxu0 %v9523
    %9898 = vmatmul.bf16.gmra.mxu0 %v9029
    %v9899 = vpop.f32.mrf.mxu0
    %v9900 = vadd.f32 %v9886, %v9899
    %v9901 = vpop.f32.mrf.mxu0
    %v9902 = vadd.f32 %v9888, %v9901
    %9903 = vdwg.mxu0
    %v9904 = vmax.f32 %v9732, 0.0
    %v9905 = vmax.f32 %v9788, 0.0
    %v9906 = vmax.f32 %v9844, 0.0
    %v9907 = vmax.f32 %v9900, 0.0
    %v9908 = vmax.f32 %v9734, 0.0
    %v9909 = vmax.f32 %v9790, 0.0
    %v9910 = vmax.f32 %v9846, 0.0
    %v9911 = vmax.f32 %v9902, 0.0
    %v9912 = vld [vmem:[#allocation29] sm:$0xff]
    %v9913 = vld [vmem:[#allocation29 + $0x8] sm:$0xff]
    %v9914 = vld [vmem:[#allocation29 + $0x10] sm:$0xff]
    %v9915 = vld [vmem:[#allocation29 + $0x18] sm:$0xff]
    %v9916 = vld [vmem:[#allocation29 + $0x20] sm:$0xff]
    %v9917 = vld [vmem:[#allocation29 + $0x28] sm:$0xff]
    %v9918 = vld [vmem:[#allocation29 + $0x30] sm:$0xff]
    %v9919 = vld [vmem:[#allocation29 + $0x38] sm:$0xff]
    %v9920 = vld [vmem:[#allocation29 + $0x40] sm:$0xff]
    %v9921 = vld [vmem:[#allocation29 + $0x48] sm:$0xff]
    %v9922 = vld [vmem:[#allocation29 + $0x50] sm:$0xff]
    %v9923 = vld [vmem:[#allocation29 + $0x58] sm:$0xff]
    %v9924 = vld [vmem:[#allocation29 + $0x60] sm:$0xff]
    %v9925 = vld [vmem:[#allocation29 + $0x68] sm:$0xff]
    %v9926 = vld [vmem:[#allocation29 + $0x70] sm:$0xff]
    %v9927 = vld [vmem:[#allocation29 + $0x78] sm:$0xff]
    %v9928 = vld [vmem:[#allocation29 + $0x80] sm:$0xff]
    %v9929 = vld [vmem:[#allocation29 + $0x88] sm:$0xff]
    %v9930 = vld [vmem:[#allocation29 + $0x90] sm:$0xff]
    %v9931 = vld [vmem:[#allocation29 + $0x98] sm:$0xff]
    %v9932 = vld [vmem:[#allocation29 + $0xa0] sm:$0xff]
    %v9933 = vld [vmem:[#allocation29 + $0xa8] sm:$0xff]
    %v9934 = vld [vmem:[#allocation29 + $0xb0] sm:$0xff]
    %v9935 = vld [vmem:[#allocation29 + $0xb8] sm:$0xff]
    %v9936 = vld [vmem:[#allocation29 + $0xc0] sm:$0xff]
    %v9937 = vld [vmem:[#allocation29 + $0xc8] sm:$0xff]
    %v9938 = vld [vmem:[#allocation29 + $0xd0] sm:$0xff]
    %v9939 = vld [vmem:[#allocation29 + $0xd8] sm:$0xff]
    %v9940 = vld [vmem:[#allocation29 + $0xe0] sm:$0xff]
    %v9941 = vld [vmem:[#allocation29 + $0xe8] sm:$0xff]
    %v9942 = vld [vmem:[#allocation29 + $0xf0] sm:$0xff]
    %v9943 = vld [vmem:[#allocation29 + $0xf8] sm:$0xff]
    %v9944 = vld [vmem:[#allocation29 + $0x100] sm:$0xff]
    %v9945 = vld [vmem:[#allocation29 + $0x108] sm:$0xff]
    %v9946 = vld [vmem:[#allocation29 + $0x110] sm:$0xff]
    %v9947 = vld [vmem:[#allocation29 + $0x118] sm:$0xff]
    %v9948 = vld [vmem:[#allocation29 + $0x120] sm:$0xff]
    %v9949 = vld [vmem:[#allocation29 + $0x128] sm:$0xff]
    %v9950 = vld [vmem:[#allocation29 + $0x130] sm:$0xff]
    %v9951 = vld [vmem:[#allocation29 + $0x138] sm:$0xff]
    %v9952 = vld [vmem:[#allocation29 + $0x140] sm:$0xff]
    %v9953 = vld [vmem:[#allocation29 + $0x148] sm:$0xff]
    %v9954 = vld [vmem:[#allocation29 + $0x150] sm:$0xff]
    %v9955 = vld [vmem:[#allocation29 + $0x158] sm:$0xff]
    %v9956 = vld [vmem:[#allocation29 + $0x160] sm:$0xff]
    %v9957 = vld [vmem:[#allocation29 + $0x168] sm:$0xff]
    %v9958 = vld [vmem:[#allocation29 + $0x170] sm:$0xff]
    %v9959 = vld [vmem:[#allocation29 + $0x178] sm:$0xff]
    %v9960 = vld [vmem:[#allocation29 + $0x180] sm:$0xff]
    %v9961 = vld [vmem:[#allocation29 + $0x188] sm:$0xff]
    %v9962 = vld [vmem:[#allocation29 + $0x190] sm:$0xff]
    %v9963 = vld [vmem:[#allocation29 + $0x198] sm:$0xff]
    %v9964 = vld [vmem:[#allocation29 + $0x1a0] sm:$0xff]
    %v9965 = vld [vmem:[#allocation29 + $0x1a8] sm:$0xff]
    %v9966 = vld [vmem:[#allocation29 + $0x1b0] sm:$0xff]
    %v9967 = vld [vmem:[#allocation29 + $0x1b8] sm:$0xff]
    %v9968 = vld [vmem:[#allocation29 + $0x1c0] sm:$0xff]
    %v9969 = vld [vmem:[#allocation29 + $0x1c8] sm:$0xff]
    %v9970 = vld [vmem:[#allocation29 + $0x1d0] sm:$0xff]
    %v9971 = vld [vmem:[#allocation29 + $0x1d8] sm:$0xff]
    %v9972 = vld [vmem:[#allocation29 + $0x1e0] sm:$0xff]
    %v9973 = vld [vmem:[#allocation29 + $0x1e8] sm:$0xff]
    %v9974 = vld [vmem:[#allocation29 + $0x1f0] sm:$0xff]
    %v9975 = vld [vmem:[#allocation29 + $0x1f8] sm:$0xff]
    %v9976 = vld [vmem:[#allocation29 + $0x200] sm:$0xff]
    %v9977 = vld [vmem:[#allocation29 + $0x208] sm:$0xff]
    %v9978 = vld [vmem:[#allocation29 + $0x210] sm:$0xff]
    %v9979 = vld [vmem:[#allocation29 + $0x218] sm:$0xff]
    %v9980 = vld [vmem:[#allocation29 + $0x220] sm:$0xff]
    %v9981 = vld [vmem:[#allocation29 + $0x228] sm:$0xff]
    %v9982 = vld [vmem:[#allocation29 + $0x230] sm:$0xff]
    %v9983 = vld [vmem:[#allocation29 + $0x238] sm:$0xff]
    %v9984 = vld [vmem:[#allocation29 + $0x240] sm:$0xff]
    %v9985 = vld [vmem:[#allocation29 + $0x248] sm:$0xff]
    %v9986 = vld [vmem:[#allocation29 + $0x250] sm:$0xff]
    %v9987 = vld [vmem:[#allocation29 + $0x258] sm:$0xff]
    %v9988 = vld [vmem:[#allocation29 + $0x260] sm:$0xff]
    %v9989 = vld [vmem:[#allocation29 + $0x268] sm:$0xff]
    %v9990 = vld [vmem:[#allocation29 + $0x270] sm:$0xff]
    %v9991 = vld [vmem:[#allocation29 + $0x278] sm:$0xff]
    %v9992 = vld [vmem:[#allocation29 + $0x280] sm:$0xff]
    %v9993 = vld [vmem:[#allocation29 + $0x288] sm:$0xff]
    %v9994 = vld [vmem:[#allocation29 + $0x290] sm:$0xff]
    %v9995 = vld [vmem:[#allocation29 + $0x298] sm:$0xff]
    %v9996 = vld [vmem:[#allocation29 + $0x2a0] sm:$0xff]
    %v9997 = vld [vmem:[#allocation29 + $0x2a8] sm:$0xff]
    %v9998 = vld [vmem:[#allocation29 + $0x2b0] sm:$0xff]
    %v9999 = vld [vmem:[#allocation29 + $0x2b8] sm:$0xff]
    %v10000 = vld [vmem:[#allocation29 + $0x2c0] sm:$0xff]
    %v10001 = vld [vmem:[#allocation29 + $0x2c8] sm:$0xff]
    %v10002 = vld [vmem:[#allocation29 + $0x2d0] sm:$0xff]
    %v10003 = vld [vmem:[#allocation29 + $0x2d8] sm:$0xff]
    %v10004 = vld [vmem:[#allocation29 + $0x2e0] sm:$0xff]
    %v10005 = vld [vmem:[#allocation29 + $0x2e8] sm:$0xff]
    %v10006 = vld [vmem:[#allocation29 + $0x2f0] sm:$0xff]
    %v10007 = vld [vmem:[#allocation29 + $0x2f8] sm:$0xff]
    %v10008 = vld [vmem:[#allocation29 + $0x300] sm:$0xff]
    %v10009 = vld [vmem:[#allocation29 + $0x308] sm:$0xff]
    %v10010 = vld [vmem:[#allocation29 + $0x310] sm:$0xff]
    %v10011 = vld [vmem:[#allocation29 + $0x318] sm:$0xff]
    %v10012 = vld [vmem:[#allocation29 + $0x320] sm:$0xff]
    %v10013 = vld [vmem:[#allocation29 + $0x328] sm:$0xff]
    %v10014 = vld [vmem:[#allocation29 + $0x330] sm:$0xff]
    %v10015 = vld [vmem:[#allocation29 + $0x338] sm:$0xff]
    %v10016 = vld [vmem:[#allocation29 + $0x340] sm:$0xff]
    %v10017 = vld [vmem:[#allocation29 + $0x348] sm:$0xff]
    %v10018 = vld [vmem:[#allocation29 + $0x350] sm:$0xff]
    %v10019 = vld [vmem:[#allocation29 + $0x358] sm:$0xff]
    %v10020 = vld [vmem:[#allocation29 + $0x360] sm:$0xff]
    %v10021 = vld [vmem:[#allocation29 + $0x368] sm:$0xff]
    %v10022 = vld [vmem:[#allocation29 + $0x370] sm:$0xff]
    %v10023 = vld [vmem:[#allocation29 + $0x378] sm:$0xff]
    %v10024 = vld [vmem:[#allocation29 + $0x380] sm:$0xff]
    %v10025 = vld [vmem:[#allocation29 + $0x388] sm:$0xff]
    %v10026 = vld [vmem:[#allocation29 + $0x390] sm:$0xff]
    %v10027 = vld [vmem:[#allocation29 + $0x398] sm:$0xff]
    %v10028 = vld [vmem:[#allocation29 + $0x3a0] sm:$0xff]
    %v10029 = vld [vmem:[#allocation29 + $0x3a8] sm:$0xff]
    %v10030 = vld [vmem:[#allocation29 + $0x3b0] sm:$0xff]
    %v10031 = vld [vmem:[#allocation29 + $0x3b8] sm:$0xff]
    %v10032 = vld [vmem:[#allocation29 + $0x3c0] sm:$0xff]
    %v10033 = vld [vmem:[#allocation29 + $0x3c8] sm:$0xff]
    %v10034 = vld [vmem:[#allocation29 + $0x3d0] sm:$0xff]
    %v10035 = vld [vmem:[#allocation29 + $0x3d8] sm:$0xff]
    %v10036 = vld [vmem:[#allocation29 + $0x3e0] sm:$0xff]
    %v10037 = vld [vmem:[#allocation29 + $0x3e8] sm:$0xff]
    %v10038 = vld [vmem:[#allocation29 + $0x3f0] sm:$0xff]
    %v10039 = vld [vmem:[#allocation29 + $0x3f8] sm:$0xff]
    %v10040 = vpack.c.bf16 %v8894, %v8886
    %v10041 = vpack.c.bf16 %v8895, %v8887
    %v10042 = vpack.c.bf16 %v8896, %v8888
    %v10043 = vpack.c.bf16 %v8897, %v8889
    %v10044 = vld [vmem:[#allocation31] sm:$0xf]
    %v10046 = vperm.slane %v10044, 0
    %v10047 = vperm.slane %v10044, 1
    %v10048 = vperm.slane %v10044, 2
    %v10049 = vperm.slane %v10044, 3
    %v10182 = vunpack.c.l.b16 %v9912
    %v10183 = vunpack.c.h.b16 %v9912
    %v10184 = vunpack.c.l.b16 %v9913
    %v10185 = vunpack.c.h.b16 %v9913
    %v10186 = vunpack.c.l.b16 %v9914
    %v10187 = vunpack.c.h.b16 %v9914
    %v10188 = vunpack.c.l.b16 %v9915
    %v10189 = vunpack.c.h.b16 %v9915
    %v10190 = vunpack.c.l.b16 %v9916
    %v10191 = vunpack.c.h.b16 %v9916
    %v10192 = vunpack.c.l.b16 %v9917
    %v10193 = vunpack.c.h.b16 %v9917
    %v10194 = vunpack.c.l.b16 %v9918
    %v10195 = vunpack.c.h.b16 %v9918
    %v10196 = vunpack.c.l.b16 %v9919
    %v10197 = vunpack.c.h.b16 %v9919
    %v10198 = vunpack.c.l.b16 %v9920
    %v10199 = vunpack.c.h.b16 %v9920
    %v10200 = vunpack.c.l.b16 %v9921
    %v10201 = vunpack.c.h.b16 %v9921
    %v10202 = vunpack.c.l.b16 %v9922
    %v10203 = vunpack.c.h.b16 %v9922
    %v10204 = vunpack.c.l.b16 %v9923
    %v10205 = vunpack.c.h.b16 %v9923
    %v10206 = vunpack.c.l.b16 %v9924
    %v10207 = vunpack.c.h.b16 %v9924
    %v10208 = vunpack.c.l.b16 %v9925
    %v10209 = vunpack.c.h.b16 %v9925
    %v10210 = vunpack.c.l.b16 %v9926
    %v10211 = vunpack.c.h.b16 %v9926
    %v10212 = vunpack.c.l.b16 %v9927
    %v10213 = vunpack.c.h.b16 %v9927
    %v10214 = vunpack.c.l.b16 %v9928
    %v10215 = vunpack.c.h.b16 %v9928
    %v10216 = vunpack.c.l.b16 %v9929
    %v10217 = vunpack.c.h.b16 %v9929
    %v10218 = vunpack.c.l.b16 %v9930
    %v10219 = vunpack.c.h.b16 %v9930
    %v10220 = vunpack.c.l.b16 %v9931
    %v10221 = vunpack.c.h.b16 %v9931
    %v10222 = vunpack.c.l.b16 %v9932
    %v10223 = vunpack.c.h.b16 %v9932
    %v10224 = vunpack.c.l.b16 %v9933
    %v10225 = vunpack.c.h.b16 %v9933
    %v10226 = vunpack.c.l.b16 %v9934
    %v10227 = vunpack.c.h.b16 %v9934
    %v10228 = vunpack.c.l.b16 %v9935
    %v10229 = vunpack.c.h.b16 %v9935
    %v10230 = vunpack.c.l.b16 %v9936
    %v10231 = vunpack.c.h.b16 %v9936
    %v10232 = vunpack.c.l.b16 %v9937
    %v10233 = vunpack.c.h.b16 %v9937
    %v10234 = vunpack.c.l.b16 %v9938
    %v10235 = vunpack.c.h.b16 %v9938
    %v10236 = vunpack.c.l.b16 %v9939
    %v10237 = vunpack.c.h.b16 %v9939
    %v10238 = vunpack.c.l.b16 %v9940
    %v10239 = vunpack.c.h.b16 %v9940
    %v10240 = vunpack.c.l.b16 %v9941
    %v10241 = vunpack.c.h.b16 %v9941
    %v10242 = vunpack.c.l.b16 %v9942
    %v10243 = vunpack.c.h.b16 %v9942
    %v10244 = vunpack.c.l.b16 %v9943
    %v10245 = vunpack.c.h.b16 %v9943
    %v10246 = vunpack.c.l.b16 %v9944
    %v10247 = vunpack.c.h.b16 %v9944
    %v10248 = vunpack.c.l.b16 %v9945
    %v10249 = vunpack.c.h.b16 %v9945
    %v10250 = vunpack.c.l.b16 %v9946
    %v10251 = vunpack.c.h.b16 %v9946
    %v10252 = vunpack.c.l.b16 %v9947
    %v10253 = vunpack.c.h.b16 %v9947
    %v10254 = vunpack.c.l.b16 %v9948
    %v10255 = vunpack.c.h.b16 %v9948
    %v10256 = vunpack.c.l.b16 %v9949
    %v10257 = vunpack.c.h.b16 %v9949
    %v10258 = vunpack.c.l.b16 %v9950
    %v10259 = vunpack.c.h.b16 %v9950
    %v10260 = vunpack.c.l.b16 %v9951
    %v10261 = vunpack.c.h.b16 %v9951
    %v10262 = vunpack.c.l.b16 %v9952
    %v10263 = vunpack.c.h.b16 %v9952
    %v10264 = vunpack.c.l.b16 %v9953
    %v10265 = vunpack.c.h.b16 %v9953
    %v10266 = vunpack.c.l.b16 %v9954
    %v10267 = vunpack.c.h.b16 %v9954
    %v10268 = vunpack.c.l.b16 %v9955
    %v10269 = vunpack.c.h.b16 %v9955
    %v10270 = vunpack.c.l.b16 %v9956
    %v10271 = vunpack.c.h.b16 %v9956
    %v10272 = vunpack.c.l.b16 %v9957
    %v10273 = vunpack.c.h.b16 %v9957
    %v10274 = vunpack.c.l.b16 %v9958
    %v10275 = vunpack.c.h.b16 %v9958
    %v10276 = vunpack.c.l.b16 %v9959
    %v10277 = vunpack.c.h.b16 %v9959
    %v10278 = vunpack.c.l.b16 %v9960
    %v10279 = vunpack.c.h.b16 %v9960
    %v10280 = vunpack.c.l.b16 %v9961
    %v10281 = vunpack.c.h.b16 %v9961
    %v10282 = vunpack.c.l.b16 %v9962
    %v10283 = vunpack.c.h.b16 %v9962
    %v10284 = vunpack.c.l.b16 %v9963
    %v10285 = vunpack.c.h.b16 %v9963
    %v10286 = vunpack.c.l.b16 %v9964
    %v10287 = vunpack.c.h.b16 %v9964
    %v10288 = vunpack.c.l.b16 %v9965
    %v10289 = vunpack.c.h.b16 %v9965
    %v10290 = vunpack.c.l.b16 %v9966
    %v10291 = vunpack.c.h.b16 %v9966
    %v10292 = vunpack.c.l.b16 %v9967
    %v10293 = vunpack.c.h.b16 %v9967
    %v10294 = vunpack.c.l.b16 %v9968
    %v10295 = vunpack.c.h.b16 %v9968
    %v10296 = vunpack.c.l.b16 %v9969
    %v10297 = vunpack.c.h.b16 %v9969
    %v10298 = vunpack.c.l.b16 %v9970
    %v10299 = vunpack.c.h.b16 %v9970
    %v10300 = vunpack.c.l.b16 %v9971
    %v10301 = vunpack.c.h.b16 %v9971
    %v10302 = vunpack.c.l.b16 %v9972
    %v10303 = vunpack.c.h.b16 %v9972
    %v10304 = vunpack.c.l.b16 %v9973
    %v10305 = vunpack.c.h.b16 %v9973
    %v10306 = vunpack.c.l.b16 %v9974
    %v10307 = vunpack.c.h.b16 %v9974
    %v10308 = vunpack.c.l.b16 %v9975
    %v10309 = vunpack.c.h.b16 %v9975
    %v10310 = vunpack.c.l.b16 %v9976
    %v10311 = vunpack.c.h.b16 %v9976
    %v10312 = vunpack.c.l.b16 %v9977
    %v10313 = vunpack.c.h.b16 %v9977
    %v10314 = vunpack.c.l.b16 %v9978
    %v10315 = vunpack.c.h.b16 %v9978
    %v10316 = vunpack.c.l.b16 %v9979
    %v10317 = vunpack.c.h.b16 %v9979
    %v10318 = vunpack.c.l.b16 %v9980
    %v10319 = vunpack.c.h.b16 %v9980
    %v10320 = vunpack.c.l.b16 %v9981
    %v10321 = vunpack.c.h.b16 %v9981
    %v10322 = vunpack.c.l.b16 %v9982
    %v10323 = vunpack.c.h.b16 %v9982
    %v10324 = vunpack.c.l.b16 %v9983
    %v10325 = vunpack.c.h.b16 %v9983
    %v10326 = vunpack.c.l.b16 %v9984
    %v10327 = vunpack.c.h.b16 %v9984
    %v10328 = vunpack.c.l.b16 %v9985
    %v10329 = vunpack.c.h.b16 %v9985
    %v10330 = vunpack.c.l.b16 %v9986
    %v10331 = vunpack.c.h.b16 %v9986
    %v10332 = vunpack.c.l.b16 %v9987
    %v10333 = vunpack.c.h.b16 %v9987
    %v10334 = vunpack.c.l.b16 %v9988
    %v10335 = vunpack.c.h.b16 %v9988
    %v10336 = vunpack.c.l.b16 %v9989
    %v10337 = vunpack.c.h.b16 %v9989
    %v10338 = vunpack.c.l.b16 %v9990
    %v10339 = vunpack.c.h.b16 %v9990
    %v10340 = vunpack.c.l.b16 %v9991
    %v10341 = vunpack.c.h.b16 %v9991
    %v10342 = vunpack.c.l.b16 %v9992
    %v10343 = vunpack.c.h.b16 %v9992
    %v10344 = vunpack.c.l.b16 %v9993
    %v10345 = vunpack.c.h.b16 %v9993
    %v10346 = vunpack.c.l.b16 %v9994
    %v10347 = vunpack.c.h.b16 %v9994
    %v10348 = vunpack.c.l.b16 %v9995
    %v10349 = vunpack.c.h.b16 %v9995
    %v10350 = vunpack.c.l.b16 %v9996
    %v10351 = vunpack.c.h.b16 %v9996
    %v10352 = vunpack.c.l.b16 %v9997
    %v10353 = vunpack.c.h.b16 %v9997
    %v10354 = vunpack.c.l.b16 %v9998
    %v10355 = vunpack.c.h.b16 %v9998
    %v10356 = vunpack.c.l.b16 %v9999
    %v10357 = vunpack.c.h.b16 %v9999
    %v10358 = vunpack.c.l.b16 %v10000
    %v10359 = vunpack.c.h.b16 %v10000
    %v10360 = vunpack.c.l.b16 %v10001
    %v10361 = vunpack.c.h.b16 %v10001
    %v10362 = vunpack.c.l.b16 %v10002
    %v10363 = vunpack.c.h.b16 %v10002
    %v10364 = vunpack.c.l.b16 %v10003
    %v10365 = vunpack.c.h.b16 %v10003
    %v10366 = vunpack.c.l.b16 %v10004
    %v10367 = vunpack.c.h.b16 %v10004
    %v10368 = vunpack.c.l.b16 %v10005
    %v10369 = vunpack.c.h.b16 %v10005
    %v10370 = vunpack.c.l.b16 %v10006
    %v10371 = vunpack.c.h.b16 %v10006
    %v10372 = vunpack.c.l.b16 %v10007
    %v10373 = vunpack.c.h.b16 %v10007
    %v10374 = vunpack.c.l.b16 %v10008
    %v10375 = vunpack.c.h.b16 %v10008
    %v10376 = vunpack.c.l.b16 %v10009
    %v10377 = vunpack.c.h.b16 %v10009
    %v10378 = vunpack.c.l.b16 %v10010
    %v10379 = vunpack.c.h.b16 %v10010
    %v10380 = vunpack.c.l.b16 %v10011
    %v10381 = vunpack.c.h.b16 %v10011
    %v10382 = vunpack.c.l.b16 %v10012
    %v10383 = vunpack.c.h.b16 %v10012
    %v10384 = vunpack.c.l.b16 %v10013
    %v10385 = vunpack.c.h.b16 %v10013
    %v10386 = vunpack.c.l.b16 %v10014
    %v10387 = vunpack.c.h.b16 %v10014
    %v10388 = vunpack.c.l.b16 %v10015
    %v10389 = vunpack.c.h.b16 %v10015
    %v10390 = vunpack.c.l.b16 %v10016
    %v10391 = vunpack.c.h.b16 %v10016
    %v10392 = vunpack.c.l.b16 %v10017
    %v10393 = vunpack.c.h.b16 %v10017
    %v10394 = vunpack.c.l.b16 %v10018
    %v10395 = vunpack.c.h.b16 %v10018
    %v10396 = vunpack.c.l.b16 %v10019
    %v10397 = vunpack.c.h.b16 %v10019
    %v10398 = vunpack.c.l.b16 %v10020
    %v10399 = vunpack.c.h.b16 %v10020
    %v10400 = vunpack.c.l.b16 %v10021
    %v10401 = vunpack.c.h.b16 %v10021
    %v10402 = vunpack.c.l.b16 %v10022
    %v10403 = vunpack.c.h.b16 %v10022
    %v10404 = vunpack.c.l.b16 %v10023
    %v10405 = vunpack.c.h.b16 %v10023
    %v10406 = vunpack.c.l.b16 %v10024
    %v10407 = vunpack.c.h.b16 %v10024
    %v10408 = vunpack.c.l.b16 %v10025
    %v10409 = vunpack.c.h.b16 %v10025
    %v10410 = vunpack.c.l.b16 %v10026
    %v10411 = vunpack.c.h.b16 %v10026
    %v10412 = vunpack.c.l.b16 %v10027
    %v10413 = vunpack.c.h.b16 %v10027
    %v10414 = vunpack.c.l.b16 %v10028
    %v10415 = vunpack.c.h.b16 %v10028
    %v10416 = vunpack.c.l.b16 %v10029
    %v10417 = vunpack.c.h.b16 %v10029
    %v10418 = vunpack.c.l.b16 %v10030
    %v10419 = vunpack.c.h.b16 %v10030
    %v10420 = vunpack.c.l.b16 %v10031
    %v10421 = vunpack.c.h.b16 %v10031
    %v10422 = vunpack.c.l.b16 %v10032
    %v10423 = vunpack.c.h.b16 %v10032
    %v10424 = vunpack.c.l.b16 %v10033
    %v10425 = vunpack.c.h.b16 %v10033
    %v10426 = vunpack.c.l.b16 %v10034
    %v10427 = vunpack.c.h.b16 %v10034
    %v10428 = vunpack.c.l.b16 %v10035
    %v10429 = vunpack.c.h.b16 %v10035
    %v10430 = vunpack.c.l.b16 %v10036
    %v10431 = vunpack.c.h.b16 %v10036
    %v10432 = vunpack.c.l.b16 %v10037
    %v10433 = vunpack.c.h.b16 %v10037
    %v10434 = vunpack.c.l.b16 %v10038
    %v10435 = vunpack.c.h.b16 %v10038
    %v10436 = vunpack.c.l.b16 %v10039
    %v10437 = vunpack.c.h.b16 %v10039
    %v10438 = vpack.c.b16 %v10186, %v10182
    %v10439 = vpack.c.b16 %v10187, %v10183
    %v10440 = vpack.c.b16 %v10188, %v10184
    %v10441 = vpack.c.b16 %v10189, %v10185
    %v10442 = vpack.c.b16 %v10194, %v10190
    %v10443 = vpack.c.b16 %v10195, %v10191
    %v10444 = vpack.c.b16 %v10196, %v10192
    %v10445 = vpack.c.b16 %v10197, %v10193
    %v10446 = vpack.c.b16 %v10202, %v10198
    %v10447 = vpack.c.b16 %v10203, %v10199
    %v10448 = vpack.c.b16 %v10204, %v10200
    %v10449 = vpack.c.b16 %v10205, %v10201
    %v10450 = vpack.c.b16 %v10210, %v10206
    %v10451 = vpack.c.b16 %v10211, %v10207
    %v10452 = vpack.c.b16 %v10212, %v10208
    %v10453 = vpack.c.b16 %v10213, %v10209
    %v10454 = vpack.c.b16 %v10218, %v10214
    %v10455 = vpack.c.b16 %v10219, %v10215
    %v10456 = vpack.c.b16 %v10220, %v10216
    %v10457 = vpack.c.b16 %v10221, %v10217
    %v10458 = vpack.c.b16 %v10226, %v10222
    %v10459 = vpack.c.b16 %v10227, %v10223
    %v10460 = vpack.c.b16 %v10228, %v10224
    %v10461 = vpack.c.b16 %v10229, %v10225
    %v10462 = vpack.c.b16 %v10234, %v10230
    %v10463 = vpack.c.b16 %v10235, %v10231
    %v10464 = vpack.c.b16 %v10236, %v10232
    %v10465 = vpack.c.b16 %v10237, %v10233
    %v10466 = vpack.c.b16 %v10242, %v10238
    %v10467 = vpack.c.b16 %v10243, %v10239
    %v10468 = vpack.c.b16 %v10244, %v10240
    %v10469 = vpack.c.b16 %v10245, %v10241
    %v10470 = vpack.c.b16 %v10250, %v10246
    %v10471 = vpack.c.b16 %v10251, %v10247
    %v10472 = vpack.c.b16 %v10252, %v10248
    %v10473 = vpack.c.b16 %v10253, %v10249
    %v10474 = vpack.c.b16 %v10258, %v10254
    %v10475 = vpack.c.b16 %v10259, %v10255
    %v10476 = vpack.c.b16 %v10260, %v10256
    %v10477 = vpack.c.b16 %v10261, %v10257
    %v10478 = vpack.c.b16 %v10266, %v10262
    %v10479 = vpack.c.b16 %v10267, %v10263
    %v10480 = vpack.c.b16 %v10268, %v10264
    %v10481 = vpack.c.b16 %v10269, %v10265
    %v10482 = vpack.c.b16 %v10274, %v10270
    %v10483 = vpack.c.b16 %v10275, %v10271
    %v10484 = vpack.c.b16 %v10276, %v10272
    %v10485 = vpack.c.b16 %v10277, %v10273
    %v10486 = vpack.c.b16 %v10282, %v10278
    %v10487 = vpack.c.b16 %v10283, %v10279
    %v10488 = vpack.c.b16 %v10284, %v10280
    %v10489 = vpack.c.b16 %v10285, %v10281
    %v10490 = vpack.c.b16 %v10290, %v10286
    %v10491 = vpack.c.b16 %v10291, %v10287
    %v10492 = vpack.c.b16 %v10292, %v10288
    %v10493 = vpack.c.b16 %v10293, %v10289
    %v10494 = vpack.c.b16 %v10298, %v10294
    %v10495 = vpack.c.b16 %v10299, %v10295
    %v10496 = vpack.c.b16 %v10300, %v10296
    %v10497 = vpack.c.b16 %v10301, %v10297
    %v10498 = vpack.c.b16 %v10306, %v10302
    %v10499 = vpack.c.b16 %v10307, %v10303
    %v10500 = vpack.c.b16 %v10308, %v10304
    %v10501 = vpack.c.b16 %v10309, %v10305
    %v10502 = vpack.c.b16 %v10314, %v10310
    %v10503 = vpack.c.b16 %v10315, %v10311
    %v10504 = vpack.c.b16 %v10316, %v10312
    %v10505 = vpack.c.b16 %v10317, %v10313
    %v10506 = vpack.c.b16 %v10322, %v10318
    %v10507 = vpack.c.b16 %v10323, %v10319
    %v10508 = vpack.c.b16 %v10324, %v10320
    %v10509 = vpack.c.b16 %v10325, %v10321
    %v10510 = vpack.c.b16 %v10330, %v10326
    %v10511 = vpack.c.b16 %v10331, %v10327
    %v10512 = vpack.c.b16 %v10332, %v10328
    %v10513 = vpack.c.b16 %v10333, %v10329
    %v10514 = vpack.c.b16 %v10338, %v10334
    %v10515 = vpack.c.b16 %v10339, %v10335
    %v10516 = vpack.c.b16 %v10340, %v10336
    %v10517 = vpack.c.b16 %v10341, %v10337
    %v10518 = vpack.c.b16 %v10346, %v10342
    %v10519 = vpack.c.b16 %v10347, %v10343
    %v10520 = vpack.c.b16 %v10348, %v10344
    %v10521 = vpack.c.b16 %v10349, %v10345
    %v10522 = vpack.c.b16 %v10354, %v10350
    %v10523 = vpack.c.b16 %v10355, %v10351
    %v10524 = vpack.c.b16 %v10356, %v10352
    %v10525 = vpack.c.b16 %v10357, %v10353
    %v10526 = vpack.c.b16 %v10362, %v10358
    %v10527 = vpack.c.b16 %v10363, %v10359
    %v10528 = vpack.c.b16 %v10364, %v10360
    %v10529 = vpack.c.b16 %v10365, %v10361
    %v10530 = vpack.c.b16 %v10370, %v10366
    %v10531 = vpack.c.b16 %v10371, %v10367
    %v10532 = vpack.c.b16 %v10372, %v10368
    %v10533 = vpack.c.b16 %v10373, %v10369
    %v10534 = vpack.c.b16 %v10378, %v10374
    %v10535 = vpack.c.b16 %v10379, %v10375
    %v10536 = vpack.c.b16 %v10380, %v10376
    %v10537 = vpack.c.b16 %v10381, %v10377
    %v10538 = vpack.c.b16 %v10386, %v10382
    %v10539 = vpack.c.b16 %v10387, %v10383
    %v10540 = vpack.c.b16 %v10388, %v10384
    %v10541 = vpack.c.b16 %v10389, %v10385
    %v10542 = vpack.c.b16 %v10394, %v10390
    %v10543 = vpack.c.b16 %v10395, %v10391
    %v10544 = vpack.c.b16 %v10396, %v10392
    %v10545 = vpack.c.b16 %v10397, %v10393
    %v10546 = vpack.c.b16 %v10402, %v10398
    %v10547 = vpack.c.b16 %v10403, %v10399
    %v10548 = vpack.c.b16 %v10404, %v10400
    %v10549 = vpack.c.b16 %v10405, %v10401
    %v10550 = vpack.c.b16 %v10410, %v10406
    %v10551 = vpack.c.b16 %v10411, %v10407
    %v10552 = vpack.c.b16 %v10412, %v10408
    %v10553 = vpack.c.b16 %v10413, %v10409
    %v10554 = vpack.c.b16 %v10418, %v10414
    %v10555 = vpack.c.b16 %v10419, %v10415
    %v10556 = vpack.c.b16 %v10420, %v10416
    %v10557 = vpack.c.b16 %v10421, %v10417
    %v10558 = vpack.c.b16 %v10426, %v10422
    %v10559 = vpack.c.b16 %v10427, %v10423
    %v10560 = vpack.c.b16 %v10428, %v10424
    %v10561 = vpack.c.b16 %v10429, %v10425
    %v10562 = vpack.c.b16 %v10434, %v10430
    %v10563 = vpack.c.b16 %v10435, %v10431
    %v10564 = vpack.c.b16 %v10436, %v10432
    %v10565 = vpack.c.b16 %v10437, %v10433
    %10694 = vmatpush.bf16.msra.mxu0 %v10466
    %10695 = vmatpush.bf16.msra.mxu0 %v10462
    %10696 = vmatpush.bf16.msra.mxu0 %v10458
    %10697 = vmatpush.bf16.msra.mxu0 %v10454
    %10698 = vmatpush.bf16.msra.mxu0 %v10450
    %10699 = vmatpush.bf16.msra.mxu0 %v10446
    %10700 = vmatpush.bf16.msra.mxu0 %v10442
    %10701 = vmatpush.bf16.msra.mxu0 %v10438
    %10702 = vmatmul.bf16.gmra.mxu0 %v10040
    %v10703 = vpop.f32.mrf.mxu0
    %v10704 = vadd.f32 %v10046, %v10703
    %v10705 = vpop.f32.mrf.mxu0
    %v10706 = vadd.f32 %v10046, %v10705
    %10707 = vdwg.mxu0
    %10708 = vmatpush.bf16.msra.mxu0 %v10498
    %10709 = vmatpush.bf16.msra.mxu0 %v10494
    %10710 = vmatpush.bf16.msra.mxu0 %v10490
    %10711 = vmatpush.bf16.msra.mxu0 %v10486
    %10712 = vmatpush.bf16.msra.mxu0 %v10482
    %10713 = vmatpush.bf16.msra.mxu0 %v10478
    %10714 = vmatpush.bf16.msra.mxu0 %v10474
    %10715 = vmatpush.bf16.msra.mxu0 %v10470
    %10716 = vmatmul.bf16.gmra.mxu0 %v10041
    %v10717 = vpop.f32.mrf.mxu0
    %v10718 = vadd.f32 %v10704, %v10717
    %v10719 = vpop.f32.mrf.mxu0
    %v10720 = vadd.f32 %v10706, %v10719
    %10721 = vdwg.mxu0
    %10722 = vmatpush.bf16.msra.mxu0 %v10530
    %10723 = vmatpush.bf16.msra.mxu0 %v10526
    %10724 = vmatpush.bf16.msra.mxu0 %v10522
    %10725 = vmatpush.bf16.msra.mxu0 %v10518
    %10726 = vmatpush.bf16.msra.mxu0 %v10514
    %10727 = vmatpush.bf16.msra.mxu0 %v10510
    %10728 = vmatpush.bf16.msra.mxu0 %v10506
    %10729 = vmatpush.bf16.msra.mxu0 %v10502
    %10730 = vmatmul.bf16.gmra.mxu0 %v10042
    %v10731 = vpop.f32.mrf.mxu0
    %v10732 = vadd.f32 %v10718, %v10731
    %v10733 = vpop.f32.mrf.mxu0
    %v10734 = vadd.f32 %v10720, %v10733
    %10735 = vdwg.mxu0
    %10736 = vmatpush.bf16.msra.mxu0 %v10562
    %10737 = vmatpush.bf16.msra.mxu0 %v10558
    %10738 = vmatpush.bf16.msra.mxu0 %v10554
    %10739 = vmatpush.bf16.msra.mxu0 %v10550
    %10740 = vmatpush.bf16.msra.mxu0 %v10546
    %10741 = vmatpush.bf16.msra.mxu0 %v10542
    %10742 = vmatpush.bf16.msra.mxu0 %v10538
    %10743 = vmatpush.bf16.msra.mxu0 %v10534
    %10744 = vmatmul.bf16.gmra.mxu0 %v10043
    %v10745 = vpop.f32.mrf.mxu0
    %v10746 = vadd.f32 %v10732, %v10745
    %v10747 = vpop.f32.mrf.mxu0
    %v10748 = vadd.f32 %v10734, %v10747
    %10749 = vdwg.mxu0
    %10750 = vmatpush.bf16.msra.mxu0 %v10467
    %10751 = vmatpush.bf16.msra.mxu0 %v10463
    %10752 = vmatpush.bf16.msra.mxu0 %v10459
    %10753 = vmatpush.bf16.msra.mxu0 %v10455
    %10754 = vmatpush.bf16.msra.mxu0 %v10451
    %10755 = vmatpush.bf16.msra.mxu0 %v10447
    %10756 = vmatpush.bf16.msra.mxu0 %v10443
    %10757 = vmatpush.bf16.msra.mxu0 %v10439
    %10758 = vmatmul.bf16.gmra.mxu0 %v10040
    %v10759 = vpop.f32.mrf.mxu0
    %v10760 = vadd.f32 %v10047, %v10759
    %v10761 = vpop.f32.mrf.mxu0
    %v10762 = vadd.f32 %v10047, %v10761
    %10763 = vdwg.mxu0
    %10764 = vmatpush.bf16.msra.mxu0 %v10499
    %10765 = vmatpush.bf16.msra.mxu0 %v10495
    %10766 = vmatpush.bf16.msra.mxu0 %v10491
    %10767 = vmatpush.bf16.msra.mxu0 %v10487
    %10768 = vmatpush.bf16.msra.mxu0 %v10483
    %10769 = vmatpush.bf16.msra.mxu0 %v10479
    %10770 = vmatpush.bf16.msra.mxu0 %v10475
    %10771 = vmatpush.bf16.msra.mxu0 %v10471
    %10772 = vmatmul.bf16.gmra.mxu0 %v10041
    %v10773 = vpop.f32.mrf.mxu0
    %v10774 = vadd.f32 %v10760, %v10773
    %v10775 = vpop.f32.mrf.mxu0
    %v10776 = vadd.f32 %v10762, %v10775
    %10777 = vdwg.mxu0
    %10778 = vmatpush.bf16.msra.mxu0 %v10531
    %10779 = vmatpush.bf16.msra.mxu0 %v10527
    %10780 = vmatpush.bf16.msra.mxu0 %v10523
    %10781 = vmatpush.bf16.msra.mxu0 %v10519
    %10782 = vmatpush.bf16.msra.mxu0 %v10515
    %10783 = vmatpush.bf16.msra.mxu0 %v10511
    %10784 = vmatpush.bf16.msra.mxu0 %v10507
    %10785 = vmatpush.bf16.msra.mxu0 %v10503
    %10786 = vmatmul.bf16.gmra.mxu0 %v10042
    %v10787 = vpop.f32.mrf.mxu0
    %v10788 = vadd.f32 %v10774, %v10787
    %v10789 = vpop.f32.mrf.mxu0
    %v10790 = vadd.f32 %v10776, %v10789
    %10791 = vdwg.mxu0
    %10792 = vmatpush.bf16.msra.mxu0 %v10563
    %10793 = vmatpush.bf16.msra.mxu0 %v10559
    %10794 = vmatpush.bf16.msra.mxu0 %v10555
    %10795 = vmatpush.bf16.msra.mxu0 %v10551
    %10796 = vmatpush.bf16.msra.mxu0 %v10547
    %10797 = vmatpush.bf16.msra.mxu0 %v10543
    %10798 = vmatpush.bf16.msra.mxu0 %v10539
    %10799 = vmatpush.bf16.msra.mxu0 %v10535
    %10800 = vmatmul.bf16.gmra.mxu0 %v10043
    %v10801 = vpop.f32.mrf.mxu0
    %v10802 = vadd.f32 %v10788, %v10801
    %v10803 = vpop.f32.mrf.mxu0
    %v10804 = vadd.f32 %v10790, %v10803
    %10805 = vdwg.mxu0
    %10806 = vmatpush.bf16.msra.mxu0 %v10468
    %10807 = vmatpush.bf16.msra.mxu0 %v10464
    %10808 = vmatpush.bf16.msra.mxu0 %v10460
    %10809 = vmatpush.bf16.msra.mxu0 %v10456
    %10810 = vmatpush.bf16.msra.mxu0 %v10452
    %10811 = vmatpush.bf16.msra.mxu0 %v10448
    %10812 = vmatpush.bf16.msra.mxu0 %v10444
    %10813 = vmatpush.bf16.msra.mxu0 %v10440
    %10814 = vmatmul.bf16.gmra.mxu0 %v10040
    %v10815 = vpop.f32.mrf.mxu0
    %v10816 = vadd.f32 %v10048, %v10815
    %v10817 = vpop.f32.mrf.mxu0
    %v10818 = vadd.f32 %v10048, %v10817
    %10819 = vdwg.mxu0
    %10820 = vmatpush.bf16.msra.mxu0 %v10500
    %10821 = vmatpush.bf16.msra.mxu0 %v10496
    %10822 = vmatpush.bf16.msra.mxu0 %v10492
    %10823 = vmatpush.bf16.msra.mxu0 %v10488
    %10824 = vmatpush.bf16.msra.mxu0 %v10484
    %10825 = vmatpush.bf16.msra.mxu0 %v10480
    %10826 = vmatpush.bf16.msra.mxu0 %v10476
    %10827 = vmatpush.bf16.msra.mxu0 %v10472
    %10828 = vmatmul.bf16.gmra.mxu0 %v10041
    %v10829 = vpop.f32.mrf.mxu0
    %v10830 = vadd.f32 %v10816, %v10829
    %v10831 = vpop.f32.mrf.mxu0
    %v10832 = vadd.f32 %v10818, %v10831
    %10833 = vdwg.mxu0
    %10834 = vmatpush.bf16.msra.mxu0 %v10532
    %10835 = vmatpush.bf16.msra.mxu0 %v10528
    %10836 = vmatpush.bf16.msra.mxu0 %v10524
    %10837 = vmatpush.bf16.msra.mxu0 %v10520
    %10838 = vmatpush.bf16.msra.mxu0 %v10516
    %10839 = vmatpush.bf16.msra.mxu0 %v10512
    %10840 = vmatpush.bf16.msra.mxu0 %v10508
    %10841 = vmatpush.bf16.msra.mxu0 %v10504
    %10842 = vmatmul.bf16.gmra.mxu0 %v10042
    %v10843 = vpop.f32.mrf.mxu0
    %v10844 = vadd.f32 %v10830, %v10843
    %v10845 = vpop.f32.mrf.mxu0
    %v10846 = vadd.f32 %v10832, %v10845
    %10847 = vdwg.mxu0
    %10848 = vmatpush.bf16.msra.mxu0 %v10564
    %10849 = vmatpush.bf16.msra.mxu0 %v10560
    %10850 = vmatpush.bf16.msra.mxu0 %v10556
    %10851 = vmatpush.bf16.msra.mxu0 %v10552
    %10852 = vmatpush.bf16.msra.mxu0 %v10548
    %10853 = vmatpush.bf16.msra.mxu0 %v10544
    %10854 = vmatpush.bf16.msra.mxu0 %v10540
    %10855 = vmatpush.bf16.msra.mxu0 %v10536
    %10856 = vmatmul.bf16.gmra.mxu0 %v10043
    %v10857 = vpop.f32.mrf.mxu0
    %v10858 = vadd.f32 %v10844, %v10857
    %v10859 = vpop.f32.mrf.mxu0
    %v10860 = vadd.f32 %v10846, %v10859
    %10861 = vdwg.mxu0
    %10862 = vmatpush.bf16.msra.mxu0 %v10469
    %10863 = vmatpush.bf16.msra.mxu0 %v10465
    %10864 = vmatpush.bf16.msra.mxu0 %v10461
    %10865 = vmatpush.bf16.msra.mxu0 %v10457
    %10866 = vmatpush.bf16.msra.mxu0 %v10453
    %10867 = vmatpush.bf16.msra.mxu0 %v10449
    %10868 = vmatpush.bf16.msra.mxu0 %v10445
    %10869 = vmatpush.bf16.msra.mxu0 %v10441
    %10870 = vmatmul.bf16.gmra.mxu0 %v10040
    %v10871 = vpop.f32.mrf.mxu0
    %v10872 = vadd.f32 %v10049, %v10871
    %v10873 = vpop.f32.mrf.mxu0
    %v10874 = vadd.f32 %v10049, %v10873
    %10875 = vdwg.mxu0
    %10876 = vmatpush.bf16.msra.mxu0 %v10501
    %10877 = vmatpush.bf16.msra.mxu0 %v10497
    %10878 = vmatpush.bf16.msra.mxu0 %v10493
    %10879 = vmatpush.bf16.msra.mxu0 %v10489
    %10880 = vmatpush.bf16.msra.mxu0 %v10485
    %10881 = vmatpush.bf16.msra.mxu0 %v10481
    %10882 = vmatpush.bf16.msra.mxu0 %v10477
    %10883 = vmatpush.bf16.msra.mxu0 %v10473
    %10884 = vmatmul.bf16.gmra.mxu0 %v10041
    %v10885 = vpop.f32.mrf.mxu0
    %v10886 = vadd.f32 %v10872, %v10885
    %v10887 = vpop.f32.mrf.mxu0
    %v10888 = vadd.f32 %v10874, %v10887
    %10889 = vdwg.mxu0
    %10890 = vmatpush.bf16.msra.mxu0 %v10533
    %10891 = vmatpush.bf16.msra.mxu0 %v10529
    %10892 = vmatpush.bf16.msra.mxu0 %v10525
    %10893 = vmatpush.bf16.msra.mxu0 %v10521
    %10894 = vmatpush.bf16.msra.mxu0 %v10517
    %10895 = vmatpush.bf16.msra.mxu0 %v10513
    %10896 = vmatpush.bf16.msra.mxu0 %v10509
    %10897 = vmatpush.bf16.msra.mxu0 %v10505
    %10898 = vmatmul.bf16.gmra.mxu0 %v10042
    %v10899 = vpop.f32.mrf.mxu0
    %v10900 = vadd.f32 %v10886, %v10899
    %v10901 = vpop.f32.mrf.mxu0
    %v10902 = vadd.f32 %v10888, %v10901
    %10903 = vdwg.mxu0
    %10904 = vmatpush.bf16.msra.mxu0 %v10565
    %10905 = vmatpush.bf16.msra.mxu0 %v10561
    %10906 = vmatpush.bf16.msra.mxu0 %v10557
    %10907 = vmatpush.bf16.msra.mxu0 %v10553
    %10908 = vmatpush.bf16.msra.mxu0 %v10549
    %10909 = vmatpush.bf16.msra.mxu0 %v10545
    %10910 = vmatpush.bf16.msra.mxu0 %v10541
    %10911 = vmatpush.bf16.msra.mxu0 %v10537
    %10912 = vmatmul.bf16.gmra.mxu0 %v10043
    %v10913 = vpop.f32.mrf.mxu0
    %v10914 = vadd.f32 %v10900, %v10913
    %v10915 = vpop.f32.mrf.mxu0
    %v10916 = vadd.f32 %v10902, %v10915
    %10917 = vdwg.mxu0
    %v10918 = vmax.f32 %v10746, 0.0
    %v10919 = vmax.f32 %v10802, 0.0
    %v10920 = vmax.f32 %v10858, 0.0
    %v10921 = vmax.f32 %v10914, 0.0
    %v10922 = vmax.f32 %v10748, 0.0
    %v10923 = vmax.f32 %v10804, 0.0
    %v10924 = vmax.f32 %v10860, 0.0
    %v10925 = vmax.f32 %v10916, 0.0
    %v10926 = vld [vmem:[#allocation32] sm:$0xf]
    %v10927 = vld [vmem:[#allocation32 + $0x4] sm:$0xf]
    %v10928 = vld [vmem:[#allocation32 + $0x8] sm:$0xf]
    %v10929 = vld [vmem:[#allocation32 + $0xc] sm:$0xf]
    %v10930 = vld [vmem:[#allocation32 + $0x10] sm:$0xf]
    %v10931 = vld [vmem:[#allocation32 + $0x14] sm:$0xf]
    %v10932 = vld [vmem:[#allocation32 + $0x18] sm:$0xf]
    %v10933 = vld [vmem:[#allocation32 + $0x1c] sm:$0xf]
    %v10934 = vld [vmem:[#allocation32 + $0x20] sm:$0xf]
    %v10935 = vld [vmem:[#allocation32 + $0x24] sm:$0xf]
    %v10936 = vld [vmem:[#allocation32 + $0x28] sm:$0xf]
    %v10937 = vld [vmem:[#allocation32 + $0x2c] sm:$0xf]
    %v10938 = vld [vmem:[#allocation32 + $0x30] sm:$0xf]
    %v10939 = vld [vmem:[#allocation32 + $0x34] sm:$0xf]
    %v10940 = vld [vmem:[#allocation32 + $0x38] sm:$0xf]
    %v10941 = vld [vmem:[#allocation32 + $0x3c] sm:$0xf]
    %v10942 = vld [vmem:[#allocation32 + $0x40] sm:$0xf]
    %v10943 = vld [vmem:[#allocation32 + $0x44] sm:$0xf]
    %v10944 = vld [vmem:[#allocation32 + $0x48] sm:$0xf]
    %v10945 = vld [vmem:[#allocation32 + $0x4c] sm:$0xf]
    %v10946 = vld [vmem:[#allocation32 + $0x50] sm:$0xf]
    %v10947 = vld [vmem:[#allocation32 + $0x54] sm:$0xf]
    %v10948 = vld [vmem:[#allocation32 + $0x58] sm:$0xf]
    %v10949 = vld [vmem:[#allocation32 + $0x5c] sm:$0xf]
    %v10950 = vld [vmem:[#allocation32 + $0x60] sm:$0xf]
    %v10951 = vld [vmem:[#allocation32 + $0x64] sm:$0xf]
    %v10952 = vld [vmem:[#allocation32 + $0x68] sm:$0xf]
    %v10953 = vld [vmem:[#allocation32 + $0x6c] sm:$0xf]
    %v10954 = vld [vmem:[#allocation32 + $0x70] sm:$0xf]
    %v10955 = vld [vmem:[#allocation32 + $0x74] sm:$0xf]
    %v10956 = vld [vmem:[#allocation32 + $0x78] sm:$0xf]
    %v10957 = vld [vmem:[#allocation32 + $0x7c] sm:$0xf]
    %v10958 = vld [vmem:[#allocation32 + $0x80] sm:$0xf]
    %v10959 = vld [vmem:[#allocation32 + $0x84] sm:$0xf]
    %v10960 = vld [vmem:[#allocation32 + $0x88] sm:$0xf]
    %v10961 = vld [vmem:[#allocation32 + $0x8c] sm:$0xf]
    %v10962 = vld [vmem:[#allocation32 + $0x90] sm:$0xf]
    %v10963 = vld [vmem:[#allocation32 + $0x94] sm:$0xf]
    %v10964 = vld [vmem:[#allocation32 + $0x98] sm:$0xf]
    %v10965 = vld [vmem:[#allocation32 + $0x9c] sm:$0xf]
    %v10966 = vld [vmem:[#allocation32 + $0xa0] sm:$0xf]
    %v10967 = vld [vmem:[#allocation32 + $0xa4] sm:$0xf]
    %v10968 = vld [vmem:[#allocation32 + $0xa8] sm:$0xf]
    %v10969 = vld [vmem:[#allocation32 + $0xac] sm:$0xf]
    %v10970 = vld [vmem:[#allocation32 + $0xb0] sm:$0xf]
    %v10971 = vld [vmem:[#allocation32 + $0xb4] sm:$0xf]
    %v10972 = vld [vmem:[#allocation32 + $0xb8] sm:$0xf]
    %v10973 = vld [vmem:[#allocation32 + $0xbc] sm:$0xf]
    %v10974 = vld [vmem:[#allocation32 + $0xc0] sm:$0xf]
    %v10975 = vld [vmem:[#allocation32 + $0xc4] sm:$0xf]
    %v10976 = vld [vmem:[#allocation32 + $0xc8] sm:$0xf]
    %v10977 = vld [vmem:[#allocation32 + $0xcc] sm:$0xf]
    %v10978 = vld [vmem:[#allocation32 + $0xd0] sm:$0xf]
    %v10979 = vld [vmem:[#allocation32 + $0xd4] sm:$0xf]
    %v10980 = vld [vmem:[#allocation32 + $0xd8] sm:$0xf]
    %v10981 = vld [vmem:[#allocation32 + $0xdc] sm:$0xf]
    %v10982 = vld [vmem:[#allocation32 + $0xe0] sm:$0xf]
    %v10983 = vld [vmem:[#allocation32 + $0xe4] sm:$0xf]
    %v10984 = vld [vmem:[#allocation32 + $0xe8] sm:$0xf]
    %v10985 = vld [vmem:[#allocation32 + $0xec] sm:$0xf]
    %v10986 = vld [vmem:[#allocation32 + $0xf0] sm:$0xf]
    %v10987 = vld [vmem:[#allocation32 + $0xf4] sm:$0xf]
    %v10988 = vld [vmem:[#allocation32 + $0xf8] sm:$0xf]
    %v10989 = vld [vmem:[#allocation32 + $0xfc] sm:$0xf]
    %v10990 = vpack.c.bf16 %v9908, %v9904
    %v10991 = vpack.c.bf16 %v9909, %v9905
    %v10992 = vpack.c.bf16 %v9910, %v9906
    %v10993 = vpack.c.bf16 %v9911, %v9907
    %v10994 = vld [vmem:[#allocation32 + $0x100] sm:$0xf]
    %v10995 = vld [vmem:[#allocation32 + $0x104] sm:$0xf]
    %v10996 = vld [vmem:[#allocation32 + $0x108] sm:$0xf]
    %v10997 = vld [vmem:[#allocation32 + $0x10c] sm:$0xf]
    %v10998 = vld [vmem:[#allocation32 + $0x110] sm:$0xf]
    %v10999 = vld [vmem:[#allocation32 + $0x114] sm:$0xf]
    %v11000 = vld [vmem:[#allocation32 + $0x118] sm:$0xf]
    %v11001 = vld [vmem:[#allocation32 + $0x11c] sm:$0xf]
    %v11002 = vld [vmem:[#allocation32 + $0x120] sm:$0xf]
    %v11003 = vld [vmem:[#allocation32 + $0x124] sm:$0xf]
    %v11004 = vld [vmem:[#allocation32 + $0x128] sm:$0xf]
    %v11005 = vld [vmem:[#allocation32 + $0x12c] sm:$0xf]
    %v11006 = vld [vmem:[#allocation32 + $0x130] sm:$0xf]
    %v11007 = vld [vmem:[#allocation32 + $0x134] sm:$0xf]
    %v11008 = vld [vmem:[#allocation32 + $0x138] sm:$0xf]
    %v11009 = vld [vmem:[#allocation32 + $0x13c] sm:$0xf]
    %v11010 = vld [vmem:[#allocation32 + $0x140] sm:$0xf]
    %v11011 = vld [vmem:[#allocation32 + $0x144] sm:$0xf]
    %v11012 = vld [vmem:[#allocation32 + $0x148] sm:$0xf]
    %v11013 = vld [vmem:[#allocation32 + $0x14c] sm:$0xf]
    %v11014 = vld [vmem:[#allocation32 + $0x150] sm:$0xf]
    %v11015 = vld [vmem:[#allocation32 + $0x154] sm:$0xf]
    %v11016 = vld [vmem:[#allocation32 + $0x158] sm:$0xf]
    %v11017 = vld [vmem:[#allocation32 + $0x15c] sm:$0xf]
    %v11018 = vld [vmem:[#allocation32 + $0x160] sm:$0xf]
    %v11019 = vld [vmem:[#allocation32 + $0x164] sm:$0xf]
    %v11020 = vld [vmem:[#allocation32 + $0x168] sm:$0xf]
    %v11021 = vld [vmem:[#allocation32 + $0x16c] sm:$0xf]
    %v11022 = vld [vmem:[#allocation32 + $0x170] sm:$0xf]
    %v11023 = vld [vmem:[#allocation32 + $0x174] sm:$0xf]
    %v11024 = vld [vmem:[#allocation32 + $0x178] sm:$0xf]
    %v11025 = vld [vmem:[#allocation32 + $0x17c] sm:$0xf]
    %v11026 = vld [vmem:[#allocation32 + $0x180] sm:$0xf]
    %v11027 = vld [vmem:[#allocation32 + $0x184] sm:$0xf]
    %v11028 = vld [vmem:[#allocation32 + $0x188] sm:$0xf]
    %v11029 = vld [vmem:[#allocation32 + $0x18c] sm:$0xf]
    %v11030 = vld [vmem:[#allocation32 + $0x190] sm:$0xf]
    %v11031 = vld [vmem:[#allocation32 + $0x194] sm:$0xf]
    %v11032 = vld [vmem:[#allocation32 + $0x198] sm:$0xf]
    %v11033 = vld [vmem:[#allocation32 + $0x19c] sm:$0xf]
    %v11034 = vld [vmem:[#allocation32 + $0x1a0] sm:$0xf]
    %v11035 = vld [vmem:[#allocation32 + $0x1a4] sm:$0xf]
    %v11036 = vld [vmem:[#allocation32 + $0x1a8] sm:$0xf]
    %v11037 = vld [vmem:[#allocation32 + $0x1ac] sm:$0xf]
    %v11038 = vld [vmem:[#allocation32 + $0x1b0] sm:$0xf]
    %v11039 = vld [vmem:[#allocation32 + $0x1b4] sm:$0xf]
    %v11040 = vld [vmem:[#allocation32 + $0x1b8] sm:$0xf]
    %v11041 = vld [vmem:[#allocation32 + $0x1bc] sm:$0xf]
    %v11042 = vld [vmem:[#allocation32 + $0x1c0] sm:$0xf]
    %v11043 = vld [vmem:[#allocation32 + $0x1c4] sm:$0xf]
    %v11044 = vld [vmem:[#allocation32 + $0x1c8] sm:$0xf]
    %v11045 = vld [vmem:[#allocation32 + $0x1cc] sm:$0xf]
    %v11046 = vld [vmem:[#allocation32 + $0x1d0] sm:$0xf]
    %v11047 = vld [vmem:[#allocation32 + $0x1d4] sm:$0xf]
    %v11048 = vld [vmem:[#allocation32 + $0x1d8] sm:$0xf]
    %v11049 = vld [vmem:[#allocation32 + $0x1dc] sm:$0xf]
    %v11050 = vld [vmem:[#allocation32 + $0x1e0] sm:$0xf]
    %v11051 = vld [vmem:[#allocation32 + $0x1e4] sm:$0xf]
    %v11052 = vld [vmem:[#allocation32 + $0x1e8] sm:$0xf]
    %v11053 = vld [vmem:[#allocation32 + $0x1ec] sm:$0xf]
    %v11054 = vld [vmem:[#allocation32 + $0x1f0] sm:$0xf]
    %v11055 = vld [vmem:[#allocation32 + $0x1f4] sm:$0xf]
    %v11056 = vld [vmem:[#allocation32 + $0x1f8] sm:$0xf]
    %v11057 = vld [vmem:[#allocation32 + $0x1fc] sm:$0xf]
    %v11058 = vpack.c.bf16 %v10922, %v10918
    %v11059 = vpack.c.bf16 %v10923, %v10919
    %v11060 = vpack.c.bf16 %v10924, %v10920
    %v11061 = vpack.c.bf16 %v10925, %v10921
    %v11126 = vunpack.c.l.b16 %v10994
    %v11127 = vunpack.c.l.b16 %v10995
    %v11128 = vunpack.c.l.b16 %v10996
    %v11129 = vunpack.c.l.b16 %v10997
    %v11130 = vunpack.c.l.b16 %v10998
    %v11131 = vunpack.c.l.b16 %v10999
    %v11132 = vunpack.c.l.b16 %v11000
    %v11133 = vunpack.c.l.b16 %v11001
    %v11134 = vunpack.c.l.b16 %v11002
    %v11135 = vunpack.c.l.b16 %v11003
    %v11136 = vunpack.c.l.b16 %v11004
    %v11137 = vunpack.c.l.b16 %v11005
    %v11138 = vunpack.c.l.b16 %v11006
    %v11139 = vunpack.c.l.b16 %v11007
    %v11140 = vunpack.c.l.b16 %v11008
    %v11141 = vunpack.c.l.b16 %v11009
    %v11142 = vunpack.c.l.b16 %v11010
    %v11143 = vunpack.c.l.b16 %v11011
    %v11144 = vunpack.c.l.b16 %v11012
    %v11145 = vunpack.c.l.b16 %v11013
    %v11146 = vunpack.c.l.b16 %v11014
    %v11147 = vunpack.c.l.b16 %v11015
    %v11148 = vunpack.c.l.b16 %v11016
    %v11149 = vunpack.c.l.b16 %v11017
    %v11150 = vunpack.c.l.b16 %v11018
    %v11151 = vunpack.c.l.b16 %v11019
    %v11152 = vunpack.c.l.b16 %v11020
    %v11153 = vunpack.c.l.b16 %v11021
    %v11154 = vunpack.c.l.b16 %v11022
    %v11155 = vunpack.c.l.b16 %v11023
    %v11156 = vunpack.c.l.b16 %v11024
    %v11157 = vunpack.c.l.b16 %v11025
    %v11158 = vunpack.c.l.b16 %v11026
    %v11159 = vunpack.c.l.b16 %v11027
    %v11160 = vunpack.c.l.b16 %v11028
    %v11161 = vunpack.c.l.b16 %v11029
    %v11162 = vunpack.c.l.b16 %v11030
    %v11163 = vunpack.c.l.b16 %v11031
    %v11164 = vunpack.c.l.b16 %v11032
    %v11165 = vunpack.c.l.b16 %v11033
    %v11166 = vunpack.c.l.b16 %v11034
    %v11167 = vunpack.c.l.b16 %v11035
    %v11168 = vunpack.c.l.b16 %v11036
    %v11169 = vunpack.c.l.b16 %v11037
    %v11170 = vunpack.c.l.b16 %v11038
    %v11171 = vunpack.c.l.b16 %v11039
    %v11172 = vunpack.c.l.b16 %v11040
    %v11173 = vunpack.c.l.b16 %v11041
    %v11174 = vunpack.c.l.b16 %v11042
    %v11175 = vunpack.c.l.b16 %v11043
    %v11176 = vunpack.c.l.b16 %v11044
    %v11177 = vunpack.c.l.b16 %v11045
    %v11178 = vunpack.c.l.b16 %v11046
    %v11179 = vunpack.c.l.b16 %v11047
    %v11180 = vunpack.c.l.b16 %v11048
    %v11181 = vunpack.c.l.b16 %v11049
    %v11182 = vunpack.c.l.b16 %v11050
    %v11183 = vunpack.c.l.b16 %v11051
    %v11184 = vunpack.c.l.b16 %v11052
    %v11185 = vunpack.c.l.b16 %v11053
    %v11186 = vunpack.c.l.b16 %v11054
    %v11187 = vunpack.c.l.b16 %v11055
    %v11188 = vunpack.c.l.b16 %v11056
    %v11189 = vunpack.c.l.b16 %v11057
    %v11190 = vpack.c.b16 %v11127, %v11126
    %v11191 = vpack.c.b16 %v11129, %v11128
    %v11192 = vpack.c.b16 %v11131, %v11130
    %v11193 = vpack.c.b16 %v11133, %v11132
    %v11194 = vpack.c.b16 %v11135, %v11134
    %v11195 = vpack.c.b16 %v11137, %v11136
    %v11196 = vpack.c.b16 %v11139, %v11138
    %v11197 = vpack.c.b16 %v11141, %v11140
    %v11198 = vpack.c.b16 %v11143, %v11142
    %v11199 = vpack.c.b16 %v11145, %v11144
    %v11200 = vpack.c.b16 %v11147, %v11146
    %v11201 = vpack.c.b16 %v11149, %v11148
    %v11202 = vpack.c.b16 %v11151, %v11150
    %v11203 = vpack.c.b16 %v11153, %v11152
    %v11204 = vpack.c.b16 %v11155, %v11154
    %v11205 = vpack.c.b16 %v11157, %v11156
    %v11206 = vpack.c.b16 %v11159, %v11158
    %v11207 = vpack.c.b16 %v11161, %v11160
    %v11208 = vpack.c.b16 %v11163, %v11162
    %v11209 = vpack.c.b16 %v11165, %v11164
    %v11210 = vpack.c.b16 %v11167, %v11166
    %v11211 = vpack.c.b16 %v11169, %v11168
    %v11212 = vpack.c.b16 %v11171, %v11170
    %v11213 = vpack.c.b16 %v11173, %v11172
    %v11214 = vpack.c.b16 %v11175, %v11174
    %v11215 = vpack.c.b16 %v11177, %v11176
    %v11216 = vpack.c.b16 %v11179, %v11178
    %v11217 = vpack.c.b16 %v11181, %v11180
    %v11218 = vpack.c.b16 %v11183, %v11182
    %v11219 = vpack.c.b16 %v11185, %v11184
    %v11220 = vpack.c.b16 %v11187, %v11186
    %v11221 = vpack.c.b16 %v11189, %v11188
    %11254 = vmatpush.bf16.msra.mxu0 %v11197
    %11255 = vmatpush.bf16.msra.mxu0 %v11196
    %11256 = vmatpush.bf16.msra.mxu0 %v11195
    %11257 = vmatpush.bf16.msra.mxu0 %v11194
    %11258 = vmatpush.bf16.msra.mxu0 %v11193
    %11259 = vmatpush.bf16.msra.mxu0 %v11192
    %11260 = vmatpush.bf16.msra.mxu0 %v11191
    %11261 = vmatpush.bf16.msra.mxu0 %v11190
    %11262 = vmatmul.bf16.gmra.mxu0 %v11058
    %v11263 = vpop.f32.mrf.mxu0
    %v11264 = vadd.f32 0.0, %v11263
    %v11265 = vpop.f32.mrf.mxu0
    %v11266 = vadd.f32 0.0, %v11265
    %11267 = vdwg.mxu0
    %11268 = vmatpush.bf16.msra.mxu0 %v11205
    %11269 = vmatpush.bf16.msra.mxu0 %v11204
    %11270 = vmatpush.bf16.msra.mxu0 %v11203
    %11271 = vmatpush.bf16.msra.mxu0 %v11202
    %11272 = vmatpush.bf16.msra.mxu0 %v11201
    %11273 = vmatpush.bf16.msra.mxu0 %v11200
    %11274 = vmatpush.bf16.msra.mxu0 %v11199
    %11275 = vmatpush.bf16.msra.mxu0 %v11198
    %11276 = vmatmul.bf16.gmra.mxu0 %v11059
    %v11277 = vpop.f32.mrf.mxu0
    %v11278 = vadd.f32 %v11264, %v11277
    %v11279 = vpop.f32.mrf.mxu0
    %v11280 = vadd.f32 %v11266, %v11279
    %11281 = vdwg.mxu0
    %11282 = vmatpush.bf16.msra.mxu0 %v11213
    %11283 = vmatpush.bf16.msra.mxu0 %v11212
    %11284 = vmatpush.bf16.msra.mxu0 %v11211
    %11285 = vmatpush.bf16.msra.mxu0 %v11210
    %11286 = vmatpush.bf16.msra.mxu0 %v11209
    %11287 = vmatpush.bf16.msra.mxu0 %v11208
    %11288 = vmatpush.bf16.msra.mxu0 %v11207
    %11289 = vmatpush.bf16.msra.mxu0 %v11206
    %11290 = vmatmul.bf16.gmra.mxu0 %v11060
    %v11291 = vpop.f32.mrf.mxu0
    %v11292 = vadd.f32 %v11278, %v11291
    %v11293 = vpop.f32.mrf.mxu0
    %v11294 = vadd.f32 %v11280, %v11293
    %11295 = vdwg.mxu0
    %11296 = vmatpush.bf16.msra.mxu0 %v11221
    %11297 = vmatpush.bf16.msra.mxu0 %v11220
    %11298 = vmatpush.bf16.msra.mxu0 %v11219
    %11299 = vmatpush.bf16.msra.mxu0 %v11218
    %11300 = vmatpush.bf16.msra.mxu0 %v11217
    %11301 = vmatpush.bf16.msra.mxu0 %v11216
    %11302 = vmatpush.bf16.msra.mxu0 %v11215
    %11303 = vmatpush.bf16.msra.mxu0 %v11214
    %11304 = vmatmul.bf16.gmra.mxu0 %v11061
    %v11305 = vpop.f32.mrf.mxu0
    %v11306 = vadd.f32 %v11292, %v11305
    %v11307 = vpop.f32.mrf.mxu0
    %v11308 = vadd.f32 %v11294, %v11307
    %11309 = vdwg.mxu0
    %v11374 = vunpack.c.l.b16 %v10926
    %v11375 = vunpack.c.l.b16 %v10927
    %v11376 = vunpack.c.l.b16 %v10928
    %v11377 = vunpack.c.l.b16 %v10929
    %v11378 = vunpack.c.l.b16 %v10930
    %v11379 = vunpack.c.l.b16 %v10931
    %v11380 = vunpack.c.l.b16 %v10932
    %v11381 = vunpack.c.l.b16 %v10933
    %v11382 = vunpack.c.l.b16 %v10934
    %v11383 = vunpack.c.l.b16 %v10935
    %v11384 = vunpack.c.l.b16 %v10936
    %v11385 = vunpack.c.l.b16 %v10937
    %v11386 = vunpack.c.l.b16 %v10938
    %v11387 = vunpack.c.l.b16 %v10939
    %v11388 = vunpack.c.l.b16 %v10940
    %v11389 = vunpack.c.l.b16 %v10941
    %v11390 = vunpack.c.l.b16 %v10942
    %v11391 = vunpack.c.l.b16 %v10943
    %v11392 = vunpack.c.l.b16 %v10944
    %v11393 = vunpack.c.l.b16 %v10945
    %v11394 = vunpack.c.l.b16 %v10946
    %v11395 = vunpack.c.l.b16 %v10947
    %v11396 = vunpack.c.l.b16 %v10948
    %v11397 = vunpack.c.l.b16 %v10949
    %v11398 = vunpack.c.l.b16 %v10950
    %v11399 = vunpack.c.l.b16 %v10951
    %v11400 = vunpack.c.l.b16 %v10952
    %v11401 = vunpack.c.l.b16 %v10953
    %v11402 = vunpack.c.l.b16 %v10954
    %v11403 = vunpack.c.l.b16 %v10955
    %v11404 = vunpack.c.l.b16 %v10956
    %v11405 = vunpack.c.l.b16 %v10957
    %v11406 = vunpack.c.l.b16 %v10958
    %v11407 = vunpack.c.l.b16 %v10959
    %v11408 = vunpack.c.l.b16 %v10960
    %v11409 = vunpack.c.l.b16 %v10961
    %v11410 = vunpack.c.l.b16 %v10962
    %v11411 = vunpack.c.l.b16 %v10963
    %v11412 = vunpack.c.l.b16 %v10964
    %v11413 = vunpack.c.l.b16 %v10965
    %v11414 = vunpack.c.l.b16 %v10966
    %v11415 = vunpack.c.l.b16 %v10967
    %v11416 = vunpack.c.l.b16 %v10968
    %v11417 = vunpack.c.l.b16 %v10969
    %v11418 = vunpack.c.l.b16 %v10970
    %v11419 = vunpack.c.l.b16 %v10971
    %v11420 = vunpack.c.l.b16 %v10972
    %v11421 = vunpack.c.l.b16 %v10973
    %v11422 = vunpack.c.l.b16 %v10974
    %v11423 = vunpack.c.l.b16 %v10975
    %v11424 = vunpack.c.l.b16 %v10976
    %v11425 = vunpack.c.l.b16 %v10977
    %v11426 = vunpack.c.l.b16 %v10978
    %v11427 = vunpack.c.l.b16 %v10979
    %v11428 = vunpack.c.l.b16 %v10980
    %v11429 = vunpack.c.l.b16 %v10981
    %v11430 = vunpack.c.l.b16 %v10982
    %v11431 = vunpack.c.l.b16 %v10983
    %v11432 = vunpack.c.l.b16 %v10984
    %v11433 = vunpack.c.l.b16 %v10985
    %v11434 = vunpack.c.l.b16 %v10986
    %v11435 = vunpack.c.l.b16 %v10987
    %v11436 = vunpack.c.l.b16 %v10988
    %v11437 = vunpack.c.l.b16 %v10989
    %v11438 = vpack.c.b16 %v11375, %v11374
    %v11439 = vpack.c.b16 %v11377, %v11376
    %v11440 = vpack.c.b16 %v11379, %v11378
    %v11441 = vpack.c.b16 %v11381, %v11380
    %v11442 = vpack.c.b16 %v11383, %v11382
    %v11443 = vpack.c.b16 %v11385, %v11384
    %v11444 = vpack.c.b16 %v11387, %v11386
    %v11445 = vpack.c.b16 %v11389, %v11388
    %v11446 = vpack.c.b16 %v11391, %v11390
    %v11447 = vpack.c.b16 %v11393, %v11392
    %v11448 = vpack.c.b16 %v11395, %v11394
    %v11449 = vpack.c.b16 %v11397, %v11396
    %v11450 = vpack.c.b16 %v11399, %v11398
    %v11451 = vpack.c.b16 %v11401, %v11400
    %v11452 = vpack.c.b16 %v11403, %v11402
    %v11453 = vpack.c.b16 %v11405, %v11404
    %v11454 = vpack.c.b16 %v11407, %v11406
    %v11455 = vpack.c.b16 %v11409, %v11408
    %v11456 = vpack.c.b16 %v11411, %v11410
    %v11457 = vpack.c.b16 %v11413, %v11412
    %v11458 = vpack.c.b16 %v11415, %v11414
    %v11459 = vpack.c.b16 %v11417, %v11416
    %v11460 = vpack.c.b16 %v11419, %v11418
    %v11461 = vpack.c.b16 %v11421, %v11420
    %v11462 = vpack.c.b16 %v11423, %v11422
    %v11463 = vpack.c.b16 %v11425, %v11424
    %v11464 = vpack.c.b16 %v11427, %v11426
    %v11465 = vpack.c.b16 %v11429, %v11428
    %v11466 = vpack.c.b16 %v11431, %v11430
    %v11467 = vpack.c.b16 %v11433, %v11432
    %v11468 = vpack.c.b16 %v11435, %v11434
    %v11469 = vpack.c.b16 %v11437, %v11436
    %11502 = vmatpush.bf16.msra.mxu0 %v11445
    %11503 = vmatpush.bf16.msra.mxu0 %v11444
    %11504 = vmatpush.bf16.msra.mxu0 %v11443
    %11505 = vmatpush.bf16.msra.mxu0 %v11442
    %11506 = vmatpush.bf16.msra.mxu0 %v11441
    %11507 = vmatpush.bf16.msra.mxu0 %v11440
    %11508 = vmatpush.bf16.msra.mxu0 %v11439
    %11509 = vmatpush.bf16.msra.mxu0 %v11438
    %11510 = vmatmul.bf16.gmra.mxu0 %v10990
    %v11511 = vpop.f32.mrf.mxu0
    %v11512 = vadd.f32 %v11306, %v11511
    %v11513 = vpop.f32.mrf.mxu0
    %v11514 = vadd.f32 %v11308, %v11513
    %11515 = vdwg.mxu0
    %11516 = vmatpush.bf16.msra.mxu0 %v11453
    %11517 = vmatpush.bf16.msra.mxu0 %v11452
    %11518 = vmatpush.bf16.msra.mxu0 %v11451
    %11519 = vmatpush.bf16.msra.mxu0 %v11450
    %11520 = vmatpush.bf16.msra.mxu0 %v11449
    %11521 = vmatpush.bf16.msra.mxu0 %v11448
    %11522 = vmatpush.bf16.msra.mxu0 %v11447
    %11523 = vmatpush.bf16.msra.mxu0 %v11446
    %11524 = vmatmul.bf16.gmra.mxu0 %v10991
    %v11525 = vpop.f32.mrf.mxu0
    %v11526 = vadd.f32 %v11512, %v11525
    %v11527 = vpop.f32.mrf.mxu0
    %v11528 = vadd.f32 %v11514, %v11527
    %11529 = vdwg.mxu0
    %11530 = vmatpush.bf16.msra.mxu0 %v11461
    %11531 = vmatpush.bf16.msra.mxu0 %v11460
    %11532 = vmatpush.bf16.msra.mxu0 %v11459
    %11533 = vmatpush.bf16.msra.mxu0 %v11458
    %11534 = vmatpush.bf16.msra.mxu0 %v11457
    %11535 = vmatpush.bf16.msra.mxu0 %v11456
    %11536 = vmatpush.bf16.msra.mxu0 %v11455
    %11537 = vmatpush.bf16.msra.mxu0 %v11454
    %11538 = vmatmul.bf16.gmra.mxu0 %v10992
    %v11539 = vpop.f32.mrf.mxu0
    %v11540 = vadd.f32 %v11526, %v11539
    %v11541 = vpop.f32.mrf.mxu0
    %v11542 = vadd.f32 %v11528, %v11541
    %11543 = vdwg.mxu0
    %11544 = vmatpush.bf16.msra.mxu0 %v11469
    %11545 = vmatpush.bf16.msra.mxu0 %v11468
    %11546 = vmatpush.bf16.msra.mxu0 %v11467
    %11547 = vmatpush.bf16.msra.mxu0 %v11466
    %11548 = vmatpush.bf16.msra.mxu0 %v11465
    %11549 = vmatpush.bf16.msra.mxu0 %v11464
    %11550 = vmatpush.bf16.msra.mxu0 %v11463
    %11551 = vmatpush.bf16.msra.mxu0 %v11462
    %11552 = vmatmul.bf16.gmra.mxu0 %v10993
    %v11553 = vpop.f32.mrf.mxu0
    %v11554 = vadd.f32 %v11540, %v11553
    %v11555 = vpop.f32.mrf.mxu0
    %v11556 = vadd.f32 %v11542, %v11555
    %11557 = vdwg.mxu0
    %v11558 = vld [vmem:[#allocation34] sm:$0x1]
    %v11560 = vperm.slane %v11558, 0
    %v11562 = vadd.f32 %v11554, %v11560
    %v11563 = vadd.f32 %v11556, %v11560
    %v11564 = vld [vmem:[%s1] sm:$0xff]
    %v11565 = vld [vmem:[%s1 + $0x8] sm:$0xff]
    %v11566 = vsub.f32 1.0, %v11564
    %v11567 = vsub.f32 1.0, %v11565
    %v11568 = vmul.f32 %v11566, -1e+33
    %v11569 = vmul.f32 %v11567, -1e+33
    %v11570 = vadd.f32 %v11562, %v11568
    %v11571 = vadd.f32 %v11563, %v11569
    %11572 = vst [vmem:[%s26] sm:$0xff] %v11570
    %11573 = vst [vmem:[%s26 + $0x8] sm:$0xff] %v11571
    %11578 = vst.sshfl [vmem:[#allocation1] sm:$0xff pattern:$0x73625140] %v6872
    %11579 = vst.sshfl [vmem:[#allocation1 + $0x8] sm:$0xff pattern:$0x73625140] %v6873
    %11580 = vst.sshfl [vmem:[#allocation1 + $0x10] sm:$0xff pattern:$0x73625140] %v6874
    %11581 = vst.sshfl [vmem:[#allocation1 + $0x18] sm:$0xff pattern:$0x73625140] %v6875
    %s11582 = scalar_lea.vmem [#allocation1], 3
    %v11583 = vld [vmem:[%s11582] ss:$4 sm:$0xff]
    %11585 = vst [vmem:[#allocation35] sm:$0xff] %v11583
    %11590 = vst.sshfl [vmem:[#allocation1] sm:$0xff pattern:$0x73625140] %v6856
    %11591 = vst.sshfl [vmem:[#allocation1 + $0x8] sm:$0xff pattern:$0x73625140] %v6857
    %11592 = vst.sshfl [vmem:[#allocation1 + $0x10] sm:$0xff pattern:$0x73625140] %v6858
    %11593 = vst.sshfl [vmem:[#allocation1 + $0x18] sm:$0xff pattern:$0x73625140] %v6859
    %s11594 = scalar_lea.vmem [#allocation1], 3
    %v11595 = vld [vmem:[%s11594] ss:$4 sm:$0xff]
    %11597 = vst [vmem:[#allocation36] sm:$0xff] %v11595
    // Predicated region
    $region190: #{lstm_qnet_forward.1} parent=1 // pred_check
      _
    $region191: #{lstm_qnet_forward.1} parent=1 // pred_check_branch
      %11599 = sbr.rel (0) target = $region193
    $region192: #{lstm_qnet_forward.1} parent=1 // pred_region
      _
    $region193: #{lstm_qnet_forward.1} parent=1 // pred_fallthru
      _
    // Predicated region
    $region194: #{lstm_qnet_forward.1} parent=1 // pred_check
      _
    $region195: #{lstm_qnet_forward.1} parent=1 // pred_check_branch
      %11601 = sbr.rel (0) target = $region197
    $region196: #{lstm_qnet_forward.1} parent=1 // pred_region
      %11603 = vsyncadd [#allocation4], 0
      %s11605 = sshll.u32 [#allocation35], 4
      %s11606 = int_to_ptr.vmem [resolvable:$true] %s11605
      %s11607 = sshll.u32 %s27, 4
      %s11608 = int_to_ptr.hbm [resolvable:$true] %s11607
      %11610 = dma.vmem_to_hbm [thread:$0]  %s11606, 128, %s11608, [#allocation4]
    $region197: #{lstm_qnet_forward.1} parent=1 // pred_fallthru
      _
    // Predicated region
    $region198: #{lstm_qnet_forward.1} parent=1 // pred_check
      _
    $region199: #{lstm_qnet_forward.1} parent=1 // pred_check_branch
      %11612 = sbr.rel (0) target = $region201
    $region200: #{lstm_qnet_forward.1} parent=1 // pred_region
      %11614 = vsyncadd [#allocation37], 0
      %s11616 = sshll.u32 [#allocation36], 4
      %s11617 = int_to_ptr.vmem [resolvable:$true] %s11616
      %s11618 = sshll.u32 %s28, 4
      %s11619 = int_to_ptr.hbm [resolvable:$true] %s11618
      %11621 = dma.vmem_to_hbm [thread:$0]  %s11617, 128, %s11619, [#allocation37]
    $region201: #{lstm_qnet_forward.1} parent=1 // pred_fallthru
      _
    // Predicated region
    $region202: #{lstm_qnet_forward.1} parent=1 // pred_check
      _
    $region203: #{lstm_qnet_forward.1} parent=1 // pred_check_branch
      %11623 = sbr.rel (0) target = $region205
    $region204: #{lstm_qnet_forward.1} parent=1 // pred_region
      _
    $region205: #{lstm_qnet_forward.1} parent=1 // pred_fallthru
      _
    // Predicated region
    $region206: #{lstm_qnet_forward.1} parent=1 // pred_check
      _
    $region207: #{lstm_qnet_forward.1} parent=1 // pred_check_branch
      %11625 = sbr.rel (0) target = $region209
    $region208: #{lstm_qnet_forward.1} parent=1 // pred_region
      %11627 = dma.done [#allocation4], 128
    $region209: #{lstm_qnet_forward.1} parent=1 // pred_fallthru
      _
    // Predicated region
    $region210: #{lstm_qnet_forward.1} parent=1 // pred_check
      _
    $region211: #{lstm_qnet_forward.1} parent=1 // pred_check_branch
      %11629 = sbr.rel (0) target = $region213
    $region212: #{lstm_qnet_forward.1} parent=1 // pred_region
      %11631 = dma.done [#allocation37], 128
    $region213: #{lstm_qnet_forward.1} parent=1 // pred_fallthru
      _
    %11632 = vsyncpa [#allocation3], 1
    %11633 = vsyncpa [#allocation6], 1
    %11634 = vsyncpa [#allocation9], 1
    %11635 = vsyncpa [#allocation12], 1
    %11636 = vsyncpa [#allocation15], 1
    %11637 = vsyncpa [#allocation18], 1
    %11638 = vsyncpa [#allocation21], 1
    %11639 = vsyncpa [#allocation24], 1
    %11640 = vsyncpa [#allocation27], 1
    %11641 = vsyncpa [#allocation30], 1
    %11642 = vsyncpa [#allocation33], 1
    %11643 = vsyncpa [#allocation4], 1
    %11644 = vsyncpa [#allocation37], 1

</llo_original>
